<compile_context>
chip_gen: v7x
topology: tpu7x:2x2x1
jax: 0.10.0
libtpu: 0.0.40
codegen_flags: <defaults>
</compile_context>

<pallas_src>
import math
import functools

import numpy as np
import jax
import jax.numpy as jnp
from jax.experimental import pallas as pl
from jax.experimental.pallas import tpu as pltpu


def _silu(y):
    return y * jax.nn.sigmoid(y)


# -----------------------------------------------------------------------------
# Fused kernel: whole PinwheelAttn forward for Bt batch elements per grid step.
# -----------------------------------------------------------------------------
def _fused_pinwheel_kernel(
    x_ref,
    mrow_ref, mcol_ref, mlo_ref, mhi_ref, mtop_ref, mbot_ref,
    ws_ref, bs_ref, wm_ref, bm_ref,
    wp_ref, bp_ref, wf1_ref, bf1_ref, wdw_ref, bdw_ref, wf3_ref, bf3_ref,
    wF_ref, bF_ref,
    out_ref,
    *, num_blocks, cm, cm_pad, c_out, H, W, HW, Bt,
):
    L = Bt * HW

    def conv1x1(w, b, inp):
        return _silu(jnp.dot(w, inp, preferred_element_type=jnp.float32) + b)

    def recip(d):
        r = pl.reciprocal(d, approx=True)           # EUP approx reciprocal
        return r * (2.0 - d * r)                    # one Newton step (near-exact, documented)

    # ---- lane-concat the Bt images into a single (C_in, Bt*HW) working slab ----
    if Bt == 1:
        x2 = x_ref[0]
    else:
        x2 = jnp.concatenate([x_ref[b] for b in range(Bt)], axis=-1)

    mrow = mrow_ref[...]                            # (L, L) block-diag "same spatial row"
    mcol = mcol_ref[...]                            # (L, L) block-diag "same spatial col"

    # Combined per-tap boundary masks (hoisted out of the block / tap loops).
    m_lo, m_hi = mlo_ref[...], mhi_ref[...]         # 0 where col==0 / col==W-1
    m_top, m_bot = mtop_ref[...], mbot_ref[...]     # 0 where row==0 / row==H-1
    col_mask = {-1: m_lo, 1: m_hi}
    row_mask = {-1: m_top, 1: m_bot}
    tmask = {}
    for sh in (-1, 0, 1):
        for sw in (-1, 0, 1):
            m = None
            if sh in row_mask:
                m = row_mask[sh]
            if sw in col_mask:
                m = col_mask[sw] if m is None else m * col_mask[sw]
            tmask[(sh, sw)] = m

    # One-hot column used to fold the softmax denominator into a padded key row.
    row_idx = jax.lax.broadcasted_iota(jnp.int32, (cm_pad, 1), 0)
    sel_den = (row_idx == (cm if cm < cm_pad else 0)).astype(jnp.float32)

    inv_sqrt_c = 1.0 / math.sqrt(cm)

    def ctx_dir(q_row, k_rows, seg_mat):
        # Segmented softmax (reduce + broadcast) fused into ONE lane-dense matmul.
        # Global-max stabilization is mathematically equal to per-segment max; the +1e-30
        # guards the (theoretical) 0/0 underflow case.
        e = jnp.exp(q_row - jnp.max(q_row, axis=-1, keepdims=True))     # (1, L)
        if cm < cm_pad:
            op = k_rows * e + sel_den * e           # denom folded into zero-padded row `cm`
            r = jnp.dot(op, seg_mat, preferred_element_type=jnp.float32)
            den = r[cm:cm + 1]
            num = r                                  # padded rows never propagate (val==0)
        else:
            op = jnp.concatenate([k_rows * e, sel_den * e], axis=0)     # (2*cm_pad, L)
            r = jnp.dot(op, seg_mat, preferred_element_type=jnp.float32)
            den = r[cm_pad:cm_pad + 1]
            num = r[0:cm_pad]
        return num * recip(den + 1e-30)             # (cm_pad, L), lane-dense

    # ---- stem convs (channel-major, lane-dense) ----
    x_short = conv1x1(ws_ref[...], bs_ref[...], x2)      # (cm_pad, L)
    x_main = conv1x1(wm_ref[...], bm_ref[...], x2)       # (cm_pad, L)

    # ---- streaming final-conv accumulation: no y-list kept live, no concat ----
    y = jnp.dot(wF_ref[0], x_short, preferred_element_type=jnp.float32)
    y = y + jnp.dot(wF_ref[1], x_main, preferred_element_type=jnp.float32)

    cur = x_main
    for blk in range(num_blocks):
        # fused projections [qk_W ; qk_H ; v]; every segment starts at a multiple of 8 rows
        proj = conv1x1(wp_ref[blk], bp_ref[blk], cur)    # (5*cm_pad, L)
        qw_q = proj[0:1]
        qw_k = proj[cm_pad:2 * cm_pad]
        qh_q = proj[2 * cm_pad:2 * cm_pad + 1]
        qh_k = proj[3 * cm_pad:4 * cm_pad]
        val = proj[4 * cm_pad:5 * cm_pad]

        cw = ctx_dir(qw_q, qw_k, mrow)                   # softmax over W, broadcast back
        ch = ctx_dir(qh_q, qh_k, mcol)                   # softmax over H, broadcast back
        att = val * (cw * ch * inv_sqrt_c) + cur         # (cm_pad, L)

        # filter: 1x1 -> depthwise 3x3 (lane rolls + masks, no scratch) -> 1x1
        f1 = conv1x1(wf1_ref[blk], bf1_ref[blk], att)
        acc = jnp.zeros((cm_pad, L), jnp.float32)
        for sh in (-1, 0, 1):
            for sw in (-1, 0, 1):
                tap = (sh + 1) * 3 + (sw + 1)
                delta = sh * W + sw
                shifted = f1 if delta == 0 else pltpu.roll(f1, (-delta) % L, 1)
                m = tmask[(sh, sw)]
                if m is not None:
                    shifted = shifted * m
                acc = acc + wdw_ref[blk, tap] * shifted
        f2 = _silu(acc + bdw_ref[blk])
        f3 = conv1x1(wf3_ref[blk], bf3_ref[blk], f2)

        y = y + jnp.dot(wF_ref[2 + blk], f3, preferred_element_type=jnp.float32)
        cur = f3

    out_full = _silu(y + bF_ref[...]) + x2               # residual (c_out == c_in asserted)
    for b in range(Bt):
        out_ref[b] = out_full[:, b * HW:(b + 1) * HW]    # 128-aligned lane slices


# -----------------------------------------------------------------------------
# Host-side constants & weight packing
# -----------------------------------------------------------------------------
def _spatial_constants(H, W, Bt):
    HW = H * W
    p = np.arange(HW)
    row, col = p // W, p % W
    mrow = (row[:, None] == row[None, :]).astype(np.float32)      # (HW, HW)
    mcol = (col[:, None] == col[None, :]).astype(np.float32)
    eye = np.eye(Bt, dtype=np.float32)
    mrow_b = np.kron(eye, mrow)                                   # block-diag over batch
    mcol_b = np.kron(eye, mcol)
    m_lo = np.tile((col != 0).astype(np.float32), Bt)[None, :]
    m_hi = np.tile((col != W - 1).astype(np.float32), Bt)[None, :]
    m_top = np.tile((row != 0).astype(np.float32), Bt)[None, :]
    m_bot = np.tile((row != H - 1).astype(np.float32), Bt)[None, :]
    return tuple(jnp.asarray(a) for a in (mrow_b, mcol_b, m_lo, m_hi, m_top, m_bot))


def _pad2(w, r, c):
    w = jnp.asarray(w, jnp.float32)
    return jnp.zeros((r, c), jnp.float32).at[:w.shape[0], :w.shape[1]].set(w)


def _pack_params(params, cm, cm_pad, c_out):
    nb = len(params["blocks"])
    c_in = params["short"][0].shape[1]
    ws, bs = _pad2(params["short"][0], cm_pad, c_in), _pad2(params["short"][1], cm_pad, 1)
    wm, bm = _pad2(params["main"][0], cm_pad, c_in), _pad2(params["main"][1], cm_pad, 1)

    wp_l, bp_l, wf1_l, bf1_l, wdw_l, bdw_l, wf3_l, bf3_l = ([] for _ in range(8))
    for blk in params["blocks"]:
        wqkW, bqkW = blk["qk_W"]
        wqkH, bqkH = blk["qk_H"]
        wv, bv = blk["v"]
        wp = jnp.zeros((5 * cm_pad, cm_pad), jnp.float32)
        bp = jnp.zeros((5 * cm_pad, 1), jnp.float32)
        wp = wp.at[0:1, :cm].set(wqkW[0:1])
        wp = wp.at[cm_pad:cm_pad + cm, :cm].set(wqkW[1:])
        wp = wp.at[2 * cm_pad:2 * cm_pad + 1, :cm].set(wqkH[0:1])
        wp = wp.at[3 * cm_pad:3 * cm_pad + cm, :cm].set(wqkH[1:])
        wp = wp.at[4 * cm_pad:4 * cm_pad + cm, :cm].set(wv)
        bp = bp.at[0:1].set(bqkW[0:1])
        bp = bp.at[cm_pad:cm_pad + cm].set(bqkW[1:])
        bp = bp.at[2 * cm_pad:2 * cm_pad + 1].set(bqkH[0:1])
        bp = bp.at[3 * cm_pad:3 * cm_pad + cm].set(bqkH[1:])
        bp = bp.at[4 * cm_pad:4 * cm_pad + cm].set(bv)
        wp_l.append(wp)
        bp_l.append(bp)
        wf1_l.append(_pad2(blk["f1"][0], cm_pad, cm_pad))
        bf1_l.append(_pad2(blk["f1"][1], cm_pad, 1))
        wdw = jnp.zeros((9, cm_pad, 1), jnp.float32).at[:, :cm, 0].set(jnp.asarray(blk["f2"][0]).T)
        wdw_l.append(wdw)
        bdw_l.append(_pad2(blk["f2"][1], cm_pad, 1))
        wf3_l.append(_pad2(blk["f3"][0], cm_pad, cm_pad))
        bf3_l.append(_pad2(blk["f3"][1], cm_pad, 1))

    wF_full, bF_full = params["final"]
    nseg = 2 + nb
    wF = jnp.zeros((nseg, c_out, cm_pad), jnp.float32)
    for k in range(nseg):
        wF = wF.at[k, :, :cm].set(wF_full[:, k * cm:(k + 1) * cm])
    bF = jnp.asarray(bF_full, jnp.float32).reshape(c_out, 1)

    st = jnp.stack
    return (ws, bs, wm, bm, st(wp_l), st(bp_l), st(wf1_l), st(bf1_l),
            st(wdw_l), st(bdw_l), st(wf3_l), st(bf3_l), wF, bF)


# -----------------------------------------------------------------------------
# Forward (single fused pallas_call)
# -----------------------------------------------------------------------------
def pinwheel_attn_forward(x, params, block_batch=None):
    B, C_in, H, W = x.shape
    HW = H * W
    cm = params["main"][0].shape[0]
    c_out = params["final"][0].shape[0]
    nb = len(params["blocks"])
    assert c_out == C_in, "PinwheelAttn residual add requires out_channels == in_channels"
    cm_pad = max(8, ((cm + 7) // 8) * 8)

    if block_batch is None:
        block_batch = next(bt for bt in (4, 2, 1) if B % bt == 0)
    Bt = block_batch
    assert B % Bt == 0

    xf = x.astype(jnp.float32).reshape(B, C_in, HW)
    consts = _spatial_constants(H, W, Bt)
    weights = _pack_params(params, cm, cm_pad, c_out)
    in_arrays = (xf,) + consts + weights

    def _const_spec(arr):
        nd = arr.ndim
        return pl.BlockSpec(arr.shape, lambda i, _nd=nd: (0,) * _nd)

    in_specs = [pl.BlockSpec((Bt, C_in, HW), lambda i: (i, 0, 0))]
    in_specs += [_const_spec(a) for a in in_arrays[1:]]

    kern = functools.partial(
        _fused_pinwheel_kernel, num_blocks=nb, cm=cm, cm_pad=cm_pad,
        c_out=c_out, H=H, W=W, HW=HW, Bt=Bt)

    out = pl.pallas_call(
        kern,
        out_shape=jax.ShapeDtypeStruct((B, c_out, HW), jnp.float32),
        grid=(B // Bt,),
        in_specs=in_specs,
        out_specs=pl.BlockSpec((Bt, c_out, HW), lambda i: (i, 0, 0)),
        compiler_params=pltpu.CompilerParams(dimension_semantics=("parallel",)),
    )(*in_arrays)
    return out.reshape(B, c_out, H, W)


# -----------------------------------------------------------------------------
# Parameter init: Conv = Conv2d(no bias) + BN(eval) + SiLU, BN folded.
# -----------------------------------------------------------------------------
def _make_conv_folded(key, c_in, c_out, ksize=1, depthwise=False):
    kw, kg, kb, km, kv = jax.random.split(key, 5)
    if depthwise:
        w = jax.random.normal(kw, (c_out, 1, ksize, ksize), jnp.float32) / math.sqrt(ksize * ksize)
    else:
        w = jax.random.normal(kw, (c_out, c_in, ksize, ksize), jnp.float32) / math.sqrt(c_in * ksize * ksize)
    gamma = 1.0 + 0.1 * jax.random.normal(kg, (c_out,), jnp.float32)
    beta = 0.1 * jax.random.normal(kb, (c_out,), jnp.float32)
    mean = 0.1 * jax.random.normal(km, (c_out,), jnp.float32)
    var = 1.0 + 0.1 * jnp.abs(jax.random.normal(kv, (c_out,), jnp.float32))
    scale = gamma / jnp.sqrt(var + 1e-5)
    w_f = w * scale[:, None, None, None]
    b_f = beta - mean * scale
    return w_f, b_f


def _conv1x1_params(key, c_in, c_out):
    w, b = _make_conv_folded(key, c_in, c_out, ksize=1)
    return w.reshape(c_out, c_in), b.reshape(c_out, 1)


def _dw3x3_params(key, c):
    w, b = _make_conv_folded(key, c, c, ksize=3, depthwise=True)
    return w.reshape(c, 9), b.reshape(c, 1)


def init_params(key, c_in, c_out, num_blocks):
    cm = int(c_in * 0.5)
    ks = jax.random.split(key, 3 + num_blocks)
    params = {
        "main": _conv1x1_params(ks[0], c_in, cm),
        "short": _conv1x1_params(ks[1], c_in, cm),
        "final": _conv1x1_params(ks[2], (2 + num_blocks) * cm, c_out),
        "blocks": [],
    }
    for i in range(num_blocks):
        bk = jax.random.split(ks[3 + i], 6)
        params["blocks"].append({
            "qk_W": _conv1x1_params(bk[0], cm, 1 + cm),
            "qk_H": _conv1x1_params(bk[1], cm, 1 + cm),
            "v":    _conv1x1_params(bk[2], cm, cm),
            "f1":   _conv1x1_params(bk[3], cm, cm),
            "f2":   _dw3x3_params(bk[4], cm),
            "f3":   _conv1x1_params(bk[5], cm, cm),
        })
    return params


# -----------------------------------------------------------------------------
# Pure-JAX reference (same folded params) for a correctness check
# -----------------------------------------------------------------------------
def _ref_conv1x1(x4, w2, b2):
    y = jnp.einsum("oc,bchw->bohw", w2, x4, precision=jax.lax.Precision.HIGHEST)
    y = y + b2[None, :, :, None]
    return _silu(y)


def _ref_dwconv3(x4, w9, b2):
    B, C, H, W = x4.shape
    xp = jnp.pad(x4, ((0, 0), (0, 0), (1, 1), (1, 1)))
    acc = jnp.zeros_like(x4)
    for dh in range(3):
        for dw in range(3):
            acc = acc + w9[None, :, dh * 3 + dw, None, None] * xp[:, :, dh:dh + H, dw:dw + W]
    return _silu(acc + b2[None, :, :, None])


def _ref_block(x4, blk, Cm):
    qkw = _ref_conv1x1(x4, *blk["qk_W"])
    q, k = qkw[:, :1], qkw[:, 1:]
    s = jax.nn.softmax(q, axis=-1)
    cv_w = jnp.sum(k * s, axis=-1, keepdims=True)
    qkh = _ref_conv1x1(x4, *blk["qk_H"])
    q, k = qkh[:, :1], qkh[:, 1:]
    s = jax.nn.softmax(q, axis=-2)
    cv_h = jnp.sum(k * s, axis=-2, keepdims=True)
    ctx = cv_w * cv_h / math.sqrt(Cm)
    v = _ref_conv1x1(x4, *blk["v"])
    att = v * ctx + x4
    f = _ref_conv1x1(att, *blk["f1"])
    f = _ref_dwconv3(f, *blk["f2"])
    f = _ref_conv1x1(f, *blk["f3"])
    return f


def _ref_forward(x4, params, Cm):
    xs = _ref_conv1x1(x4, *params["short"])
    xm = _ref_conv1x1(x4, *params["main"])
    ys = [xs, xm]
    cur = xm
    for blk in params["blocks"]:
        cur = _ref_block(cur, blk, Cm)
        ys.append(cur)
    cat = jnp.concatenate(ys, axis=1)
    return _ref_conv1x1(cat, *params["final"]) + x4


# -----------------------------------------------------------------------------
if __name__ == "__main__":
    B, C_in, H, W = 2, 8, 16, 16
    num_blocks = 2
    C_out = C_in  # residual add in PinwheelAttn.forward implies out_channels == in_channels
    Cm = int(C_in * 0.5)

    root = jax.random.PRNGKey(0)
    kx, kp = jax.random.split(root)
    x = jax.random.normal(kx, (B, C_in, H, W), jnp.float32)
    params = init_params(kp, C_in, C_out, num_blocks)

    fwd = jax.jit(pinwheel_attn_forward)
    out = jax.block_until_ready(fwd(x, params))

    ref = _ref_forward(x, params, Cm)
    assert out.shape == (B, C_out, H, W), out.shape
    max_err = float(jnp.max(jnp.abs(out - ref)))
    assert jnp.allclose(out, ref, atol=5e-3, rtol=5e-3), f"max abs err {max_err}"
    print("KERNEL_OK")
</pallas_src>

<mosaic_0001>
module attributes {stable_mosaic.version = 11 : i64} {
  func.func @_fused_pinwheel_kernel(%arg0: i32, %arg1: memref<2x8x256xf32, #tpu.memory_space<vmem>>, %arg2: memref<512x512xf32, #tpu.memory_space<vmem>>, %arg3: memref<512x512xf32, #tpu.memory_space<vmem>>, %arg4: memref<1x512xf32, #tpu.memory_space<vmem>>, %arg5: memref<1x512xf32, #tpu.memory_space<vmem>>, %arg6: memref<1x512xf32, #tpu.memory_space<vmem>>, %arg7: memref<1x512xf32, #tpu.memory_space<vmem>>, %arg8: memref<8x8xf32, #tpu.memory_space<vmem>>, %arg9: memref<8x1xf32, #tpu.memory_space<vmem>>, %arg10: memref<8x8xf32, #tpu.memory_space<vmem>>, %arg11: memref<8x1xf32, #tpu.memory_space<vmem>>, %arg12: memref<2x40x8xf32, #tpu.memory_space<vmem>>, %arg13: memref<2x40x1xf32, #tpu.memory_space<vmem>>, %arg14: memref<2x8x8xf32, #tpu.memory_space<vmem>>, %arg15: memref<2x8x1xf32, #tpu.memory_space<vmem>>, %arg16: memref<2x9x8x1xf32, #tpu.memory_space<vmem>>, %arg17: memref<2x8x1xf32, #tpu.memory_space<vmem>>, %arg18: memref<2x8x8xf32, #tpu.memory_space<vmem>>, %arg19: memref<2x8x1xf32, #tpu.memory_space<vmem>>, %arg20: memref<4x8x8xf32, #tpu.memory_space<vmem>>, %arg21: memref<8x1xf32, #tpu.memory_space<vmem>>, %arg22: memref<2x8x256xf32, #tpu.memory_space<vmem>>) attributes {dimension_semantics = [#tpu.dimension_semantics<parallel>], iteration_bounds = array<i64: 1>, scalar_prefetch = 0 : i64, scratch_operands = 0 : i64, tpu.core_type = #tpu.core_type<tc>, window_params = [{transform_indices = @transform_0, window_bounds = array<i64: 2, 8, 256>}, {pipeline_mode = #tpu.pipeline_mode<synchronous>, transform_indices = @transform_1, window_bounds = array<i64: 512, 512>}, {pipeline_mode = #tpu.pipeline_mode<synchronous>, transform_indices = @transform_2, window_bounds = array<i64: 512, 512>}, {pipeline_mode = #tpu.pipeline_mode<synchronous>, transform_indices = @transform_3, window_bounds = array<i64: 1, 512>}, {pipeline_mode = #tpu.pipeline_mode<synchronous>, transform_indices = @transform_4, window_bounds = array<i64: 1, 512>}, {pipeline_mode = #tpu.pipeline_mode<synchronous>, transform_indices = @transform_5, window_bounds = array<i64: 1, 512>}, {pipeline_mode = #tpu.pipeline_mode<synchronous>, transform_indices = @transform_6, window_bounds = array<i64: 1, 512>}, {pipeline_mode = #tpu.pipeline_mode<synchronous>, transform_indices = @transform_7, window_bounds = array<i64: 8, 8>}, {pipeline_mode = #tpu.pipeline_mode<synchronous>, transform_indices = @transform_8, window_bounds = array<i64: 8, 1>}, {pipeline_mode = #tpu.pipeline_mode<synchronous>, transform_indices = @transform_9, window_bounds = array<i64: 8, 8>}, {pipeline_mode = #tpu.pipeline_mode<synchronous>, transform_indices = @transform_10, window_bounds = array<i64: 8, 1>}, {pipeline_mode = #tpu.pipeline_mode<synchronous>, transform_indices = @transform_11, window_bounds = array<i64: 2, 40, 8>}, {pipeline_mode = #tpu.pipeline_mode<synchronous>, transform_indices = @transform_12, window_bounds = array<i64: 2, 40, 1>}, {pipeline_mode = #tpu.pipeline_mode<synchronous>, transform_indices = @transform_13, window_bounds = array<i64: 2, 8, 8>}, {pipeline_mode = #tpu.pipeline_mode<synchronous>, transform_indices = @transform_14, window_bounds = array<i64: 2, 8, 1>}, {pipeline_mode = #tpu.pipeline_mode<synchronous>, transform_indices = @transform_15, window_bounds = array<i64: 2, 9, 8, 1>}, {pipeline_mode = #tpu.pipeline_mode<synchronous>, transform_indices = @transform_16, window_bounds = array<i64: 2, 8, 1>}, {pipeline_mode = #tpu.pipeline_mode<synchronous>, transform_indices = @transform_17, window_bounds = array<i64: 2, 8, 8>}, {pipeline_mode = #tpu.pipeline_mode<synchronous>, transform_indices = @transform_18, window_bounds = array<i64: 2, 8, 1>}, {pipeline_mode = #tpu.pipeline_mode<synchronous>, transform_indices = @transform_19, window_bounds = array<i64: 4, 8, 8>}, {pipeline_mode = #tpu.pipeline_mode<synchronous>, transform_indices = @transform_20, window_bounds = array<i64: 8, 1>}, {transform_indices = @transform_21, window_bounds = array<i64: 2, 8, 256>}]} {
    %c0 = arith.constant 0 : index
    %c0_0 = arith.constant 0 : index
    %c0_1 = arith.constant 0 : index
    %0 = vector.load %arg1[%c0, %c0_0, %c0_1] : memref<2x8x256xf32, #tpu.memory_space<vmem>>, vector<1x8x256xf32>
    %1 = vector.shape_cast %0 : vector<1x8x256xf32> to vector<8x256xf32>
    %c1 = arith.constant 1 : index
    %c0_2 = arith.constant 0 : index
    %c0_3 = arith.constant 0 : index
    %2 = vector.load %arg1[%c1, %c0_2, %c0_3] : memref<2x8x256xf32, #tpu.memory_space<vmem>>, vector<1x8x256xf32>
    %3 = vector.shape_cast %2 : vector<1x8x256xf32> to vector<8x256xf32>
    %4 = tpu.concatenate %1, %3 in 1 : vector<8x256xf32>, vector<8x256xf32> -> vector<8x512xf32>
    %c0_4 = arith.constant 0 : index
    %c0_5 = arith.constant 0 : index
    %5 = vector.load %arg2[%c0_4, %c0_5] : memref<512x512xf32, #tpu.memory_space<vmem>>, vector<512x512xf32>
    %c0_6 = arith.constant 0 : index
    %c0_7 = arith.constant 0 : index
    %6 = vector.load %arg3[%c0_6, %c0_7] : memref<512x512xf32, #tpu.memory_space<vmem>>, vector<512x512xf32>
    %c0_8 = arith.constant 0 : index
    %c0_9 = arith.constant 0 : index
    %7 = vector.load %arg4[%c0_8, %c0_9] : memref<1x512xf32, #tpu.memory_space<vmem>>, vector<1x512xf32>
    %c0_10 = arith.constant 0 : index
    %c0_11 = arith.constant 0 : index
    %8 = vector.load %arg5[%c0_10, %c0_11] : memref<1x512xf32, #tpu.memory_space<vmem>>, vector<1x512xf32>
    %c0_12 = arith.constant 0 : index
    %c0_13 = arith.constant 0 : index
    %9 = vector.load %arg6[%c0_12, %c0_13] : memref<1x512xf32, #tpu.memory_space<vmem>>, vector<1x512xf32>
    %c0_14 = arith.constant 0 : index
    %c0_15 = arith.constant 0 : index
    %10 = vector.load %arg7[%c0_14, %c0_15] : memref<1x512xf32, #tpu.memory_space<vmem>>, vector<1x512xf32>
    %11 = arith.mulf %9, %7 : vector<1x512xf32>
    %12 = arith.mulf %9, %8 : vector<1x512xf32>
    %13 = arith.mulf %10, %7 : vector<1x512xf32>
    %14 = arith.mulf %10, %8 : vector<1x512xf32>
    %15 = tpu.iota {dimensions = array<i32: 0>} : vector<8x1xi32>
    %c4_i32 = arith.constant 4 : i32
    %16 = vector.broadcast %c4_i32 : i32 to vector<8x1xi32>
    %17 = arith.cmpi eq, %15, %16 : vector<8x1xi32>
    %18 = arith.extui %17 : vector<8x1xi1> to vector<8x1xi32>
    %19 = arith.sitofp %18 : vector<8x1xi32> to vector<8x1xf32>
    %c0_16 = arith.constant 0 : index
    %c0_17 = arith.constant 0 : index
    %20 = vector.load %arg8[%c0_16, %c0_17] : memref<8x8xf32, #tpu.memory_space<vmem>>, vector<8x8xf32>
    %c0_18 = arith.constant 0 : index
    %c0_19 = arith.constant 0 : index
    %21 = vector.load %arg9[%c0_18, %c0_19] : memref<8x1xf32, #tpu.memory_space<vmem>>, vector<8x1xf32>
    %cst = arith.constant dense<0.000000e+00> : vector<8x512xf32>
    %22 = tpu.matmul %20, %4, %cst {dimension_numbers = #tpu.dot_dimension_numbers<[1], [0], [0], [1], [0, 0, 1, 1], [], []>} : vector<8x8xf32>, vector<8x512xf32>, vector<8x512xf32> -> vector<8x512xf32>
    %23 = vector.broadcast %21 : vector<8x1xf32> to vector<8x512xf32>
    %24 = arith.addf %22, %23 : vector<8x512xf32>
    %25 = arith.negf %24 : vector<8x512xf32>
    %26 = math.exp %25 : vector<8x512xf32>
    %cst_20 = arith.constant 1.000000e+00 : f32
    %27 = vector.broadcast %cst_20 : f32 to vector<8x512xf32>
    %28 = arith.addf %27, %26 : vector<8x512xf32>
    %29 = arith.divf %27, %28 : vector<8x512xf32>
    %30 = arith.mulf %24, %29 : vector<8x512xf32>
    %c0_21 = arith.constant 0 : index
    %c0_22 = arith.constant 0 : index
    %31 = vector.load %arg10[%c0_21, %c0_22] : memref<8x8xf32, #tpu.memory_space<vmem>>, vector<8x8xf32>
    %c0_23 = arith.constant 0 : index
    %c0_24 = arith.constant 0 : index
    %32 = vector.load %arg11[%c0_23, %c0_24] : memref<8x1xf32, #tpu.memory_space<vmem>>, vector<8x1xf32>
    %cst_25 = arith.constant dense<0.000000e+00> : vector<8x512xf32>
    %33 = tpu.matmul %31, %4, %cst_25 {dimension_numbers = #tpu.dot_dimension_numbers<[1], [0], [0], [1], [0, 0, 1, 1], [], []>} : vector<8x8xf32>, vector<8x512xf32>, vector<8x512xf32> -> vector<8x512xf32>
    %34 = vector.broadcast %32 : vector<8x1xf32> to vector<8x512xf32>
    %35 = arith.addf %33, %34 : vector<8x512xf32>
    %36 = arith.negf %35 : vector<8x512xf32>
    %37 = math.exp %36 : vector<8x512xf32>
    %cst_26 = arith.constant 1.000000e+00 : f32
    %38 = vector.broadcast %cst_26 : f32 to vector<8x512xf32>
    %39 = arith.addf %38, %37 : vector<8x512xf32>
    %40 = arith.divf %38, %39 : vector<8x512xf32>
    %41 = arith.mulf %35, %40 : vector<8x512xf32>
    %c0_27 = arith.constant 0 : index
    %c0_28 = arith.constant 0 : index
    %c0_29 = arith.constant 0 : index
    %42 = vector.load %arg20[%c0_27, %c0_28, %c0_29] : memref<4x8x8xf32, #tpu.memory_space<vmem>>, vector<1x8x8xf32>
    %43 = vector.shape_cast %42 : vector<1x8x8xf32> to vector<8x8xf32>
    %cst_30 = arith.constant dense<0.000000e+00> : vector<8x512xf32>
    %44 = tpu.matmul %43, %30, %cst_30 {dimension_numbers = #tpu.dot_dimension_numbers<[1], [0], [0], [1], [0, 0, 1, 1], [], []>} : vector<8x8xf32>, vector<8x512xf32>, vector<8x512xf32> -> vector<8x512xf32>
    %c1_31 = arith.constant 1 : index
    %c0_32 = arith.constant 0 : index
    %c0_33 = arith.constant 0 : index
    %45 = vector.load %arg20[%c1_31, %c0_32, %c0_33] : memref<4x8x8xf32, #tpu.memory_space<vmem>>, vector<1x8x8xf32>
    %46 = vector.shape_cast %45 : vector<1x8x8xf32> to vector<8x8xf32>
    %cst_34 = arith.constant dense<0.000000e+00> : vector<8x512xf32>
    %47 = tpu.matmul %46, %41, %cst_34 {dimension_numbers = #tpu.dot_dimension_numbers<[1], [0], [0], [1], [0, 0, 1, 1], [], []>} : vector<8x8xf32>, vector<8x512xf32>, vector<8x512xf32> -> vector<8x512xf32>
    %48 = arith.addf %44, %47 : vector<8x512xf32>
    %c0_35 = arith.constant 0 : index
    %c0_36 = arith.constant 0 : index
    %c0_37 = arith.constant 0 : index
    %49 = vector.load %arg12[%c0_35, %c0_36, %c0_37] : memref<2x40x8xf32, #tpu.memory_space<vmem>>, vector<1x40x8xf32>
    %50 = vector.shape_cast %49 : vector<1x40x8xf32> to vector<40x8xf32>
    %c0_38 = arith.constant 0 : index
    %c0_39 = arith.constant 0 : index
    %c0_40 = arith.constant 0 : index
    %51 = vector.load %arg13[%c0_38, %c0_39, %c0_40] : memref<2x40x1xf32, #tpu.memory_space<vmem>>, vector<1x40x1xf32>
    %52 = vector.shape_cast %51 : vector<1x40x1xf32> to vector<40x1xf32>
    %cst_41 = arith.constant dense<0.000000e+00> : vector<40x512xf32>
    %53 = tpu.matmul %50, %41, %cst_41 {dimension_numbers = #tpu.dot_dimension_numbers<[1], [0], [0], [1], [0, 0, 1, 1], [], []>} : vector<40x8xf32>, vector<8x512xf32>, vector<40x512xf32> -> vector<40x512xf32>
    %54 = vector.broadcast %52 : vector<40x1xf32> to vector<40x512xf32>
    %55 = arith.addf %53, %54 : vector<40x512xf32>
    %56 = arith.negf %55 : vector<40x512xf32>
    %57 = math.exp %56 : vector<40x512xf32>
    %cst_42 = arith.constant 1.000000e+00 : f32
    %58 = vector.broadcast %cst_42 : f32 to vector<40x512xf32>
    %59 = arith.addf %58, %57 : vector<40x512xf32>
    %60 = arith.divf %58, %59 : vector<40x512xf32>
    %61 = arith.mulf %55, %60 : vector<40x512xf32>
    %62 = vector.extract_strided_slice %61 {offsets = [0, 0], sizes = [1, 512], strides = [1, 1]} : vector<40x512xf32> to vector<1x512xf32>
    %63 = vector.extract_strided_slice %61 {offsets = [8, 0], sizes = [8, 512], strides = [1, 1]} : vector<40x512xf32> to vector<8x512xf32>
    %64 = vector.extract_strided_slice %61 {offsets = [16, 0], sizes = [1, 512], strides = [1, 1]} : vector<40x512xf32> to vector<1x512xf32>
    %65 = vector.extract_strided_slice %61 {offsets = [24, 0], sizes = [8, 512], strides = [1, 1]} : vector<40x512xf32> to vector<8x512xf32>
    %66 = vector.extract_strided_slice %61 {offsets = [32, 0], sizes = [8, 512], strides = [1, 1]} : vector<40x512xf32> to vector<8x512xf32>
    %cst_43 = arith.constant dense<0xFF800000> : vector<1xf32>
    %67 = vector.multi_reduction <maximumf>, %62, %cst_43 [1] : vector<1x512xf32> to vector<1xf32>
    %68 = vector.shape_cast %67 : vector<1xf32> to vector<1x1xf32>
    %69 = vector.broadcast %68 : vector<1x1xf32> to vector<1x512xf32>
    %70 = arith.subf %62, %69 : vector<1x512xf32>
    %71 = math.exp %70 : vector<1x512xf32>
    %72 = vector.broadcast %71 : vector<1x512xf32> to vector<8x512xf32>
    %73 = arith.mulf %63, %72 : vector<8x512xf32>
    %74 = vector.broadcast %19 : vector<8x1xf32> to vector<8x512xf32>
    %75 = vector.broadcast %71 : vector<1x512xf32> to vector<8x512xf32>
    %76 = arith.mulf %74, %75 : vector<8x512xf32>
    %77 = arith.addf %73, %76 : vector<8x512xf32>
    %cst_44 = arith.constant dense<0.000000e+00> : vector<8x512xf32>
    %78 = tpu.matmul %77, %5, %cst_44 {dimension_numbers = #tpu.dot_dimension_numbers<[1], [0], [0], [1], [0, 0, 1, 1], [], []>} : vector<8x512xf32>, vector<512x512xf32>, vector<8x512xf32> -> vector<8x512xf32>
    %79 = vector.extract_strided_slice %78 {offsets = [4, 0], sizes = [1, 512], strides = [1, 1]} : vector<8x512xf32> to vector<1x512xf32>
    %cst_45 = arith.constant 1.000000e-30 : f32
    %80 = vector.broadcast %cst_45 : f32 to vector<1x512xf32>
    %81 = arith.addf %79, %80 : vector<1x512xf32>
    %82 = tpu.reciprocal %81 {approx = true} : vector<1x512xf32> -> vector<1x512xf32>
    %83 = arith.mulf %81, %82 : vector<1x512xf32>
    %cst_46 = arith.constant 2.000000e+00 : f32
    %84 = vector.broadcast %cst_46 : f32 to vector<1x512xf32>
    %85 = arith.subf %84, %83 : vector<1x512xf32>
    %86 = arith.mulf %82, %85 : vector<1x512xf32>
    %87 = vector.broadcast %86 : vector<1x512xf32> to vector<8x512xf32>
    %88 = arith.mulf %78, %87 : vector<8x512xf32>
    %cst_47 = arith.constant dense<0xFF800000> : vector<1xf32>
    %89 = vector.multi_reduction <maximumf>, %64, %cst_47 [1] : vector<1x512xf32> to vector<1xf32>
    %90 = vector.shape_cast %89 : vector<1xf32> to vector<1x1xf32>
    %91 = vector.broadcast %90 : vector<1x1xf32> to vector<1x512xf32>
    %92 = arith.subf %64, %91 : vector<1x512xf32>
    %93 = math.exp %92 : vector<1x512xf32>
    %94 = vector.broadcast %93 : vector<1x512xf32> to vector<8x512xf32>
    %95 = arith.mulf %65, %94 : vector<8x512xf32>
    %96 = vector.broadcast %19 : vector<8x1xf32> to vector<8x512xf32>
    %97 = vector.broadcast %93 : vector<1x512xf32> to vector<8x512xf32>
    %98 = arith.mulf %96, %97 : vector<8x512xf32>
    %99 = arith.addf %95, %98 : vector<8x512xf32>
    %cst_48 = arith.constant dense<0.000000e+00> : vector<8x512xf32>
    %100 = tpu.matmul %99, %6, %cst_48 {dimension_numbers = #tpu.dot_dimension_numbers<[1], [0], [0], [1], [0, 0, 1, 1], [], []>} : vector<8x512xf32>, vector<512x512xf32>, vector<8x512xf32> -> vector<8x512xf32>
    %101 = vector.extract_strided_slice %100 {offsets = [4, 0], sizes = [1, 512], strides = [1, 1]} : vector<8x512xf32> to vector<1x512xf32>
    %cst_49 = arith.constant 1.000000e-30 : f32
    %102 = vector.broadcast %cst_49 : f32 to vector<1x512xf32>
    %103 = arith.addf %101, %102 : vector<1x512xf32>
    %104 = tpu.reciprocal %103 {approx = true} : vector<1x512xf32> -> vector<1x512xf32>
    %105 = arith.mulf %103, %104 : vector<1x512xf32>
    %cst_50 = arith.constant 2.000000e+00 : f32
    %106 = vector.broadcast %cst_50 : f32 to vector<1x512xf32>
    %107 = arith.subf %106, %105 : vector<1x512xf32>
    %108 = arith.mulf %104, %107 : vector<1x512xf32>
    %109 = vector.broadcast %108 : vector<1x512xf32> to vector<8x512xf32>
    %110 = arith.mulf %100, %109 : vector<8x512xf32>
    %111 = arith.mulf %88, %110 : vector<8x512xf32>
    %cst_51 = arith.constant 5.000000e-01 : f32
    %112 = vector.broadcast %cst_51 : f32 to vector<8x512xf32>
    %113 = arith.mulf %111, %112 : vector<8x512xf32>
    %114 = arith.mulf %66, %113 : vector<8x512xf32>
    %115 = arith.addf %114, %41 : vector<8x512xf32>
    %c0_52 = arith.constant 0 : index
    %c0_53 = arith.constant 0 : index
    %c0_54 = arith.constant 0 : index
    %116 = vector.load %arg14[%c0_52, %c0_53, %c0_54] : memref<2x8x8xf32, #tpu.memory_space<vmem>>, vector<1x8x8xf32>
    %117 = vector.shape_cast %116 : vector<1x8x8xf32> to vector<8x8xf32>
    %c0_55 = arith.constant 0 : index
    %c0_56 = arith.constant 0 : index
    %c0_57 = arith.constant 0 : index
    %118 = vector.load %arg15[%c0_55, %c0_56, %c0_57] : memref<2x8x1xf32, #tpu.memory_space<vmem>>, vector<1x8x1xf32>
    %119 = vector.shape_cast %118 : vector<1x8x1xf32> to vector<8x1xf32>
    %cst_58 = arith.constant dense<0.000000e+00> : vector<8x512xf32>
    %120 = tpu.matmul %117, %115, %cst_58 {dimension_numbers = #tpu.dot_dimension_numbers<[1], [0], [0], [1], [0, 0, 1, 1], [], []>} : vector<8x8xf32>, vector<8x512xf32>, vector<8x512xf32> -> vector<8x512xf32>
    %121 = vector.broadcast %119 : vector<8x1xf32> to vector<8x512xf32>
    %122 = arith.addf %120, %121 : vector<8x512xf32>
    %123 = arith.negf %122 : vector<8x512xf32>
    %124 = math.exp %123 : vector<8x512xf32>
    %cst_59 = arith.constant 1.000000e+00 : f32
    %125 = vector.broadcast %cst_59 : f32 to vector<8x512xf32>
    %126 = arith.addf %125, %124 : vector<8x512xf32>
    %127 = arith.divf %125, %126 : vector<8x512xf32>
    %128 = arith.mulf %122, %127 : vector<8x512xf32>
    %cst_60 = arith.constant 0.000000e+00 : f32
    %129 = vector.broadcast %cst_60 : f32 to vector<8x512xf32>
    %c17_i32 = arith.constant 17 : i32
    %130 = tpu.dynamic_rotate %128 by %c17_i32 dim 1 : vector<8x512xf32>, i32 -> vector<8x512xf32>
    %131 = vector.broadcast %11 : vector<1x512xf32> to vector<8x512xf32>
    %132 = arith.mulf %130, %131 : vector<8x512xf32>
    %c0_61 = arith.constant 0 : index
    %c0_62 = arith.constant 0 : index
    %c0_63 = arith.constant 0 : index
    %c0_64 = arith.constant 0 : index
    %133 = vector.load %arg16[%c0_61, %c0_62, %c0_63, %c0_64] : memref<2x9x8x1xf32, #tpu.memory_space<vmem>>, vector<1x1x8x1xf32>
    %134 = vector.shape_cast %133 : vector<1x1x8x1xf32> to vector<8x1xf32>
    %135 = vector.broadcast %134 : vector<8x1xf32> to vector<8x512xf32>
    %136 = arith.mulf %135, %132 : vector<8x512xf32>
    %137 = arith.addf %129, %136 : vector<8x512xf32>
    %c16_i32 = arith.constant 16 : i32
    %138 = tpu.dynamic_rotate %128 by %c16_i32 dim 1 : vector<8x512xf32>, i32 -> vector<8x512xf32>
    %139 = vector.broadcast %9 : vector<1x512xf32> to vector<8x512xf32>
    %140 = arith.mulf %138, %139 : vector<8x512xf32>
    %c0_65 = arith.constant 0 : index
    %c1_66 = arith.constant 1 : index
    %c0_67 = arith.constant 0 : index
    %c0_68 = arith.constant 0 : index
    %141 = vector.load %arg16[%c0_65, %c1_66, %c0_67, %c0_68] : memref<2x9x8x1xf32, #tpu.memory_space<vmem>>, vector<1x1x8x1xf32>
    %142 = vector.shape_cast %141 : vector<1x1x8x1xf32> to vector<8x1xf32>
    %143 = vector.broadcast %142 : vector<8x1xf32> to vector<8x512xf32>
    %144 = arith.mulf %143, %140 : vector<8x512xf32>
    %145 = arith.addf %137, %144 : vector<8x512xf32>
    %c15_i32 = arith.constant 15 : i32
    %146 = tpu.dynamic_rotate %128 by %c15_i32 dim 1 : vector<8x512xf32>, i32 -> vector<8x512xf32>
    %147 = vector.broadcast %12 : vector<1x512xf32> to vector<8x512xf32>
    %148 = arith.mulf %146, %147 : vector<8x512xf32>
    %c0_69 = arith.constant 0 : index
    %c2 = arith.constant 2 : index
    %c0_70 = arith.constant 0 : index
    %c0_71 = arith.constant 0 : index
    %149 = vector.load %arg16[%c0_69, %c2, %c0_70, %c0_71] : memref<2x9x8x1xf32, #tpu.memory_space<vmem>>, vector<1x1x8x1xf32>
    %150 = vector.shape_cast %149 : vector<1x1x8x1xf32> to vector<8x1xf32>
    %151 = vector.broadcast %150 : vector<8x1xf32> to vector<8x512xf32>
    %152 = arith.mulf %151, %148 : vector<8x512xf32>
    %153 = arith.addf %145, %152 : vector<8x512xf32>
    %c1_i32 = arith.constant 1 : i32
    %154 = tpu.dynamic_rotate %128 by %c1_i32 dim 1 : vector<8x512xf32>, i32 -> vector<8x512xf32>
    %155 = vector.broadcast %7 : vector<1x512xf32> to vector<8x512xf32>
    %156 = arith.mulf %154, %155 : vector<8x512xf32>
    %c0_72 = arith.constant 0 : index
    %c3 = arith.constant 3 : index
    %c0_73 = arith.constant 0 : index
    %c0_74 = arith.constant 0 : index
    %157 = vector.load %arg16[%c0_72, %c3, %c0_73, %c0_74] : memref<2x9x8x1xf32, #tpu.memory_space<vmem>>, vector<1x1x8x1xf32>
    %158 = vector.shape_cast %157 : vector<1x1x8x1xf32> to vector<8x1xf32>
    %159 = vector.broadcast %158 : vector<8x1xf32> to vector<8x512xf32>
    %160 = arith.mulf %159, %156 : vector<8x512xf32>
    %161 = arith.addf %153, %160 : vector<8x512xf32>
    %c0_75 = arith.constant 0 : index
    %c4 = arith.constant 4 : index
    %c0_76 = arith.constant 0 : index
    %c0_77 = arith.constant 0 : index
    %162 = vector.load %arg16[%c0_75, %c4, %c0_76, %c0_77] : memref<2x9x8x1xf32, #tpu.memory_space<vmem>>, vector<1x1x8x1xf32>
    %163 = vector.shape_cast %162 : vector<1x1x8x1xf32> to vector<8x1xf32>
    %164 = vector.broadcast %163 : vector<8x1xf32> to vector<8x512xf32>
    %165 = arith.mulf %164, %128 : vector<8x512xf32>
    %166 = arith.addf %161, %165 : vector<8x512xf32>
    %c511_i32 = arith.constant 511 : i32
    %167 = tpu.dynamic_rotate %128 by %c511_i32 dim 1 : vector<8x512xf32>, i32 -> vector<8x512xf32>
    %168 = vector.broadcast %8 : vector<1x512xf32> to vector<8x512xf32>
    %169 = arith.mulf %167, %168 : vector<8x512xf32>
    %c0_78 = arith.constant 0 : index
    %c5 = arith.constant 5 : index
    %c0_79 = arith.constant 0 : index
    %c0_80 = arith.constant 0 : index
    %170 = vector.load %arg16[%c0_78, %c5, %c0_79, %c0_80] : memref<2x9x8x1xf32, #tpu.memory_space<vmem>>, vector<1x1x8x1xf32>
    %171 = vector.shape_cast %170 : vector<1x1x8x1xf32> to vector<8x1xf32>
    %172 = vector.broadcast %171 : vector<8x1xf32> to vector<8x512xf32>
    %173 = arith.mulf %172, %169 : vector<8x512xf32>
    %174 = arith.addf %166, %173 : vector<8x512xf32>
    %c497_i32 = arith.constant 497 : i32
    %175 = tpu.dynamic_rotate %128 by %c497_i32 dim 1 : vector<8x512xf32>, i32 -> vector<8x512xf32>
    %176 = vector.broadcast %13 : vector<1x512xf32> to vector<8x512xf32>
    %177 = arith.mulf %175, %176 : vector<8x512xf32>
    %c0_81 = arith.constant 0 : index
    %c6 = arith.constant 6 : index
    %c0_82 = arith.constant 0 : index
    %c0_83 = arith.constant 0 : index
    %178 = vector.load %arg16[%c0_81, %c6, %c0_82, %c0_83] : memref<2x9x8x1xf32, #tpu.memory_space<vmem>>, vector<1x1x8x1xf32>
    %179 = vector.shape_cast %178 : vector<1x1x8x1xf32> to vector<8x1xf32>
    %180 = vector.broadcast %179 : vector<8x1xf32> to vector<8x512xf32>
    %181 = arith.mulf %180, %177 : vector<8x512xf32>
    %182 = arith.addf %174, %181 : vector<8x512xf32>
    %c496_i32 = arith.constant 496 : i32
    %183 = tpu.dynamic_rotate %128 by %c496_i32 dim 1 : vector<8x512xf32>, i32 -> vector<8x512xf32>
    %184 = vector.broadcast %10 : vector<1x512xf32> to vector<8x512xf32>
    %185 = arith.mulf %183, %184 : vector<8x512xf32>
    %c0_84 = arith.constant 0 : index
    %c7 = arith.constant 7 : index
    %c0_85 = arith.constant 0 : index
    %c0_86 = arith.constant 0 : index
    %186 = vector.load %arg16[%c0_84, %c7, %c0_85, %c0_86] : memref<2x9x8x1xf32, #tpu.memory_space<vmem>>, vector<1x1x8x1xf32>
    %187 = vector.shape_cast %186 : vector<1x1x8x1xf32> to vector<8x1xf32>
    %188 = vector.broadcast %187 : vector<8x1xf32> to vector<8x512xf32>
    %189 = arith.mulf %188, %185 : vector<8x512xf32>
    %190 = arith.addf %182, %189 : vector<8x512xf32>
    %c495_i32 = arith.constant 495 : i32
    %191 = tpu.dynamic_rotate %128 by %c495_i32 dim 1 : vector<8x512xf32>, i32 -> vector<8x512xf32>
    %192 = vector.broadcast %14 : vector<1x512xf32> to vector<8x512xf32>
    %193 = arith.mulf %191, %192 : vector<8x512xf32>
    %c0_87 = arith.constant 0 : index
    %c8 = arith.constant 8 : index
    %c0_88 = arith.constant 0 : index
    %c0_89 = arith.constant 0 : index
    %194 = vector.load %arg16[%c0_87, %c8, %c0_88, %c0_89] : memref<2x9x8x1xf32, #tpu.memory_space<vmem>>, vector<1x1x8x1xf32>
    %195 = vector.shape_cast %194 : vector<1x1x8x1xf32> to vector<8x1xf32>
    %196 = vector.broadcast %195 : vector<8x1xf32> to vector<8x512xf32>
    %197 = arith.mulf %196, %193 : vector<8x512xf32>
    %198 = arith.addf %190, %197 : vector<8x512xf32>
    %c0_90 = arith.constant 0 : index
    %c0_91 = arith.constant 0 : index
    %c0_92 = arith.constant 0 : index
    %199 = vector.load %arg17[%c0_90, %c0_91, %c0_92] : memref<2x8x1xf32, #tpu.memory_space<vmem>>, vector<1x8x1xf32>
    %200 = vector.shape_cast %199 : vector<1x8x1xf32> to vector<8x1xf32>
    %201 = vector.broadcast %200 : vector<8x1xf32> to vector<8x512xf32>
    %202 = arith.addf %198, %201 : vector<8x512xf32>
    %203 = arith.negf %202 : vector<8x512xf32>
    %204 = math.exp %203 : vector<8x512xf32>
    %cst_93 = arith.constant 1.000000e+00 : f32
    %205 = vector.broadcast %cst_93 : f32 to vector<8x512xf32>
    %206 = arith.addf %205, %204 : vector<8x512xf32>
    %207 = arith.divf %205, %206 : vector<8x512xf32>
    %208 = arith.mulf %202, %207 : vector<8x512xf32>
    %c0_94 = arith.constant 0 : index
    %c0_95 = arith.constant 0 : index
    %c0_96 = arith.constant 0 : index
    %209 = vector.load %arg18[%c0_94, %c0_95, %c0_96] : memref<2x8x8xf32, #tpu.memory_space<vmem>>, vector<1x8x8xf32>
    %210 = vector.shape_cast %209 : vector<1x8x8xf32> to vector<8x8xf32>
    %c0_97 = arith.constant 0 : index
    %c0_98 = arith.constant 0 : index
    %c0_99 = arith.constant 0 : index
    %211 = vector.load %arg19[%c0_97, %c0_98, %c0_99] : memref<2x8x1xf32, #tpu.memory_space<vmem>>, vector<1x8x1xf32>
    %212 = vector.shape_cast %211 : vector<1x8x1xf32> to vector<8x1xf32>
    %cst_100 = arith.constant dense<0.000000e+00> : vector<8x512xf32>
    %213 = tpu.matmul %210, %208, %cst_100 {dimension_numbers = #tpu.dot_dimension_numbers<[1], [0], [0], [1], [0, 0, 1, 1], [], []>} : vector<8x8xf32>, vector<8x512xf32>, vector<8x512xf32> -> vector<8x512xf32>
    %214 = vector.broadcast %212 : vector<8x1xf32> to vector<8x512xf32>
    %215 = arith.addf %213, %214 : vector<8x512xf32>
    %216 = arith.negf %215 : vector<8x512xf32>
    %217 = math.exp %216 : vector<8x512xf32>
    %cst_101 = arith.constant 1.000000e+00 : f32
    %218 = vector.broadcast %cst_101 : f32 to vector<8x512xf32>
    %219 = arith.addf %218, %217 : vector<8x512xf32>
    %220 = arith.divf %218, %219 : vector<8x512xf32>
    %221 = arith.mulf %215, %220 : vector<8x512xf32>
    %c2_102 = arith.constant 2 : index
    %c0_103 = arith.constant 0 : index
    %c0_104 = arith.constant 0 : index
    %222 = vector.load %arg20[%c2_102, %c0_103, %c0_104] : memref<4x8x8xf32, #tpu.memory_space<vmem>>, vector<1x8x8xf32>
    %223 = vector.shape_cast %222 : vector<1x8x8xf32> to vector<8x8xf32>
    %cst_105 = arith.constant dense<0.000000e+00> : vector<8x512xf32>
    %224 = tpu.matmul %223, %221, %cst_105 {dimension_numbers = #tpu.dot_dimension_numbers<[1], [0], [0], [1], [0, 0, 1, 1], [], []>} : vector<8x8xf32>, vector<8x512xf32>, vector<8x512xf32> -> vector<8x512xf32>
    %225 = arith.addf %48, %224 : vector<8x512xf32>
    %c1_106 = arith.constant 1 : index
    %c0_107 = arith.constant 0 : index
    %c0_108 = arith.constant 0 : index
    %226 = vector.load %arg12[%c1_106, %c0_107, %c0_108] : memref<2x40x8xf32, #tpu.memory_space<vmem>>, vector<1x40x8xf32>
    %227 = vector.shape_cast %226 : vector<1x40x8xf32> to vector<40x8xf32>
    %c1_109 = arith.constant 1 : index
    %c0_110 = arith.constant 0 : index
    %c0_111 = arith.constant 0 : index
    %228 = vector.load %arg13[%c1_109, %c0_110, %c0_111] : memref<2x40x1xf32, #tpu.memory_space<vmem>>, vector<1x40x1xf32>
    %229 = vector.shape_cast %228 : vector<1x40x1xf32> to vector<40x1xf32>
    %cst_112 = arith.constant dense<0.000000e+00> : vector<40x512xf32>
    %230 = tpu.matmul %227, %221, %cst_112 {dimension_numbers = #tpu.dot_dimension_numbers<[1], [0], [0], [1], [0, 0, 1, 1], [], []>} : vector<40x8xf32>, vector<8x512xf32>, vector<40x512xf32> -> vector<40x512xf32>
    %231 = vector.broadcast %229 : vector<40x1xf32> to vector<40x512xf32>
    %232 = arith.addf %230, %231 : vector<40x512xf32>
    %233 = arith.negf %232 : vector<40x512xf32>
    %234 = math.exp %233 : vector<40x512xf32>
    %cst_113 = arith.constant 1.000000e+00 : f32
    %235 = vector.broadcast %cst_113 : f32 to vector<40x512xf32>
    %236 = arith.addf %235, %234 : vector<40x512xf32>
    %237 = arith.divf %235, %236 : vector<40x512xf32>
    %238 = arith.mulf %232, %237 : vector<40x512xf32>
    %239 = vector.extract_strided_slice %238 {offsets = [0, 0], sizes = [1, 512], strides = [1, 1]} : vector<40x512xf32> to vector<1x512xf32>
    %240 = vector.extract_strided_slice %238 {offsets = [8, 0], sizes = [8, 512], strides = [1, 1]} : vector<40x512xf32> to vector<8x512xf32>
    %241 = vector.extract_strided_slice %238 {offsets = [16, 0], sizes = [1, 512], strides = [1, 1]} : vector<40x512xf32> to vector<1x512xf32>
    %242 = vector.extract_strided_slice %238 {offsets = [24, 0], sizes = [8, 512], strides = [1, 1]} : vector<40x512xf32> to vector<8x512xf32>
    %243 = vector.extract_strided_slice %238 {offsets = [32, 0], sizes = [8, 512], strides = [1, 1]} : vector<40x512xf32> to vector<8x512xf32>
    %cst_114 = arith.constant dense<0xFF800000> : vector<1xf32>
    %244 = vector.multi_reduction <maximumf>, %239, %cst_114 [1] : vector<1x512xf32> to vector<1xf32>
    %245 = vector.shape_cast %244 : vector<1xf32> to vector<1x1xf32>
    %246 = vector.broadcast %245 : vector<1x1xf32> to vector<1x512xf32>
    %247 = arith.subf %239, %246 : vector<1x512xf32>
    %248 = math.exp %247 : vector<1x512xf32>
    %249 = vector.broadcast %248 : vector<1x512xf32> to vector<8x512xf32>
    %250 = arith.mulf %240, %249 : vector<8x512xf32>
    %251 = vector.broadcast %19 : vector<8x1xf32> to vector<8x512xf32>
    %252 = vector.broadcast %248 : vector<1x512xf32> to vector<8x512xf32>
    %253 = arith.mulf %251, %252 : vector<8x512xf32>
    %254 = arith.addf %250, %253 : vector<8x512xf32>
    %cst_115 = arith.constant dense<0.000000e+00> : vector<8x512xf32>
    %255 = tpu.matmul %254, %5, %cst_115 {dimension_numbers = #tpu.dot_dimension_numbers<[1], [0], [0], [1], [0, 0, 1, 1], [], []>} : vector<8x512xf32>, vector<512x512xf32>, vector<8x512xf32> -> vector<8x512xf32>
    %256 = vector.extract_strided_slice %255 {offsets = [4, 0], sizes = [1, 512], strides = [1, 1]} : vector<8x512xf32> to vector<1x512xf32>
    %cst_116 = arith.constant 1.000000e-30 : f32
    %257 = vector.broadcast %cst_116 : f32 to vector<1x512xf32>
    %258 = arith.addf %256, %257 : vector<1x512xf32>
    %259 = tpu.reciprocal %258 {approx = true} : vector<1x512xf32> -> vector<1x512xf32>
    %260 = arith.mulf %258, %259 : vector<1x512xf32>
    %cst_117 = arith.constant 2.000000e+00 : f32
    %261 = vector.broadcast %cst_117 : f32 to vector<1x512xf32>
    %262 = arith.subf %261, %260 : vector<1x512xf32>
    %263 = arith.mulf %259, %262 : vector<1x512xf32>
    %264 = vector.broadcast %263 : vector<1x512xf32> to vector<8x512xf32>
    %265 = arith.mulf %255, %264 : vector<8x512xf32>
    %cst_118 = arith.constant dense<0xFF800000> : vector<1xf32>
    %266 = vector.multi_reduction <maximumf>, %241, %cst_118 [1] : vector<1x512xf32> to vector<1xf32>
    %267 = vector.shape_cast %266 : vector<1xf32> to vector<1x1xf32>
    %268 = vector.broadcast %267 : vector<1x1xf32> to vector<1x512xf32>
    %269 = arith.subf %241, %268 : vector<1x512xf32>
    %270 = math.exp %269 : vector<1x512xf32>
    %271 = vector.broadcast %270 : vector<1x512xf32> to vector<8x512xf32>
    %272 = arith.mulf %242, %271 : vector<8x512xf32>
    %273 = vector.broadcast %19 : vector<8x1xf32> to vector<8x512xf32>
    %274 = vector.broadcast %270 : vector<1x512xf32> to vector<8x512xf32>
    %275 = arith.mulf %273, %274 : vector<8x512xf32>
    %276 = arith.addf %272, %275 : vector<8x512xf32>
    %cst_119 = arith.constant dense<0.000000e+00> : vector<8x512xf32>
    %277 = tpu.matmul %276, %6, %cst_119 {dimension_numbers = #tpu.dot_dimension_numbers<[1], [0], [0], [1], [0, 0, 1, 1], [], []>} : vector<8x512xf32>, vector<512x512xf32>, vector<8x512xf32> -> vector<8x512xf32>
    %278 = vector.extract_strided_slice %277 {offsets = [4, 0], sizes = [1, 512], strides = [1, 1]} : vector<8x512xf32> to vector<1x512xf32>
    %cst_120 = arith.constant 1.000000e-30 : f32
    %279 = vector.broadcast %cst_120 : f32 to vector<1x512xf32>
    %280 = arith.addf %278, %279 : vector<1x512xf32>
    %281 = tpu.reciprocal %280 {approx = true} : vector<1x512xf32> -> vector<1x512xf32>
    %282 = arith.mulf %280, %281 : vector<1x512xf32>
    %cst_121 = arith.constant 2.000000e+00 : f32
    %283 = vector.broadcast %cst_121 : f32 to vector<1x512xf32>
    %284 = arith.subf %283, %282 : vector<1x512xf32>
    %285 = arith.mulf %281, %284 : vector<1x512xf32>
    %286 = vector.broadcast %285 : vector<1x512xf32> to vector<8x512xf32>
    %287 = arith.mulf %277, %286 : vector<8x512xf32>
    %288 = arith.mulf %265, %287 : vector<8x512xf32>
    %cst_122 = arith.constant 5.000000e-01 : f32
    %289 = vector.broadcast %cst_122 : f32 to vector<8x512xf32>
    %290 = arith.mulf %288, %289 : vector<8x512xf32>
    %291 = arith.mulf %243, %290 : vector<8x512xf32>
    %292 = arith.addf %291, %221 : vector<8x512xf32>
    %c1_123 = arith.constant 1 : index
    %c0_124 = arith.constant 0 : index
    %c0_125 = arith.constant 0 : index
    %293 = vector.load %arg14[%c1_123, %c0_124, %c0_125] : memref<2x8x8xf32, #tpu.memory_space<vmem>>, vector<1x8x8xf32>
    %294 = vector.shape_cast %293 : vector<1x8x8xf32> to vector<8x8xf32>
    %c1_126 = arith.constant 1 : index
    %c0_127 = arith.constant 0 : index
    %c0_128 = arith.constant 0 : index
    %295 = vector.load %arg15[%c1_126, %c0_127, %c0_128] : memref<2x8x1xf32, #tpu.memory_space<vmem>>, vector<1x8x1xf32>
    %296 = vector.shape_cast %295 : vector<1x8x1xf32> to vector<8x1xf32>
    %cst_129 = arith.constant dense<0.000000e+00> : vector<8x512xf32>
    %297 = tpu.matmul %294, %292, %cst_129 {dimension_numbers = #tpu.dot_dimension_numbers<[1], [0], [0], [1], [0, 0, 1, 1], [], []>} : vector<8x8xf32>, vector<8x512xf32>, vector<8x512xf32> -> vector<8x512xf32>
    %298 = vector.broadcast %296 : vector<8x1xf32> to vector<8x512xf32>
    %299 = arith.addf %297, %298 : vector<8x512xf32>
    %300 = arith.negf %299 : vector<8x512xf32>
    %301 = math.exp %300 : vector<8x512xf32>
    %cst_130 = arith.constant 1.000000e+00 : f32
    %302 = vector.broadcast %cst_130 : f32 to vector<8x512xf32>
    %303 = arith.addf %302, %301 : vector<8x512xf32>
    %304 = arith.divf %302, %303 : vector<8x512xf32>
    %305 = arith.mulf %299, %304 : vector<8x512xf32>
    %cst_131 = arith.constant 0.000000e+00 : f32
    %306 = vector.broadcast %cst_131 : f32 to vector<8x512xf32>
    %c17_i32_132 = arith.constant 17 : i32
    %307 = tpu.dynamic_rotate %305 by %c17_i32_132 dim 1 : vector<8x512xf32>, i32 -> vector<8x512xf32>
    %308 = vector.broadcast %11 : vector<1x512xf32> to vector<8x512xf32>
    %309 = arith.mulf %307, %308 : vector<8x512xf32>
    %c1_133 = arith.constant 1 : index
    %c0_134 = arith.constant 0 : index
    %c0_135 = arith.constant 0 : index
    %c0_136 = arith.constant 0 : index
    %310 = vector.load %arg16[%c1_133, %c0_134, %c0_135, %c0_136] : memref<2x9x8x1xf32, #tpu.memory_space<vmem>>, vector<1x1x8x1xf32>
    %311 = vector.shape_cast %310 : vector<1x1x8x1xf32> to vector<8x1xf32>
    %312 = vector.broadcast %311 : vector<8x1xf32> to vector<8x512xf32>
    %313 = arith.mulf %312, %309 : vector<8x512xf32>
    %314 = arith.addf %306, %313 : vector<8x512xf32>
    %c16_i32_137 = arith.constant 16 : i32
    %315 = tpu.dynamic_rotate %305 by %c16_i32_137 dim 1 : vector<8x512xf32>, i32 -> vector<8x512xf32>
    %316 = vector.broadcast %9 : vector<1x512xf32> to vector<8x512xf32>
    %317 = arith.mulf %315, %316 : vector<8x512xf32>
    %c1_138 = arith.constant 1 : index
    %c1_139 = arith.constant 1 : index
    %c0_140 = arith.constant 0 : index
    %c0_141 = arith.constant 0 : index
    %318 = vector.load %arg16[%c1_138, %c1_139, %c0_140, %c0_141] : memref<2x9x8x1xf32, #tpu.memory_space<vmem>>, vector<1x1x8x1xf32>
    %319 = vector.shape_cast %318 : vector<1x1x8x1xf32> to vector<8x1xf32>
    %320 = vector.broadcast %319 : vector<8x1xf32> to vector<8x512xf32>
    %321 = arith.mulf %320, %317 : vector<8x512xf32>
    %322 = arith.addf %314, %321 : vector<8x512xf32>
    %c15_i32_142 = arith.constant 15 : i32
    %323 = tpu.dynamic_rotate %305 by %c15_i32_142 dim 1 : vector<8x512xf32>, i32 -> vector<8x512xf32>
    %324 = vector.broadcast %12 : vector<1x512xf32> to vector<8x512xf32>
    %325 = arith.mulf %323, %324 : vector<8x512xf32>
    %c1_143 = arith.constant 1 : index
    %c2_144 = arith.constant 2 : index
    %c0_145 = arith.constant 0 : index
    %c0_146 = arith.constant 0 : index
    %326 = vector.load %arg16[%c1_143, %c2_144, %c0_145, %c0_146] : memref<2x9x8x1xf32, #tpu.memory_space<vmem>>, vector<1x1x8x1xf32>
    %327 = vector.shape_cast %326 : vector<1x1x8x1xf32> to vector<8x1xf32>
    %328 = vector.broadcast %327 : vector<8x1xf32> to vector<8x512xf32>
    %329 = arith.mulf %328, %325 : vector<8x512xf32>
    %330 = arith.addf %322, %329 : vector<8x512xf32>
    %c1_i32_147 = arith.constant 1 : i32
    %331 = tpu.dynamic_rotate %305 by %c1_i32_147 dim 1 : vector<8x512xf32>, i32 -> vector<8x512xf32>
    %332 = vector.broadcast %7 : vector<1x512xf32> to vector<8x512xf32>
    %333 = arith.mulf %331, %332 : vector<8x512xf32>
    %c1_148 = arith.constant 1 : index
    %c3_149 = arith.constant 3 : index
    %c0_150 = arith.constant 0 : index
    %c0_151 = arith.constant 0 : index
    %334 = vector.load %arg16[%c1_148, %c3_149, %c0_150, %c0_151] : memref<2x9x8x1xf32, #tpu.memory_space<vmem>>, vector<1x1x8x1xf32>
    %335 = vector.shape_cast %334 : vector<1x1x8x1xf32> to vector<8x1xf32>
    %336 = vector.broadcast %335 : vector<8x1xf32> to vector<8x512xf32>
    %337 = arith.mulf %336, %333 : vector<8x512xf32>
    %338 = arith.addf %330, %337 : vector<8x512xf32>
    %c1_152 = arith.constant 1 : index
    %c4_153 = arith.constant 4 : index
    %c0_154 = arith.constant 0 : index
    %c0_155 = arith.constant 0 : index
    %339 = vector.load %arg16[%c1_152, %c4_153, %c0_154, %c0_155] : memref<2x9x8x1xf32, #tpu.memory_space<vmem>>, vector<1x1x8x1xf32>
    %340 = vector.shape_cast %339 : vector<1x1x8x1xf32> to vector<8x1xf32>
    %341 = vector.broadcast %340 : vector<8x1xf32> to vector<8x512xf32>
    %342 = arith.mulf %341, %305 : vector<8x512xf32>
    %343 = arith.addf %338, %342 : vector<8x512xf32>
    %c511_i32_156 = arith.constant 511 : i32
    %344 = tpu.dynamic_rotate %305 by %c511_i32_156 dim 1 : vector<8x512xf32>, i32 -> vector<8x512xf32>
    %345 = vector.broadcast %8 : vector<1x512xf32> to vector<8x512xf32>
    %346 = arith.mulf %344, %345 : vector<8x512xf32>
    %c1_157 = arith.constant 1 : index
    %c5_158 = arith.constant 5 : index
    %c0_159 = arith.constant 0 : index
    %c0_160 = arith.constant 0 : index
    %347 = vector.load %arg16[%c1_157, %c5_158, %c0_159, %c0_160] : memref<2x9x8x1xf32, #tpu.memory_space<vmem>>, vector<1x1x8x1xf32>
    %348 = vector.shape_cast %347 : vector<1x1x8x1xf32> to vector<8x1xf32>
    %349 = vector.broadcast %348 : vector<8x1xf32> to vector<8x512xf32>
    %350 = arith.mulf %349, %346 : vector<8x512xf32>
    %351 = arith.addf %343, %350 : vector<8x512xf32>
    %c497_i32_161 = arith.constant 497 : i32
    %352 = tpu.dynamic_rotate %305 by %c497_i32_161 dim 1 : vector<8x512xf32>, i32 -> vector<8x512xf32>
    %353 = vector.broadcast %13 : vector<1x512xf32> to vector<8x512xf32>
    %354 = arith.mulf %352, %353 : vector<8x512xf32>
    %c1_162 = arith.constant 1 : index
    %c6_163 = arith.constant 6 : index
    %c0_164 = arith.constant 0 : index
    %c0_165 = arith.constant 0 : index
    %355 = vector.load %arg16[%c1_162, %c6_163, %c0_164, %c0_165] : memref<2x9x8x1xf32, #tpu.memory_space<vmem>>, vector<1x1x8x1xf32>
    %356 = vector.shape_cast %355 : vector<1x1x8x1xf32> to vector<8x1xf32>
    %357 = vector.broadcast %356 : vector<8x1xf32> to vector<8x512xf32>
    %358 = arith.mulf %357, %354 : vector<8x512xf32>
    %359 = arith.addf %351, %358 : vector<8x512xf32>
    %c496_i32_166 = arith.constant 496 : i32
    %360 = tpu.dynamic_rotate %305 by %c496_i32_166 dim 1 : vector<8x512xf32>, i32 -> vector<8x512xf32>
    %361 = vector.broadcast %10 : vector<1x512xf32> to vector<8x512xf32>
    %362 = arith.mulf %360, %361 : vector<8x512xf32>
    %c1_167 = arith.constant 1 : index
    %c7_168 = arith.constant 7 : index
    %c0_169 = arith.constant 0 : index
    %c0_170 = arith.constant 0 : index
    %363 = vector.load %arg16[%c1_167, %c7_168, %c0_169, %c0_170] : memref<2x9x8x1xf32, #tpu.memory_space<vmem>>, vector<1x1x8x1xf32>
    %364 = vector.shape_cast %363 : vector<1x1x8x1xf32> to vector<8x1xf32>
    %365 = vector.broadcast %364 : vector<8x1xf32> to vector<8x512xf32>
    %366 = arith.mulf %365, %362 : vector<8x512xf32>
    %367 = arith.addf %359, %366 : vector<8x512xf32>
    %c495_i32_171 = arith.constant 495 : i32
    %368 = tpu.dynamic_rotate %305 by %c495_i32_171 dim 1 : vector<8x512xf32>, i32 -> vector<8x512xf32>
    %369 = vector.broadcast %14 : vector<1x512xf32> to vector<8x512xf32>
    %370 = arith.mulf %368, %369 : vector<8x512xf32>
    %c1_172 = arith.constant 1 : index
    %c8_173 = arith.constant 8 : index
    %c0_174 = arith.constant 0 : index
    %c0_175 = arith.constant 0 : index
    %371 = vector.load %arg16[%c1_172, %c8_173, %c0_174, %c0_175] : memref<2x9x8x1xf32, #tpu.memory_space<vmem>>, vector<1x1x8x1xf32>
    %372 = vector.shape_cast %371 : vector<1x1x8x1xf32> to vector<8x1xf32>
    %373 = vector.broadcast %372 : vector<8x1xf32> to vector<8x512xf32>
    %374 = arith.mulf %373, %370 : vector<8x512xf32>
    %375 = arith.addf %367, %374 : vector<8x512xf32>
    %c1_176 = arith.constant 1 : index
    %c0_177 = arith.constant 0 : index
    %c0_178 = arith.constant 0 : index
    %376 = vector.load %arg17[%c1_176, %c0_177, %c0_178] : memref<2x8x1xf32, #tpu.memory_space<vmem>>, vector<1x8x1xf32>
    %377 = vector.shape_cast %376 : vector<1x8x1xf32> to vector<8x1xf32>
    %378 = vector.broadcast %377 : vector<8x1xf32> to vector<8x512xf32>
    %379 = arith.addf %375, %378 : vector<8x512xf32>
    %380 = arith.negf %379 : vector<8x512xf32>
    %381 = math.exp %380 : vector<8x512xf32>
    %cst_179 = arith.constant 1.000000e+00 : f32
    %382 = vector.broadcast %cst_179 : f32 to vector<8x512xf32>
    %383 = arith.addf %382, %381 : vector<8x512xf32>
    %384 = arith.divf %382, %383 : vector<8x512xf32>
    %385 = arith.mulf %379, %384 : vector<8x512xf32>
    %c1_180 = arith.constant 1 : index
    %c0_181 = arith.constant 0 : index
    %c0_182 = arith.constant 0 : index
    %386 = vector.load %arg18[%c1_180, %c0_181, %c0_182] : memref<2x8x8xf32, #tpu.memory_space<vmem>>, vector<1x8x8xf32>
    %387 = vector.shape_cast %386 : vector<1x8x8xf32> to vector<8x8xf32>
    %c1_183 = arith.constant 1 : index
    %c0_184 = arith.constant 0 : index
    %c0_185 = arith.constant 0 : index
    %388 = vector.load %arg19[%c1_183, %c0_184, %c0_185] : memref<2x8x1xf32, #tpu.memory_space<vmem>>, vector<1x8x1xf32>
    %389 = vector.shape_cast %388 : vector<1x8x1xf32> to vector<8x1xf32>
    %cst_186 = arith.constant dense<0.000000e+00> : vector<8x512xf32>
    %390 = tpu.matmul %387, %385, %cst_186 {dimension_numbers = #tpu.dot_dimension_numbers<[1], [0], [0], [1], [0, 0, 1, 1], [], []>} : vector<8x8xf32>, vector<8x512xf32>, vector<8x512xf32> -> vector<8x512xf32>
    %391 = vector.broadcast %389 : vector<8x1xf32> to vector<8x512xf32>
    %392 = arith.addf %390, %391 : vector<8x512xf32>
    %393 = arith.negf %392 : vector<8x512xf32>
    %394 = math.exp %393 : vector<8x512xf32>
    %cst_187 = arith.constant 1.000000e+00 : f32
    %395 = vector.broadcast %cst_187 : f32 to vector<8x512xf32>
    %396 = arith.addf %395, %394 : vector<8x512xf32>
    %397 = arith.divf %395, %396 : vector<8x512xf32>
    %398 = arith.mulf %392, %397 : vector<8x512xf32>
    %c3_188 = arith.constant 3 : index
    %c0_189 = arith.constant 0 : index
    %c0_190 = arith.constant 0 : index
    %399 = vector.load %arg20[%c3_188, %c0_189, %c0_190] : memref<4x8x8xf32, #tpu.memory_space<vmem>>, vector<1x8x8xf32>
    %400 = vector.shape_cast %399 : vector<1x8x8xf32> to vector<8x8xf32>
    %cst_191 = arith.constant dense<0.000000e+00> : vector<8x512xf32>
    %401 = tpu.matmul %400, %398, %cst_191 {dimension_numbers = #tpu.dot_dimension_numbers<[1], [0], [0], [1], [0, 0, 1, 1], [], []>} : vector<8x8xf32>, vector<8x512xf32>, vector<8x512xf32> -> vector<8x512xf32>
    %402 = arith.addf %225, %401 : vector<8x512xf32>
    %c0_192 = arith.constant 0 : index
    %c0_193 = arith.constant 0 : index
    %403 = vector.load %arg21[%c0_192, %c0_193] : memref<8x1xf32, #tpu.memory_space<vmem>>, vector<8x1xf32>
    %404 = vector.broadcast %403 : vector<8x1xf32> to vector<8x512xf32>
    %405 = arith.addf %402, %404 : vector<8x512xf32>
    %406 = arith.negf %405 : vector<8x512xf32>
    %407 = math.exp %406 : vector<8x512xf32>
    %cst_194 = arith.constant 1.000000e+00 : f32
    %408 = vector.broadcast %cst_194 : f32 to vector<8x512xf32>
    %409 = arith.addf %408, %407 : vector<8x512xf32>
    %410 = arith.divf %408, %409 : vector<8x512xf32>
    %411 = arith.mulf %405, %410 : vector<8x512xf32>
    %412 = arith.addf %411, %4 : vector<8x512xf32>
    %413 = vector.extract_strided_slice %412 {offsets = [0, 0], sizes = [8, 256], strides = [1, 1]} : vector<8x512xf32> to vector<8x256xf32>
    %c0_195 = arith.constant 0 : index
    %c0_196 = arith.constant 0 : index
    %c0_197 = arith.constant 0 : index
    %414 = vector.load %arg22[%c0_195, %c0_196, %c0_197] : memref<2x8x256xf32, #tpu.memory_space<vmem>>, vector<1x8x256xf32>
    %415 = vector.shape_cast %414 : vector<1x8x256xf32> to vector<8x256xf32>
    %416 = vector.shape_cast %413 : vector<8x256xf32> to vector<1x8x256xf32>
    tpu.vector_store %arg22[%c0_195, %c0_196, %c0_197], %416 {strides = array<i32>} : memref<2x8x256xf32, #tpu.memory_space<vmem>>, vector<1x8x256xf32>,
    %417 = vector.extract_strided_slice %412 {offsets = [0, 256], sizes = [8, 256], strides = [1, 1]} : vector<8x512xf32> to vector<8x256xf32>
    %c1_198 = arith.constant 1 : index
    %c0_199 = arith.constant 0 : index
    %c0_200 = arith.constant 0 : index
    %418 = vector.load %arg22[%c1_198, %c0_199, %c0_200] : memref<2x8x256xf32, #tpu.memory_space<vmem>>, vector<1x8x256xf32>
    %419 = vector.shape_cast %418 : vector<1x8x256xf32> to vector<8x256xf32>
    %420 = vector.shape_cast %417 : vector<8x256xf32> to vector<1x8x256xf32>
    tpu.vector_store %arg22[%c1_198, %c0_199, %c0_200], %420 {strides = array<i32>} : memref<2x8x256xf32, #tpu.memory_space<vmem>>, vector<1x8x256xf32>,
    return
  }
  func.func @transform_0(%arg0: i32) -> (i32, i32, i32) {
    %c0_i32 = arith.constant 0 : i32
    %c0_i32_0 = arith.constant 0 : i32
    %c0_i32_1 = arith.constant 0 : i32
    return %arg0, %c0_i32, %c0_i32_0 : i32, i32, i32
  }
  func.func @transform_1(%arg0: i32) -> (i32, i32) {
    %c0_i32 = arith.constant 0 : i32
    %c0_i32_0 = arith.constant 0 : i32
    %c0_i32_1 = arith.constant 0 : i32
    return %c0_i32, %c0_i32_0 : i32, i32
  }
  func.func @transform_2(%arg0: i32) -> (i32, i32) {
    %c0_i32 = arith.constant 0 : i32
    %c0_i32_0 = arith.constant 0 : i32
    %c0_i32_1 = arith.constant 0 : i32
    return %c0_i32, %c0_i32_0 : i32, i32
  }
  func.func @transform_3(%arg0: i32) -> (i32, i32) {
    %c0_i32 = arith.constant 0 : i32
    %c0_i32_0 = arith.constant 0 : i32
    %c0_i32_1 = arith.constant 0 : i32
    return %c0_i32, %c0_i32_0 : i32, i32
  }
  func.func @transform_4(%arg0: i32) -> (i32, i32) {
    %c0_i32 = arith.constant 0 : i32
    %c0_i32_0 = arith.constant 0 : i32
    %c0_i32_1 = arith.constant 0 : i32
    return %c0_i32, %c0_i32_0 : i32, i32
  }
  func.func @transform_5(%arg0: i32) -> (i32, i32) {
    %c0_i32 = arith.constant 0 : i32
    %c0_i32_0 = arith.constant 0 : i32
    %c0_i32_1 = arith.constant 0 : i32
    return %c0_i32, %c0_i32_0 : i32, i32
  }
  func.func @transform_6(%arg0: i32) -> (i32, i32) {
    %c0_i32 = arith.constant 0 : i32
    %c0_i32_0 = arith.constant 0 : i32
    %c0_i32_1 = arith.constant 0 : i32
    return %c0_i32, %c0_i32_0 : i32, i32
  }
  func.func @transform_7(%arg0: i32) -> (i32, i32) {
    %c0_i32 = arith.constant 0 : i32
    %c0_i32_0 = arith.constant 0 : i32
    %c0_i32_1 = arith.constant 0 : i32
    return %c0_i32, %c0_i32_0 : i32, i32
  }
  func.func @transform_8(%arg0: i32) -> (i32, i32) {
    %c0_i32 = arith.constant 0 : i32
    %c0_i32_0 = arith.constant 0 : i32
    %c0_i32_1 = arith.constant 0 : i32
    return %c0_i32, %c0_i32_0 : i32, i32
  }
  func.func @transform_9(%arg0: i32) -> (i32, i32) {
    %c0_i32 = arith.constant 0 : i32
    %c0_i32_0 = arith.constant 0 : i32
    %c0_i32_1 = arith.constant 0 : i32
    return %c0_i32, %c0_i32_0 : i32, i32
  }
  func.func @transform_10(%arg0: i32) -> (i32, i32) {
    %c0_i32 = arith.constant 0 : i32
    %c0_i32_0 = arith.constant 0 : i32
    %c0_i32_1 = arith.constant 0 : i32
    return %c0_i32, %c0_i32_0 : i32, i32
  }
  func.func @transform_11(%arg0: i32) -> (i32, i32, i32) {
    %c0_i32 = arith.constant 0 : i32
    %c0_i32_0 = arith.constant 0 : i32
    %c0_i32_1 = arith.constant 0 : i32
    %c0_i32_2 = arith.constant 0 : i32
    return %c0_i32, %c0_i32_0, %c0_i32_1 : i32, i32, i32
  }
  func.func @transform_12(%arg0: i32) -> (i32, i32, i32) {
    %c0_i32 = arith.constant 0 : i32
    %c0_i32_0 = arith.constant 0 : i32
    %c0_i32_1 = arith.constant 0 : i32
    %c0_i32_2 = arith.constant 0 : i32
    return %c0_i32, %c0_i32_0, %c0_i32_1 : i32, i32, i32
  }
  func.func @transform_13(%arg0: i32) -> (i32, i32, i32) {
    %c0_i32 = arith.constant 0 : i32
    %c0_i32_0 = arith.constant 0 : i32
    %c0_i32_1 = arith.constant 0 : i32
    %c0_i32_2 = arith.constant 0 : i32
    return %c0_i32, %c0_i32_0, %c0_i32_1 : i32, i32, i32
  }
  func.func @transform_14(%arg0: i32) -> (i32, i32, i32) {
    %c0_i32 = arith.constant 0 : i32
    %c0_i32_0 = arith.constant 0 : i32
    %c0_i32_1 = arith.constant 0 : i32
    %c0_i32_2 = arith.constant 0 : i32
    return %c0_i32, %c0_i32_0, %c0_i32_1 : i32, i32, i32
  }
  func.func @transform_15(%arg0: i32) -> (i32, i32, i32, i32) {
    %c0_i32 = arith.constant 0 : i32
    %c0_i32_0 = arith.constant 0 : i32
    %c0_i32_1 = arith.constant 0 : i32
    %c0_i32_2 = arith.constant 0 : i32
    %c0_i32_3 = arith.constant 0 : i32
    return %c0_i32, %c0_i32_0, %c0_i32_1, %c0_i32_2 : i32, i32, i32, i32
  }
  func.func @transform_16(%arg0: i32) -> (i32, i32, i32) {
    %c0_i32 = arith.constant 0 : i32
    %c0_i32_0 = arith.constant 0 : i32
    %c0_i32_1 = arith.constant 0 : i32
    %c0_i32_2 = arith.constant 0 : i32
    return %c0_i32, %c0_i32_0, %c0_i32_1 : i32, i32, i32
  }
  func.func @transform_17(%arg0: i32) -> (i32, i32, i32) {
    %c0_i32 = arith.constant 0 : i32
    %c0_i32_0 = arith.constant 0 : i32
    %c0_i32_1 = arith.constant 0 : i32
    %c0_i32_2 = arith.constant 0 : i32
    return %c0_i32, %c0_i32_0, %c0_i32_1 : i32, i32, i32
  }
  func.func @transform_18(%arg0: i32) -> (i32, i32, i32) {
    %c0_i32 = arith.constant 0 : i32
    %c0_i32_0 = arith.constant 0 : i32
    %c0_i32_1 = arith.constant 0 : i32
    %c0_i32_2 = arith.constant 0 : i32
    return %c0_i32, %c0_i32_0, %c0_i32_1 : i32, i32, i32
  }
  func.func @transform_19(%arg0: i32) -> (i32, i32, i32) {
    %c0_i32 = arith.constant 0 : i32
    %c0_i32_0 = arith.constant 0 : i32
    %c0_i32_1 = arith.constant 0 : i32
    %c0_i32_2 = arith.constant 0 : i32
    return %c0_i32, %c0_i32_0, %c0_i32_1 : i32, i32, i32
  }
  func.func @transform_20(%arg0: i32) -> (i32, i32) {
    %c0_i32 = arith.constant 0 : i32
    %c0_i32_0 = arith.constant 0 : i32
    %c0_i32_1 = arith.constant 0 : i32
    return %c0_i32, %c0_i32_0 : i32, i32
  }
  func.func @transform_21(%arg0: i32) -> (i32, i32, i32) {
    %c0_i32 = arith.constant 0 : i32
    %c0_i32_0 = arith.constant 0 : i32
    %c0_i32_1 = arith.constant 0 : i32
    return %arg0, %c0_i32, %c0_i32_0 : i32, i32, i32
  }
}

</mosaic_0001>

<llo_original>
// kernel: pinwheel_attn_forward.1
$region0: #{pinwheel_attn_forward.1}
  #allocation0 [shape = 'u32[]', space=smem, size = 0x4, offset = 0x4, fixed_abs, tag = 'smem constant byte address 0x4 - core index']
  #allocation1 [shape = 'u32[144,128]{1,0:T(1,128)}', space=vmem, size = 0x12000, scoped, tag = 'internal scratch']
  %s0 = inlined_call_operand.vmem [shape: f32[2,8,256], index: 0, kind: input, shape index: {}]
  %s1 = inlined_call_operand.hbm [shape: f32[512,512], index: 1, kind: input, shape index: {}]
  %s2 = inlined_call_operand.hbm [shape: f32[512,512], index: 2, kind: input, shape index: {}]
  %s3 = inlined_call_operand.vmem [shape: f32[1,512], index: 3, kind: input, shape index: {}]
  %s4 = inlined_call_operand.vmem [shape: f32[1,512], index: 4, kind: input, shape index: {}]
  %s5 = inlined_call_operand.vmem [shape: f32[1,512], index: 5, kind: input, shape index: {}]
  %s6 = inlined_call_operand.vmem [shape: f32[1,512], index: 6, kind: input, shape index: {}]
  %s7 = inlined_call_operand.vmem [shape: f32[8,8], index: 7, kind: input, shape index: {}]
  %s8 = inlined_call_operand.vmem [shape: f32[8,1], index: 8, kind: input, shape index: {}]
  %s9 = inlined_call_operand.vmem [shape: f32[8,8], index: 9, kind: input, shape index: {}]
  %s10 = inlined_call_operand.vmem [shape: f32[8,1], index: 10, kind: input, shape index: {}]
  %s11 = inlined_call_operand.vmem [shape: f32[2,40,8], index: 11, kind: input, shape index: {}]
  %s12 = inlined_call_operand.vmem [shape: f32[2,40,1], index: 12, kind: input, shape index: {}]
  %s13 = inlined_call_operand.vmem [shape: f32[2,8,8], index: 13, kind: input, shape index: {}]
  %s14 = inlined_call_operand.vmem [shape: f32[2,8,1], index: 14, kind: input, shape index: {}]
  %s15 = inlined_call_operand.vmem [shape: f32[2,9,8,1], index: 15, kind: input, shape index: {}]
  %s16 = inlined_call_operand.vmem [shape: f32[2,8,1], index: 16, kind: input, shape index: {}]
  %s17 = inlined_call_operand.vmem [shape: f32[2,8,8], index: 17, kind: input, shape index: {}]
  %s18 = inlined_call_operand.vmem [shape: f32[2,8,1], index: 18, kind: input, shape index: {}]
  %s19 = inlined_call_operand.vmem [shape: f32[4,8,8], index: 19, kind: input, shape index: {}]
  %s20 = inlined_call_operand.vmem [shape: f32[8,1], index: 20, kind: input, shape index: {}]
  %s21 = inlined_call_operand.vmem [shape: f32[2,8,256], index: 21, kind: output, shape index: {}]
  %s22 = sld [smem:[#allocation0]]
  $region102: #{pinwheel_attn_forward.1} parent=0
    _
  %s24 = ssub.s32 1, %s22
  %s25 = scalar_select 0, %s24, %s22
  $region1: #{pinwheel_attn_forward.1} parent=0
    #allocation2 [shape = 'u8[1048576]{0}', space=vmem, size = 0x100000, scoped, tag = 'input window, operand 1, single buffered']
    #allocation3 [shape = 's32[1]{0}', space=sflag, size = 0x4, scoped, tag = 'scoped memory for pinwheel_attn_forward.1']
    #allocation4 [shape = 'u8[1048576]{0}', space=vmem, size = 0x100000, scoped, tag = 'input window, operand 2, single buffered']
    #allocation5 [shape = 's32[1]{0}', space=sflag, size = 0x4, scoped, tag = 'scoped memory for pinwheel_attn_forward.1']
    %26 = vsyncpa [#allocation3], 0
    %27 = vsyncpa [#allocation5], 0
    // Predicated region
    $region2: #{pinwheel_attn_forward.1} parent=1 // pred_check
      _
    $region3: #{pinwheel_attn_forward.1} parent=1 // pred_check_branch
      %29 = sbr.rel (0) target = $region5
    $region4: #{pinwheel_attn_forward.1} parent=1 // pred_region
      _
    $region5: #{pinwheel_attn_forward.1} parent=1 // pred_fallthru
      _
    // Predicated region
    $region6: #{pinwheel_attn_forward.1} parent=1 // pred_check
      _
    $region7: #{pinwheel_attn_forward.1} parent=1 // pred_check_branch
      %31 = sbr.rel (0) target = $region9
    $region8: #{pinwheel_attn_forward.1} parent=1 // pred_region
      %s33 = ssub.s32 32768, 32768
      %34 = vsyncadd [#allocation3], %s33
      %s35 = sshll.u32 [#allocation2], 4
      %s36 = int_to_ptr.vmem [resolvable:$true] %s35
      %41 = dma.hbm_to_vmem [thread:$0]  %s1, 32768, %s36, [#allocation3], 512, 512, 32
    $region9: #{pinwheel_attn_forward.1} parent=1 // pred_fallthru
      _
    // Predicated region
    $region10: #{pinwheel_attn_forward.1} parent=1 // pred_check
      _
    $region11: #{pinwheel_attn_forward.1} parent=1 // pred_check_branch
      %43 = sbr.rel (0) target = $region13
    $region12: #{pinwheel_attn_forward.1} parent=1 // pred_region
      %s45 = ssub.s32 32768, 32768
      %46 = vsyncadd [#allocation5], %s45
      %s47 = sshll.u32 [#allocation4], 4
      %s48 = int_to_ptr.vmem [resolvable:$true] %s47
      %53 = dma.hbm_to_vmem [thread:$0]  %s2, 32768, %s48, [#allocation5], 512, 512, 32
    $region13: #{pinwheel_attn_forward.1} parent=1 // pred_fallthru
      _
    // Predicated region
    $region14: #{pinwheel_attn_forward.1} parent=1 // pred_check
      _
    $region15: #{pinwheel_attn_forward.1} parent=1 // pred_check_branch
      %55 = sbr.rel (0) target = $region17
    $region16: #{pinwheel_attn_forward.1} parent=1 // pred_region
      _
    $region17: #{pinwheel_attn_forward.1} parent=1 // pred_fallthru
      _
    // Predicated region
    $region18: #{pinwheel_attn_forward.1} parent=1 // pred_check
      _
    $region19: #{pinwheel_attn_forward.1} parent=1 // pred_check_branch
      %57 = sbr.rel (0) target = $region21
    $region20: #{pinwheel_attn_forward.1} parent=1 // pred_region
      _
    $region21: #{pinwheel_attn_forward.1} parent=1 // pred_fallthru
      _
    // Predicated region
    $region22: #{pinwheel_attn_forward.1} parent=1 // pred_check
      _
    $region23: #{pinwheel_attn_forward.1} parent=1 // pred_check_branch
      %59 = sbr.rel (0) target = $region25
    $region24: #{pinwheel_attn_forward.1} parent=1 // pred_region
      _
    $region25: #{pinwheel_attn_forward.1} parent=1 // pred_fallthru
      _
    // Predicated region
    $region26: #{pinwheel_attn_forward.1} parent=1 // pred_check
      _
    $region27: #{pinwheel_attn_forward.1} parent=1 // pred_check_branch
      %61 = sbr.rel (0) target = $region29
    $region28: #{pinwheel_attn_forward.1} parent=1 // pred_region
      _
    $region29: #{pinwheel_attn_forward.1} parent=1 // pred_fallthru
      _
    // Predicated region
    $region30: #{pinwheel_attn_forward.1} parent=1 // pred_check
      _
    $region31: #{pinwheel_attn_forward.1} parent=1 // pred_check_branch
      %63 = sbr.rel (0) target = $region33
    $region32: #{pinwheel_attn_forward.1} parent=1 // pred_region
      _
    $region33: #{pinwheel_attn_forward.1} parent=1 // pred_fallthru
      _
    // Predicated region
    $region34: #{pinwheel_attn_forward.1} parent=1 // pred_check
      _
    $region35: #{pinwheel_attn_forward.1} parent=1 // pred_check_branch
      %65 = sbr.rel (0) target = $region37
    $region36: #{pinwheel_attn_forward.1} parent=1 // pred_region
      _
    $region37: #{pinwheel_attn_forward.1} parent=1 // pred_fallthru
      _
    // Predicated region
    $region38: #{pinwheel_attn_forward.1} parent=1 // pred_check
      _
    $region39: #{pinwheel_attn_forward.1} parent=1 // pred_check_branch
      %67 = sbr.rel (0) target = $region41
    $region40: #{pinwheel_attn_forward.1} parent=1 // pred_region
      _
    $region41: #{pinwheel_attn_forward.1} parent=1 // pred_fallthru
      _
    // Predicated region
    $region42: #{pinwheel_attn_forward.1} parent=1 // pred_check
      _
    $region43: #{pinwheel_attn_forward.1} parent=1 // pred_check_branch
      %69 = sbr.rel (0) target = $region45
    $region44: #{pinwheel_attn_forward.1} parent=1 // pred_region
      _
    $region45: #{pinwheel_attn_forward.1} parent=1 // pred_fallthru
      _
    // Predicated region
    $region46: #{pinwheel_attn_forward.1} parent=1 // pred_check
      _
    $region47: #{pinwheel_attn_forward.1} parent=1 // pred_check_branch
      %71 = sbr.rel (0) target = $region49
    $region48: #{pinwheel_attn_forward.1} parent=1 // pred_region
      _
    $region49: #{pinwheel_attn_forward.1} parent=1 // pred_fallthru
      _
    // Predicated region
    $region50: #{pinwheel_attn_forward.1} parent=1 // pred_check
      _
    $region51: #{pinwheel_attn_forward.1} parent=1 // pred_check_branch
      %73 = sbr.rel (0) target = $region53
    $region52: #{pinwheel_attn_forward.1} parent=1 // pred_region
      _
    $region53: #{pinwheel_attn_forward.1} parent=1 // pred_fallthru
      _
    // Predicated region
    $region54: #{pinwheel_attn_forward.1} parent=1 // pred_check
      _
    $region55: #{pinwheel_attn_forward.1} parent=1 // pred_check_branch
      %75 = sbr.rel (0) target = $region57
    $region56: #{pinwheel_attn_forward.1} parent=1 // pred_region
      _
    $region57: #{pinwheel_attn_forward.1} parent=1 // pred_fallthru
      _
    // Predicated region
    $region58: #{pinwheel_attn_forward.1} parent=1 // pred_check
      _
    $region59: #{pinwheel_attn_forward.1} parent=1 // pred_check_branch
      %77 = sbr.rel (0) target = $region61
    $region60: #{pinwheel_attn_forward.1} parent=1 // pred_region
      _
    $region61: #{pinwheel_attn_forward.1} parent=1 // pred_fallthru
      _
    // Predicated region
    $region62: #{pinwheel_attn_forward.1} parent=1 // pred_check
      _
    $region63: #{pinwheel_attn_forward.1} parent=1 // pred_check_branch
      %79 = sbr.rel (0) target = $region65
    $region64: #{pinwheel_attn_forward.1} parent=1 // pred_region
      _
    $region65: #{pinwheel_attn_forward.1} parent=1 // pred_fallthru
      _
    // Predicated region
    $region66: #{pinwheel_attn_forward.1} parent=1 // pred_check
      _
    $region67: #{pinwheel_attn_forward.1} parent=1 // pred_check_branch
      %81 = sbr.rel (0) target = $region69
    $region68: #{pinwheel_attn_forward.1} parent=1 // pred_region
      _
    $region69: #{pinwheel_attn_forward.1} parent=1 // pred_fallthru
      _
    // Predicated region
    $region70: #{pinwheel_attn_forward.1} parent=1 // pred_check
      _
    $region71: #{pinwheel_attn_forward.1} parent=1 // pred_check_branch
      %83 = sbr.rel (0) target = $region73
    $region72: #{pinwheel_attn_forward.1} parent=1 // pred_region
      _
    $region73: #{pinwheel_attn_forward.1} parent=1 // pred_fallthru
      _
    // Predicated region
    $region74: #{pinwheel_attn_forward.1} parent=1 // pred_check
      _
    $region75: #{pinwheel_attn_forward.1} parent=1 // pred_check_branch
      %85 = sbr.rel (0) target = $region77
    $region76: #{pinwheel_attn_forward.1} parent=1 // pred_region
      _
    $region77: #{pinwheel_attn_forward.1} parent=1 // pred_fallthru
      _
    // Predicated region
    $region78: #{pinwheel_attn_forward.1} parent=1 // pred_check
      _
    $region79: #{pinwheel_attn_forward.1} parent=1 // pred_check_branch
      %87 = sbr.rel (0) target = $region81
    $region80: #{pinwheel_attn_forward.1} parent=1 // pred_region
      _
    $region81: #{pinwheel_attn_forward.1} parent=1 // pred_fallthru
      _
    // Predicated region
    $region82: #{pinwheel_attn_forward.1} parent=1 // pred_check
      _
    $region83: #{pinwheel_attn_forward.1} parent=1 // pred_check_branch
      %89 = sbr.rel (0) target = $region85
    $region84: #{pinwheel_attn_forward.1} parent=1 // pred_region
      _
    $region85: #{pinwheel_attn_forward.1} parent=1 // pred_fallthru
      _
    // Predicated region
    $region86: #{pinwheel_attn_forward.1} parent=1 // pred_check
      _
    $region87: #{pinwheel_attn_forward.1} parent=1 // pred_check_branch
      %91 = sbr.rel (0) target = $region89
    $region88: #{pinwheel_attn_forward.1} parent=1 // pred_region
      %92 = dma.done [#allocation3], 32768
    $region89: #{pinwheel_attn_forward.1} parent=1 // pred_fallthru
      _
    // Predicated region
    $region90: #{pinwheel_attn_forward.1} parent=1 // pred_check
      _
    $region91: #{pinwheel_attn_forward.1} parent=1 // pred_check_branch
      %94 = sbr.rel (0) target = $region93
    $region92: #{pinwheel_attn_forward.1} parent=1 // pred_region
      %95 = dma.done [#allocation5], 32768
    $region93: #{pinwheel_attn_forward.1} parent=1 // pred_fallthru
      _
    %v96 = vld [vmem:[%s0] sm:$0xff]
    %v97 = vld [vmem:[%s0 + $0x8] sm:$0xff]
    %s98 = scalar_lea.vmem %s0, 16
    %v99 = vld [vmem:[%s98] sm:$0xff]
    %v100 = vld [vmem:[%s98 + $0x8] sm:$0xff]
    %v101 = vld [vmem:[#allocation2] sm:$0xff]
    %v102 = vld [vmem:[#allocation2 + $0x8] sm:$0xff]
    %v103 = vld [vmem:[#allocation2 + $0x10] sm:$0xff]
    %v104 = vld [vmem:[#allocation2 + $0x18] sm:$0xff]
    %v105 = vld [vmem:[#allocation2 + $0x20] sm:$0xff]
    %v106 = vld [vmem:[#allocation2 + $0x28] sm:$0xff]
    %v107 = vld [vmem:[#allocation2 + $0x30] sm:$0xff]
    %v108 = vld [vmem:[#allocation2 + $0x38] sm:$0xff]
    %v109 = vld [vmem:[#allocation2 + $0x40] sm:$0xff]
    %v110 = vld [vmem:[#allocation2 + $0x48] sm:$0xff]
    %v111 = vld [vmem:[#allocation2 + $0x50] sm:$0xff]
    %v112 = vld [vmem:[#allocation2 + $0x58] sm:$0xff]
    %v113 = vld [vmem:[#allocation2 + $0x60] sm:$0xff]
    %v114 = vld [vmem:[#allocation2 + $0x68] sm:$0xff]
    %v115 = vld [vmem:[#allocation2 + $0x70] sm:$0xff]
    %v116 = vld [vmem:[#allocation2 + $0x78] sm:$0xff]
    %v117 = vld [vmem:[#allocation2 + $0x80] sm:$0xff]
    %v118 = vld [vmem:[#allocation2 + $0x88] sm:$0xff]
    %v119 = vld [vmem:[#allocation2 + $0x90] sm:$0xff]
    %v120 = vld [vmem:[#allocation2 + $0x98] sm:$0xff]
    %v121 = vld [vmem:[#allocation2 + $0xa0] sm:$0xff]
    %v122 = vld [vmem:[#allocation2 + $0xa8] sm:$0xff]
    %v123 = vld [vmem:[#allocation2 + $0xb0] sm:$0xff]
    %v124 = vld [vmem:[#allocation2 + $0xb8] sm:$0xff]
    %v125 = vld [vmem:[#allocation2 + $0xc0] sm:$0xff]
    %v126 = vld [vmem:[#allocation2 + $0xc8] sm:$0xff]
    %v127 = vld [vmem:[#allocation2 + $0xd0] sm:$0xff]
    %v128 = vld [vmem:[#allocation2 + $0xd8] sm:$0xff]
    %v129 = vld [vmem:[#allocation2 + $0xe0] sm:$0xff]
    %v130 = vld [vmem:[#allocation2 + $0xe8] sm:$0xff]
    %v131 = vld [vmem:[#allocation2 + $0xf0] sm:$0xff]
    %v132 = vld [vmem:[#allocation2 + $0xf8] sm:$0xff]
    %v133 = vld [vmem:[#allocation2 + $0x100] sm:$0xff]
    %v134 = vld [vmem:[#allocation2 + $0x108] sm:$0xff]
    %v135 = vld [vmem:[#allocation2 + $0x110] sm:$0xff]
    %v136 = vld [vmem:[#allocation2 + $0x118] sm:$0xff]
    %v137 = vld [vmem:[#allocation2 + $0x120] sm:$0xff]
    %v138 = vld [vmem:[#allocation2 + $0x128] sm:$0xff]
    %v139 = vld [vmem:[#allocation2 + $0x130] sm:$0xff]
    %v140 = vld [vmem:[#allocation2 + $0x138] sm:$0xff]
    %v141 = vld [vmem:[#allocation2 + $0x140] sm:$0xff]
    %v142 = vld [vmem:[#allocation2 + $0x148] sm:$0xff]
    %v143 = vld [vmem:[#allocation2 + $0x150] sm:$0xff]
    %v144 = vld [vmem:[#allocation2 + $0x158] sm:$0xff]
    %v145 = vld [vmem:[#allocation2 + $0x160] sm:$0xff]
    %v146 = vld [vmem:[#allocation2 + $0x168] sm:$0xff]
    %v147 = vld [vmem:[#allocation2 + $0x170] sm:$0xff]
    %v148 = vld [vmem:[#allocation2 + $0x178] sm:$0xff]
    %v149 = vld [vmem:[#allocation2 + $0x180] sm:$0xff]
    %v150 = vld [vmem:[#allocation2 + $0x188] sm:$0xff]
    %v151 = vld [vmem:[#allocation2 + $0x190] sm:$0xff]
    %v152 = vld [vmem:[#allocation2 + $0x198] sm:$0xff]
    %v153 = vld [vmem:[#allocation2 + $0x1a0] sm:$0xff]
    %v154 = vld [vmem:[#allocation2 + $0x1a8] sm:$0xff]
    %v155 = vld [vmem:[#allocation2 + $0x1b0] sm:$0xff]
    %v156 = vld [vmem:[#allocation2 + $0x1b8] sm:$0xff]
    %v157 = vld [vmem:[#allocation2 + $0x1c0] sm:$0xff]
    %v158 = vld [vmem:[#allocation2 + $0x1c8] sm:$0xff]
    %v159 = vld [vmem:[#allocation2 + $0x1d0] sm:$0xff]
    %v160 = vld [vmem:[#allocation2 + $0x1d8] sm:$0xff]
    %v161 = vld [vmem:[#allocation2 + $0x1e0] sm:$0xff]
    %v162 = vld [vmem:[#allocation2 + $0x1e8] sm:$0xff]
    %v163 = vld [vmem:[#allocation2 + $0x1f0] sm:$0xff]
    %v164 = vld [vmem:[#allocation2 + $0x1f8] sm:$0xff]
    %v165 = vld [vmem:[#allocation2 + $0x200] sm:$0xff]
    %v166 = vld [vmem:[#allocation2 + $0x208] sm:$0xff]
    %v167 = vld [vmem:[#allocation2 + $0x210] sm:$0xff]
    %v168 = vld [vmem:[#allocation2 + $0x218] sm:$0xff]
    %v169 = vld [vmem:[#allocation2 + $0x220] sm:$0xff]
    %v170 = vld [vmem:[#allocation2 + $0x228] sm:$0xff]
    %v171 = vld [vmem:[#allocation2 + $0x230] sm:$0xff]
    %v172 = vld [vmem:[#allocation2 + $0x238] sm:$0xff]
    %v173 = vld [vmem:[#allocation2 + $0x240] sm:$0xff]
    %v174 = vld [vmem:[#allocation2 + $0x248] sm:$0xff]
    %v175 = vld [vmem:[#allocation2 + $0x250] sm:$0xff]
    %v176 = vld [vmem:[#allocation2 + $0x258] sm:$0xff]
    %v177 = vld [vmem:[#allocation2 + $0x260] sm:$0xff]
    %v178 = vld [vmem:[#allocation2 + $0x268] sm:$0xff]
    %v179 = vld [vmem:[#allocation2 + $0x270] sm:$0xff]
    %v180 = vld [vmem:[#allocation2 + $0x278] sm:$0xff]
    %v181 = vld [vmem:[#allocation2 + $0x280] sm:$0xff]
    %v182 = vld [vmem:[#allocation2 + $0x288] sm:$0xff]
    %v183 = vld [vmem:[#allocation2 + $0x290] sm:$0xff]
    %v184 = vld [vmem:[#allocation2 + $0x298] sm:$0xff]
    %v185 = vld [vmem:[#allocation2 + $0x2a0] sm:$0xff]
    %v186 = vld [vmem:[#allocation2 + $0x2a8] sm:$0xff]
    %v187 = vld [vmem:[#allocation2 + $0x2b0] sm:$0xff]
    %v188 = vld [vmem:[#allocation2 + $0x2b8] sm:$0xff]
    %v189 = vld [vmem:[#allocation2 + $0x2c0] sm:$0xff]
    %v190 = vld [vmem:[#allocation2 + $0x2c8] sm:$0xff]
    %v191 = vld [vmem:[#allocation2 + $0x2d0] sm:$0xff]
    %v192 = vld [vmem:[#allocation2 + $0x2d8] sm:$0xff]
    %v193 = vld [vmem:[#allocation2 + $0x2e0] sm:$0xff]
    %v194 = vld [vmem:[#allocation2 + $0x2e8] sm:$0xff]
    %v195 = vld [vmem:[#allocation2 + $0x2f0] sm:$0xff]
    %v196 = vld [vmem:[#allocation2 + $0x2f8] sm:$0xff]
    %v197 = vld [vmem:[#allocation2 + $0x300] sm:$0xff]
    %v198 = vld [vmem:[#allocation2 + $0x308] sm:$0xff]
    %v199 = vld [vmem:[#allocation2 + $0x310] sm:$0xff]
    %v200 = vld [vmem:[#allocation2 + $0x318] sm:$0xff]
    %v201 = vld [vmem:[#allocation2 + $0x320] sm:$0xff]
    %v202 = vld [vmem:[#allocation2 + $0x328] sm:$0xff]
    %v203 = vld [vmem:[#allocation2 + $0x330] sm:$0xff]
    %v204 = vld [vmem:[#allocation2 + $0x338] sm:$0xff]
    %v205 = vld [vmem:[#allocation2 + $0x340] sm:$0xff]
    %v206 = vld [vmem:[#allocation2 + $0x348] sm:$0xff]
    %v207 = vld [vmem:[#allocation2 + $0x350] sm:$0xff]
    %v208 = vld [vmem:[#allocation2 + $0x358] sm:$0xff]
    %v209 = vld [vmem:[#allocation2 + $0x360] sm:$0xff]
    %v210 = vld [vmem:[#allocation2 + $0x368] sm:$0xff]
    %v211 = vld [vmem:[#allocation2 + $0x370] sm:$0xff]
    %v212 = vld [vmem:[#allocation2 + $0x378] sm:$0xff]
    %v213 = vld [vmem:[#allocation2 + $0x380] sm:$0xff]
    %v214 = vld [vmem:[#allocation2 + $0x388] sm:$0xff]
    %v215 = vld [vmem:[#allocation2 + $0x390] sm:$0xff]
    %v216 = vld [vmem:[#allocation2 + $0x398] sm:$0xff]
    %v217 = vld [vmem:[#allocation2 + $0x3a0] sm:$0xff]
    %v218 = vld [vmem:[#allocation2 + $0x3a8] sm:$0xff]
    %v219 = vld [vmem:[#allocation2 + $0x3b0] sm:$0xff]
    %v220 = vld [vmem:[#allocation2 + $0x3b8] sm:$0xff]
    %v221 = vld [vmem:[#allocation2 + $0x3c0] sm:$0xff]
    %v222 = vld [vmem:[#allocation2 + $0x3c8] sm:$0xff]
    %v223 = vld [vmem:[#allocation2 + $0x3d0] sm:$0xff]
    %v224 = vld [vmem:[#allocation2 + $0x3d8] sm:$0xff]
    %v225 = vld [vmem:[#allocation2 + $0x3e0] sm:$0xff]
    %v226 = vld [vmem:[#allocation2 + $0x3e8] sm:$0xff]
    %v227 = vld [vmem:[#allocation2 + $0x3f0] sm:$0xff]
    %v228 = vld [vmem:[#allocation2 + $0x3f8] sm:$0xff]
    %v229 = vld [vmem:[#allocation2 + $0x400] sm:$0xff]
    %v230 = vld [vmem:[#allocation2 + $0x408] sm:$0xff]
    %v231 = vld [vmem:[#allocation2 + $0x410] sm:$0xff]
    %v232 = vld [vmem:[#allocation2 + $0x418] sm:$0xff]
    %v233 = vld [vmem:[#allocation2 + $0x420] sm:$0xff]
    %v234 = vld [vmem:[#allocation2 + $0x428] sm:$0xff]
    %v235 = vld [vmem:[#allocation2 + $0x430] sm:$0xff]
    %v236 = vld [vmem:[#allocation2 + $0x438] sm:$0xff]
    %v237 = vld [vmem:[#allocation2 + $0x440] sm:$0xff]
    %v238 = vld [vmem:[#allocation2 + $0x448] sm:$0xff]
    %v239 = vld [vmem:[#allocation2 + $0x450] sm:$0xff]
    %v240 = vld [vmem:[#allocation2 + $0x458] sm:$0xff]
    %v241 = vld [vmem:[#allocation2 + $0x460] sm:$0xff]
    %v242 = vld [vmem:[#allocation2 + $0x468] sm:$0xff]
    %v243 = vld [vmem:[#allocation2 + $0x470] sm:$0xff]
    %v244 = vld [vmem:[#allocation2 + $0x478] sm:$0xff]
    %v245 = vld [vmem:[#allocation2 + $0x480] sm:$0xff]
    %v246 = vld [vmem:[#allocation2 + $0x488] sm:$0xff]
    %v247 = vld [vmem:[#allocation2 + $0x490] sm:$0xff]
    %v248 = vld [vmem:[#allocation2 + $0x498] sm:$0xff]
    %v249 = vld [vmem:[#allocation2 + $0x4a0] sm:$0xff]
    %v250 = vld [vmem:[#allocation2 + $0x4a8] sm:$0xff]
    %v251 = vld [vmem:[#allocation2 + $0x4b0] sm:$0xff]
    %v252 = vld [vmem:[#allocation2 + $0x4b8] sm:$0xff]
    %v253 = vld [vmem:[#allocation2 + $0x4c0] sm:$0xff]
    %v254 = vld [vmem:[#allocation2 + $0x4c8] sm:$0xff]
    %v255 = vld [vmem:[#allocation2 + $0x4d0] sm:$0xff]
    %v256 = vld [vmem:[#allocation2 + $0x4d8] sm:$0xff]
    %v257 = vld [vmem:[#allocation2 + $0x4e0] sm:$0xff]
    %v258 = vld [vmem:[#allocation2 + $0x4e8] sm:$0xff]
    %v259 = vld [vmem:[#allocation2 + $0x4f0] sm:$0xff]
    %v260 = vld [vmem:[#allocation2 + $0x4f8] sm:$0xff]
    %v261 = vld [vmem:[#allocation2 + $0x500] sm:$0xff]
    %v262 = vld [vmem:[#allocation2 + $0x508] sm:$0xff]
    %v263 = vld [vmem:[#allocation2 + $0x510] sm:$0xff]
    %v264 = vld [vmem:[#allocation2 + $0x518] sm:$0xff]
    %v265 = vld [vmem:[#allocation2 + $0x520] sm:$0xff]
    %v266 = vld [vmem:[#allocation2 + $0x528] sm:$0xff]
    %v267 = vld [vmem:[#allocation2 + $0x530] sm:$0xff]
    %v268 = vld [vmem:[#allocation2 + $0x538] sm:$0xff]
    %v269 = vld [vmem:[#allocation2 + $0x540] sm:$0xff]
    %v270 = vld [vmem:[#allocation2 + $0x548] sm:$0xff]
    %v271 = vld [vmem:[#allocation2 + $0x550] sm:$0xff]
    %v272 = vld [vmem:[#allocation2 + $0x558] sm:$0xff]
    %v273 = vld [vmem:[#allocation2 + $0x560] sm:$0xff]
    %v274 = vld [vmem:[#allocation2 + $0x568] sm:$0xff]
    %v275 = vld [vmem:[#allocation2 + $0x570] sm:$0xff]
    %v276 = vld [vmem:[#allocation2 + $0x578] sm:$0xff]
    %v277 = vld [vmem:[#allocation2 + $0x580] sm:$0xff]
    %v278 = vld [vmem:[#allocation2 + $0x588] sm:$0xff]
    %v279 = vld [vmem:[#allocation2 + $0x590] sm:$0xff]
    %v280 = vld [vmem:[#allocation2 + $0x598] sm:$0xff]
    %v281 = vld [vmem:[#allocation2 + $0x5a0] sm:$0xff]
    %v282 = vld [vmem:[#allocation2 + $0x5a8] sm:$0xff]
    %v283 = vld [vmem:[#allocation2 + $0x5b0] sm:$0xff]
    %v284 = vld [vmem:[#allocation2 + $0x5b8] sm:$0xff]
    %v285 = vld [vmem:[#allocation2 + $0x5c0] sm:$0xff]
    %v286 = vld [vmem:[#allocation2 + $0x5c8] sm:$0xff]
    %v287 = vld [vmem:[#allocation2 + $0x5d0] sm:$0xff]
    %v288 = vld [vmem:[#allocation2 + $0x5d8] sm:$0xff]
    %v289 = vld [vmem:[#allocation2 + $0x5e0] sm:$0xff]
    %v290 = vld [vmem:[#allocation2 + $0x5e8] sm:$0xff]
    %v291 = vld [vmem:[#allocation2 + $0x5f0] sm:$0xff]
    %v292 = vld [vmem:[#allocation2 + $0x5f8] sm:$0xff]
    %v293 = vld [vmem:[#allocation2 + $0x600] sm:$0xff]
    %v294 = vld [vmem:[#allocation2 + $0x608] sm:$0xff]
    %v295 = vld [vmem:[#allocation2 + $0x610] sm:$0xff]
    %v296 = vld [vmem:[#allocation2 + $0x618] sm:$0xff]
    %v297 = vld [vmem:[#allocation2 + $0x620] sm:$0xff]
    %v298 = vld [vmem:[#allocation2 + $0x628] sm:$0xff]
    %v299 = vld [vmem:[#allocation2 + $0x630] sm:$0xff]
    %v300 = vld [vmem:[#allocation2 + $0x638] sm:$0xff]
    %v301 = vld [vmem:[#allocation2 + $0x640] sm:$0xff]
    %v302 = vld [vmem:[#allocation2 + $0x648] sm:$0xff]
    %v303 = vld [vmem:[#allocation2 + $0x650] sm:$0xff]
    %v304 = vld [vmem:[#allocation2 + $0x658] sm:$0xff]
    %v305 = vld [vmem:[#allocation2 + $0x660] sm:$0xff]
    %v306 = vld [vmem:[#allocation2 + $0x668] sm:$0xff]
    %v307 = vld [vmem:[#allocation2 + $0x670] sm:$0xff]
    %v308 = vld [vmem:[#allocation2 + $0x678] sm:$0xff]
    %v309 = vld [vmem:[#allocation2 + $0x680] sm:$0xff]
    %v310 = vld [vmem:[#allocation2 + $0x688] sm:$0xff]
    %v311 = vld [vmem:[#allocation2 + $0x690] sm:$0xff]
    %v312 = vld [vmem:[#allocation2 + $0x698] sm:$0xff]
    %v313 = vld [vmem:[#allocation2 + $0x6a0] sm:$0xff]
    %v314 = vld [vmem:[#allocation2 + $0x6a8] sm:$0xff]
    %v315 = vld [vmem:[#allocation2 + $0x6b0] sm:$0xff]
    %v316 = vld [vmem:[#allocation2 + $0x6b8] sm:$0xff]
    %v317 = vld [vmem:[#allocation2 + $0x6c0] sm:$0xff]
    %v318 = vld [vmem:[#allocation2 + $0x6c8] sm:$0xff]
    %v319 = vld [vmem:[#allocation2 + $0x6d0] sm:$0xff]
    %v320 = vld [vmem:[#allocation2 + $0x6d8] sm:$0xff]
    %v321 = vld [vmem:[#allocation2 + $0x6e0] sm:$0xff]
    %v322 = vld [vmem:[#allocation2 + $0x6e8] sm:$0xff]
    %v323 = vld [vmem:[#allocation2 + $0x6f0] sm:$0xff]
    %v324 = vld [vmem:[#allocation2 + $0x6f8] sm:$0xff]
    %v325 = vld [vmem:[#allocation2 + $0x700] sm:$0xff]
    %v326 = vld [vmem:[#allocation2 + $0x708] sm:$0xff]
    %v327 = vld [vmem:[#allocation2 + $0x710] sm:$0xff]
    %v328 = vld [vmem:[#allocation2 + $0x718] sm:$0xff]
    %v329 = vld [vmem:[#allocation2 + $0x720] sm:$0xff]
    %v330 = vld [vmem:[#allocation2 + $0x728] sm:$0xff]
    %v331 = vld [vmem:[#allocation2 + $0x730] sm:$0xff]
    %v332 = vld [vmem:[#allocation2 + $0x738] sm:$0xff]
    %v333 = vld [vmem:[#allocation2 + $0x740] sm:$0xff]
    %v334 = vld [vmem:[#allocation2 + $0x748] sm:$0xff]
    %v335 = vld [vmem:[#allocation2 + $0x750] sm:$0xff]
    %v336 = vld [vmem:[#allocation2 + $0x758] sm:$0xff]
    %v337 = vld [vmem:[#allocation2 + $0x760] sm:$0xff]
    %v338 = vld [vmem:[#allocation2 + $0x768] sm:$0xff]
    %v339 = vld [vmem:[#allocation2 + $0x770] sm:$0xff]
    %v340 = vld [vmem:[#allocation2 + $0x778] sm:$0xff]
    %v341 = vld [vmem:[#allocation2 + $0x780] sm:$0xff]
    %v342 = vld [vmem:[#allocation2 + $0x788] sm:$0xff]
    %v343 = vld [vmem:[#allocation2 + $0x790] sm:$0xff]
    %v344 = vld [vmem:[#allocation2 + $0x798] sm:$0xff]
    %v345 = vld [vmem:[#allocation2 + $0x7a0] sm:$0xff]
    %v346 = vld [vmem:[#allocation2 + $0x7a8] sm:$0xff]
    %v347 = vld [vmem:[#allocation2 + $0x7b0] sm:$0xff]
    %v348 = vld [vmem:[#allocation2 + $0x7b8] sm:$0xff]
    %v349 = vld [vmem:[#allocation2 + $0x7c0] sm:$0xff]
    %v350 = vld [vmem:[#allocation2 + $0x7c8] sm:$0xff]
    %v351 = vld [vmem:[#allocation2 + $0x7d0] sm:$0xff]
    %v352 = vld [vmem:[#allocation2 + $0x7d8] sm:$0xff]
    %v353 = vld [vmem:[#allocation2 + $0x7e0] sm:$0xff]
    %v354 = vld [vmem:[#allocation2 + $0x7e8] sm:$0xff]
    %v355 = vld [vmem:[#allocation2 + $0x7f0] sm:$0xff]
    %v356 = vld [vmem:[#allocation2 + $0x7f8] sm:$0xff]
    %v357 = vld [vmem:[#allocation4] sm:$0xff]
    %v358 = vld [vmem:[#allocation4 + $0x8] sm:$0xff]
    %v359 = vld [vmem:[#allocation4 + $0x10] sm:$0xff]
    %v360 = vld [vmem:[#allocation4 + $0x18] sm:$0xff]
    %v361 = vld [vmem:[#allocation4 + $0x20] sm:$0xff]
    %v362 = vld [vmem:[#allocation4 + $0x28] sm:$0xff]
    %v363 = vld [vmem:[#allocation4 + $0x30] sm:$0xff]
    %v364 = vld [vmem:[#allocation4 + $0x38] sm:$0xff]
    %v365 = vld [vmem:[#allocation4 + $0x40] sm:$0xff]
    %v366 = vld [vmem:[#allocation4 + $0x48] sm:$0xff]
    %v367 = vld [vmem:[#allocation4 + $0x50] sm:$0xff]
    %v368 = vld [vmem:[#allocation4 + $0x58] sm:$0xff]
    %v369 = vld [vmem:[#allocation4 + $0x60] sm:$0xff]
    %v370 = vld [vmem:[#allocation4 + $0x68] sm:$0xff]
    %v371 = vld [vmem:[#allocation4 + $0x70] sm:$0xff]
    %v372 = vld [vmem:[#allocation4 + $0x78] sm:$0xff]
    %v373 = vld [vmem:[#allocation4 + $0x80] sm:$0xff]
    %v374 = vld [vmem:[#allocation4 + $0x88] sm:$0xff]
    %v375 = vld [vmem:[#allocation4 + $0x90] sm:$0xff]
    %v376 = vld [vmem:[#allocation4 + $0x98] sm:$0xff]
    %v377 = vld [vmem:[#allocation4 + $0xa0] sm:$0xff]
    %v378 = vld [vmem:[#allocation4 + $0xa8] sm:$0xff]
    %v379 = vld [vmem:[#allocation4 + $0xb0] sm:$0xff]
    %v380 = vld [vmem:[#allocation4 + $0xb8] sm:$0xff]
    %v381 = vld [vmem:[#allocation4 + $0xc0] sm:$0xff]
    %v382 = vld [vmem:[#allocation4 + $0xc8] sm:$0xff]
    %v383 = vld [vmem:[#allocation4 + $0xd0] sm:$0xff]
    %v384 = vld [vmem:[#allocation4 + $0xd8] sm:$0xff]
    %v385 = vld [vmem:[#allocation4 + $0xe0] sm:$0xff]
    %v386 = vld [vmem:[#allocation4 + $0xe8] sm:$0xff]
    %v387 = vld [vmem:[#allocation4 + $0xf0] sm:$0xff]
    %v388 = vld [vmem:[#allocation4 + $0xf8] sm:$0xff]
    %v389 = vld [vmem:[#allocation4 + $0x100] sm:$0xff]
    %v390 = vld [vmem:[#allocation4 + $0x108] sm:$0xff]
    %v391 = vld [vmem:[#allocation4 + $0x110] sm:$0xff]
    %v392 = vld [vmem:[#allocation4 + $0x118] sm:$0xff]
    %v393 = vld [vmem:[#allocation4 + $0x120] sm:$0xff]
    %v394 = vld [vmem:[#allocation4 + $0x128] sm:$0xff]
    %v395 = vld [vmem:[#allocation4 + $0x130] sm:$0xff]
    %v396 = vld [vmem:[#allocation4 + $0x138] sm:$0xff]
    %v397 = vld [vmem:[#allocation4 + $0x140] sm:$0xff]
    %v398 = vld [vmem:[#allocation4 + $0x148] sm:$0xff]
    %v399 = vld [vmem:[#allocation4 + $0x150] sm:$0xff]
    %v400 = vld [vmem:[#allocation4 + $0x158] sm:$0xff]
    %v401 = vld [vmem:[#allocation4 + $0x160] sm:$0xff]
    %v402 = vld [vmem:[#allocation4 + $0x168] sm:$0xff]
    %v403 = vld [vmem:[#allocation4 + $0x170] sm:$0xff]
    %v404 = vld [vmem:[#allocation4 + $0x178] sm:$0xff]
    %v405 = vld [vmem:[#allocation4 + $0x180] sm:$0xff]
    %v406 = vld [vmem:[#allocation4 + $0x188] sm:$0xff]
    %v407 = vld [vmem:[#allocation4 + $0x190] sm:$0xff]
    %v408 = vld [vmem:[#allocation4 + $0x198] sm:$0xff]
    %v409 = vld [vmem:[#allocation4 + $0x1a0] sm:$0xff]
    %v410 = vld [vmem:[#allocation4 + $0x1a8] sm:$0xff]
    %v411 = vld [vmem:[#allocation4 + $0x1b0] sm:$0xff]
    %v412 = vld [vmem:[#allocation4 + $0x1b8] sm:$0xff]
    %v413 = vld [vmem:[#allocation4 + $0x1c0] sm:$0xff]
    %v414 = vld [vmem:[#allocation4 + $0x1c8] sm:$0xff]
    %v415 = vld [vmem:[#allocation4 + $0x1d0] sm:$0xff]
    %v416 = vld [vmem:[#allocation4 + $0x1d8] sm:$0xff]
    %v417 = vld [vmem:[#allocation4 + $0x1e0] sm:$0xff]
    %v418 = vld [vmem:[#allocation4 + $0x1e8] sm:$0xff]
    %v419 = vld [vmem:[#allocation4 + $0x1f0] sm:$0xff]
    %v420 = vld [vmem:[#allocation4 + $0x1f8] sm:$0xff]
    %v421 = vld [vmem:[#allocation4 + $0x200] sm:$0xff]
    %v422 = vld [vmem:[#allocation4 + $0x208] sm:$0xff]
    %v423 = vld [vmem:[#allocation4 + $0x210] sm:$0xff]
    %v424 = vld [vmem:[#allocation4 + $0x218] sm:$0xff]
    %v425 = vld [vmem:[#allocation4 + $0x220] sm:$0xff]
    %v426 = vld [vmem:[#allocation4 + $0x228] sm:$0xff]
    %v427 = vld [vmem:[#allocation4 + $0x230] sm:$0xff]
    %v428 = vld [vmem:[#allocation4 + $0x238] sm:$0xff]
    %v429 = vld [vmem:[#allocation4 + $0x240] sm:$0xff]
    %v430 = vld [vmem:[#allocation4 + $0x248] sm:$0xff]
    %v431 = vld [vmem:[#allocation4 + $0x250] sm:$0xff]
    %v432 = vld [vmem:[#allocation4 + $0x258] sm:$0xff]
    %v433 = vld [vmem:[#allocation4 + $0x260] sm:$0xff]
    %v434 = vld [vmem:[#allocation4 + $0x268] sm:$0xff]
    %v435 = vld [vmem:[#allocation4 + $0x270] sm:$0xff]
    %v436 = vld [vmem:[#allocation4 + $0x278] sm:$0xff]
    %v437 = vld [vmem:[#allocation4 + $0x280] sm:$0xff]
    %v438 = vld [vmem:[#allocation4 + $0x288] sm:$0xff]
    %v439 = vld [vmem:[#allocation4 + $0x290] sm:$0xff]
    %v440 = vld [vmem:[#allocation4 + $0x298] sm:$0xff]
    %v441 = vld [vmem:[#allocation4 + $0x2a0] sm:$0xff]
    %v442 = vld [vmem:[#allocation4 + $0x2a8] sm:$0xff]
    %v443 = vld [vmem:[#allocation4 + $0x2b0] sm:$0xff]
    %v444 = vld [vmem:[#allocation4 + $0x2b8] sm:$0xff]
    %v445 = vld [vmem:[#allocation4 + $0x2c0] sm:$0xff]
    %v446 = vld [vmem:[#allocation4 + $0x2c8] sm:$0xff]
    %v447 = vld [vmem:[#allocation4 + $0x2d0] sm:$0xff]
    %v448 = vld [vmem:[#allocation4 + $0x2d8] sm:$0xff]
    %v449 = vld [vmem:[#allocation4 + $0x2e0] sm:$0xff]
    %v450 = vld [vmem:[#allocation4 + $0x2e8] sm:$0xff]
    %v451 = vld [vmem:[#allocation4 + $0x2f0] sm:$0xff]
    %v452 = vld [vmem:[#allocation4 + $0x2f8] sm:$0xff]
    %v453 = vld [vmem:[#allocation4 + $0x300] sm:$0xff]
    %v454 = vld [vmem:[#allocation4 + $0x308] sm:$0xff]
    %v455 = vld [vmem:[#allocation4 + $0x310] sm:$0xff]
    %v456 = vld [vmem:[#allocation4 + $0x318] sm:$0xff]
    %v457 = vld [vmem:[#allocation4 + $0x320] sm:$0xff]
    %v458 = vld [vmem:[#allocation4 + $0x328] sm:$0xff]
    %v459 = vld [vmem:[#allocation4 + $0x330] sm:$0xff]
    %v460 = vld [vmem:[#allocation4 + $0x338] sm:$0xff]
    %v461 = vld [vmem:[#allocation4 + $0x340] sm:$0xff]
    %v462 = vld [vmem:[#allocation4 + $0x348] sm:$0xff]
    %v463 = vld [vmem:[#allocation4 + $0x350] sm:$0xff]
    %v464 = vld [vmem:[#allocation4 + $0x358] sm:$0xff]
    %v465 = vld [vmem:[#allocation4 + $0x360] sm:$0xff]
    %v466 = vld [vmem:[#allocation4 + $0x368] sm:$0xff]
    %v467 = vld [vmem:[#allocation4 + $0x370] sm:$0xff]
    %v468 = vld [vmem:[#allocation4 + $0x378] sm:$0xff]
    %v469 = vld [vmem:[#allocation4 + $0x380] sm:$0xff]
    %v470 = vld [vmem:[#allocation4 + $0x388] sm:$0xff]
    %v471 = vld [vmem:[#allocation4 + $0x390] sm:$0xff]
    %v472 = vld [vmem:[#allocation4 + $0x398] sm:$0xff]
    %v473 = vld [vmem:[#allocation4 + $0x3a0] sm:$0xff]
    %v474 = vld [vmem:[#allocation4 + $0x3a8] sm:$0xff]
    %v475 = vld [vmem:[#allocation4 + $0x3b0] sm:$0xff]
    %v476 = vld [vmem:[#allocation4 + $0x3b8] sm:$0xff]
    %v477 = vld [vmem:[#allocation4 + $0x3c0] sm:$0xff]
    %v478 = vld [vmem:[#allocation4 + $0x3c8] sm:$0xff]
    %v479 = vld [vmem:[#allocation4 + $0x3d0] sm:$0xff]
    %v480 = vld [vmem:[#allocation4 + $0x3d8] sm:$0xff]
    %v481 = vld [vmem:[#allocation4 + $0x3e0] sm:$0xff]
    %v482 = vld [vmem:[#allocation4 + $0x3e8] sm:$0xff]
    %v483 = vld [vmem:[#allocation4 + $0x3f0] sm:$0xff]
    %v484 = vld [vmem:[#allocation4 + $0x3f8] sm:$0xff]
    %v485 = vld [vmem:[#allocation4 + $0x400] sm:$0xff]
    %v486 = vld [vmem:[#allocation4 + $0x408] sm:$0xff]
    %v487 = vld [vmem:[#allocation4 + $0x410] sm:$0xff]
    %v488 = vld [vmem:[#allocation4 + $0x418] sm:$0xff]
    %v489 = vld [vmem:[#allocation4 + $0x420] sm:$0xff]
    %v490 = vld [vmem:[#allocation4 + $0x428] sm:$0xff]
    %v491 = vld [vmem:[#allocation4 + $0x430] sm:$0xff]
    %v492 = vld [vmem:[#allocation4 + $0x438] sm:$0xff]
    %v493 = vld [vmem:[#allocation4 + $0x440] sm:$0xff]
    %v494 = vld [vmem:[#allocation4 + $0x448] sm:$0xff]
    %v495 = vld [vmem:[#allocation4 + $0x450] sm:$0xff]
    %v496 = vld [vmem:[#allocation4 + $0x458] sm:$0xff]
    %v497 = vld [vmem:[#allocation4 + $0x460] sm:$0xff]
    %v498 = vld [vmem:[#allocation4 + $0x468] sm:$0xff]
    %v499 = vld [vmem:[#allocation4 + $0x470] sm:$0xff]
    %v500 = vld [vmem:[#allocation4 + $0x478] sm:$0xff]
    %v501 = vld [vmem:[#allocation4 + $0x480] sm:$0xff]
    %v502 = vld [vmem:[#allocation4 + $0x488] sm:$0xff]
    %v503 = vld [vmem:[#allocation4 + $0x490] sm:$0xff]
    %v504 = vld [vmem:[#allocation4 + $0x498] sm:$0xff]
    %v505 = vld [vmem:[#allocation4 + $0x4a0] sm:$0xff]
    %v506 = vld [vmem:[#allocation4 + $0x4a8] sm:$0xff]
    %v507 = vld [vmem:[#allocation4 + $0x4b0] sm:$0xff]
    %v508 = vld [vmem:[#allocation4 + $0x4b8] sm:$0xff]
    %v509 = vld [vmem:[#allocation4 + $0x4c0] sm:$0xff]
    %v510 = vld [vmem:[#allocation4 + $0x4c8] sm:$0xff]
    %v511 = vld [vmem:[#allocation4 + $0x4d0] sm:$0xff]
    %v512 = vld [vmem:[#allocation4 + $0x4d8] sm:$0xff]
    %v513 = vld [vmem:[#allocation4 + $0x4e0] sm:$0xff]
    %v514 = vld [vmem:[#allocation4 + $0x4e8] sm:$0xff]
    %v515 = vld [vmem:[#allocation4 + $0x4f0] sm:$0xff]
    %v516 = vld [vmem:[#allocation4 + $0x4f8] sm:$0xff]
    %v517 = vld [vmem:[#allocation4 + $0x500] sm:$0xff]
    %v518 = vld [vmem:[#allocation4 + $0x508] sm:$0xff]
    %v519 = vld [vmem:[#allocation4 + $0x510] sm:$0xff]
    %v520 = vld [vmem:[#allocation4 + $0x518] sm:$0xff]
    %v521 = vld [vmem:[#allocation4 + $0x520] sm:$0xff]
    %v522 = vld [vmem:[#allocation4 + $0x528] sm:$0xff]
    %v523 = vld [vmem:[#allocation4 + $0x530] sm:$0xff]
    %v524 = vld [vmem:[#allocation4 + $0x538] sm:$0xff]
    %v525 = vld [vmem:[#allocation4 + $0x540] sm:$0xff]
    %v526 = vld [vmem:[#allocation4 + $0x548] sm:$0xff]
    %v527 = vld [vmem:[#allocation4 + $0x550] sm:$0xff]
    %v528 = vld [vmem:[#allocation4 + $0x558] sm:$0xff]
    %v529 = vld [vmem:[#allocation4 + $0x560] sm:$0xff]
    %v530 = vld [vmem:[#allocation4 + $0x568] sm:$0xff]
    %v531 = vld [vmem:[#allocation4 + $0x570] sm:$0xff]
    %v532 = vld [vmem:[#allocation4 + $0x578] sm:$0xff]
    %v533 = vld [vmem:[#allocation4 + $0x580] sm:$0xff]
    %v534 = vld [vmem:[#allocation4 + $0x588] sm:$0xff]
    %v535 = vld [vmem:[#allocation4 + $0x590] sm:$0xff]
    %v536 = vld [vmem:[#allocation4 + $0x598] sm:$0xff]
    %v537 = vld [vmem:[#allocation4 + $0x5a0] sm:$0xff]
    %v538 = vld [vmem:[#allocation4 + $0x5a8] sm:$0xff]
    %v539 = vld [vmem:[#allocation4 + $0x5b0] sm:$0xff]
    %v540 = vld [vmem:[#allocation4 + $0x5b8] sm:$0xff]
    %v541 = vld [vmem:[#allocation4 + $0x5c0] sm:$0xff]
    %v542 = vld [vmem:[#allocation4 + $0x5c8] sm:$0xff]
    %v543 = vld [vmem:[#allocation4 + $0x5d0] sm:$0xff]
    %v544 = vld [vmem:[#allocation4 + $0x5d8] sm:$0xff]
    %v545 = vld [vmem:[#allocation4 + $0x5e0] sm:$0xff]
    %v546 = vld [vmem:[#allocation4 + $0x5e8] sm:$0xff]
    %v547 = vld [vmem:[#allocation4 + $0x5f0] sm:$0xff]
    %v548 = vld [vmem:[#allocation4 + $0x5f8] sm:$0xff]
    %v549 = vld [vmem:[#allocation4 + $0x600] sm:$0xff]
    %v550 = vld [vmem:[#allocation4 + $0x608] sm:$0xff]
    %v551 = vld [vmem:[#allocation4 + $0x610] sm:$0xff]
    %v552 = vld [vmem:[#allocation4 + $0x618] sm:$0xff]
    %v553 = vld [vmem:[#allocation4 + $0x620] sm:$0xff]
    %v554 = vld [vmem:[#allocation4 + $0x628] sm:$0xff]
    %v555 = vld [vmem:[#allocation4 + $0x630] sm:$0xff]
    %v556 = vld [vmem:[#allocation4 + $0x638] sm:$0xff]
    %v557 = vld [vmem:[#allocation4 + $0x640] sm:$0xff]
    %v558 = vld [vmem:[#allocation4 + $0x648] sm:$0xff]
    %v559 = vld [vmem:[#allocation4 + $0x650] sm:$0xff]
    %v560 = vld [vmem:[#allocation4 + $0x658] sm:$0xff]
    %v561 = vld [vmem:[#allocation4 + $0x660] sm:$0xff]
    %v562 = vld [vmem:[#allocation4 + $0x668] sm:$0xff]
    %v563 = vld [vmem:[#allocation4 + $0x670] sm:$0xff]
    %v564 = vld [vmem:[#allocation4 + $0x678] sm:$0xff]
    %v565 = vld [vmem:[#allocation4 + $0x680] sm:$0xff]
    %v566 = vld [vmem:[#allocation4 + $0x688] sm:$0xff]
    %v567 = vld [vmem:[#allocation4 + $0x690] sm:$0xff]
    %v568 = vld [vmem:[#allocation4 + $0x698] sm:$0xff]
    %v569 = vld [vmem:[#allocation4 + $0x6a0] sm:$0xff]
    %v570 = vld [vmem:[#allocation4 + $0x6a8] sm:$0xff]
    %v571 = vld [vmem:[#allocation4 + $0x6b0] sm:$0xff]
    %v572 = vld [vmem:[#allocation4 + $0x6b8] sm:$0xff]
    %v573 = vld [vmem:[#allocation4 + $0x6c0] sm:$0xff]
    %v574 = vld [vmem:[#allocation4 + $0x6c8] sm:$0xff]
    %v575 = vld [vmem:[#allocation4 + $0x6d0] sm:$0xff]
    %v576 = vld [vmem:[#allocation4 + $0x6d8] sm:$0xff]
    %v577 = vld [vmem:[#allocation4 + $0x6e0] sm:$0xff]
    %v578 = vld [vmem:[#allocation4 + $0x6e8] sm:$0xff]
    %v579 = vld [vmem:[#allocation4 + $0x6f0] sm:$0xff]
    %v580 = vld [vmem:[#allocation4 + $0x6f8] sm:$0xff]
    %v581 = vld [vmem:[#allocation4 + $0x700] sm:$0xff]
    %v582 = vld [vmem:[#allocation4 + $0x708] sm:$0xff]
    %v583 = vld [vmem:[#allocation4 + $0x710] sm:$0xff]
    %v584 = vld [vmem:[#allocation4 + $0x718] sm:$0xff]
    %v585 = vld [vmem:[#allocation4 + $0x720] sm:$0xff]
    %v586 = vld [vmem:[#allocation4 + $0x728] sm:$0xff]
    %v587 = vld [vmem:[#allocation4 + $0x730] sm:$0xff]
    %v588 = vld [vmem:[#allocation4 + $0x738] sm:$0xff]
    %v589 = vld [vmem:[#allocation4 + $0x740] sm:$0xff]
    %v590 = vld [vmem:[#allocation4 + $0x748] sm:$0xff]
    %v591 = vld [vmem:[#allocation4 + $0x750] sm:$0xff]
    %v592 = vld [vmem:[#allocation4 + $0x758] sm:$0xff]
    %v593 = vld [vmem:[#allocation4 + $0x760] sm:$0xff]
    %v594 = vld [vmem:[#allocation4 + $0x768] sm:$0xff]
    %v595 = vld [vmem:[#allocation4 + $0x770] sm:$0xff]
    %v596 = vld [vmem:[#allocation4 + $0x778] sm:$0xff]
    %v597 = vld [vmem:[#allocation4 + $0x780] sm:$0xff]
    %v598 = vld [vmem:[#allocation4 + $0x788] sm:$0xff]
    %v599 = vld [vmem:[#allocation4 + $0x790] sm:$0xff]
    %v600 = vld [vmem:[#allocation4 + $0x798] sm:$0xff]
    %v601 = vld [vmem:[#allocation4 + $0x7a0] sm:$0xff]
    %v602 = vld [vmem:[#allocation4 + $0x7a8] sm:$0xff]
    %v603 = vld [vmem:[#allocation4 + $0x7b0] sm:$0xff]
    %v604 = vld [vmem:[#allocation4 + $0x7b8] sm:$0xff]
    %v605 = vld [vmem:[#allocation4 + $0x7c0] sm:$0xff]
    %v606 = vld [vmem:[#allocation4 + $0x7c8] sm:$0xff]
    %v607 = vld [vmem:[#allocation4 + $0x7d0] sm:$0xff]
    %v608 = vld [vmem:[#allocation4 + $0x7d8] sm:$0xff]
    %v609 = vld [vmem:[#allocation4 + $0x7e0] sm:$0xff]
    %v610 = vld [vmem:[#allocation4 + $0x7e8] sm:$0xff]
    %v611 = vld [vmem:[#allocation4 + $0x7f0] sm:$0xff]
    %v612 = vld [vmem:[#allocation4 + $0x7f8] sm:$0xff]
    %v613 = vld [vmem:[%s3] sm:$0xf]
    %v614 = vld [vmem:[%s4] sm:$0xf]
    %v615 = vld [vmem:[%s5] sm:$0xf]
    %v616 = vld [vmem:[%s6] sm:$0xf]
    %v617 = vmul.f32 %v615, %v613
    %v618 = vmul.f32 %v615, %v614
    %v619 = vmul.f32 %v616, %v613
    %v620 = vmul.f32 %v616, %v614
    %v621 = vlaneseq
    %v622 = vshrl.u32 %v621, 7
    %vm623 = vcmp.eq.s32.totalorder %v622, 4
    %v624 = vsel %vm623, 1, 0
    %v625 = vcvt.s32.f32 %v624
    %v626 = vld [vmem:[%s7] sm:$0xff]
    %v627 = vld [vmem:[%s8] sm:$0xff]
    %629 = vset.pattern.permute.xlu0 0
    %630 = vperm.xlu0 %629, %v627
    %v631 = vpop.permute.xlu0 %630
    %vm633 = vcmask 64512
    %v635 = vsel %vm633, %v626, 0
    %637 = vmatprep.subr.mxu0 %v97
    %638 = vmatpush1.msra.mxu0 %v96
    %639 = vmatprep.subr.mxu0 0.0
    %640 = vmatpush1.msra.mxu0 0.0
    %641 = vmatprep.subr.mxu0 0.0
    %642 = vmatpush1.msra.mxu0 0.0
    %643 = vmatprep.subr.mxu0 0.0
    %644 = vmatpush1.msra.mxu0 0.0
    %645 = vmatprep.subr.mxu0 0.0
    %646 = vmatpush1.msra.mxu0 0.0
    %647 = vmatprep.subr.mxu0 0.0
    %648 = vmatpush1.msra.mxu0 0.0
    %649 = vmatprep.subr.mxu0 0.0
    %650 = vmatpush1.msra.mxu0 0.0
    %651 = vmatprep.subr.mxu0 0.0
    %652 = vmatpush1.msra.mxu0 0.0
    %653 = vmatprep.subr.mxu0 0.0
    %654 = vmatpush1.msra.mxu0 0.0
    %655 = vmatprep.subr.mxu0 0.0
    %656 = vmatpush1.msra.mxu0 0.0
    %657 = vmatprep.subr.mxu0 0.0
    %658 = vmatpush1.msra.mxu0 0.0
    %659 = vmatprep.subr.mxu0 0.0
    %660 = vmatpush1.msra.mxu0 0.0
    %661 = vmatprep.subr.mxu0 0.0
    %662 = vmatpush1.msra.mxu0 0.0
    %663 = vmatprep.subr.mxu0 0.0
    %664 = vmatpush1.msra.mxu0 0.0
    %665 = vmatprep.subr.mxu0 0.0
    %666 = vmatpush1.msra.mxu0 0.0
    %667 = vmatprep.subr.mxu0 0.0
    %668 = vmatpush1.msra.mxu0 0.0
    %669 = vmatprep.subr.mxu0 0.0
    %670 = vmatpush1.msra.mxu0 0.0
    %671 = vmatprep.subr.mxu0 0.0
    %672 = vmatpush1.msra.mxu0 0.0
    %673 = vmatprep.subr.mxu0 0.0
    %674 = vmatpush1.msra.mxu0 0.0
    %675 = vmatprep.subr.mxu0 0.0
    %676 = vmatpush1.msra.mxu0 0.0
    %677 = vmatprep.subr.mxu0 0.0
    %678 = vmatpush1.msra.mxu0 0.0
    %679 = vmatprep.subr.mxu0 0.0
    %680 = vmatpush1.msra.mxu0 0.0
    %681 = vmatprep.subr.mxu0 0.0
    %682 = vmatpush1.msra.mxu0 0.0
    %683 = vmatprep.subr.mxu0 0.0
    %684 = vmatpush1.msra.mxu0 0.0
    %685 = vmatprep.subr.mxu0 0.0
    %686 = vmatpush1.msra.mxu0 0.0
    %687 = vmatprep.subr.mxu0 0.0
    %688 = vmatpush1.msra.mxu0 0.0
    %689 = vmatprep.subr.mxu0 0.0
    %690 = vmatpush1.msra.mxu0 0.0
    %691 = vmatprep.subr.mxu0 0.0
    %692 = vmatpush1.msra.mxu0 0.0
    %693 = vmatprep.subr.mxu0 0.0
    %694 = vmatpush1.msra.mxu0 0.0
    %695 = vmatprep.subr.mxu0 0.0
    %696 = vmatpush1.msra.mxu0 0.0
    %697 = vmatprep.subr.mxu0 0.0
    %698 = vmatpush1.msra.mxu0 0.0
    %699 = vmatprep.subr.mxu0 0.0
    %700 = vmatpush1.msra.mxu0 0.0
    %701 = vmatprep.mubr.f32.mxu0 0.0
    %702 = vmatmul.mubr.f32.gmra.mrb[0].mxu0 %v635
    %v703 = vpop.f32.mrb[0].mxu0
    %v704 = vadd.f32 %v631, %v703
    %v705 = vpop.f32.mrb[0].mxu0
    %v706 = vadd.f32 %v631, %v705
    %707 = vdwg.mxu0
    %708 = vmatprep.subr.mxu0 %v100
    %709 = vmatpush1.msra.mxu0 %v99
    %710 = vmatprep.subr.mxu0 0.0
    %711 = vmatpush1.msra.mxu0 0.0
    %712 = vmatprep.subr.mxu0 0.0
    %713 = vmatpush1.msra.mxu0 0.0
    %714 = vmatprep.subr.mxu0 0.0
    %715 = vmatpush1.msra.mxu0 0.0
    %716 = vmatprep.subr.mxu0 0.0
    %717 = vmatpush1.msra.mxu0 0.0
    %718 = vmatprep.subr.mxu0 0.0
    %719 = vmatpush1.msra.mxu0 0.0
    %720 = vmatprep.subr.mxu0 0.0
    %721 = vmatpush1.msra.mxu0 0.0
    %722 = vmatprep.subr.mxu0 0.0
    %723 = vmatpush1.msra.mxu0 0.0
    %724 = vmatprep.subr.mxu0 0.0
    %725 = vmatpush1.msra.mxu0 0.0
    %726 = vmatprep.subr.mxu0 0.0
    %727 = vmatpush1.msra.mxu0 0.0
    %728 = vmatprep.subr.mxu0 0.0
    %729 = vmatpush1.msra.mxu0 0.0
    %730 = vmatprep.subr.mxu0 0.0
    %731 = vmatpush1.msra.mxu0 0.0
    %732 = vmatprep.subr.mxu0 0.0
    %733 = vmatpush1.msra.mxu0 0.0
    %734 = vmatprep.subr.mxu0 0.0
    %735 = vmatpush1.msra.mxu0 0.0
    %736 = vmatprep.subr.mxu0 0.0
    %737 = vmatpush1.msra.mxu0 0.0
    %738 = vmatprep.subr.mxu0 0.0
    %739 = vmatpush1.msra.mxu0 0.0
    %740 = vmatprep.subr.mxu0 0.0
    %741 = vmatpush1.msra.mxu0 0.0
    %742 = vmatprep.subr.mxu0 0.0
    %743 = vmatpush1.msra.mxu0 0.0
    %744 = vmatprep.subr.mxu0 0.0
    %745 = vmatpush1.msra.mxu0 0.0
    %746 = vmatprep.subr.mxu0 0.0
    %747 = vmatpush1.msra.mxu0 0.0
    %748 = vmatprep.subr.mxu0 0.0
    %749 = vmatpush1.msra.mxu0 0.0
    %750 = vmatprep.subr.mxu0 0.0
    %751 = vmatpush1.msra.mxu0 0.0
    %752 = vmatprep.subr.mxu0 0.0
    %753 = vmatpush1.msra.mxu0 0.0
    %754 = vmatprep.subr.mxu0 0.0
    %755 = vmatpush1.msra.mxu0 0.0
    %756 = vmatprep.subr.mxu0 0.0
    %757 = vmatpush1.msra.mxu0 0.0
    %758 = vmatprep.subr.mxu0 0.0
    %759 = vmatpush1.msra.mxu0 0.0
    %760 = vmatprep.subr.mxu0 0.0
    %761 = vmatpush1.msra.mxu0 0.0
    %762 = vmatprep.subr.mxu0 0.0
    %763 = vmatpush1.msra.mxu0 0.0
    %764 = vmatprep.subr.mxu0 0.0
    %765 = vmatpush1.msra.mxu0 0.0
    %766 = vmatprep.subr.mxu0 0.0
    %767 = vmatpush1.msra.mxu0 0.0
    %768 = vmatprep.subr.mxu0 0.0
    %769 = vmatpush1.msra.mxu0 0.0
    %770 = vmatprep.subr.mxu0 0.0
    %771 = vmatpush1.msra.mxu0 0.0
    %772 = vmatprep.mubr.f32.mxu0 0.0
    %773 = vmatmul.mubr.f32.gmra.mrb[0].mxu0 %v635
    %v774 = vpop.f32.mrb[0].mxu0
    %v775 = vadd.f32 %v631, %v774
    %v776 = vpop.f32.mrb[0].mxu0
    %v777 = vadd.f32 %v631, %v776
    %778 = vdwg.mxu0
    %v779 = vxor.u32 %v704, 2147483648
    %v780 = vxor.u32 %v706, 2147483648
    %v781 = vxor.u32 %v775, 2147483648
    %v782 = vxor.u32 %v777, 2147483648
    %v783 = vmul.f32 %v779, 1.442695
    %v784 = vpow.pop %v783
    %v785 = vmul.f32 %v780, 1.442695
    %v786 = vpow.pop %v785
    %v787 = vmul.f32 %v781, 1.442695
    %v788 = vpow.pop %v787
    %v789 = vmul.f32 %v782, 1.442695
    %v790 = vpow.pop %v789
    %v791 = vadd.f32 %v784, 1.0
    %v792 = vadd.f32 %v786, 1.0
    %v793 = vadd.f32 %v788, 1.0
    %v794 = vadd.f32 %v790, 1.0
    %v795 = vrcp.pop %v791
    %v796 = vmul.f32 1.0, %v795
    %v797 = vrcp.pop %v792
    %v798 = vmul.f32 1.0, %v797
    %v799 = vrcp.pop %v793
    %v800 = vmul.f32 1.0, %v799
    %v801 = vrcp.pop %v794
    %v802 = vmul.f32 1.0, %v801
    %v803 = vmul.f32 %v704, %v796
    %v804 = vmul.f32 %v706, %v798
    %v805 = vmul.f32 %v775, %v800
    %v806 = vmul.f32 %v777, %v802
    %v807 = vld [vmem:[%s9] sm:$0xff]
    %v808 = vld [vmem:[%s10] sm:$0xff]
    %810 = vset.pattern.permute.xlu0 0
    %811 = vperm.xlu0 %810, %v808
    %v812 = vpop.permute.xlu0 %811
    %v815 = vsel %vm633, %v807, 0
    %817 = vmatprep.subr.mxu0 %v97
    %818 = vmatpush1.msra.mxu0 %v96
    %819 = vmatprep.subr.mxu0 0.0
    %820 = vmatpush1.msra.mxu0 0.0
    %821 = vmatprep.subr.mxu0 0.0
    %822 = vmatpush1.msra.mxu0 0.0
    %823 = vmatprep.subr.mxu0 0.0
    %824 = vmatpush1.msra.mxu0 0.0
    %825 = vmatprep.subr.mxu0 0.0
    %826 = vmatpush1.msra.mxu0 0.0
    %827 = vmatprep.subr.mxu0 0.0
    %828 = vmatpush1.msra.mxu0 0.0
    %829 = vmatprep.subr.mxu0 0.0
    %830 = vmatpush1.msra.mxu0 0.0
    %831 = vmatprep.subr.mxu0 0.0
    %832 = vmatpush1.msra.mxu0 0.0
    %833 = vmatprep.subr.mxu0 0.0
    %834 = vmatpush1.msra.mxu0 0.0
    %835 = vmatprep.subr.mxu0 0.0
    %836 = vmatpush1.msra.mxu0 0.0
    %837 = vmatprep.subr.mxu0 0.0
    %838 = vmatpush1.msra.mxu0 0.0
    %839 = vmatprep.subr.mxu0 0.0
    %840 = vmatpush1.msra.mxu0 0.0
    %841 = vmatprep.subr.mxu0 0.0
    %842 = vmatpush1.msra.mxu0 0.0
    %843 = vmatprep.subr.mxu0 0.0
    %844 = vmatpush1.msra.mxu0 0.0
    %845 = vmatprep.subr.mxu0 0.0
    %846 = vmatpush1.msra.mxu0 0.0
    %847 = vmatprep.subr.mxu0 0.0
    %848 = vmatpush1.msra.mxu0 0.0
    %849 = vmatprep.subr.mxu0 0.0
    %850 = vmatpush1.msra.mxu0 0.0
    %851 = vmatprep.subr.mxu0 0.0
    %852 = vmatpush1.msra.mxu0 0.0
    %853 = vmatprep.subr.mxu0 0.0
    %854 = vmatpush1.msra.mxu0 0.0
    %855 = vmatprep.subr.mxu0 0.0
    %856 = vmatpush1.msra.mxu0 0.0
    %857 = vmatprep.subr.mxu0 0.0
    %858 = vmatpush1.msra.mxu0 0.0
    %859 = vmatprep.subr.mxu0 0.0
    %860 = vmatpush1.msra.mxu0 0.0
    %861 = vmatprep.subr.mxu0 0.0
    %862 = vmatpush1.msra.mxu0 0.0
    %863 = vmatprep.subr.mxu0 0.0
    %864 = vmatpush1.msra.mxu0 0.0
    %865 = vmatprep.subr.mxu0 0.0
    %866 = vmatpush1.msra.mxu0 0.0
    %867 = vmatprep.subr.mxu0 0.0
    %868 = vmatpush1.msra.mxu0 0.0
    %869 = vmatprep.subr.mxu0 0.0
    %870 = vmatpush1.msra.mxu0 0.0
    %871 = vmatprep.subr.mxu0 0.0
    %872 = vmatpush1.msra.mxu0 0.0
    %873 = vmatprep.subr.mxu0 0.0
    %874 = vmatpush1.msra.mxu0 0.0
    %875 = vmatprep.subr.mxu0 0.0
    %876 = vmatpush1.msra.mxu0 0.0
    %877 = vmatprep.subr.mxu0 0.0
    %878 = vmatpush1.msra.mxu0 0.0
    %879 = vmatprep.subr.mxu0 0.0
    %880 = vmatpush1.msra.mxu0 0.0
    %881 = vmatprep.mubr.f32.mxu0 0.0
    %882 = vmatmul.mubr.f32.gmra.mrb[0].mxu0 %v815
    %v883 = vpop.f32.mrb[0].mxu0
    %v884 = vadd.f32 %v812, %v883
    %v885 = vpop.f32.mrb[0].mxu0
    %v886 = vadd.f32 %v812, %v885
    %887 = vdwg.mxu0
    %888 = vmatprep.subr.mxu0 %v100
    %889 = vmatpush1.msra.mxu0 %v99
    %890 = vmatprep.subr.mxu0 0.0
    %891 = vmatpush1.msra.mxu0 0.0
    %892 = vmatprep.subr.mxu0 0.0
    %893 = vmatpush1.msra.mxu0 0.0
    %894 = vmatprep.subr.mxu0 0.0
    %895 = vmatpush1.msra.mxu0 0.0
    %896 = vmatprep.subr.mxu0 0.0
    %897 = vmatpush1.msra.mxu0 0.0
    %898 = vmatprep.subr.mxu0 0.0
    %899 = vmatpush1.msra.mxu0 0.0
    %900 = vmatprep.subr.mxu0 0.0
    %901 = vmatpush1.msra.mxu0 0.0
    %902 = vmatprep.subr.mxu0 0.0
    %903 = vmatpush1.msra.mxu0 0.0
    %904 = vmatprep.subr.mxu0 0.0
    %905 = vmatpush1.msra.mxu0 0.0
    %906 = vmatprep.subr.mxu0 0.0
    %907 = vmatpush1.msra.mxu0 0.0
    %908 = vmatprep.subr.mxu0 0.0
    %909 = vmatpush1.msra.mxu0 0.0
    %910 = vmatprep.subr.mxu0 0.0
    %911 = vmatpush1.msra.mxu0 0.0
    %912 = vmatprep.subr.mxu0 0.0
    %913 = vmatpush1.msra.mxu0 0.0
    %914 = vmatprep.subr.mxu0 0.0
    %915 = vmatpush1.msra.mxu0 0.0
    %916 = vmatprep.subr.mxu0 0.0
    %917 = vmatpush1.msra.mxu0 0.0
    %918 = vmatprep.subr.mxu0 0.0
    %919 = vmatpush1.msra.mxu0 0.0
    %920 = vmatprep.subr.mxu0 0.0
    %921 = vmatpush1.msra.mxu0 0.0
    %922 = vmatprep.subr.mxu0 0.0
    %923 = vmatpush1.msra.mxu0 0.0
    %924 = vmatprep.subr.mxu0 0.0
    %925 = vmatpush1.msra.mxu0 0.0
    %926 = vmatprep.subr.mxu0 0.0
    %927 = vmatpush1.msra.mxu0 0.0
    %928 = vmatprep.subr.mxu0 0.0
    %929 = vmatpush1.msra.mxu0 0.0
    %930 = vmatprep.subr.mxu0 0.0
    %931 = vmatpush1.msra.mxu0 0.0
    %932 = vmatprep.subr.mxu0 0.0
    %933 = vmatpush1.msra.mxu0 0.0
    %934 = vmatprep.subr.mxu0 0.0
    %935 = vmatpush1.msra.mxu0 0.0
    %936 = vmatprep.subr.mxu0 0.0
    %937 = vmatpush1.msra.mxu0 0.0
    %938 = vmatprep.subr.mxu0 0.0
    %939 = vmatpush1.msra.mxu0 0.0
    %940 = vmatprep.subr.mxu0 0.0
    %941 = vmatpush1.msra.mxu0 0.0
    %942 = vmatprep.subr.mxu0 0.0
    %943 = vmatpush1.msra.mxu0 0.0
    %944 = vmatprep.subr.mxu0 0.0
    %945 = vmatpush1.msra.mxu0 0.0
    %946 = vmatprep.subr.mxu0 0.0
    %947 = vmatpush1.msra.mxu0 0.0
    %948 = vmatprep.subr.mxu0 0.0
    %949 = vmatpush1.msra.mxu0 0.0
    %950 = vmatprep.subr.mxu0 0.0
    %951 = vmatpush1.msra.mxu0 0.0
    %952 = vmatprep.mubr.f32.mxu0 0.0
    %953 = vmatmul.mubr.f32.gmra.mrb[0].mxu0 %v815
    %v954 = vpop.f32.mrb[0].mxu0
    %v955 = vadd.f32 %v812, %v954
    %v956 = vpop.f32.mrb[0].mxu0
    %v957 = vadd.f32 %v812, %v956
    %958 = vdwg.mxu0
    %v959 = vxor.u32 %v884, 2147483648
    %v960 = vxor.u32 %v886, 2147483648
    %v961 = vxor.u32 %v955, 2147483648
    %v962 = vxor.u32 %v957, 2147483648
    %v963 = vmul.f32 %v959, 1.442695
    %v964 = vpow.pop %v963
    %v965 = vmul.f32 %v960, 1.442695
    %v966 = vpow.pop %v965
    %v967 = vmul.f32 %v961, 1.442695
    %v968 = vpow.pop %v967
    %v969 = vmul.f32 %v962, 1.442695
    %v970 = vpow.pop %v969
    %v971 = vadd.f32 %v964, 1.0
    %v972 = vadd.f32 %v966, 1.0
    %v973 = vadd.f32 %v968, 1.0
    %v974 = vadd.f32 %v970, 1.0
    %v975 = vrcp.pop %v971
    %v976 = vmul.f32 1.0, %v975
    %v977 = vrcp.pop %v972
    %v978 = vmul.f32 1.0, %v977
    %v979 = vrcp.pop %v973
    %v980 = vmul.f32 1.0, %v979
    %v981 = vrcp.pop %v974
    %v982 = vmul.f32 1.0, %v981
    %v983 = vmul.f32 %v884, %v976
    %v984 = vmul.f32 %v886, %v978
    %v985 = vmul.f32 %v955, %v980
    %v986 = vmul.f32 %v957, %v982
    %v987 = vld [vmem:[%s19] sm:$0xff]
    %s988 = scalar_lea.vmem %s19, 8
    %v989 = vld [vmem:[%s988] sm:$0xff]
    %v991 = vsel %vm633, %v989, 0
    %993 = vmatprep.subr.mxu0 %v984
    %994 = vmatpush1.msra.mxu0 %v983
    %995 = vmatprep.subr.mxu0 0.0
    %996 = vmatpush1.msra.mxu0 0.0
    %997 = vmatprep.subr.mxu0 0.0
    %998 = vmatpush1.msra.mxu0 0.0
    %999 = vmatprep.subr.mxu0 0.0
    %1000 = vmatpush1.msra.mxu0 0.0
    %1001 = vmatprep.subr.mxu0 0.0
    %1002 = vmatpush1.msra.mxu0 0.0
    %1003 = vmatprep.subr.mxu0 0.0
    %1004 = vmatpush1.msra.mxu0 0.0
    %1005 = vmatprep.subr.mxu0 0.0
    %1006 = vmatpush1.msra.mxu0 0.0
    %1007 = vmatprep.subr.mxu0 0.0
    %1008 = vmatpush1.msra.mxu0 0.0
    %1009 = vmatprep.subr.mxu0 0.0
    %1010 = vmatpush1.msra.mxu0 0.0
    %1011 = vmatprep.subr.mxu0 0.0
    %1012 = vmatpush1.msra.mxu0 0.0
    %1013 = vmatprep.subr.mxu0 0.0
    %1014 = vmatpush1.msra.mxu0 0.0
    %1015 = vmatprep.subr.mxu0 0.0
    %1016 = vmatpush1.msra.mxu0 0.0
    %1017 = vmatprep.subr.mxu0 0.0
    %1018 = vmatpush1.msra.mxu0 0.0
    %1019 = vmatprep.subr.mxu0 0.0
    %1020 = vmatpush1.msra.mxu0 0.0
    %1021 = vmatprep.subr.mxu0 0.0
    %1022 = vmatpush1.msra.mxu0 0.0
    %1023 = vmatprep.subr.mxu0 0.0
    %1024 = vmatpush1.msra.mxu0 0.0
    %1025 = vmatprep.subr.mxu0 0.0
    %1026 = vmatpush1.msra.mxu0 0.0
    %1027 = vmatprep.subr.mxu0 0.0
    %1028 = vmatpush1.msra.mxu0 0.0
    %1029 = vmatprep.subr.mxu0 0.0
    %1030 = vmatpush1.msra.mxu0 0.0
    %1031 = vmatprep.subr.mxu0 0.0
    %1032 = vmatpush1.msra.mxu0 0.0
    %1033 = vmatprep.subr.mxu0 0.0
    %1034 = vmatpush1.msra.mxu0 0.0
    %1035 = vmatprep.subr.mxu0 0.0
    %1036 = vmatpush1.msra.mxu0 0.0
    %1037 = vmatprep.subr.mxu0 0.0
    %1038 = vmatpush1.msra.mxu0 0.0
    %1039 = vmatprep.subr.mxu0 0.0
    %1040 = vmatpush1.msra.mxu0 0.0
    %1041 = vmatprep.subr.mxu0 0.0
    %1042 = vmatpush1.msra.mxu0 0.0
    %1043 = vmatprep.subr.mxu0 0.0
    %1044 = vmatpush1.msra.mxu0 0.0
    %1045 = vmatprep.subr.mxu0 0.0
    %1046 = vmatpush1.msra.mxu0 0.0
    %1047 = vmatprep.subr.mxu0 0.0
    %1048 = vmatpush1.msra.mxu0 0.0
    %1049 = vmatprep.subr.mxu0 0.0
    %1050 = vmatpush1.msra.mxu0 0.0
    %1051 = vmatprep.subr.mxu0 0.0
    %1052 = vmatpush1.msra.mxu0 0.0
    %1053 = vmatprep.subr.mxu0 0.0
    %1054 = vmatpush1.msra.mxu0 0.0
    %1055 = vmatprep.subr.mxu0 0.0
    %1056 = vmatpush1.msra.mxu0 0.0
    %1057 = vmatprep.mubr.f32.mxu0 0.0
    %1058 = vmatmul.mubr.f32.gmra.mrb[0].mxu0 %v991
    %v1059 = vpop.f32.mrb[0].mxu0
    %v1060 = vadd.f32 0.0, %v1059
    %v1061 = vpop.f32.mrb[0].mxu0
    %v1062 = vadd.f32 0.0, %v1061
    %1063 = vdwg.mxu0
    %1064 = vmatprep.subr.mxu0 %v986
    %1065 = vmatpush1.msra.mxu0 %v985
    %1066 = vmatprep.subr.mxu0 0.0
    %1067 = vmatpush1.msra.mxu0 0.0
    %1068 = vmatprep.subr.mxu0 0.0
    %1069 = vmatpush1.msra.mxu0 0.0
    %1070 = vmatprep.subr.mxu0 0.0
    %1071 = vmatpush1.msra.mxu0 0.0
    %1072 = vmatprep.subr.mxu0 0.0
    %1073 = vmatpush1.msra.mxu0 0.0
    %1074 = vmatprep.subr.mxu0 0.0
    %1075 = vmatpush1.msra.mxu0 0.0
    %1076 = vmatprep.subr.mxu0 0.0
    %1077 = vmatpush1.msra.mxu0 0.0
    %1078 = vmatprep.subr.mxu0 0.0
    %1079 = vmatpush1.msra.mxu0 0.0
    %1080 = vmatprep.subr.mxu0 0.0
    %1081 = vmatpush1.msra.mxu0 0.0
    %1082 = vmatprep.subr.mxu0 0.0
    %1083 = vmatpush1.msra.mxu0 0.0
    %1084 = vmatprep.subr.mxu0 0.0
    %1085 = vmatpush1.msra.mxu0 0.0
    %1086 = vmatprep.subr.mxu0 0.0
    %1087 = vmatpush1.msra.mxu0 0.0
    %1088 = vmatprep.subr.mxu0 0.0
    %1089 = vmatpush1.msra.mxu0 0.0
    %1090 = vmatprep.subr.mxu0 0.0
    %1091 = vmatpush1.msra.mxu0 0.0
    %1092 = vmatprep.subr.mxu0 0.0
    %1093 = vmatpush1.msra.mxu0 0.0
    %1094 = vmatprep.subr.mxu0 0.0
    %1095 = vmatpush1.msra.mxu0 0.0
    %1096 = vmatprep.subr.mxu0 0.0
    %1097 = vmatpush1.msra.mxu0 0.0
    %1098 = vmatprep.subr.mxu0 0.0
    %1099 = vmatpush1.msra.mxu0 0.0
    %1100 = vmatprep.subr.mxu0 0.0
    %1101 = vmatpush1.msra.mxu0 0.0
    %1102 = vmatprep.subr.mxu0 0.0
    %1103 = vmatpush1.msra.mxu0 0.0
    %1104 = vmatprep.subr.mxu0 0.0
    %1105 = vmatpush1.msra.mxu0 0.0
    %1106 = vmatprep.subr.mxu0 0.0
    %1107 = vmatpush1.msra.mxu0 0.0
    %1108 = vmatprep.subr.mxu0 0.0
    %1109 = vmatpush1.msra.mxu0 0.0
    %1110 = vmatprep.subr.mxu0 0.0
    %1111 = vmatpush1.msra.mxu0 0.0
    %1112 = vmatprep.subr.mxu0 0.0
    %1113 = vmatpush1.msra.mxu0 0.0
    %1114 = vmatprep.subr.mxu0 0.0
    %1115 = vmatpush1.msra.mxu0 0.0
    %1116 = vmatprep.subr.mxu0 0.0
    %1117 = vmatpush1.msra.mxu0 0.0
    %1118 = vmatprep.subr.mxu0 0.0
    %1119 = vmatpush1.msra.mxu0 0.0
    %1120 = vmatprep.subr.mxu0 0.0
    %1121 = vmatpush1.msra.mxu0 0.0
    %1122 = vmatprep.subr.mxu0 0.0
    %1123 = vmatpush1.msra.mxu0 0.0
    %1124 = vmatprep.subr.mxu0 0.0
    %1125 = vmatpush1.msra.mxu0 0.0
    %1126 = vmatprep.subr.mxu0 0.0
    %1127 = vmatpush1.msra.mxu0 0.0
    %1128 = vmatprep.mubr.f32.mxu0 0.0
    %1129 = vmatmul.mubr.f32.gmra.mrb[0].mxu0 %v991
    %v1130 = vpop.f32.mrb[0].mxu0
    %v1131 = vadd.f32 0.0, %v1130
    %v1132 = vpop.f32.mrb[0].mxu0
    %v1133 = vadd.f32 0.0, %v1132
    %1134 = vdwg.mxu0
    %v1136 = vsel %vm633, %v987, 0
    %1138 = vmatprep.subr.mxu0 %v804
    %1139 = vmatpush1.msra.mxu0 %v803
    %1140 = vmatprep.subr.mxu0 0.0
    %1141 = vmatpush1.msra.mxu0 0.0
    %1142 = vmatprep.subr.mxu0 0.0
    %1143 = vmatpush1.msra.mxu0 0.0
    %1144 = vmatprep.subr.mxu0 0.0
    %1145 = vmatpush1.msra.mxu0 0.0
    %1146 = vmatprep.subr.mxu0 0.0
    %1147 = vmatpush1.msra.mxu0 0.0
    %1148 = vmatprep.subr.mxu0 0.0
    %1149 = vmatpush1.msra.mxu0 0.0
    %1150 = vmatprep.subr.mxu0 0.0
    %1151 = vmatpush1.msra.mxu0 0.0
    %1152 = vmatprep.subr.mxu0 0.0
    %1153 = vmatpush1.msra.mxu0 0.0
    %1154 = vmatprep.subr.mxu0 0.0
    %1155 = vmatpush1.msra.mxu0 0.0
    %1156 = vmatprep.subr.mxu0 0.0
    %1157 = vmatpush1.msra.mxu0 0.0
    %1158 = vmatprep.subr.mxu0 0.0
    %1159 = vmatpush1.msra.mxu0 0.0
    %1160 = vmatprep.subr.mxu0 0.0
    %1161 = vmatpush1.msra.mxu0 0.0
    %1162 = vmatprep.subr.mxu0 0.0
    %1163 = vmatpush1.msra.mxu0 0.0
    %1164 = vmatprep.subr.mxu0 0.0
    %1165 = vmatpush1.msra.mxu0 0.0
    %1166 = vmatprep.subr.mxu0 0.0
    %1167 = vmatpush1.msra.mxu0 0.0
    %1168 = vmatprep.subr.mxu0 0.0
    %1169 = vmatpush1.msra.mxu0 0.0
    %1170 = vmatprep.subr.mxu0 0.0
    %1171 = vmatpush1.msra.mxu0 0.0
    %1172 = vmatprep.subr.mxu0 0.0
    %1173 = vmatpush1.msra.mxu0 0.0
    %1174 = vmatprep.subr.mxu0 0.0
    %1175 = vmatpush1.msra.mxu0 0.0
    %1176 = vmatprep.subr.mxu0 0.0
    %1177 = vmatpush1.msra.mxu0 0.0
    %1178 = vmatprep.subr.mxu0 0.0
    %1179 = vmatpush1.msra.mxu0 0.0
    %1180 = vmatprep.subr.mxu0 0.0
    %1181 = vmatpush1.msra.mxu0 0.0
    %1182 = vmatprep.subr.mxu0 0.0
    %1183 = vmatpush1.msra.mxu0 0.0
    %1184 = vmatprep.subr.mxu0 0.0
    %1185 = vmatpush1.msra.mxu0 0.0
    %1186 = vmatprep.subr.mxu0 0.0
    %1187 = vmatpush1.msra.mxu0 0.0
    %1188 = vmatprep.subr.mxu0 0.0
    %1189 = vmatpush1.msra.mxu0 0.0
    %1190 = vmatprep.subr.mxu0 0.0
    %1191 = vmatpush1.msra.mxu0 0.0
    %1192 = vmatprep.subr.mxu0 0.0
    %1193 = vmatpush1.msra.mxu0 0.0
    %1194 = vmatprep.subr.mxu0 0.0
    %1195 = vmatpush1.msra.mxu0 0.0
    %1196 = vmatprep.subr.mxu0 0.0
    %1197 = vmatpush1.msra.mxu0 0.0
    %1198 = vmatprep.subr.mxu0 0.0
    %1199 = vmatpush1.msra.mxu0 0.0
    %1200 = vmatprep.subr.mxu0 0.0
    %1201 = vmatpush1.msra.mxu0 0.0
    %1202 = vmatprep.mubr.f32.mxu0 0.0
    %1203 = vmatmul.mubr.f32.gmra.mrb[0].mxu0 %v1136
    %v1204 = vpop.f32.mrb[0].mxu0
    %v1205 = vadd.f32 %v1060, %v1204
    %v1206 = vpop.f32.mrb[0].mxu0
    %v1207 = vadd.f32 %v1062, %v1206
    %1208 = vdwg.mxu0
    %1209 = vmatprep.subr.mxu0 %v806
    %1210 = vmatpush1.msra.mxu0 %v805
    %1211 = vmatprep.subr.mxu0 0.0
    %1212 = vmatpush1.msra.mxu0 0.0
    %1213 = vmatprep.subr.mxu0 0.0
    %1214 = vmatpush1.msra.mxu0 0.0
    %1215 = vmatprep.subr.mxu0 0.0
    %1216 = vmatpush1.msra.mxu0 0.0
    %1217 = vmatprep.subr.mxu0 0.0
    %1218 = vmatpush1.msra.mxu0 0.0
    %1219 = vmatprep.subr.mxu0 0.0
    %1220 = vmatpush1.msra.mxu0 0.0
    %1221 = vmatprep.subr.mxu0 0.0
    %1222 = vmatpush1.msra.mxu0 0.0
    %1223 = vmatprep.subr.mxu0 0.0
    %1224 = vmatpush1.msra.mxu0 0.0
    %1225 = vmatprep.subr.mxu0 0.0
    %1226 = vmatpush1.msra.mxu0 0.0
    %1227 = vmatprep.subr.mxu0 0.0
    %1228 = vmatpush1.msra.mxu0 0.0
    %1229 = vmatprep.subr.mxu0 0.0
    %1230 = vmatpush1.msra.mxu0 0.0
    %1231 = vmatprep.subr.mxu0 0.0
    %1232 = vmatpush1.msra.mxu0 0.0
    %1233 = vmatprep.subr.mxu0 0.0
    %1234 = vmatpush1.msra.mxu0 0.0
    %1235 = vmatprep.subr.mxu0 0.0
    %1236 = vmatpush1.msra.mxu0 0.0
    %1237 = vmatprep.subr.mxu0 0.0
    %1238 = vmatpush1.msra.mxu0 0.0
    %1239 = vmatprep.subr.mxu0 0.0
    %1240 = vmatpush1.msra.mxu0 0.0
    %1241 = vmatprep.subr.mxu0 0.0
    %1242 = vmatpush1.msra.mxu0 0.0
    %1243 = vmatprep.subr.mxu0 0.0
    %1244 = vmatpush1.msra.mxu0 0.0
    %1245 = vmatprep.subr.mxu0 0.0
    %1246 = vmatpush1.msra.mxu0 0.0
    %1247 = vmatprep.subr.mxu0 0.0
    %1248 = vmatpush1.msra.mxu0 0.0
    %1249 = vmatprep.subr.mxu0 0.0
    %1250 = vmatpush1.msra.mxu0 0.0
    %1251 = vmatprep.subr.mxu0 0.0
    %1252 = vmatpush1.msra.mxu0 0.0
    %1253 = vmatprep.subr.mxu0 0.0
    %1254 = vmatpush1.msra.mxu0 0.0
    %1255 = vmatprep.subr.mxu0 0.0
    %1256 = vmatpush1.msra.mxu0 0.0
    %1257 = vmatprep.subr.mxu0 0.0
    %1258 = vmatpush1.msra.mxu0 0.0
    %1259 = vmatprep.subr.mxu0 0.0
    %1260 = vmatpush1.msra.mxu0 0.0
    %1261 = vmatprep.subr.mxu0 0.0
    %1262 = vmatpush1.msra.mxu0 0.0
    %1263 = vmatprep.subr.mxu0 0.0
    %1264 = vmatpush1.msra.mxu0 0.0
    %1265 = vmatprep.subr.mxu0 0.0
    %1266 = vmatpush1.msra.mxu0 0.0
    %1267 = vmatprep.subr.mxu0 0.0
    %1268 = vmatpush1.msra.mxu0 0.0
    %1269 = vmatprep.subr.mxu0 0.0
    %1270 = vmatpush1.msra.mxu0 0.0
    %1271 = vmatprep.subr.mxu0 0.0
    %1272 = vmatpush1.msra.mxu0 0.0
    %1273 = vmatprep.mubr.f32.mxu0 0.0
    %1274 = vmatmul.mubr.f32.gmra.mrb[0].mxu0 %v1136
    %v1275 = vpop.f32.mrb[0].mxu0
    %v1276 = vadd.f32 %v1131, %v1275
    %v1277 = vpop.f32.mrb[0].mxu0
    %v1278 = vadd.f32 %v1133, %v1277
    %1279 = vdwg.mxu0
    %v1280 = vld [vmem:[%s11] sm:$0xff]
    %v1281 = vld [vmem:[%s11 + $0x8] sm:$0xff]
    %v1282 = vld [vmem:[%s11 + $0x10] sm:$0xff]
    %v1283 = vld [vmem:[%s11 + $0x18] sm:$0xff]
    %v1284 = vld [vmem:[%s11 + $0x20] sm:$0xff]
    %v1285 = vld [vmem:[%s12] sm:$0xff]
    %v1286 = vld [vmem:[%s12 + $0x8] sm:$0xff]
    %v1287 = vld [vmem:[%s12 + $0x10] sm:$0xff]
    %v1288 = vld [vmem:[%s12 + $0x18] sm:$0xff]
    %v1289 = vld [vmem:[%s12 + $0x20] sm:$0xff]
    %1291 = vset.pattern.permute.xlu0 0
    %1292 = vperm.xlu0 %1291, %v1285
    %v1293 = vpop.permute.xlu0 %1292
    %1296 = vset.pattern.permute.xlu0 0
    %1297 = vperm.xlu0 %1296, %v1286
    %v1298 = vpop.permute.xlu0 %1297
    %1301 = vset.pattern.permute.xlu0 0
    %1302 = vperm.xlu0 %1301, %v1287
    %v1303 = vpop.permute.xlu0 %1302
    %1306 = vset.pattern.permute.xlu0 0
    %1307 = vperm.xlu0 %1306, %v1288
    %v1308 = vpop.permute.xlu0 %1307
    %1311 = vset.pattern.permute.xlu0 0
    %1312 = vperm.xlu0 %1311, %v1289
    %v1313 = vpop.permute.xlu0 %1312
    %v1316 = vsel %vm633, %v1280, 0
    %v1319 = vsel %vm633, %v1281, 0
    %v1322 = vsel %vm633, %v1282, 0
    %v1325 = vsel %vm633, %v1283, 0
    %v1328 = vsel %vm633, %v1284, 0
    %1330 = vmatprep.subr.mxu0 %v984
    %1331 = vmatpush1.msra.mxu0 %v983
    %1332 = vmatprep.subr.mxu0 0.0
    %1333 = vmatpush1.msra.mxu0 0.0
    %1334 = vmatprep.subr.mxu0 0.0
    %1335 = vmatpush1.msra.mxu0 0.0
    %1336 = vmatprep.subr.mxu0 0.0
    %1337 = vmatpush1.msra.mxu0 0.0
    %1338 = vmatprep.subr.mxu0 0.0
    %1339 = vmatpush1.msra.mxu0 0.0
    %1340 = vmatprep.subr.mxu0 0.0
    %1341 = vmatpush1.msra.mxu0 0.0
    %1342 = vmatprep.subr.mxu0 0.0
    %1343 = vmatpush1.msra.mxu0 0.0
    %1344 = vmatprep.subr.mxu0 0.0
    %1345 = vmatpush1.msra.mxu0 0.0
    %1346 = vmatprep.subr.mxu0 0.0
    %1347 = vmatpush1.msra.mxu0 0.0
    %1348 = vmatprep.subr.mxu0 0.0
    %1349 = vmatpush1.msra.mxu0 0.0
    %1350 = vmatprep.subr.mxu0 0.0
    %1351 = vmatpush1.msra.mxu0 0.0
    %1352 = vmatprep.subr.mxu0 0.0
    %1353 = vmatpush1.msra.mxu0 0.0
    %1354 = vmatprep.subr.mxu0 0.0
    %1355 = vmatpush1.msra.mxu0 0.0
    %1356 = vmatprep.subr.mxu0 0.0
    %1357 = vmatpush1.msra.mxu0 0.0
    %1358 = vmatprep.subr.mxu0 0.0
    %1359 = vmatpush1.msra.mxu0 0.0
    %1360 = vmatprep.subr.mxu0 0.0
    %1361 = vmatpush1.msra.mxu0 0.0
    %1362 = vmatprep.subr.mxu0 0.0
    %1363 = vmatpush1.msra.mxu0 0.0
    %1364 = vmatprep.subr.mxu0 0.0
    %1365 = vmatpush1.msra.mxu0 0.0
    %1366 = vmatprep.subr.mxu0 0.0
    %1367 = vmatpush1.msra.mxu0 0.0
    %1368 = vmatprep.subr.mxu0 0.0
    %1369 = vmatpush1.msra.mxu0 0.0
    %1370 = vmatprep.subr.mxu0 0.0
    %1371 = vmatpush1.msra.mxu0 0.0
    %1372 = vmatprep.subr.mxu0 0.0
    %1373 = vmatpush1.msra.mxu0 0.0
    %1374 = vmatprep.subr.mxu0 0.0
    %1375 = vmatpush1.msra.mxu0 0.0
    %1376 = vmatprep.subr.mxu0 0.0
    %1377 = vmatpush1.msra.mxu0 0.0
    %1378 = vmatprep.subr.mxu0 0.0
    %1379 = vmatpush1.msra.mxu0 0.0
    %1380 = vmatprep.subr.mxu0 0.0
    %1381 = vmatpush1.msra.mxu0 0.0
    %1382 = vmatprep.subr.mxu0 0.0
    %1383 = vmatpush1.msra.mxu0 0.0
    %1384 = vmatprep.subr.mxu0 0.0
    %1385 = vmatpush1.msra.mxu0 0.0
    %1386 = vmatprep.subr.mxu0 0.0
    %1387 = vmatpush1.msra.mxu0 0.0
    %1388 = vmatprep.subr.mxu0 0.0
    %1389 = vmatpush1.msra.mxu0 0.0
    %1390 = vmatprep.subr.mxu0 0.0
    %1391 = vmatpush1.msra.mxu0 0.0
    %1392 = vmatprep.subr.mxu0 0.0
    %1393 = vmatpush1.msra.mxu0 0.0
    %1394 = vmatprep.mubr.f32.mxu0 0.0
    %1395 = vmatmul.mubr.f32.gmra.mrb[0].mxu0 %v1316
    %v1396 = vpop.f32.mrb[0].mxu0
    %v1397 = vadd.f32 %v1293, %v1396
    %v1398 = vpop.f32.mrb[0].mxu0
    %v1399 = vadd.f32 %v1293, %v1398
    %1400 = vmatprep.mubr.f32.mxu0 0.0
    %1401 = vmatmul.mubr.f32.gmra.mrb[0].mxu0 %v1319
    %v1402 = vpop.f32.mrb[0].mxu0
    %v1403 = vadd.f32 %v1298, %v1402
    %v1404 = vpop.f32.mrb[0].mxu0
    %v1405 = vadd.f32 %v1298, %v1404
    %1406 = vmatprep.mubr.f32.mxu0 0.0
    %1407 = vmatmul.mubr.f32.gmra.mrb[0].mxu0 %v1322
    %v1408 = vpop.f32.mrb[0].mxu0
    %v1409 = vadd.f32 %v1303, %v1408
    %v1410 = vpop.f32.mrb[0].mxu0
    %v1411 = vadd.f32 %v1303, %v1410
    %1412 = vmatprep.mubr.f32.mxu0 0.0
    %1413 = vmatmul.mubr.f32.gmra.mrb[0].mxu0 %v1325
    %v1414 = vpop.f32.mrb[0].mxu0
    %v1415 = vadd.f32 %v1308, %v1414
    %v1416 = vpop.f32.mrb[0].mxu0
    %v1417 = vadd.f32 %v1308, %v1416
    %1418 = vmatprep.mubr.f32.mxu0 0.0
    %1419 = vmatmul.mubr.f32.gmra.mrb[0].mxu0 %v1328
    %v1420 = vpop.f32.mrb[0].mxu0
    %v1421 = vadd.f32 %v1313, %v1420
    %v1422 = vpop.f32.mrb[0].mxu0
    %v1423 = vadd.f32 %v1313, %v1422
    %1424 = vdwg.mxu0
    %1425 = vmatprep.subr.mxu0 %v986
    %1426 = vmatpush1.msra.mxu0 %v985
    %1427 = vmatprep.subr.mxu0 0.0
    %1428 = vmatpush1.msra.mxu0 0.0
    %1429 = vmatprep.subr.mxu0 0.0
    %1430 = vmatpush1.msra.mxu0 0.0
    %1431 = vmatprep.subr.mxu0 0.0
    %1432 = vmatpush1.msra.mxu0 0.0
    %1433 = vmatprep.subr.mxu0 0.0
    %1434 = vmatpush1.msra.mxu0 0.0
    %1435 = vmatprep.subr.mxu0 0.0
    %1436 = vmatpush1.msra.mxu0 0.0
    %1437 = vmatprep.subr.mxu0 0.0
    %1438 = vmatpush1.msra.mxu0 0.0
    %1439 = vmatprep.subr.mxu0 0.0
    %1440 = vmatpush1.msra.mxu0 0.0
    %1441 = vmatprep.subr.mxu0 0.0
    %1442 = vmatpush1.msra.mxu0 0.0
    %1443 = vmatprep.subr.mxu0 0.0
    %1444 = vmatpush1.msra.mxu0 0.0
    %1445 = vmatprep.subr.mxu0 0.0
    %1446 = vmatpush1.msra.mxu0 0.0
    %1447 = vmatprep.subr.mxu0 0.0
    %1448 = vmatpush1.msra.mxu0 0.0
    %1449 = vmatprep.subr.mxu0 0.0
    %1450 = vmatpush1.msra.mxu0 0.0
    %1451 = vmatprep.subr.mxu0 0.0
    %1452 = vmatpush1.msra.mxu0 0.0
    %1453 = vmatprep.subr.mxu0 0.0
    %1454 = vmatpush1.msra.mxu0 0.0
    %1455 = vmatprep.subr.mxu0 0.0
    %1456 = vmatpush1.msra.mxu0 0.0
    %1457 = vmatprep.subr.mxu0 0.0
    %1458 = vmatpush1.msra.mxu0 0.0
    %1459 = vmatprep.subr.mxu0 0.0
    %1460 = vmatpush1.msra.mxu0 0.0
    %1461 = vmatprep.subr.mxu0 0.0
    %1462 = vmatpush1.msra.mxu0 0.0
    %1463 = vmatprep.subr.mxu0 0.0
    %1464 = vmatpush1.msra.mxu0 0.0
    %1465 = vmatprep.subr.mxu0 0.0
    %1466 = vmatpush1.msra.mxu0 0.0
    %1467 = vmatprep.subr.mxu0 0.0
    %1468 = vmatpush1.msra.mxu0 0.0
    %1469 = vmatprep.subr.mxu0 0.0
    %1470 = vmatpush1.msra.mxu0 0.0
    %1471 = vmatprep.subr.mxu0 0.0
    %1472 = vmatpush1.msra.mxu0 0.0
    %1473 = vmatprep.subr.mxu0 0.0
    %1474 = vmatpush1.msra.mxu0 0.0
    %1475 = vmatprep.subr.mxu0 0.0
    %1476 = vmatpush1.msra.mxu0 0.0
    %1477 = vmatprep.subr.mxu0 0.0
    %1478 = vmatpush1.msra.mxu0 0.0
    %1479 = vmatprep.subr.mxu0 0.0
    %1480 = vmatpush1.msra.mxu0 0.0
    %1481 = vmatprep.subr.mxu0 0.0
    %1482 = vmatpush1.msra.mxu0 0.0
    %1483 = vmatprep.subr.mxu0 0.0
    %1484 = vmatpush1.msra.mxu0 0.0
    %1485 = vmatprep.subr.mxu0 0.0
    %1486 = vmatpush1.msra.mxu0 0.0
    %1487 = vmatprep.subr.mxu0 0.0
    %1488 = vmatpush1.msra.mxu0 0.0
    %1489 = vmatprep.mubr.f32.mxu0 0.0
    %1490 = vmatmul.mubr.f32.gmra.mrb[0].mxu0 %v1316
    %v1491 = vpop.f32.mrb[0].mxu0
    %v1492 = vadd.f32 %v1293, %v1491
    %v1493 = vpop.f32.mrb[0].mxu0
    %v1494 = vadd.f32 %v1293, %v1493
    %1495 = vmatprep.mubr.f32.mxu0 0.0
    %1496 = vmatmul.mubr.f32.gmra.mrb[0].mxu0 %v1319
    %v1497 = vpop.f32.mrb[0].mxu0
    %v1498 = vadd.f32 %v1298, %v1497
    %v1499 = vpop.f32.mrb[0].mxu0
    %v1500 = vadd.f32 %v1298, %v1499
    %1501 = vmatprep.mubr.f32.mxu0 0.0
    %1502 = vmatmul.mubr.f32.gmra.mrb[0].mxu0 %v1322
    %v1503 = vpop.f32.mrb[0].mxu0
    %v1504 = vadd.f32 %v1303, %v1503
    %v1505 = vpop.f32.mrb[0].mxu0
    %v1506 = vadd.f32 %v1303, %v1505
    %1507 = vmatprep.mubr.f32.mxu0 0.0
    %1508 = vmatmul.mubr.f32.gmra.mrb[0].mxu0 %v1325
    %v1509 = vpop.f32.mrb[0].mxu0
    %v1510 = vadd.f32 %v1308, %v1509
    %v1511 = vpop.f32.mrb[0].mxu0
    %v1512 = vadd.f32 %v1308, %v1511
    %1513 = vmatprep.mubr.f32.mxu0 0.0
    %1514 = vmatmul.mubr.f32.gmra.mrb[0].mxu0 %v1328
    %v1515 = vpop.f32.mrb[0].mxu0
    %v1516 = vadd.f32 %v1313, %v1515
    %v1517 = vpop.f32.mrb[0].mxu0
    %v1518 = vadd.f32 %v1313, %v1517
    %1519 = vdwg.mxu0
    %v1520 = vxor.u32 %v1397, 2147483648
    %v1521 = vxor.u32 %v1399, 2147483648
    %v1522 = vxor.u32 %v1492, 2147483648
    %v1523 = vxor.u32 %v1494, 2147483648
    %v1524 = vxor.u32 %v1403, 2147483648
    %v1525 = vxor.u32 %v1405, 2147483648
    %v1526 = vxor.u32 %v1498, 2147483648
    %v1527 = vxor.u32 %v1500, 2147483648
    %v1528 = vxor.u32 %v1409, 2147483648
    %v1529 = vxor.u32 %v1411, 2147483648
    %v1530 = vxor.u32 %v1504, 2147483648
    %v1531 = vxor.u32 %v1506, 2147483648
    %v1532 = vxor.u32 %v1415, 2147483648
    %v1533 = vxor.u32 %v1417, 2147483648
    %v1534 = vxor.u32 %v1510, 2147483648
    %v1535 = vxor.u32 %v1512, 2147483648
    %v1536 = vxor.u32 %v1421, 2147483648
    %v1537 = vxor.u32 %v1423, 2147483648
    %v1538 = vxor.u32 %v1516, 2147483648
    %v1539 = vxor.u32 %v1518, 2147483648
    %v1540 = vmul.f32 %v1520, 1.442695
    %v1541 = vpow.pop %v1540
    %v1542 = vmul.f32 %v1521, 1.442695
    %v1543 = vpow.pop %v1542
    %v1544 = vmul.f32 %v1522, 1.442695
    %v1545 = vpow.pop %v1544
    %v1546 = vmul.f32 %v1523, 1.442695
    %v1547 = vpow.pop %v1546
    %v1548 = vmul.f32 %v1524, 1.442695
    %v1549 = vpow.pop %v1548
    %v1550 = vmul.f32 %v1525, 1.442695
    %v1551 = vpow.pop %v1550
    %v1552 = vmul.f32 %v1526, 1.442695
    %v1553 = vpow.pop %v1552
    %v1554 = vmul.f32 %v1527, 1.442695
    %v1555 = vpow.pop %v1554
    %v1556 = vmul.f32 %v1528, 1.442695
    %v1557 = vpow.pop %v1556
    %v1558 = vmul.f32 %v1529, 1.442695
    %v1559 = vpow.pop %v1558
    %v1560 = vmul.f32 %v1530, 1.442695
    %v1561 = vpow.pop %v1560
    %v1562 = vmul.f32 %v1531, 1.442695
    %v1563 = vpow.pop %v1562
    %v1564 = vmul.f32 %v1532, 1.442695
    %v1565 = vpow.pop %v1564
    %v1566 = vmul.f32 %v1533, 1.442695
    %v1567 = vpow.pop %v1566
    %v1568 = vmul.f32 %v1534, 1.442695
    %v1569 = vpow.pop %v1568
    %v1570 = vmul.f32 %v1535, 1.442695
    %v1571 = vpow.pop %v1570
    %v1572 = vmul.f32 %v1536, 1.442695
    %v1573 = vpow.pop %v1572
    %v1574 = vmul.f32 %v1537, 1.442695
    %v1575 = vpow.pop %v1574
    %v1576 = vmul.f32 %v1538, 1.442695
    %v1577 = vpow.pop %v1576
    %v1578 = vmul.f32 %v1539, 1.442695
    %v1579 = vpow.pop %v1578
    %v1580 = vadd.f32 %v1541, 1.0
    %v1581 = vadd.f32 %v1543, 1.0
    %v1582 = vadd.f32 %v1545, 1.0
    %v1583 = vadd.f32 %v1547, 1.0
    %v1584 = vadd.f32 %v1549, 1.0
    %v1585 = vadd.f32 %v1551, 1.0
    %v1586 = vadd.f32 %v1553, 1.0
    %v1587 = vadd.f32 %v1555, 1.0
    %v1588 = vadd.f32 %v1557, 1.0
    %v1589 = vadd.f32 %v1559, 1.0
    %v1590 = vadd.f32 %v1561, 1.0
    %v1591 = vadd.f32 %v1563, 1.0
    %v1592 = vadd.f32 %v1565, 1.0
    %v1593 = vadd.f32 %v1567, 1.0
    %v1594 = vadd.f32 %v1569, 1.0
    %v1595 = vadd.f32 %v1571, 1.0
    %v1596 = vadd.f32 %v1573, 1.0
    %v1597 = vadd.f32 %v1575, 1.0
    %v1598 = vadd.f32 %v1577, 1.0
    %v1599 = vadd.f32 %v1579, 1.0
    %v1600 = vrcp.pop %v1580
    %v1601 = vmul.f32 1.0, %v1600
    %v1602 = vrcp.pop %v1581
    %v1603 = vmul.f32 1.0, %v1602
    %v1604 = vrcp.pop %v1582
    %v1605 = vmul.f32 1.0, %v1604
    %v1606 = vrcp.pop %v1583
    %v1607 = vmul.f32 1.0, %v1606
    %v1608 = vrcp.pop %v1584
    %v1609 = vmul.f32 1.0, %v1608
    %v1610 = vrcp.pop %v1585
    %v1611 = vmul.f32 1.0, %v1610
    %v1612 = vrcp.pop %v1586
    %v1613 = vmul.f32 1.0, %v1612
    %v1614 = vrcp.pop %v1587
    %v1615 = vmul.f32 1.0, %v1614
    %v1616 = vrcp.pop %v1588
    %v1617 = vmul.f32 1.0, %v1616
    %v1618 = vrcp.pop %v1589
    %v1619 = vmul.f32 1.0, %v1618
    %v1620 = vrcp.pop %v1590
    %v1621 = vmul.f32 1.0, %v1620
    %v1622 = vrcp.pop %v1591
    %v1623 = vmul.f32 1.0, %v1622
    %v1624 = vrcp.pop %v1592
    %v1625 = vmul.f32 1.0, %v1624
    %v1626 = vrcp.pop %v1593
    %v1627 = vmul.f32 1.0, %v1626
    %v1628 = vrcp.pop %v1594
    %v1629 = vmul.f32 1.0, %v1628
    %v1630 = vrcp.pop %v1595
    %v1631 = vmul.f32 1.0, %v1630
    %v1632 = vrcp.pop %v1596
    %v1633 = vmul.f32 1.0, %v1632
    %v1634 = vrcp.pop %v1597
    %v1635 = vmul.f32 1.0, %v1634
    %v1636 = vrcp.pop %v1598
    %v1637 = vmul.f32 1.0, %v1636
    %v1638 = vrcp.pop %v1599
    %v1639 = vmul.f32 1.0, %v1638
    %v1640 = vmul.f32 %v1397, %v1601
    %v1641 = vmul.f32 %v1399, %v1603
    %v1642 = vmul.f32 %v1492, %v1605
    %v1643 = vmul.f32 %v1494, %v1607
    %v1644 = vmul.f32 %v1403, %v1609
    %v1645 = vmul.f32 %v1405, %v1611
    %v1646 = vmul.f32 %v1498, %v1613
    %v1647 = vmul.f32 %v1500, %v1615
    %v1648 = vmul.f32 %v1409, %v1617
    %v1649 = vmul.f32 %v1411, %v1619
    %v1650 = vmul.f32 %v1504, %v1621
    %v1651 = vmul.f32 %v1506, %v1623
    %v1652 = vmul.f32 %v1415, %v1625
    %v1653 = vmul.f32 %v1417, %v1627
    %v1654 = vmul.f32 %v1510, %v1629
    %v1655 = vmul.f32 %v1512, %v1631
    %v1656 = vmul.f32 %v1421, %v1633
    %v1657 = vmul.f32 %v1423, %v1635
    %v1658 = vmul.f32 %v1516, %v1637
    %v1659 = vmul.f32 %v1518, %v1639
    %vm1660 = vcmask 1040384
    %v1661 = vsel %vm1660, %v1640, -inf
    %v1662 = vsel %vm1660, %v1641, -inf
    %v1663 = vsel %vm1660, %v1642, -inf
    %v1664 = vsel %vm1660, %v1643, -inf
    %v1665 = vmax.f32 %v1661, %v1662
    %v1666 = vmax.f32 %v1663, %v1664
    %v1667 = vmax.f32 %v1665, %v1666
    %1668 = vmax.xlane.f32.xlu0 %v1667
    %v1669 = vpop.xlane.xlu0 %1668
    %v1670 = vsub.f32 %v1640, %v1669
    %v1671 = vsub.f32 %v1641, %v1669
    %v1672 = vsub.f32 %v1642, %v1669
    %v1673 = vsub.f32 %v1643, %v1669
    %v1674 = vmul.f32 %v1670, 1.442695
    %v1675 = vpow.pop %v1674
    %v1676 = vmul.f32 %v1671, 1.442695
    %v1677 = vpow.pop %v1676
    %v1678 = vmul.f32 %v1672, 1.442695
    %v1679 = vpow.pop %v1678
    %v1680 = vmul.f32 %v1673, 1.442695
    %v1681 = vpow.pop %v1680
    %v1682 = vlaneseq
    %v1683 = vshrl.u32 %v1682, 7
    %v1684 = vsub.s32 0, %v1683
    %v1685 = vrot.slane %v1675, %v1684
    %v1686 = vlaneseq
    %v1687 = vshrl.u32 %v1686, 7
    %v1688 = vsub.s32 0, %v1687
    %v1689 = vrot.slane %v1677, %v1688
    %v1690 = vlaneseq
    %v1691 = vshrl.u32 %v1690, 7
    %v1692 = vsub.s32 0, %v1691
    %v1693 = vrot.slane %v1679, %v1692
    %v1694 = vlaneseq
    %v1695 = vshrl.u32 %v1694, 7
    %v1696 = vsub.s32 0, %v1695
    %v1697 = vrot.slane %v1681, %v1696
    %v1698 = vmul.f32 %v1644, %v1685
    %v1699 = vmul.f32 %v1645, %v1689
    %v1700 = vmul.f32 %v1646, %v1693
    %v1701 = vmul.f32 %v1647, %v1697
    %v1702 = vmul.f32 %v625, %v1685
    %v1703 = vmul.f32 %v625, %v1689
    %v1704 = vmul.f32 %v625, %v1693
    %v1705 = vmul.f32 %v625, %v1697
    %v1706 = vadd.f32 %v1698, %v1702
    %v1707 = vadd.f32 %v1699, %v1703
    %v1708 = vadd.f32 %v1700, %v1704
    %v1709 = vadd.f32 %v1701, %v1705
    %1710 = vmatprep.subr.mxu0 %v102
    %1711 = vmatpush1.msra.mxu0 %v101
    %1712 = vmatprep.subr.mxu0 %v106
    %1713 = vmatpush1.msra.mxu0 %v105
    %1714 = vmatprep.subr.mxu0 %v110
    %1715 = vmatpush1.msra.mxu0 %v109
    %1716 = vmatprep.subr.mxu0 %v114
    %1717 = vmatpush1.msra.mxu0 %v113
    %1718 = vmatprep.subr.mxu0 %v118
    %1719 = vmatpush1.msra.mxu0 %v117
    %1720 = vmatprep.subr.mxu0 %v122
    %1721 = vmatpush1.msra.mxu0 %v121
    %1722 = vmatprep.subr.mxu0 %v126
    %1723 = vmatpush1.msra.mxu0 %v125
    %1724 = vmatprep.subr.mxu0 %v130
    %1725 = vmatpush1.msra.mxu0 %v129
    %1726 = vmatprep.subr.mxu0 %v134
    %1727 = vmatpush1.msra.mxu0 %v133
    %1728 = vmatprep.subr.mxu0 %v138
    %1729 = vmatpush1.msra.mxu0 %v137
    %1730 = vmatprep.subr.mxu0 %v142
    %1731 = vmatpush1.msra.mxu0 %v141
    %1732 = vmatprep.subr.mxu0 %v146
    %1733 = vmatpush1.msra.mxu0 %v145
    %1734 = vmatprep.subr.mxu0 %v150
    %1735 = vmatpush1.msra.mxu0 %v149
    %1736 = vmatprep.subr.mxu0 %v154
    %1737 = vmatpush1.msra.mxu0 %v153
    %1738 = vmatprep.subr.mxu0 %v158
    %1739 = vmatpush1.msra.mxu0 %v157
    %1740 = vmatprep.subr.mxu0 %v162
    %1741 = vmatpush1.msra.mxu0 %v161
    %1742 = vmatprep.subr.mxu0 %v166
    %1743 = vmatpush1.msra.mxu0 %v165
    %1744 = vmatprep.subr.mxu0 %v170
    %1745 = vmatpush1.msra.mxu0 %v169
    %1746 = vmatprep.subr.mxu0 %v174
    %1747 = vmatpush1.msra.mxu0 %v173
    %1748 = vmatprep.subr.mxu0 %v178
    %1749 = vmatpush1.msra.mxu0 %v177
    %1750 = vmatprep.subr.mxu0 %v182
    %1751 = vmatpush1.msra.mxu0 %v181
    %1752 = vmatprep.subr.mxu0 %v186
    %1753 = vmatpush1.msra.mxu0 %v185
    %1754 = vmatprep.subr.mxu0 %v190
    %1755 = vmatpush1.msra.mxu0 %v189
    %1756 = vmatprep.subr.mxu0 %v194
    %1757 = vmatpush1.msra.mxu0 %v193
    %1758 = vmatprep.subr.mxu0 %v198
    %1759 = vmatpush1.msra.mxu0 %v197
    %1760 = vmatprep.subr.mxu0 %v202
    %1761 = vmatpush1.msra.mxu0 %v201
    %1762 = vmatprep.subr.mxu0 %v206
    %1763 = vmatpush1.msra.mxu0 %v205
    %1764 = vmatprep.subr.mxu0 %v210
    %1765 = vmatpush1.msra.mxu0 %v209
    %1766 = vmatprep.subr.mxu0 %v214
    %1767 = vmatpush1.msra.mxu0 %v213
    %1768 = vmatprep.subr.mxu0 %v218
    %1769 = vmatpush1.msra.mxu0 %v217
    %1770 = vmatprep.subr.mxu0 %v222
    %1771 = vmatpush1.msra.mxu0 %v221
    %1772 = vmatprep.subr.mxu0 %v226
    %1773 = vmatpush1.msra.mxu0 %v225
    %1774 = vmatprep.mubr.f32.mxu0 %v1707
    %1775 = vmatmul.mubr.f32.gmra.mrb[0].mxu0 %v1706
    %v1776 = vpop.f32.mrb[0].mxu0
    %v1777 = vadd.f32 0.0, %v1776
    %v1778 = vpop.f32.mrb[0].mxu0
    %v1779 = vadd.f32 0.0, %v1778
    %1780 = vdwg.mxu0
    %1781 = vmatprep.subr.mxu0 %v230
    %1782 = vmatpush1.msra.mxu0 %v229
    %1783 = vmatprep.subr.mxu0 %v234
    %1784 = vmatpush1.msra.mxu0 %v233
    %1785 = vmatprep.subr.mxu0 %v238
    %1786 = vmatpush1.msra.mxu0 %v237
    %1787 = vmatprep.subr.mxu0 %v242
    %1788 = vmatpush1.msra.mxu0 %v241
    %1789 = vmatprep.subr.mxu0 %v246
    %1790 = vmatpush1.msra.mxu0 %v245
    %1791 = vmatprep.subr.mxu0 %v250
    %1792 = vmatpush1.msra.mxu0 %v249
    %1793 = vmatprep.subr.mxu0 %v254
    %1794 = vmatpush1.msra.mxu0 %v253
    %1795 = vmatprep.subr.mxu0 %v258
    %1796 = vmatpush1.msra.mxu0 %v257
    %1797 = vmatprep.subr.mxu0 %v262
    %1798 = vmatpush1.msra.mxu0 %v261
    %1799 = vmatprep.subr.mxu0 %v266
    %1800 = vmatpush1.msra.mxu0 %v265
    %1801 = vmatprep.subr.mxu0 %v270
    %1802 = vmatpush1.msra.mxu0 %v269
    %1803 = vmatprep.subr.mxu0 %v274
    %1804 = vmatpush1.msra.mxu0 %v273
    %1805 = vmatprep.subr.mxu0 %v278
    %1806 = vmatpush1.msra.mxu0 %v277
    %1807 = vmatprep.subr.mxu0 %v282
    %1808 = vmatpush1.msra.mxu0 %v281
    %1809 = vmatprep.subr.mxu0 %v286
    %1810 = vmatpush1.msra.mxu0 %v285
    %1811 = vmatprep.subr.mxu0 %v290
    %1812 = vmatpush1.msra.mxu0 %v289
    %1813 = vmatprep.subr.mxu0 %v294
    %1814 = vmatpush1.msra.mxu0 %v293
    %1815 = vmatprep.subr.mxu0 %v298
    %1816 = vmatpush1.msra.mxu0 %v297
    %1817 = vmatprep.subr.mxu0 %v302
    %1818 = vmatpush1.msra.mxu0 %v301
    %1819 = vmatprep.subr.mxu0 %v306
    %1820 = vmatpush1.msra.mxu0 %v305
    %1821 = vmatprep.subr.mxu0 %v310
    %1822 = vmatpush1.msra.mxu0 %v309
    %1823 = vmatprep.subr.mxu0 %v314
    %1824 = vmatpush1.msra.mxu0 %v313
    %1825 = vmatprep.subr.mxu0 %v318
    %1826 = vmatpush1.msra.mxu0 %v317
    %1827 = vmatprep.subr.mxu0 %v322
    %1828 = vmatpush1.msra.mxu0 %v321
    %1829 = vmatprep.subr.mxu0 %v326
    %1830 = vmatpush1.msra.mxu0 %v325
    %1831 = vmatprep.subr.mxu0 %v330
    %1832 = vmatpush1.msra.mxu0 %v329
    %1833 = vmatprep.subr.mxu0 %v334
    %1834 = vmatpush1.msra.mxu0 %v333
    %1835 = vmatprep.subr.mxu0 %v338
    %1836 = vmatpush1.msra.mxu0 %v337
    %1837 = vmatprep.subr.mxu0 %v342
    %1838 = vmatpush1.msra.mxu0 %v341
    %1839 = vmatprep.subr.mxu0 %v346
    %1840 = vmatpush1.msra.mxu0 %v345
    %1841 = vmatprep.subr.mxu0 %v350
    %1842 = vmatpush1.msra.mxu0 %v349
    %1843 = vmatprep.subr.mxu0 %v354
    %1844 = vmatpush1.msra.mxu0 %v353
    %1845 = vmatprep.mubr.f32.mxu0 %v1709
    %1846 = vmatmul.mubr.f32.gmra.mrb[0].mxu0 %v1708
    %v1847 = vpop.f32.mrb[0].mxu0
    %v1848 = vadd.f32 %v1777, %v1847
    %v1849 = vpop.f32.mrb[0].mxu0
    %v1850 = vadd.f32 %v1779, %v1849
    %1851 = vdwg.mxu0
    %1852 = vmatprep.subr.mxu0 %v104
    %1853 = vmatpush1.msra.mxu0 %v103
    %1854 = vmatprep.subr.mxu0 %v108
    %1855 = vmatpush1.msra.mxu0 %v107
    %1856 = vmatprep.subr.mxu0 %v112
    %1857 = vmatpush1.msra.mxu0 %v111
    %1858 = vmatprep.subr.mxu0 %v116
    %1859 = vmatpush1.msra.mxu0 %v115
    %1860 = vmatprep.subr.mxu0 %v120
    %1861 = vmatpush1.msra.mxu0 %v119
    %1862 = vmatprep.subr.mxu0 %v124
    %1863 = vmatpush1.msra.mxu0 %v123
    %1864 = vmatprep.subr.mxu0 %v128
    %1865 = vmatpush1.msra.mxu0 %v127
    %1866 = vmatprep.subr.mxu0 %v132
    %1867 = vmatpush1.msra.mxu0 %v131
    %1868 = vmatprep.subr.mxu0 %v136
    %1869 = vmatpush1.msra.mxu0 %v135
    %1870 = vmatprep.subr.mxu0 %v140
    %1871 = vmatpush1.msra.mxu0 %v139
    %1872 = vmatprep.subr.mxu0 %v144
    %1873 = vmatpush1.msra.mxu0 %v143
    %1874 = vmatprep.subr.mxu0 %v148
    %1875 = vmatpush1.msra.mxu0 %v147
    %1876 = vmatprep.subr.mxu0 %v152
    %1877 = vmatpush1.msra.mxu0 %v151
    %1878 = vmatprep.subr.mxu0 %v156
    %1879 = vmatpush1.msra.mxu0 %v155
    %1880 = vmatprep.subr.mxu0 %v160
    %1881 = vmatpush1.msra.mxu0 %v159
    %1882 = vmatprep.subr.mxu0 %v164
    %1883 = vmatpush1.msra.mxu0 %v163
    %1884 = vmatprep.subr.mxu0 %v168
    %1885 = vmatpush1.msra.mxu0 %v167
    %1886 = vmatprep.subr.mxu0 %v172
    %1887 = vmatpush1.msra.mxu0 %v171
    %1888 = vmatprep.subr.mxu0 %v176
    %1889 = vmatpush1.msra.mxu0 %v175
    %1890 = vmatprep.subr.mxu0 %v180
    %1891 = vmatpush1.msra.mxu0 %v179
    %1892 = vmatprep.subr.mxu0 %v184
    %1893 = vmatpush1.msra.mxu0 %v183
    %1894 = vmatprep.subr.mxu0 %v188
    %1895 = vmatpush1.msra.mxu0 %v187
    %1896 = vmatprep.subr.mxu0 %v192
    %1897 = vmatpush1.msra.mxu0 %v191
    %1898 = vmatprep.subr.mxu0 %v196
    %1899 = vmatpush1.msra.mxu0 %v195
    %1900 = vmatprep.subr.mxu0 %v200
    %1901 = vmatpush1.msra.mxu0 %v199
    %1902 = vmatprep.subr.mxu0 %v204
    %1903 = vmatpush1.msra.mxu0 %v203
    %1904 = vmatprep.subr.mxu0 %v208
    %1905 = vmatpush1.msra.mxu0 %v207
    %1906 = vmatprep.subr.mxu0 %v212
    %1907 = vmatpush1.msra.mxu0 %v211
    %1908 = vmatprep.subr.mxu0 %v216
    %1909 = vmatpush1.msra.mxu0 %v215
    %1910 = vmatprep.subr.mxu0 %v220
    %1911 = vmatpush1.msra.mxu0 %v219
    %1912 = vmatprep.subr.mxu0 %v224
    %1913 = vmatpush1.msra.mxu0 %v223
    %1914 = vmatprep.subr.mxu0 %v228
    %1915 = vmatpush1.msra.mxu0 %v227
    %1916 = vmatprep.mubr.f32.mxu0 %v1707
    %1917 = vmatmul.mubr.f32.gmra.mrb[0].mxu0 %v1706
    %v1918 = vpop.f32.mrb[0].mxu0
    %v1919 = vadd.f32 0.0, %v1918
    %v1920 = vpop.f32.mrb[0].mxu0
    %v1921 = vadd.f32 0.0, %v1920
    %1922 = vdwg.mxu0
    %1923 = vmatprep.subr.mxu0 %v232
    %1924 = vmatpush1.msra.mxu0 %v231
    %1925 = vmatprep.subr.mxu0 %v236
    %1926 = vmatpush1.msra.mxu0 %v235
    %1927 = vmatprep.subr.mxu0 %v240
    %1928 = vmatpush1.msra.mxu0 %v239
    %1929 = vmatprep.subr.mxu0 %v244
    %1930 = vmatpush1.msra.mxu0 %v243
    %1931 = vmatprep.subr.mxu0 %v248
    %1932 = vmatpush1.msra.mxu0 %v247
    %1933 = vmatprep.subr.mxu0 %v252
    %1934 = vmatpush1.msra.mxu0 %v251
    %1935 = vmatprep.subr.mxu0 %v256
    %1936 = vmatpush1.msra.mxu0 %v255
    %1937 = vmatprep.subr.mxu0 %v260
    %1938 = vmatpush1.msra.mxu0 %v259
    %1939 = vmatprep.subr.mxu0 %v264
    %1940 = vmatpush1.msra.mxu0 %v263
    %1941 = vmatprep.subr.mxu0 %v268
    %1942 = vmatpush1.msra.mxu0 %v267
    %1943 = vmatprep.subr.mxu0 %v272
    %1944 = vmatpush1.msra.mxu0 %v271
    %1945 = vmatprep.subr.mxu0 %v276
    %1946 = vmatpush1.msra.mxu0 %v275
    %1947 = vmatprep.subr.mxu0 %v280
    %1948 = vmatpush1.msra.mxu0 %v279
    %1949 = vmatprep.subr.mxu0 %v284
    %1950 = vmatpush1.msra.mxu0 %v283
    %1951 = vmatprep.subr.mxu0 %v288
    %1952 = vmatpush1.msra.mxu0 %v287
    %1953 = vmatprep.subr.mxu0 %v292
    %1954 = vmatpush1.msra.mxu0 %v291
    %1955 = vmatprep.subr.mxu0 %v296
    %1956 = vmatpush1.msra.mxu0 %v295
    %1957 = vmatprep.subr.mxu0 %v300
    %1958 = vmatpush1.msra.mxu0 %v299
    %1959 = vmatprep.subr.mxu0 %v304
    %1960 = vmatpush1.msra.mxu0 %v303
    %1961 = vmatprep.subr.mxu0 %v308
    %1962 = vmatpush1.msra.mxu0 %v307
    %1963 = vmatprep.subr.mxu0 %v312
    %1964 = vmatpush1.msra.mxu0 %v311
    %1965 = vmatprep.subr.mxu0 %v316
    %1966 = vmatpush1.msra.mxu0 %v315
    %1967 = vmatprep.subr.mxu0 %v320
    %1968 = vmatpush1.msra.mxu0 %v319
    %1969 = vmatprep.subr.mxu0 %v324
    %1970 = vmatpush1.msra.mxu0 %v323
    %1971 = vmatprep.subr.mxu0 %v328
    %1972 = vmatpush1.msra.mxu0 %v327
    %1973 = vmatprep.subr.mxu0 %v332
    %1974 = vmatpush1.msra.mxu0 %v331
    %1975 = vmatprep.subr.mxu0 %v336
    %1976 = vmatpush1.msra.mxu0 %v335
    %1977 = vmatprep.subr.mxu0 %v340
    %1978 = vmatpush1.msra.mxu0 %v339
    %1979 = vmatprep.subr.mxu0 %v344
    %1980 = vmatpush1.msra.mxu0 %v343
    %1981 = vmatprep.subr.mxu0 %v348
    %1982 = vmatpush1.msra.mxu0 %v347
    %1983 = vmatprep.subr.mxu0 %v352
    %1984 = vmatpush1.msra.mxu0 %v351
    %1985 = vmatprep.subr.mxu0 %v356
    %1986 = vmatpush1.msra.mxu0 %v355
    %1987 = vmatprep.mubr.f32.mxu0 %v1709
    %1988 = vmatmul.mubr.f32.gmra.mrb[0].mxu0 %v1708
    %v1989 = vpop.f32.mrb[0].mxu0
    %v1990 = vadd.f32 %v1919, %v1989
    %v1991 = vpop.f32.mrb[0].mxu0
    %v1992 = vadd.f32 %v1921, %v1991
    %1993 = vdwg.mxu0
    %v1994 = vadd.f32 %v1848, 1e-30
    %v1995 = vadd.f32 %v1850, 1e-30
    %v1996 = vadd.f32 %v1990, 1e-30
    %v1997 = vadd.f32 %v1992, 1e-30
    %v1998 = vrcp.pop %v1994
    %v1999 = vrcp.pop %v1995
    %v2000 = vrcp.pop %v1996
    %v2001 = vrcp.pop %v1997
    %v2002 = vmul.f32 %v1994, %v1998
    %v2003 = vmul.f32 %v1995, %v1999
    %v2004 = vmul.f32 %v1996, %v2000
    %v2005 = vmul.f32 %v1997, %v2001
    %v2006 = vsub.f32 2.0, %v2002
    %v2007 = vsub.f32 2.0, %v2003
    %v2008 = vsub.f32 2.0, %v2004
    %v2009 = vsub.f32 2.0, %v2005
    %v2010 = vmul.f32 %v1998, %v2006
    %v2011 = vmul.f32 %v1999, %v2007
    %v2012 = vmul.f32 %v2000, %v2008
    %v2013 = vmul.f32 %v2001, %v2009
    %v2014 = vlaneseq
    %v2015 = vshrl.u32 %v2014, 7
    %v2016 = vsub.s32 4, %v2015
    %v2017 = vrot.slane %v2010, %v2016
    %v2018 = vlaneseq
    %v2019 = vshrl.u32 %v2018, 7
    %v2020 = vsub.s32 4, %v2019
    %v2021 = vrot.slane %v2011, %v2020
    %v2022 = vlaneseq
    %v2023 = vshrl.u32 %v2022, 7
    %v2024 = vsub.s32 4, %v2023
    %v2025 = vrot.slane %v2012, %v2024
    %v2026 = vlaneseq
    %v2027 = vshrl.u32 %v2026, 7
    %v2028 = vsub.s32 4, %v2027
    %v2029 = vrot.slane %v2013, %v2028
    %v2030 = vmul.f32 %v1848, %v2017
    %v2031 = vmul.f32 %v1850, %v2021
    %v2032 = vmul.f32 %v1990, %v2025
    %v2033 = vmul.f32 %v1992, %v2029
    %v2034 = vsel %vm1660, %v1648, -inf
    %v2035 = vsel %vm1660, %v1649, -inf
    %v2036 = vsel %vm1660, %v1650, -inf
    %v2037 = vsel %vm1660, %v1651, -inf
    %v2038 = vmax.f32 %v2034, %v2035
    %v2039 = vmax.f32 %v2036, %v2037
    %v2040 = vmax.f32 %v2038, %v2039
    %2041 = vmax.xlane.f32.xlu0 %v2040
    %v2042 = vpop.xlane.xlu0 %2041
    %v2043 = vsub.f32 %v1648, %v2042
    %v2044 = vsub.f32 %v1649, %v2042
    %v2045 = vsub.f32 %v1650, %v2042
    %v2046 = vsub.f32 %v1651, %v2042
    %v2047 = vmul.f32 %v2043, 1.442695
    %v2048 = vpow.pop %v2047
    %v2049 = vmul.f32 %v2044, 1.442695
    %v2050 = vpow.pop %v2049
    %v2051 = vmul.f32 %v2045, 1.442695
    %v2052 = vpow.pop %v2051
    %v2053 = vmul.f32 %v2046, 1.442695
    %v2054 = vpow.pop %v2053
    %v2055 = vlaneseq
    %v2056 = vshrl.u32 %v2055, 7
    %v2057 = vsub.s32 0, %v2056
    %v2058 = vrot.slane %v2048, %v2057
    %v2059 = vlaneseq
    %v2060 = vshrl.u32 %v2059, 7
    %v2061 = vsub.s32 0, %v2060
    %v2062 = vrot.slane %v2050, %v2061
    %v2063 = vlaneseq
    %v2064 = vshrl.u32 %v2063, 7
    %v2065 = vsub.s32 0, %v2064
    %v2066 = vrot.slane %v2052, %v2065
    %v2067 = vlaneseq
    %v2068 = vshrl.u32 %v2067, 7
    %v2069 = vsub.s32 0, %v2068
    %v2070 = vrot.slane %v2054, %v2069
    %v2071 = vmul.f32 %v1652, %v2058
    %v2072 = vmul.f32 %v1653, %v2062
    %v2073 = vmul.f32 %v1654, %v2066
    %v2074 = vmul.f32 %v1655, %v2070
    %v2075 = vmul.f32 %v625, %v2058
    %v2076 = vmul.f32 %v625, %v2062
    %v2077 = vmul.f32 %v625, %v2066
    %v2078 = vmul.f32 %v625, %v2070
    %v2079 = vadd.f32 %v2071, %v2075
    %v2080 = vadd.f32 %v2072, %v2076
    %v2081 = vadd.f32 %v2073, %v2077
    %v2082 = vadd.f32 %v2074, %v2078
    %2083 = vmatprep.subr.mxu0 %v358
    %2084 = vmatpush1.msra.mxu0 %v357
    %2085 = vmatprep.subr.mxu0 %v362
    %2086 = vmatpush1.msra.mxu0 %v361
    %2087 = vmatprep.subr.mxu0 %v366
    %2088 = vmatpush1.msra.mxu0 %v365
    %2089 = vmatprep.subr.mxu0 %v370
    %2090 = vmatpush1.msra.mxu0 %v369
    %2091 = vmatprep.subr.mxu0 %v374
    %2092 = vmatpush1.msra.mxu0 %v373
    %2093 = vmatprep.subr.mxu0 %v378
    %2094 = vmatpush1.msra.mxu0 %v377
    %2095 = vmatprep.subr.mxu0 %v382
    %2096 = vmatpush1.msra.mxu0 %v381
    %2097 = vmatprep.subr.mxu0 %v386
    %2098 = vmatpush1.msra.mxu0 %v385
    %2099 = vmatprep.subr.mxu0 %v390
    %2100 = vmatpush1.msra.mxu0 %v389
    %2101 = vmatprep.subr.mxu0 %v394
    %2102 = vmatpush1.msra.mxu0 %v393
    %2103 = vmatprep.subr.mxu0 %v398
    %2104 = vmatpush1.msra.mxu0 %v397
    %2105 = vmatprep.subr.mxu0 %v402
    %2106 = vmatpush1.msra.mxu0 %v401
    %2107 = vmatprep.subr.mxu0 %v406
    %2108 = vmatpush1.msra.mxu0 %v405
    %2109 = vmatprep.subr.mxu0 %v410
    %2110 = vmatpush1.msra.mxu0 %v409
    %2111 = vmatprep.subr.mxu0 %v414
    %2112 = vmatpush1.msra.mxu0 %v413
    %2113 = vmatprep.subr.mxu0 %v418
    %2114 = vmatpush1.msra.mxu0 %v417
    %2115 = vmatprep.subr.mxu0 %v422
    %2116 = vmatpush1.msra.mxu0 %v421
    %2117 = vmatprep.subr.mxu0 %v426
    %2118 = vmatpush1.msra.mxu0 %v425
    %2119 = vmatprep.subr.mxu0 %v430
    %2120 = vmatpush1.msra.mxu0 %v429
    %2121 = vmatprep.subr.mxu0 %v434
    %2122 = vmatpush1.msra.mxu0 %v433
    %2123 = vmatprep.subr.mxu0 %v438
    %2124 = vmatpush1.msra.mxu0 %v437
    %2125 = vmatprep.subr.mxu0 %v442
    %2126 = vmatpush1.msra.mxu0 %v441
    %2127 = vmatprep.subr.mxu0 %v446
    %2128 = vmatpush1.msra.mxu0 %v445
    %2129 = vmatprep.subr.mxu0 %v450
    %2130 = vmatpush1.msra.mxu0 %v449
    %2131 = vmatprep.subr.mxu0 %v454
    %2132 = vmatpush1.msra.mxu0 %v453
    %2133 = vmatprep.subr.mxu0 %v458
    %2134 = vmatpush1.msra.mxu0 %v457
    %2135 = vmatprep.subr.mxu0 %v462
    %2136 = vmatpush1.msra.mxu0 %v461
    %2137 = vmatprep.subr.mxu0 %v466
    %2138 = vmatpush1.msra.mxu0 %v465
    %2139 = vmatprep.subr.mxu0 %v470
    %2140 = vmatpush1.msra.mxu0 %v469
    %2141 = vmatprep.subr.mxu0 %v474
    %2142 = vmatpush1.msra.mxu0 %v473
    %2143 = vmatprep.subr.mxu0 %v478
    %2144 = vmatpush1.msra.mxu0 %v477
    %2145 = vmatprep.subr.mxu0 %v482
    %2146 = vmatpush1.msra.mxu0 %v481
    %2147 = vmatprep.mubr.f32.mxu0 %v2080
    %2148 = vmatmul.mubr.f32.gmra.mrb[0].mxu0 %v2079
    %v2149 = vpop.f32.mrb[0].mxu0
    %v2150 = vadd.f32 0.0, %v2149
    %v2151 = vpop.f32.mrb[0].mxu0
    %v2152 = vadd.f32 0.0, %v2151
    %2153 = vdwg.mxu0
    %2154 = vmatprep.subr.mxu0 %v486
    %2155 = vmatpush1.msra.mxu0 %v485
    %2156 = vmatprep.subr.mxu0 %v490
    %2157 = vmatpush1.msra.mxu0 %v489
    %2158 = vmatprep.subr.mxu0 %v494
    %2159 = vmatpush1.msra.mxu0 %v493
    %2160 = vmatprep.subr.mxu0 %v498
    %2161 = vmatpush1.msra.mxu0 %v497
    %2162 = vmatprep.subr.mxu0 %v502
    %2163 = vmatpush1.msra.mxu0 %v501
    %2164 = vmatprep.subr.mxu0 %v506
    %2165 = vmatpush1.msra.mxu0 %v505
    %2166 = vmatprep.subr.mxu0 %v510
    %2167 = vmatpush1.msra.mxu0 %v509
    %2168 = vmatprep.subr.mxu0 %v514
    %2169 = vmatpush1.msra.mxu0 %v513
    %2170 = vmatprep.subr.mxu0 %v518
    %2171 = vmatpush1.msra.mxu0 %v517
    %2172 = vmatprep.subr.mxu0 %v522
    %2173 = vmatpush1.msra.mxu0 %v521
    %2174 = vmatprep.subr.mxu0 %v526
    %2175 = vmatpush1.msra.mxu0 %v525
    %2176 = vmatprep.subr.mxu0 %v530
    %2177 = vmatpush1.msra.mxu0 %v529
    %2178 = vmatprep.subr.mxu0 %v534
    %2179 = vmatpush1.msra.mxu0 %v533
    %2180 = vmatprep.subr.mxu0 %v538
    %2181 = vmatpush1.msra.mxu0 %v537
    %2182 = vmatprep.subr.mxu0 %v542
    %2183 = vmatpush1.msra.mxu0 %v541
    %2184 = vmatprep.subr.mxu0 %v546
    %2185 = vmatpush1.msra.mxu0 %v545
    %2186 = vmatprep.subr.mxu0 %v550
    %2187 = vmatpush1.msra.mxu0 %v549
    %2188 = vmatprep.subr.mxu0 %v554
    %2189 = vmatpush1.msra.mxu0 %v553
    %2190 = vmatprep.subr.mxu0 %v558
    %2191 = vmatpush1.msra.mxu0 %v557
    %2192 = vmatprep.subr.mxu0 %v562
    %2193 = vmatpush1.msra.mxu0 %v561
    %2194 = vmatprep.subr.mxu0 %v566
    %2195 = vmatpush1.msra.mxu0 %v565
    %2196 = vmatprep.subr.mxu0 %v570
    %2197 = vmatpush1.msra.mxu0 %v569
    %2198 = vmatprep.subr.mxu0 %v574
    %2199 = vmatpush1.msra.mxu0 %v573
    %2200 = vmatprep.subr.mxu0 %v578
    %2201 = vmatpush1.msra.mxu0 %v577
    %2202 = vmatprep.subr.mxu0 %v582
    %2203 = vmatpush1.msra.mxu0 %v581
    %2204 = vmatprep.subr.mxu0 %v586
    %2205 = vmatpush1.msra.mxu0 %v585
    %2206 = vmatprep.subr.mxu0 %v590
    %2207 = vmatpush1.msra.mxu0 %v589
    %2208 = vmatprep.subr.mxu0 %v594
    %2209 = vmatpush1.msra.mxu0 %v593
    %2210 = vmatprep.subr.mxu0 %v598
    %2211 = vmatpush1.msra.mxu0 %v597
    %2212 = vmatprep.subr.mxu0 %v602
    %2213 = vmatpush1.msra.mxu0 %v601
    %2214 = vmatprep.subr.mxu0 %v606
    %2215 = vmatpush1.msra.mxu0 %v605
    %2216 = vmatprep.subr.mxu0 %v610
    %2217 = vmatpush1.msra.mxu0 %v609
    %2218 = vmatprep.mubr.f32.mxu0 %v2082
    %2219 = vmatmul.mubr.f32.gmra.mrb[0].mxu0 %v2081
    %v2220 = vpop.f32.mrb[0].mxu0
    %v2221 = vadd.f32 %v2150, %v2220
    %v2222 = vpop.f32.mrb[0].mxu0
    %v2223 = vadd.f32 %v2152, %v2222
    %2224 = vdwg.mxu0
    %2225 = vmatprep.subr.mxu0 %v360
    %2226 = vmatpush1.msra.mxu0 %v359
    %2227 = vmatprep.subr.mxu0 %v364
    %2228 = vmatpush1.msra.mxu0 %v363
    %2229 = vmatprep.subr.mxu0 %v368
    %2230 = vmatpush1.msra.mxu0 %v367
    %2231 = vmatprep.subr.mxu0 %v372
    %2232 = vmatpush1.msra.mxu0 %v371
    %2233 = vmatprep.subr.mxu0 %v376
    %2234 = vmatpush1.msra.mxu0 %v375
    %2235 = vmatprep.subr.mxu0 %v380
    %2236 = vmatpush1.msra.mxu0 %v379
    %2237 = vmatprep.subr.mxu0 %v384
    %2238 = vmatpush1.msra.mxu0 %v383
    %2239 = vmatprep.subr.mxu0 %v388
    %2240 = vmatpush1.msra.mxu0 %v387
    %2241 = vmatprep.subr.mxu0 %v392
    %2242 = vmatpush1.msra.mxu0 %v391
    %2243 = vmatprep.subr.mxu0 %v396
    %2244 = vmatpush1.msra.mxu0 %v395
    %2245 = vmatprep.subr.mxu0 %v400
    %2246 = vmatpush1.msra.mxu0 %v399
    %2247 = vmatprep.subr.mxu0 %v404
    %2248 = vmatpush1.msra.mxu0 %v403
    %2249 = vmatprep.subr.mxu0 %v408
    %2250 = vmatpush1.msra.mxu0 %v407
    %2251 = vmatprep.subr.mxu0 %v412
    %2252 = vmatpush1.msra.mxu0 %v411
    %2253 = vmatprep.subr.mxu0 %v416
    %2254 = vmatpush1.msra.mxu0 %v415
    %2255 = vmatprep.subr.mxu0 %v420
    %2256 = vmatpush1.msra.mxu0 %v419
    %2257 = vmatprep.subr.mxu0 %v424
    %2258 = vmatpush1.msra.mxu0 %v423
    %2259 = vmatprep.subr.mxu0 %v428
    %2260 = vmatpush1.msra.mxu0 %v427
    %2261 = vmatprep.subr.mxu0 %v432
    %2262 = vmatpush1.msra.mxu0 %v431
    %2263 = vmatprep.subr.mxu0 %v436
    %2264 = vmatpush1.msra.mxu0 %v435
    %2265 = vmatprep.subr.mxu0 %v440
    %2266 = vmatpush1.msra.mxu0 %v439
    %2267 = vmatprep.subr.mxu0 %v444
    %2268 = vmatpush1.msra.mxu0 %v443
    %2269 = vmatprep.subr.mxu0 %v448
    %2270 = vmatpush1.msra.mxu0 %v447
    %2271 = vmatprep.subr.mxu0 %v452
    %2272 = vmatpush1.msra.mxu0 %v451
    %2273 = vmatprep.subr.mxu0 %v456
    %2274 = vmatpush1.msra.mxu0 %v455
    %2275 = vmatprep.subr.mxu0 %v460
    %2276 = vmatpush1.msra.mxu0 %v459
    %2277 = vmatprep.subr.mxu0 %v464
    %2278 = vmatpush1.msra.mxu0 %v463
    %2279 = vmatprep.subr.mxu0 %v468
    %2280 = vmatpush1.msra.mxu0 %v467
    %2281 = vmatprep.subr.mxu0 %v472
    %2282 = vmatpush1.msra.mxu0 %v471
    %2283 = vmatprep.subr.mxu0 %v476
    %2284 = vmatpush1.msra.mxu0 %v475
    %2285 = vmatprep.subr.mxu0 %v480
    %2286 = vmatpush1.msra.mxu0 %v479
    %2287 = vmatprep.subr.mxu0 %v484
    %2288 = vmatpush1.msra.mxu0 %v483
    %2289 = vmatprep.mubr.f32.mxu0 %v2080
    %2290 = vmatmul.mubr.f32.gmra.mrb[0].mxu0 %v2079
    %v2291 = vpop.f32.mrb[0].mxu0
    %v2292 = vadd.f32 0.0, %v2291
    %v2293 = vpop.f32.mrb[0].mxu0
    %v2294 = vadd.f32 0.0, %v2293
    %2295 = vdwg.mxu0
    %2296 = vmatprep.subr.mxu0 %v488
    %2297 = vmatpush1.msra.mxu0 %v487
    %2298 = vmatprep.subr.mxu0 %v492
    %2299 = vmatpush1.msra.mxu0 %v491
    %2300 = vmatprep.subr.mxu0 %v496
    %2301 = vmatpush1.msra.mxu0 %v495
    %2302 = vmatprep.subr.mxu0 %v500
    %2303 = vmatpush1.msra.mxu0 %v499
    %2304 = vmatprep.subr.mxu0 %v504
    %2305 = vmatpush1.msra.mxu0 %v503
    %2306 = vmatprep.subr.mxu0 %v508
    %2307 = vmatpush1.msra.mxu0 %v507
    %2308 = vmatprep.subr.mxu0 %v512
    %2309 = vmatpush1.msra.mxu0 %v511
    %2310 = vmatprep.subr.mxu0 %v516
    %2311 = vmatpush1.msra.mxu0 %v515
    %2312 = vmatprep.subr.mxu0 %v520
    %2313 = vmatpush1.msra.mxu0 %v519
    %2314 = vmatprep.subr.mxu0 %v524
    %2315 = vmatpush1.msra.mxu0 %v523
    %2316 = vmatprep.subr.mxu0 %v528
    %2317 = vmatpush1.msra.mxu0 %v527
    %2318 = vmatprep.subr.mxu0 %v532
    %2319 = vmatpush1.msra.mxu0 %v531
    %2320 = vmatprep.subr.mxu0 %v536
    %2321 = vmatpush1.msra.mxu0 %v535
    %2322 = vmatprep.subr.mxu0 %v540
    %2323 = vmatpush1.msra.mxu0 %v539
    %2324 = vmatprep.subr.mxu0 %v544
    %2325 = vmatpush1.msra.mxu0 %v543
    %2326 = vmatprep.subr.mxu0 %v548
    %2327 = vmatpush1.msra.mxu0 %v547
    %2328 = vmatprep.subr.mxu0 %v552
    %2329 = vmatpush1.msra.mxu0 %v551
    %2330 = vmatprep.subr.mxu0 %v556
    %2331 = vmatpush1.msra.mxu0 %v555
    %2332 = vmatprep.subr.mxu0 %v560
    %2333 = vmatpush1.msra.mxu0 %v559
    %2334 = vmatprep.subr.mxu0 %v564
    %2335 = vmatpush1.msra.mxu0 %v563
    %2336 = vmatprep.subr.mxu0 %v568
    %2337 = vmatpush1.msra.mxu0 %v567
    %2338 = vmatprep.subr.mxu0 %v572
    %2339 = vmatpush1.msra.mxu0 %v571
    %2340 = vmatprep.subr.mxu0 %v576
    %2341 = vmatpush1.msra.mxu0 %v575
    %2342 = vmatprep.subr.mxu0 %v580
    %2343 = vmatpush1.msra.mxu0 %v579
    %2344 = vmatprep.subr.mxu0 %v584
    %2345 = vmatpush1.msra.mxu0 %v583
    %2346 = vmatprep.subr.mxu0 %v588
    %2347 = vmatpush1.msra.mxu0 %v587
    %2348 = vmatprep.subr.mxu0 %v592
    %2349 = vmatpush1.msra.mxu0 %v591
    %2350 = vmatprep.subr.mxu0 %v596
    %2351 = vmatpush1.msra.mxu0 %v595
    %2352 = vmatprep.subr.mxu0 %v600
    %2353 = vmatpush1.msra.mxu0 %v599
    %2354 = vmatprep.subr.mxu0 %v604
    %2355 = vmatpush1.msra.mxu0 %v603
    %2356 = vmatprep.subr.mxu0 %v608
    %2357 = vmatpush1.msra.mxu0 %v607
    %2358 = vmatprep.subr.mxu0 %v612
    %2359 = vmatpush1.msra.mxu0 %v611
    %2360 = vmatprep.mubr.f32.mxu0 %v2082
    %2361 = vmatmul.mubr.f32.gmra.mrb[0].mxu0 %v2081
    %v2362 = vpop.f32.mrb[0].mxu0
    %v2363 = vadd.f32 %v2292, %v2362
    %v2364 = vpop.f32.mrb[0].mxu0
    %v2365 = vadd.f32 %v2294, %v2364
    %2366 = vdwg.mxu0
    %v2367 = vadd.f32 %v2221, 1e-30
    %v2368 = vadd.f32 %v2223, 1e-30
    %v2369 = vadd.f32 %v2363, 1e-30
    %v2370 = vadd.f32 %v2365, 1e-30
    %v2371 = vrcp.pop %v2367
    %v2372 = vrcp.pop %v2368
    %v2373 = vrcp.pop %v2369
    %v2374 = vrcp.pop %v2370
    %v2375 = vmul.f32 %v2367, %v2371
    %v2376 = vmul.f32 %v2368, %v2372
    %v2377 = vmul.f32 %v2369, %v2373
    %v2378 = vmul.f32 %v2370, %v2374
    %v2379 = vsub.f32 2.0, %v2375
    %v2380 = vsub.f32 2.0, %v2376
    %v2381 = vsub.f32 2.0, %v2377
    %v2382 = vsub.f32 2.0, %v2378
    %v2383 = vmul.f32 %v2371, %v2379
    %v2384 = vmul.f32 %v2372, %v2380
    %v2385 = vmul.f32 %v2373, %v2381
    %v2386 = vmul.f32 %v2374, %v2382
    %v2387 = vlaneseq
    %v2388 = vshrl.u32 %v2387, 7
    %v2389 = vsub.s32 4, %v2388
    %v2390 = vrot.slane %v2383, %v2389
    %v2391 = vlaneseq
    %v2392 = vshrl.u32 %v2391, 7
    %v2393 = vsub.s32 4, %v2392
    %v2394 = vrot.slane %v2384, %v2393
    %v2395 = vlaneseq
    %v2396 = vshrl.u32 %v2395, 7
    %v2397 = vsub.s32 4, %v2396
    %v2398 = vrot.slane %v2385, %v2397
    %v2399 = vlaneseq
    %v2400 = vshrl.u32 %v2399, 7
    %v2401 = vsub.s32 4, %v2400
    %v2402 = vrot.slane %v2386, %v2401
    %v2403 = vmul.f32 %v2221, %v2390
    %v2404 = vmul.f32 %v2223, %v2394
    %v2405 = vmul.f32 %v2363, %v2398
    %v2406 = vmul.f32 %v2365, %v2402
    %v2407 = vmul.f32 %v2030, %v2403
    %v2408 = vmul.f32 %v2031, %v2404
    %v2409 = vmul.f32 %v2032, %v2405
    %v2410 = vmul.f32 %v2033, %v2406
    %v2411 = vmul.f32 %v2407, 0.5
    %v2412 = vmul.f32 %v2408, 0.5
    %v2413 = vmul.f32 %v2409, 0.5
    %v2414 = vmul.f32 %v2410, 0.5
    %v2415 = vmul.f32 %v1656, %v2411
    %v2416 = vmul.f32 %v1657, %v2412
    %v2417 = vmul.f32 %v1658, %v2413
    %v2418 = vmul.f32 %v1659, %v2414
    %v2419 = vadd.f32 %v2415, %v983
    %v2420 = vadd.f32 %v2416, %v984
    %v2421 = vadd.f32 %v2417, %v985
    %v2422 = vadd.f32 %v2418, %v986
    %v2423 = vld [vmem:[%s13] sm:$0xff]
    %v2424 = vld [vmem:[%s14] sm:$0xff]
    %2426 = vset.pattern.permute.xlu0 0
    %2427 = vperm.xlu0 %2426, %v2424
    %v2428 = vpop.permute.xlu0 %2427
    %v2431 = vsel %vm633, %v2423, 0
    %2433 = vmatprep.subr.mxu0 %v2420
    %2434 = vmatpush1.msra.mxu0 %v2419
    %2435 = vmatprep.subr.mxu0 0.0
    %2436 = vmatpush1.msra.mxu0 0.0
    %2437 = vmatprep.subr.mxu0 0.0
    %2438 = vmatpush1.msra.mxu0 0.0
    %2439 = vmatprep.subr.mxu0 0.0
    %2440 = vmatpush1.msra.mxu0 0.0
    %2441 = vmatprep.subr.mxu0 0.0
    %2442 = vmatpush1.msra.mxu0 0.0
    %2443 = vmatprep.subr.mxu0 0.0
    %2444 = vmatpush1.msra.mxu0 0.0
    %2445 = vmatprep.subr.mxu0 0.0
    %2446 = vmatpush1.msra.mxu0 0.0
    %2447 = vmatprep.subr.mxu0 0.0
    %2448 = vmatpush1.msra.mxu0 0.0
    %2449 = vmatprep.subr.mxu0 0.0
    %2450 = vmatpush1.msra.mxu0 0.0
    %2451 = vmatprep.subr.mxu0 0.0
    %2452 = vmatpush1.msra.mxu0 0.0
    %2453 = vmatprep.subr.mxu0 0.0
    %2454 = vmatpush1.msra.mxu0 0.0
    %2455 = vmatprep.subr.mxu0 0.0
    %2456 = vmatpush1.msra.mxu0 0.0
    %2457 = vmatprep.subr.mxu0 0.0
    %2458 = vmatpush1.msra.mxu0 0.0
    %2459 = vmatprep.subr.mxu0 0.0
    %2460 = vmatpush1.msra.mxu0 0.0
    %2461 = vmatprep.subr.mxu0 0.0
    %2462 = vmatpush1.msra.mxu0 0.0
    %2463 = vmatprep.subr.mxu0 0.0
    %2464 = vmatpush1.msra.mxu0 0.0
    %2465 = vmatprep.subr.mxu0 0.0
    %2466 = vmatpush1.msra.mxu0 0.0
    %2467 = vmatprep.subr.mxu0 0.0
    %2468 = vmatpush1.msra.mxu0 0.0
    %2469 = vmatprep.subr.mxu0 0.0
    %2470 = vmatpush1.msra.mxu0 0.0
    %2471 = vmatprep.subr.mxu0 0.0
    %2472 = vmatpush1.msra.mxu0 0.0
    %2473 = vmatprep.subr.mxu0 0.0
    %2474 = vmatpush1.msra.mxu0 0.0
    %2475 = vmatprep.subr.mxu0 0.0
    %2476 = vmatpush1.msra.mxu0 0.0
    %2477 = vmatprep.subr.mxu0 0.0
    %2478 = vmatpush1.msra.mxu0 0.0
    %2479 = vmatprep.subr.mxu0 0.0
    %2480 = vmatpush1.msra.mxu0 0.0
    %2481 = vmatprep.subr.mxu0 0.0
    %2482 = vmatpush1.msra.mxu0 0.0
    %2483 = vmatprep.subr.mxu0 0.0
    %2484 = vmatpush1.msra.mxu0 0.0
    %2485 = vmatprep.subr.mxu0 0.0
    %2486 = vmatpush1.msra.mxu0 0.0
    %2487 = vmatprep.subr.mxu0 0.0
    %2488 = vmatpush1.msra.mxu0 0.0
    %2489 = vmatprep.subr.mxu0 0.0
    %2490 = vmatpush1.msra.mxu0 0.0
    %2491 = vmatprep.subr.mxu0 0.0
    %2492 = vmatpush1.msra.mxu0 0.0
    %2493 = vmatprep.subr.mxu0 0.0
    %2494 = vmatpush1.msra.mxu0 0.0
    %2495 = vmatprep.subr.mxu0 0.0
    %2496 = vmatpush1.msra.mxu0 0.0
    %2497 = vmatprep.mubr.f32.mxu0 0.0
    %2498 = vmatmul.mubr.f32.gmra.mrb[0].mxu0 %v2431
    %v2499 = vpop.f32.mrb[0].mxu0
    %v2500 = vadd.f32 %v2428, %v2499
    %v2501 = vpop.f32.mrb[0].mxu0
    %v2502 = vadd.f32 %v2428, %v2501
    %2503 = vdwg.mxu0
    %2504 = vmatprep.subr.mxu0 %v2422
    %2505 = vmatpush1.msra.mxu0 %v2421
    %2506 = vmatprep.subr.mxu0 0.0
    %2507 = vmatpush1.msra.mxu0 0.0
    %2508 = vmatprep.subr.mxu0 0.0
    %2509 = vmatpush1.msra.mxu0 0.0
    %2510 = vmatprep.subr.mxu0 0.0
    %2511 = vmatpush1.msra.mxu0 0.0
    %2512 = vmatprep.subr.mxu0 0.0
    %2513 = vmatpush1.msra.mxu0 0.0
    %2514 = vmatprep.subr.mxu0 0.0
    %2515 = vmatpush1.msra.mxu0 0.0
    %2516 = vmatprep.subr.mxu0 0.0
    %2517 = vmatpush1.msra.mxu0 0.0
    %2518 = vmatprep.subr.mxu0 0.0
    %2519 = vmatpush1.msra.mxu0 0.0
    %2520 = vmatprep.subr.mxu0 0.0
    %2521 = vmatpush1.msra.mxu0 0.0
    %2522 = vmatprep.subr.mxu0 0.0
    %2523 = vmatpush1.msra.mxu0 0.0
    %2524 = vmatprep.subr.mxu0 0.0
    %2525 = vmatpush1.msra.mxu0 0.0
    %2526 = vmatprep.subr.mxu0 0.0
    %2527 = vmatpush1.msra.mxu0 0.0
    %2528 = vmatprep.subr.mxu0 0.0
    %2529 = vmatpush1.msra.mxu0 0.0
    %2530 = vmatprep.subr.mxu0 0.0
    %2531 = vmatpush1.msra.mxu0 0.0
    %2532 = vmatprep.subr.mxu0 0.0
    %2533 = vmatpush1.msra.mxu0 0.0
    %2534 = vmatprep.subr.mxu0 0.0
    %2535 = vmatpush1.msra.mxu0 0.0
    %2536 = vmatprep.subr.mxu0 0.0
    %2537 = vmatpush1.msra.mxu0 0.0
    %2538 = vmatprep.subr.mxu0 0.0
    %2539 = vmatpush1.msra.mxu0 0.0
    %2540 = vmatprep.subr.mxu0 0.0
    %2541 = vmatpush1.msra.mxu0 0.0
    %2542 = vmatprep.subr.mxu0 0.0
    %2543 = vmatpush1.msra.mxu0 0.0
    %2544 = vmatprep.subr.mxu0 0.0
    %2545 = vmatpush1.msra.mxu0 0.0
    %2546 = vmatprep.subr.mxu0 0.0
    %2547 = vmatpush1.msra.mxu0 0.0
    %2548 = vmatprep.subr.mxu0 0.0
    %2549 = vmatpush1.msra.mxu0 0.0
    %2550 = vmatprep.subr.mxu0 0.0
    %2551 = vmatpush1.msra.mxu0 0.0
    %2552 = vmatprep.subr.mxu0 0.0
    %2553 = vmatpush1.msra.mxu0 0.0
    %2554 = vmatprep.subr.mxu0 0.0
    %2555 = vmatpush1.msra.mxu0 0.0
    %2556 = vmatprep.subr.mxu0 0.0
    %2557 = vmatpush1.msra.mxu0 0.0
    %2558 = vmatprep.subr.mxu0 0.0
    %2559 = vmatpush1.msra.mxu0 0.0
    %2560 = vmatprep.subr.mxu0 0.0
    %2561 = vmatpush1.msra.mxu0 0.0
    %2562 = vmatprep.subr.mxu0 0.0
    %2563 = vmatpush1.msra.mxu0 0.0
    %2564 = vmatprep.subr.mxu0 0.0
    %2565 = vmatpush1.msra.mxu0 0.0
    %2566 = vmatprep.subr.mxu0 0.0
    %2567 = vmatpush1.msra.mxu0 0.0
    %2568 = vmatprep.mubr.f32.mxu0 0.0
    %2569 = vmatmul.mubr.f32.gmra.mrb[0].mxu0 %v2431
    %v2570 = vpop.f32.mrb[0].mxu0
    %v2571 = vadd.f32 %v2428, %v2570
    %v2572 = vpop.f32.mrb[0].mxu0
    %v2573 = vadd.f32 %v2428, %v2572
    %2574 = vdwg.mxu0
    %v2575 = vxor.u32 %v2500, 2147483648
    %v2576 = vxor.u32 %v2502, 2147483648
    %v2577 = vxor.u32 %v2571, 2147483648
    %v2578 = vxor.u32 %v2573, 2147483648
    %v2579 = vmul.f32 %v2575, 1.442695
    %v2580 = vpow.pop %v2579
    %v2581 = vmul.f32 %v2576, 1.442695
    %v2582 = vpow.pop %v2581
    %v2583 = vmul.f32 %v2577, 1.442695
    %v2584 = vpow.pop %v2583
    %v2585 = vmul.f32 %v2578, 1.442695
    %v2586 = vpow.pop %v2585
    %v2587 = vadd.f32 %v2580, 1.0
    %v2588 = vadd.f32 %v2582, 1.0
    %v2589 = vadd.f32 %v2584, 1.0
    %v2590 = vadd.f32 %v2586, 1.0
    %v2591 = vrcp.pop %v2587
    %v2592 = vmul.f32 1.0, %v2591
    %v2593 = vrcp.pop %v2588
    %v2594 = vmul.f32 1.0, %v2593
    %v2595 = vrcp.pop %v2589
    %v2596 = vmul.f32 1.0, %v2595
    %v2597 = vrcp.pop %v2590
    %v2598 = vmul.f32 1.0, %v2597
    %v2599 = vmul.f32 %v2500, %v2592
    %v2600 = vmul.f32 %v2502, %v2594
    %v2601 = vmul.f32 %v2571, %v2596
    %v2602 = vmul.f32 %v2573, %v2598
    %2603 = vrot.lane.b32.xlu0 %v2599, 17
    %v2604 = vpop.permute.xlu0 %2603
    %2605 = vrot.lane.b32.xlu0 %v2600, 17
    %v2606 = vpop.permute.xlu0 %2605
    %2607 = vrot.lane.b32.xlu0 %v2601, 17
    %v2608 = vpop.permute.xlu0 %2607
    %2609 = vrot.lane.b32.xlu0 %v2602, 17
    %v2610 = vpop.permute.xlu0 %2609
    %v2611 = vlaneseq
    %v2612 = vand.u32 %v2611, 127
    %vm2613 = vcmp.lt.s32.totalorder %v2612, 17
    %v2614 = vsel %vm2613, %v2608, %v2610
    %v2615 = vsel %vm2613, %v2606, %v2608
    %v2616 = vsel %vm2613, %v2604, %v2606
    %v2617 = vsel %vm2613, %v2610, %v2604
    %v2619 = vlaneseq
    %v2620 = vshrl.u32 %v2619, 7
    %v2621 = vsub.s32 0, %v2620
    %v2622 = vrot.slane %v617, %v2621
    %v2623 = vlaneseq
    %v2624 = vshrl.u32 %v2623, 7
    %v2625 = vsub.s32 1, %v2624
    %v2626 = vrot.slane %v617, %v2625
    %v2627 = vlaneseq
    %v2628 = vshrl.u32 %v2627, 7
    %v2629 = vsub.s32 2, %v2628
    %v2630 = vrot.slane %v617, %v2629
    %v2631 = vlaneseq
    %v2632 = vshrl.u32 %v2631, 7
    %v2633 = vsub.s32 3, %v2632
    %v2634 = vrot.slane %v617, %v2633
    %v2639 = vmul.f32 %v2617, %v2622
    %v2640 = vmul.f32 %v2616, %v2626
    %v2641 = vmul.f32 %v2615, %v2630
    %v2642 = vmul.f32 %v2614, %v2634
    %v2643 = vld [vmem:[%s15] sm:$0xff]
    %2645 = vset.pattern.permute.xlu0 0
    %2646 = vperm.xlu0 %2645, %v2643
    %v2647 = vpop.permute.xlu0 %2646
    %v2649 = vmul.f32 %v2647, %v2639
    %v2650 = vmul.f32 %v2647, %v2640
    %v2651 = vmul.f32 %v2647, %v2641
    %v2652 = vmul.f32 %v2647, %v2642
    %v2653 = vadd.f32 %v2649, 0.0
    %v2654 = vadd.f32 %v2650, 0.0
    %v2655 = vadd.f32 %v2651, 0.0
    %v2656 = vadd.f32 %v2652, 0.0
    %2657 = vrot.lane.b32.xlu0 %v2599, 16
    %v2658 = vpop.permute.xlu0 %2657
    %2659 = vrot.lane.b32.xlu0 %v2600, 16
    %v2660 = vpop.permute.xlu0 %2659
    %2661 = vrot.lane.b32.xlu0 %v2601, 16
    %v2662 = vpop.permute.xlu0 %2661
    %2663 = vrot.lane.b32.xlu0 %v2602, 16
    %v2664 = vpop.permute.xlu0 %2663
    %vm2665 = vcmp.lt.s32.totalorder %v2612, 16
    %v2666 = vsel %vm2665, %v2662, %v2664
    %v2667 = vsel %vm2665, %v2660, %v2662
    %v2668 = vsel %vm2665, %v2658, %v2660
    %v2669 = vsel %vm2665, %v2664, %v2658
    %v2671 = vlaneseq
    %v2672 = vshrl.u32 %v2671, 7
    %v2673 = vsub.s32 0, %v2672
    %v2674 = vrot.slane %v615, %v2673
    %v2675 = vlaneseq
    %v2676 = vshrl.u32 %v2675, 7
    %v2677 = vsub.s32 1, %v2676
    %v2678 = vrot.slane %v615, %v2677
    %v2679 = vlaneseq
    %v2680 = vshrl.u32 %v2679, 7
    %v2681 = vsub.s32 2, %v2680
    %v2682 = vrot.slane %v615, %v2681
    %v2683 = vlaneseq
    %v2684 = vshrl.u32 %v2683, 7
    %v2685 = vsub.s32 3, %v2684
    %v2686 = vrot.slane %v615, %v2685
    %v2691 = vmul.f32 %v2669, %v2674
    %v2692 = vmul.f32 %v2668, %v2678
    %v2693 = vmul.f32 %v2667, %v2682
    %v2694 = vmul.f32 %v2666, %v2686
    %s2695 = scalar_lea.vmem %s15, 8
    %v2696 = vld [vmem:[%s2695] sm:$0xff]
    %2698 = vset.pattern.permute.xlu0 0
    %2699 = vperm.xlu0 %2698, %v2696
    %v2700 = vpop.permute.xlu0 %2699
    %v2702 = vmul.f32 %v2700, %v2691
    %v2703 = vmul.f32 %v2700, %v2692
    %v2704 = vmul.f32 %v2700, %v2693
    %v2705 = vmul.f32 %v2700, %v2694
    %v2706 = vadd.f32 %v2653, %v2702
    %v2707 = vadd.f32 %v2654, %v2703
    %v2708 = vadd.f32 %v2655, %v2704
    %v2709 = vadd.f32 %v2656, %v2705
    %2710 = vrot.lane.b32.xlu0 %v2599, 15
    %v2711 = vpop.permute.xlu0 %2710
    %2712 = vrot.lane.b32.xlu0 %v2600, 15
    %v2713 = vpop.permute.xlu0 %2712
    %2714 = vrot.lane.b32.xlu0 %v2601, 15
    %v2715 = vpop.permute.xlu0 %2714
    %2716 = vrot.lane.b32.xlu0 %v2602, 15
    %v2717 = vpop.permute.xlu0 %2716
    %vm2718 = vcmp.lt.s32.totalorder %v2612, 15
    %v2719 = vsel %vm2718, %v2715, %v2717
    %v2720 = vsel %vm2718, %v2713, %v2715
    %v2721 = vsel %vm2718, %v2711, %v2713
    %v2722 = vsel %vm2718, %v2717, %v2711
    %v2724 = vlaneseq
    %v2725 = vshrl.u32 %v2724, 7
    %v2726 = vsub.s32 0, %v2725
    %v2727 = vrot.slane %v618, %v2726
    %v2728 = vlaneseq
    %v2729 = vshrl.u32 %v2728, 7
    %v2730 = vsub.s32 1, %v2729
    %v2731 = vrot.slane %v618, %v2730
    %v2732 = vlaneseq
    %v2733 = vshrl.u32 %v2732, 7
    %v2734 = vsub.s32 2, %v2733
    %v2735 = vrot.slane %v618, %v2734
    %v2736 = vlaneseq
    %v2737 = vshrl.u32 %v2736, 7
    %v2738 = vsub.s32 3, %v2737
    %v2739 = vrot.slane %v618, %v2738
    %v2744 = vmul.f32 %v2722, %v2727
    %v2745 = vmul.f32 %v2721, %v2731
    %v2746 = vmul.f32 %v2720, %v2735
    %v2747 = vmul.f32 %v2719, %v2739
    %s2748 = scalar_lea.vmem %s15, 16
    %v2749 = vld [vmem:[%s2748] sm:$0xff]
    %2751 = vset.pattern.permute.xlu0 0
    %2752 = vperm.xlu0 %2751, %v2749
    %v2753 = vpop.permute.xlu0 %2752
    %v2755 = vmul.f32 %v2753, %v2744
    %v2756 = vmul.f32 %v2753, %v2745
    %v2757 = vmul.f32 %v2753, %v2746
    %v2758 = vmul.f32 %v2753, %v2747
    %v2759 = vadd.f32 %v2706, %v2755
    %v2760 = vadd.f32 %v2707, %v2756
    %v2761 = vadd.f32 %v2708, %v2757
    %v2762 = vadd.f32 %v2709, %v2758
    %2763 = vrot.lane.b32.xlu0 %v2599, 1
    %v2764 = vpop.permute.xlu0 %2763
    %2765 = vrot.lane.b32.xlu0 %v2600, 1
    %v2766 = vpop.permute.xlu0 %2765
    %2767 = vrot.lane.b32.xlu0 %v2601, 1
    %v2768 = vpop.permute.xlu0 %2767
    %2769 = vrot.lane.b32.xlu0 %v2602, 1
    %v2770 = vpop.permute.xlu0 %2769
    %vm2771 = vcmp.lt.s32.totalorder %v2612, 1
    %v2772 = vsel %vm2771, %v2768, %v2770
    %v2773 = vsel %vm2771, %v2766, %v2768
    %v2774 = vsel %vm2771, %v2764, %v2766
    %v2775 = vsel %vm2771, %v2770, %v2764
    %v2777 = vlaneseq
    %v2778 = vshrl.u32 %v2777, 7
    %v2779 = vsub.s32 0, %v2778
    %v2780 = vrot.slane %v613, %v2779
    %v2781 = vlaneseq
    %v2782 = vshrl.u32 %v2781, 7
    %v2783 = vsub.s32 1, %v2782
    %v2784 = vrot.slane %v613, %v2783
    %v2785 = vlaneseq
    %v2786 = vshrl.u32 %v2785, 7
    %v2787 = vsub.s32 2, %v2786
    %v2788 = vrot.slane %v613, %v2787
    %v2789 = vlaneseq
    %v2790 = vshrl.u32 %v2789, 7
    %v2791 = vsub.s32 3, %v2790
    %v2792 = vrot.slane %v613, %v2791
    %v2797 = vmul.f32 %v2775, %v2780
    %v2798 = vmul.f32 %v2774, %v2784
    %v2799 = vmul.f32 %v2773, %v2788
    %v2800 = vmul.f32 %v2772, %v2792
    %s2801 = scalar_lea.vmem %s15, 24
    %v2802 = vld [vmem:[%s2801] sm:$0xff]
    %2804 = vset.pattern.permute.xlu0 0
    %2805 = vperm.xlu0 %2804, %v2802
    %v2806 = vpop.permute.xlu0 %2805
    %v2808 = vmul.f32 %v2806, %v2797
    %v2809 = vmul.f32 %v2806, %v2798
    %v2810 = vmul.f32 %v2806, %v2799
    %v2811 = vmul.f32 %v2806, %v2800
    %v2812 = vadd.f32 %v2759, %v2808
    %v2813 = vadd.f32 %v2760, %v2809
    %v2814 = vadd.f32 %v2761, %v2810
    %v2815 = vadd.f32 %v2762, %v2811
    %s2816 = scalar_lea.vmem %s15, 32
    %v2817 = vld [vmem:[%s2816] sm:$0xff]
    %2819 = vset.pattern.permute.xlu0 0
    %2820 = vperm.xlu0 %2819, %v2817
    %v2821 = vpop.permute.xlu0 %2820
    %v2823 = vmul.f32 %v2821, %v2599
    %v2824 = vmul.f32 %v2821, %v2600
    %v2825 = vmul.f32 %v2821, %v2601
    %v2826 = vmul.f32 %v2821, %v2602
    %v2827 = vadd.f32 %v2812, %v2823
    %v2828 = vadd.f32 %v2813, %v2824
    %v2829 = vadd.f32 %v2814, %v2825
    %v2830 = vadd.f32 %v2815, %v2826
    %2831 = vrot.lane.b32.xlu0 %v2599, 127
    %v2832 = vpop.permute.xlu0 %2831
    %2833 = vrot.lane.b32.xlu0 %v2600, 127
    %v2834 = vpop.permute.xlu0 %2833
    %2835 = vrot.lane.b32.xlu0 %v2601, 127
    %v2836 = vpop.permute.xlu0 %2835
    %2837 = vrot.lane.b32.xlu0 %v2602, 127
    %v2838 = vpop.permute.xlu0 %2837
    %vm2839 = vcmp.lt.s32.totalorder %v2612, 127
    %v2840 = vsel %vm2839, %v2836, %v2838
    %v2841 = vsel %vm2839, %v2834, %v2836
    %v2842 = vsel %vm2839, %v2832, %v2834
    %v2843 = vsel %vm2839, %v2838, %v2832
    %v2845 = vlaneseq
    %v2846 = vshrl.u32 %v2845, 7
    %v2847 = vsub.s32 0, %v2846
    %v2848 = vrot.slane %v614, %v2847
    %v2849 = vlaneseq
    %v2850 = vshrl.u32 %v2849, 7
    %v2851 = vsub.s32 1, %v2850
    %v2852 = vrot.slane %v614, %v2851
    %v2853 = vlaneseq
    %v2854 = vshrl.u32 %v2853, 7
    %v2855 = vsub.s32 2, %v2854
    %v2856 = vrot.slane %v614, %v2855
    %v2857 = vlaneseq
    %v2858 = vshrl.u32 %v2857, 7
    %v2859 = vsub.s32 3, %v2858
    %v2860 = vrot.slane %v614, %v2859
    %v2865 = vmul.f32 %v2842, %v2848
    %v2866 = vmul.f32 %v2841, %v2852
    %v2867 = vmul.f32 %v2840, %v2856
    %v2868 = vmul.f32 %v2843, %v2860
    %s2869 = scalar_lea.vmem %s15, 40
    %v2870 = vld [vmem:[%s2869] sm:$0xff]
    %2872 = vset.pattern.permute.xlu0 0
    %2873 = vperm.xlu0 %2872, %v2870
    %v2874 = vpop.permute.xlu0 %2873
    %v2876 = vmul.f32 %v2874, %v2865
    %v2877 = vmul.f32 %v2874, %v2866
    %v2878 = vmul.f32 %v2874, %v2867
    %v2879 = vmul.f32 %v2874, %v2868
    %v2880 = vadd.f32 %v2827, %v2876
    %v2881 = vadd.f32 %v2828, %v2877
    %v2882 = vadd.f32 %v2829, %v2878
    %v2883 = vadd.f32 %v2830, %v2879
    %2884 = vrot.lane.b32.xlu0 %v2599, 113
    %v2885 = vpop.permute.xlu0 %2884
    %2886 = vrot.lane.b32.xlu0 %v2600, 113
    %v2887 = vpop.permute.xlu0 %2886
    %2888 = vrot.lane.b32.xlu0 %v2601, 113
    %v2889 = vpop.permute.xlu0 %2888
    %2890 = vrot.lane.b32.xlu0 %v2602, 113
    %v2891 = vpop.permute.xlu0 %2890
    %vm2892 = vcmp.lt.s32.totalorder %v2612, 113
    %v2893 = vsel %vm2892, %v2889, %v2891
    %v2894 = vsel %vm2892, %v2887, %v2889
    %v2895 = vsel %vm2892, %v2885, %v2887
    %v2896 = vsel %vm2892, %v2891, %v2885
    %v2898 = vlaneseq
    %v2899 = vshrl.u32 %v2898, 7
    %v2900 = vsub.s32 0, %v2899
    %v2901 = vrot.slane %v619, %v2900
    %v2902 = vlaneseq
    %v2903 = vshrl.u32 %v2902, 7
    %v2904 = vsub.s32 1, %v2903
    %v2905 = vrot.slane %v619, %v2904
    %v2906 = vlaneseq
    %v2907 = vshrl.u32 %v2906, 7
    %v2908 = vsub.s32 2, %v2907
    %v2909 = vrot.slane %v619, %v2908
    %v2910 = vlaneseq
    %v2911 = vshrl.u32 %v2910, 7
    %v2912 = vsub.s32 3, %v2911
    %v2913 = vrot.slane %v619, %v2912
    %v2918 = vmul.f32 %v2895, %v2901
    %v2919 = vmul.f32 %v2894, %v2905
    %v2920 = vmul.f32 %v2893, %v2909
    %v2921 = vmul.f32 %v2896, %v2913
    %s2922 = scalar_lea.vmem %s15, 48
    %v2923 = vld [vmem:[%s2922] sm:$0xff]
    %2925 = vset.pattern.permute.xlu0 0
    %2926 = vperm.xlu0 %2925, %v2923
    %v2927 = vpop.permute.xlu0 %2926
    %v2929 = vmul.f32 %v2927, %v2918
    %v2930 = vmul.f32 %v2927, %v2919
    %v2931 = vmul.f32 %v2927, %v2920
    %v2932 = vmul.f32 %v2927, %v2921
    %v2933 = vadd.f32 %v2880, %v2929
    %v2934 = vadd.f32 %v2881, %v2930
    %v2935 = vadd.f32 %v2882, %v2931
    %v2936 = vadd.f32 %v2883, %v2932
    %2937 = vrot.lane.b32.xlu0 %v2599, 112
    %v2938 = vpop.permute.xlu0 %2937
    %2939 = vrot.lane.b32.xlu0 %v2600, 112
    %v2940 = vpop.permute.xlu0 %2939
    %2941 = vrot.lane.b32.xlu0 %v2601, 112
    %v2942 = vpop.permute.xlu0 %2941
    %2943 = vrot.lane.b32.xlu0 %v2602, 112
    %v2944 = vpop.permute.xlu0 %2943
    %vm2945 = vcmp.lt.s32.totalorder %v2612, 112
    %v2946 = vsel %vm2945, %v2942, %v2944
    %v2947 = vsel %vm2945, %v2940, %v2942
    %v2948 = vsel %vm2945, %v2938, %v2940
    %v2949 = vsel %vm2945, %v2944, %v2938
    %v2951 = vlaneseq
    %v2952 = vshrl.u32 %v2951, 7
    %v2953 = vsub.s32 0, %v2952
    %v2954 = vrot.slane %v616, %v2953
    %v2955 = vlaneseq
    %v2956 = vshrl.u32 %v2955, 7
    %v2957 = vsub.s32 1, %v2956
    %v2958 = vrot.slane %v616, %v2957
    %v2959 = vlaneseq
    %v2960 = vshrl.u32 %v2959, 7
    %v2961 = vsub.s32 2, %v2960
    %v2962 = vrot.slane %v616, %v2961
    %v2963 = vlaneseq
    %v2964 = vshrl.u32 %v2963, 7
    %v2965 = vsub.s32 3, %v2964
    %v2966 = vrot.slane %v616, %v2965
    %v2971 = vmul.f32 %v2948, %v2954
    %v2972 = vmul.f32 %v2947, %v2958
    %v2973 = vmul.f32 %v2946, %v2962
    %v2974 = vmul.f32 %v2949, %v2966
    %s2975 = scalar_lea.vmem %s15, 56
    %v2976 = vld [vmem:[%s2975] sm:$0xff]
    %2978 = vset.pattern.permute.xlu0 0
    %2979 = vperm.xlu0 %2978, %v2976
    %v2980 = vpop.permute.xlu0 %2979
    %v2982 = vmul.f32 %v2980, %v2971
    %v2983 = vmul.f32 %v2980, %v2972
    %v2984 = vmul.f32 %v2980, %v2973
    %v2985 = vmul.f32 %v2980, %v2974
    %v2986 = vadd.f32 %v2933, %v2982
    %v2987 = vadd.f32 %v2934, %v2983
    %v2988 = vadd.f32 %v2935, %v2984
    %v2989 = vadd.f32 %v2936, %v2985
    %2990 = vrot.lane.b32.xlu0 %v2599, 111
    %v2991 = vpop.permute.xlu0 %2990
    %2992 = vrot.lane.b32.xlu0 %v2600, 111
    %v2993 = vpop.permute.xlu0 %2992
    %2994 = vrot.lane.b32.xlu0 %v2601, 111
    %v2995 = vpop.permute.xlu0 %2994
    %2996 = vrot.lane.b32.xlu0 %v2602, 111
    %v2997 = vpop.permute.xlu0 %2996
    %vm2998 = vcmp.lt.s32.totalorder %v2612, 111
    %v2999 = vsel %vm2998, %v2995, %v2997
    %v3000 = vsel %vm2998, %v2993, %v2995
    %v3001 = vsel %vm2998, %v2991, %v2993
    %v3002 = vsel %vm2998, %v2997, %v2991
    %v3004 = vlaneseq
    %v3005 = vshrl.u32 %v3004, 7
    %v3006 = vsub.s32 0, %v3005
    %v3007 = vrot.slane %v620, %v3006
    %v3008 = vlaneseq
    %v3009 = vshrl.u32 %v3008, 7
    %v3010 = vsub.s32 1, %v3009
    %v3011 = vrot.slane %v620, %v3010
    %v3012 = vlaneseq
    %v3013 = vshrl.u32 %v3012, 7
    %v3014 = vsub.s32 2, %v3013
    %v3015 = vrot.slane %v620, %v3014
    %v3016 = vlaneseq
    %v3017 = vshrl.u32 %v3016, 7
    %v3018 = vsub.s32 3, %v3017
    %v3019 = vrot.slane %v620, %v3018
    %v3024 = vmul.f32 %v3001, %v3007
    %v3025 = vmul.f32 %v3000, %v3011
    %v3026 = vmul.f32 %v2999, %v3015
    %v3027 = vmul.f32 %v3002, %v3019
    %s3028 = scalar_lea.vmem %s15, 64
    %v3029 = vld [vmem:[%s3028] sm:$0xff]
    %3031 = vset.pattern.permute.xlu0 0
    %3032 = vperm.xlu0 %3031, %v3029
    %v3033 = vpop.permute.xlu0 %3032
    %v3035 = vmul.f32 %v3033, %v3024
    %v3036 = vmul.f32 %v3033, %v3025
    %v3037 = vmul.f32 %v3033, %v3026
    %v3038 = vmul.f32 %v3033, %v3027
    %v3039 = vadd.f32 %v2986, %v3035
    %v3040 = vadd.f32 %v2987, %v3036
    %v3041 = vadd.f32 %v2988, %v3037
    %v3042 = vadd.f32 %v2989, %v3038
    %v3043 = vld [vmem:[%s16] sm:$0xff]
    %3045 = vset.pattern.permute.xlu0 0
    %3046 = vperm.xlu0 %3045, %v3043
    %v3047 = vpop.permute.xlu0 %3046
    %v3049 = vadd.f32 %v3039, %v3047
    %v3050 = vadd.f32 %v3040, %v3047
    %v3051 = vadd.f32 %v3041, %v3047
    %v3052 = vadd.f32 %v3042, %v3047
    %v3053 = vxor.u32 %v3049, 2147483648
    %v3054 = vxor.u32 %v3050, 2147483648
    %v3055 = vxor.u32 %v3051, 2147483648
    %v3056 = vxor.u32 %v3052, 2147483648
    %v3057 = vmul.f32 %v3053, 1.442695
    %v3058 = vpow.pop %v3057
    %v3059 = vmul.f32 %v3054, 1.442695
    %v3060 = vpow.pop %v3059
    %v3061 = vmul.f32 %v3055, 1.442695
    %v3062 = vpow.pop %v3061
    %v3063 = vmul.f32 %v3056, 1.442695
    %v3064 = vpow.pop %v3063
    %v3065 = vadd.f32 %v3058, 1.0
    %v3066 = vadd.f32 %v3060, 1.0
    %v3067 = vadd.f32 %v3062, 1.0
    %v3068 = vadd.f32 %v3064, 1.0
    %v3069 = vrcp.pop %v3065
    %v3070 = vmul.f32 1.0, %v3069
    %v3071 = vrcp.pop %v3066
    %v3072 = vmul.f32 1.0, %v3071
    %v3073 = vrcp.pop %v3067
    %v3074 = vmul.f32 1.0, %v3073
    %v3075 = vrcp.pop %v3068
    %v3076 = vmul.f32 1.0, %v3075
    %v3077 = vmul.f32 %v3049, %v3070
    %v3078 = vmul.f32 %v3050, %v3072
    %v3079 = vmul.f32 %v3051, %v3074
    %v3080 = vmul.f32 %v3052, %v3076
    %v3081 = vld [vmem:[%s17] sm:$0xff]
    %v3082 = vld [vmem:[%s18] sm:$0xff]
    %3084 = vset.pattern.permute.xlu0 0
    %3085 = vperm.xlu0 %3084, %v3082
    %v3086 = vpop.permute.xlu0 %3085
    %v3089 = vsel %vm633, %v3081, 0
    %3091 = vmatprep.subr.mxu0 %v3078
    %3092 = vmatpush1.msra.mxu0 %v3077
    %3093 = vmatprep.subr.mxu0 0.0
    %3094 = vmatpush1.msra.mxu0 0.0
    %3095 = vmatprep.subr.mxu0 0.0
    %3096 = vmatpush1.msra.mxu0 0.0
    %3097 = vmatprep.subr.mxu0 0.0
    %3098 = vmatpush1.msra.mxu0 0.0
    %3099 = vmatprep.subr.mxu0 0.0
    %3100 = vmatpush1.msra.mxu0 0.0
    %3101 = vmatprep.subr.mxu0 0.0
    %3102 = vmatpush1.msra.mxu0 0.0
    %3103 = vmatprep.subr.mxu0 0.0
    %3104 = vmatpush1.msra.mxu0 0.0
    %3105 = vmatprep.subr.mxu0 0.0
    %3106 = vmatpush1.msra.mxu0 0.0
    %3107 = vmatprep.subr.mxu0 0.0
    %3108 = vmatpush1.msra.mxu0 0.0
    %3109 = vmatprep.subr.mxu0 0.0
    %3110 = vmatpush1.msra.mxu0 0.0
    %3111 = vmatprep.subr.mxu0 0.0
    %3112 = vmatpush1.msra.mxu0 0.0
    %3113 = vmatprep.subr.mxu0 0.0
    %3114 = vmatpush1.msra.mxu0 0.0
    %3115 = vmatprep.subr.mxu0 0.0
    %3116 = vmatpush1.msra.mxu0 0.0
    %3117 = vmatprep.subr.mxu0 0.0
    %3118 = vmatpush1.msra.mxu0 0.0
    %3119 = vmatprep.subr.mxu0 0.0
    %3120 = vmatpush1.msra.mxu0 0.0
    %3121 = vmatprep.subr.mxu0 0.0
    %3122 = vmatpush1.msra.mxu0 0.0
    %3123 = vmatprep.subr.mxu0 0.0
    %3124 = vmatpush1.msra.mxu0 0.0
    %3125 = vmatprep.subr.mxu0 0.0
    %3126 = vmatpush1.msra.mxu0 0.0
    %3127 = vmatprep.subr.mxu0 0.0
    %3128 = vmatpush1.msra.mxu0 0.0
    %3129 = vmatprep.subr.mxu0 0.0
    %3130 = vmatpush1.msra.mxu0 0.0
    %3131 = vmatprep.subr.mxu0 0.0
    %3132 = vmatpush1.msra.mxu0 0.0
    %3133 = vmatprep.subr.mxu0 0.0
    %3134 = vmatpush1.msra.mxu0 0.0
    %3135 = vmatprep.subr.mxu0 0.0
    %3136 = vmatpush1.msra.mxu0 0.0
    %3137 = vmatprep.subr.mxu0 0.0
    %3138 = vmatpush1.msra.mxu0 0.0
    %3139 = vmatprep.subr.mxu0 0.0
    %3140 = vmatpush1.msra.mxu0 0.0
    %3141 = vmatprep.subr.mxu0 0.0
    %3142 = vmatpush1.msra.mxu0 0.0
    %3143 = vmatprep.subr.mxu0 0.0
    %3144 = vmatpush1.msra.mxu0 0.0
    %3145 = vmatprep.subr.mxu0 0.0
    %3146 = vmatpush1.msra.mxu0 0.0
    %3147 = vmatprep.subr.mxu0 0.0
    %3148 = vmatpush1.msra.mxu0 0.0
    %3149 = vmatprep.subr.mxu0 0.0
    %3150 = vmatpush1.msra.mxu0 0.0
    %3151 = vmatprep.subr.mxu0 0.0
    %3152 = vmatpush1.msra.mxu0 0.0
    %3153 = vmatprep.subr.mxu0 0.0
    %3154 = vmatpush1.msra.mxu0 0.0
    %3155 = vmatprep.mubr.f32.mxu0 0.0
    %3156 = vmatmul.mubr.f32.gmra.mrb[0].mxu0 %v3089
    %v3157 = vpop.f32.mrb[0].mxu0
    %v3158 = vadd.f32 %v3086, %v3157
    %v3159 = vpop.f32.mrb[0].mxu0
    %v3160 = vadd.f32 %v3086, %v3159
    %3161 = vdwg.mxu0
    %3162 = vmatprep.subr.mxu0 %v3080
    %3163 = vmatpush1.msra.mxu0 %v3079
    %3164 = vmatprep.subr.mxu0 0.0
    %3165 = vmatpush1.msra.mxu0 0.0
    %3166 = vmatprep.subr.mxu0 0.0
    %3167 = vmatpush1.msra.mxu0 0.0
    %3168 = vmatprep.subr.mxu0 0.0
    %3169 = vmatpush1.msra.mxu0 0.0
    %3170 = vmatprep.subr.mxu0 0.0
    %3171 = vmatpush1.msra.mxu0 0.0
    %3172 = vmatprep.subr.mxu0 0.0
    %3173 = vmatpush1.msra.mxu0 0.0
    %3174 = vmatprep.subr.mxu0 0.0
    %3175 = vmatpush1.msra.mxu0 0.0
    %3176 = vmatprep.subr.mxu0 0.0
    %3177 = vmatpush1.msra.mxu0 0.0
    %3178 = vmatprep.subr.mxu0 0.0
    %3179 = vmatpush1.msra.mxu0 0.0
    %3180 = vmatprep.subr.mxu0 0.0
    %3181 = vmatpush1.msra.mxu0 0.0
    %3182 = vmatprep.subr.mxu0 0.0
    %3183 = vmatpush1.msra.mxu0 0.0
    %3184 = vmatprep.subr.mxu0 0.0
    %3185 = vmatpush1.msra.mxu0 0.0
    %3186 = vmatprep.subr.mxu0 0.0
    %3187 = vmatpush1.msra.mxu0 0.0
    %3188 = vmatprep.subr.mxu0 0.0
    %3189 = vmatpush1.msra.mxu0 0.0
    %3190 = vmatprep.subr.mxu0 0.0
    %3191 = vmatpush1.msra.mxu0 0.0
    %3192 = vmatprep.subr.mxu0 0.0
    %3193 = vmatpush1.msra.mxu0 0.0
    %3194 = vmatprep.subr.mxu0 0.0
    %3195 = vmatpush1.msra.mxu0 0.0
    %3196 = vmatprep.subr.mxu0 0.0
    %3197 = vmatpush1.msra.mxu0 0.0
    %3198 = vmatprep.subr.mxu0 0.0
    %3199 = vmatpush1.msra.mxu0 0.0
    %3200 = vmatprep.subr.mxu0 0.0
    %3201 = vmatpush1.msra.mxu0 0.0
    %3202 = vmatprep.subr.mxu0 0.0
    %3203 = vmatpush1.msra.mxu0 0.0
    %3204 = vmatprep.subr.mxu0 0.0
    %3205 = vmatpush1.msra.mxu0 0.0
    %3206 = vmatprep.subr.mxu0 0.0
    %3207 = vmatpush1.msra.mxu0 0.0
    %3208 = vmatprep.subr.mxu0 0.0
    %3209 = vmatpush1.msra.mxu0 0.0
    %3210 = vmatprep.subr.mxu0 0.0
    %3211 = vmatpush1.msra.mxu0 0.0
    %3212 = vmatprep.subr.mxu0 0.0
    %3213 = vmatpush1.msra.mxu0 0.0
    %3214 = vmatprep.subr.mxu0 0.0
    %3215 = vmatpush1.msra.mxu0 0.0
    %3216 = vmatprep.subr.mxu0 0.0
    %3217 = vmatpush1.msra.mxu0 0.0
    %3218 = vmatprep.subr.mxu0 0.0
    %3219 = vmatpush1.msra.mxu0 0.0
    %3220 = vmatprep.subr.mxu0 0.0
    %3221 = vmatpush1.msra.mxu0 0.0
    %3222 = vmatprep.subr.mxu0 0.0
    %3223 = vmatpush1.msra.mxu0 0.0
    %3224 = vmatprep.subr.mxu0 0.0
    %3225 = vmatpush1.msra.mxu0 0.0
    %3226 = vmatprep.mubr.f32.mxu0 0.0
    %3227 = vmatmul.mubr.f32.gmra.mrb[0].mxu0 %v3089
    %v3228 = vpop.f32.mrb[0].mxu0
    %v3229 = vadd.f32 %v3086, %v3228
    %v3230 = vpop.f32.mrb[0].mxu0
    %v3231 = vadd.f32 %v3086, %v3230
    %3232 = vdwg.mxu0
    %v3233 = vxor.u32 %v3158, 2147483648
    %v3234 = vxor.u32 %v3160, 2147483648
    %v3235 = vxor.u32 %v3229, 2147483648
    %v3236 = vxor.u32 %v3231, 2147483648
    %v3237 = vmul.f32 %v3233, 1.442695
    %v3238 = vpow.pop %v3237
    %v3239 = vmul.f32 %v3234, 1.442695
    %v3240 = vpow.pop %v3239
    %v3241 = vmul.f32 %v3235, 1.442695
    %v3242 = vpow.pop %v3241
    %v3243 = vmul.f32 %v3236, 1.442695
    %v3244 = vpow.pop %v3243
    %v3245 = vadd.f32 %v3238, 1.0
    %v3246 = vadd.f32 %v3240, 1.0
    %v3247 = vadd.f32 %v3242, 1.0
    %v3248 = vadd.f32 %v3244, 1.0
    %v3249 = vrcp.pop %v3245
    %v3250 = vmul.f32 1.0, %v3249
    %v3251 = vrcp.pop %v3246
    %v3252 = vmul.f32 1.0, %v3251
    %v3253 = vrcp.pop %v3247
    %v3254 = vmul.f32 1.0, %v3253
    %v3255 = vrcp.pop %v3248
    %v3256 = vmul.f32 1.0, %v3255
    %v3257 = vmul.f32 %v3158, %v3250
    %v3258 = vmul.f32 %v3160, %v3252
    %v3259 = vmul.f32 %v3229, %v3254
    %v3260 = vmul.f32 %v3231, %v3256
    %s3261 = scalar_lea.vmem %s19, 16
    %v3262 = vld [vmem:[%s3261] sm:$0xff]
    %v3264 = vsel %vm633, %v3262, 0
    %3266 = vmatprep.subr.mxu0 %v3258
    %3267 = vmatpush1.msra.mxu0 %v3257
    %3268 = vmatprep.subr.mxu0 0.0
    %3269 = vmatpush1.msra.mxu0 0.0
    %3270 = vmatprep.subr.mxu0 0.0
    %3271 = vmatpush1.msra.mxu0 0.0
    %3272 = vmatprep.subr.mxu0 0.0
    %3273 = vmatpush1.msra.mxu0 0.0
    %3274 = vmatprep.subr.mxu0 0.0
    %3275 = vmatpush1.msra.mxu0 0.0
    %3276 = vmatprep.subr.mxu0 0.0
    %3277 = vmatpush1.msra.mxu0 0.0
    %3278 = vmatprep.subr.mxu0 0.0
    %3279 = vmatpush1.msra.mxu0 0.0
    %3280 = vmatprep.subr.mxu0 0.0
    %3281 = vmatpush1.msra.mxu0 0.0
    %3282 = vmatprep.subr.mxu0 0.0
    %3283 = vmatpush1.msra.mxu0 0.0
    %3284 = vmatprep.subr.mxu0 0.0
    %3285 = vmatpush1.msra.mxu0 0.0
    %3286 = vmatprep.subr.mxu0 0.0
    %3287 = vmatpush1.msra.mxu0 0.0
    %3288 = vmatprep.subr.mxu0 0.0
    %3289 = vmatpush1.msra.mxu0 0.0
    %3290 = vmatprep.subr.mxu0 0.0
    %3291 = vmatpush1.msra.mxu0 0.0
    %3292 = vmatprep.subr.mxu0 0.0
    %3293 = vmatpush1.msra.mxu0 0.0
    %3294 = vmatprep.subr.mxu0 0.0
    %3295 = vmatpush1.msra.mxu0 0.0
    %3296 = vmatprep.subr.mxu0 0.0
    %3297 = vmatpush1.msra.mxu0 0.0
    %3298 = vmatprep.subr.mxu0 0.0
    %3299 = vmatpush1.msra.mxu0 0.0
    %3300 = vmatprep.subr.mxu0 0.0
    %3301 = vmatpush1.msra.mxu0 0.0
    %3302 = vmatprep.subr.mxu0 0.0
    %3303 = vmatpush1.msra.mxu0 0.0
    %3304 = vmatprep.subr.mxu0 0.0
    %3305 = vmatpush1.msra.mxu0 0.0
    %3306 = vmatprep.subr.mxu0 0.0
    %3307 = vmatpush1.msra.mxu0 0.0
    %3308 = vmatprep.subr.mxu0 0.0
    %3309 = vmatpush1.msra.mxu0 0.0
    %3310 = vmatprep.subr.mxu0 0.0
    %3311 = vmatpush1.msra.mxu0 0.0
    %3312 = vmatprep.subr.mxu0 0.0
    %3313 = vmatpush1.msra.mxu0 0.0
    %3314 = vmatprep.subr.mxu0 0.0
    %3315 = vmatpush1.msra.mxu0 0.0
    %3316 = vmatprep.subr.mxu0 0.0
    %3317 = vmatpush1.msra.mxu0 0.0
    %3318 = vmatprep.subr.mxu0 0.0
    %3319 = vmatpush1.msra.mxu0 0.0
    %3320 = vmatprep.subr.mxu0 0.0
    %3321 = vmatpush1.msra.mxu0 0.0
    %3322 = vmatprep.subr.mxu0 0.0
    %3323 = vmatpush1.msra.mxu0 0.0
    %3324 = vmatprep.subr.mxu0 0.0
    %3325 = vmatpush1.msra.mxu0 0.0
    %3326 = vmatprep.subr.mxu0 0.0
    %3327 = vmatpush1.msra.mxu0 0.0
    %3328 = vmatprep.subr.mxu0 0.0
    %3329 = vmatpush1.msra.mxu0 0.0
    %3330 = vmatprep.mubr.f32.mxu0 0.0
    %3331 = vmatmul.mubr.f32.gmra.mrb[0].mxu0 %v3264
    %v3332 = vpop.f32.mrb[0].mxu0
    %v3333 = vadd.f32 0.0, %v3332
    %v3334 = vpop.f32.mrb[0].mxu0
    %v3335 = vadd.f32 0.0, %v3334
    %3336 = vdwg.mxu0
    %3337 = vmatprep.subr.mxu0 %v3260
    %3338 = vmatpush1.msra.mxu0 %v3259
    %3339 = vmatprep.subr.mxu0 0.0
    %3340 = vmatpush1.msra.mxu0 0.0
    %3341 = vmatprep.subr.mxu0 0.0
    %3342 = vmatpush1.msra.mxu0 0.0
    %3343 = vmatprep.subr.mxu0 0.0
    %3344 = vmatpush1.msra.mxu0 0.0
    %3345 = vmatprep.subr.mxu0 0.0
    %3346 = vmatpush1.msra.mxu0 0.0
    %3347 = vmatprep.subr.mxu0 0.0
    %3348 = vmatpush1.msra.mxu0 0.0
    %3349 = vmatprep.subr.mxu0 0.0
    %3350 = vmatpush1.msra.mxu0 0.0
    %3351 = vmatprep.subr.mxu0 0.0
    %3352 = vmatpush1.msra.mxu0 0.0
    %3353 = vmatprep.subr.mxu0 0.0
    %3354 = vmatpush1.msra.mxu0 0.0
    %3355 = vmatprep.subr.mxu0 0.0
    %3356 = vmatpush1.msra.mxu0 0.0
    %3357 = vmatprep.subr.mxu0 0.0
    %3358 = vmatpush1.msra.mxu0 0.0
    %3359 = vmatprep.subr.mxu0 0.0
    %3360 = vmatpush1.msra.mxu0 0.0
    %3361 = vmatprep.subr.mxu0 0.0
    %3362 = vmatpush1.msra.mxu0 0.0
    %3363 = vmatprep.subr.mxu0 0.0
    %3364 = vmatpush1.msra.mxu0 0.0
    %3365 = vmatprep.subr.mxu0 0.0
    %3366 = vmatpush1.msra.mxu0 0.0
    %3367 = vmatprep.subr.mxu0 0.0
    %3368 = vmatpush1.msra.mxu0 0.0
    %3369 = vmatprep.subr.mxu0 0.0
    %3370 = vmatpush1.msra.mxu0 0.0
    %3371 = vmatprep.subr.mxu0 0.0
    %3372 = vmatpush1.msra.mxu0 0.0
    %3373 = vmatprep.subr.mxu0 0.0
    %3374 = vmatpush1.msra.mxu0 0.0
    %3375 = vmatprep.subr.mxu0 0.0
    %3376 = vmatpush1.msra.mxu0 0.0
    %3377 = vmatprep.subr.mxu0 0.0
    %3378 = vmatpush1.msra.mxu0 0.0
    %3379 = vmatprep.subr.mxu0 0.0
    %3380 = vmatpush1.msra.mxu0 0.0
    %3381 = vmatprep.subr.mxu0 0.0
    %3382 = vmatpush1.msra.mxu0 0.0
    %3383 = vmatprep.subr.mxu0 0.0
    %3384 = vmatpush1.msra.mxu0 0.0
    %3385 = vmatprep.subr.mxu0 0.0
    %3386 = vmatpush1.msra.mxu0 0.0
    %3387 = vmatprep.subr.mxu0 0.0
    %3388 = vmatpush1.msra.mxu0 0.0
    %3389 = vmatprep.subr.mxu0 0.0
    %3390 = vmatpush1.msra.mxu0 0.0
    %3391 = vmatprep.subr.mxu0 0.0
    %3392 = vmatpush1.msra.mxu0 0.0
    %3393 = vmatprep.subr.mxu0 0.0
    %3394 = vmatpush1.msra.mxu0 0.0
    %3395 = vmatprep.subr.mxu0 0.0
    %3396 = vmatpush1.msra.mxu0 0.0
    %3397 = vmatprep.subr.mxu0 0.0
    %3398 = vmatpush1.msra.mxu0 0.0
    %3399 = vmatprep.subr.mxu0 0.0
    %3400 = vmatpush1.msra.mxu0 0.0
    %3401 = vmatprep.mubr.f32.mxu0 0.0
    %3402 = vmatmul.mubr.f32.gmra.mrb[0].mxu0 %v3264
    %v3403 = vpop.f32.mrb[0].mxu0
    %v3404 = vadd.f32 0.0, %v3403
    %v3405 = vpop.f32.mrb[0].mxu0
    %v3406 = vadd.f32 0.0, %v3405
    %3407 = vdwg.mxu0
    %v3408 = vadd.f32 %v1205, %v3333
    %v3409 = vadd.f32 %v1207, %v3335
    %v3410 = vadd.f32 %v1276, %v3404
    %v3411 = vadd.f32 %v1278, %v3406
    %s3412 = scalar_lea.vmem %s11, 40
    %v3413 = vld [vmem:[%s3412] sm:$0xff]
    %v3414 = vld [vmem:[%s3412 + $0x8] sm:$0xff]
    %v3415 = vld [vmem:[%s3412 + $0x10] sm:$0xff]
    %v3416 = vld [vmem:[%s3412 + $0x18] sm:$0xff]
    %v3417 = vld [vmem:[%s3412 + $0x20] sm:$0xff]
    %s3418 = scalar_lea.vmem %s12, 40
    %v3419 = vld [vmem:[%s3418] sm:$0xff]
    %v3420 = vld [vmem:[%s3418 + $0x8] sm:$0xff]
    %v3421 = vld [vmem:[%s3418 + $0x10] sm:$0xff]
    %v3422 = vld [vmem:[%s3418 + $0x18] sm:$0xff]
    %v3423 = vld [vmem:[%s3418 + $0x20] sm:$0xff]
    %3425 = vset.pattern.permute.xlu0 0
    %3426 = vperm.xlu0 %3425, %v3419
    %v3427 = vpop.permute.xlu0 %3426
    %3430 = vset.pattern.permute.xlu0 0
    %3431 = vperm.xlu0 %3430, %v3420
    %v3432 = vpop.permute.xlu0 %3431
    %3435 = vset.pattern.permute.xlu0 0
    %3436 = vperm.xlu0 %3435, %v3421
    %v3437 = vpop.permute.xlu0 %3436
    %3440 = vset.pattern.permute.xlu0 0
    %3441 = vperm.xlu0 %3440, %v3422
    %v3442 = vpop.permute.xlu0 %3441
    %3445 = vset.pattern.permute.xlu0 0
    %3446 = vperm.xlu0 %3445, %v3423
    %v3447 = vpop.permute.xlu0 %3446
    %v3450 = vsel %vm633, %v3413, 0
    %v3453 = vsel %vm633, %v3414, 0
    %v3456 = vsel %vm633, %v3415, 0
    %v3459 = vsel %vm633, %v3416, 0
    %v3462 = vsel %vm633, %v3417, 0
    %3464 = vmatprep.subr.mxu0 %v3258
    %3465 = vmatpush1.msra.mxu0 %v3257
    %3466 = vmatprep.subr.mxu0 0.0
    %3467 = vmatpush1.msra.mxu0 0.0
    %3468 = vmatprep.subr.mxu0 0.0
    %3469 = vmatpush1.msra.mxu0 0.0
    %3470 = vmatprep.subr.mxu0 0.0
    %3471 = vmatpush1.msra.mxu0 0.0
    %3472 = vmatprep.subr.mxu0 0.0
    %3473 = vmatpush1.msra.mxu0 0.0
    %3474 = vmatprep.subr.mxu0 0.0
    %3475 = vmatpush1.msra.mxu0 0.0
    %3476 = vmatprep.subr.mxu0 0.0
    %3477 = vmatpush1.msra.mxu0 0.0
    %3478 = vmatprep.subr.mxu0 0.0
    %3479 = vmatpush1.msra.mxu0 0.0
    %3480 = vmatprep.subr.mxu0 0.0
    %3481 = vmatpush1.msra.mxu0 0.0
    %3482 = vmatprep.subr.mxu0 0.0
    %3483 = vmatpush1.msra.mxu0 0.0
    %3484 = vmatprep.subr.mxu0 0.0
    %3485 = vmatpush1.msra.mxu0 0.0
    %3486 = vmatprep.subr.mxu0 0.0
    %3487 = vmatpush1.msra.mxu0 0.0
    %3488 = vmatprep.subr.mxu0 0.0
    %3489 = vmatpush1.msra.mxu0 0.0
    %3490 = vmatprep.subr.mxu0 0.0
    %3491 = vmatpush1.msra.mxu0 0.0
    %3492 = vmatprep.subr.mxu0 0.0
    %3493 = vmatpush1.msra.mxu0 0.0
    %3494 = vmatprep.subr.mxu0 0.0
    %3495 = vmatpush1.msra.mxu0 0.0
    %3496 = vmatprep.subr.mxu0 0.0
    %3497 = vmatpush1.msra.mxu0 0.0
    %3498 = vmatprep.subr.mxu0 0.0
    %3499 = vmatpush1.msra.mxu0 0.0
    %3500 = vmatprep.subr.mxu0 0.0
    %3501 = vmatpush1.msra.mxu0 0.0
    %3502 = vmatprep.subr.mxu0 0.0
    %3503 = vmatpush1.msra.mxu0 0.0
    %3504 = vmatprep.subr.mxu0 0.0
    %3505 = vmatpush1.msra.mxu0 0.0
    %3506 = vmatprep.subr.mxu0 0.0
    %3507 = vmatpush1.msra.mxu0 0.0
    %3508 = vmatprep.subr.mxu0 0.0
    %3509 = vmatpush1.msra.mxu0 0.0
    %3510 = vmatprep.subr.mxu0 0.0
    %3511 = vmatpush1.msra.mxu0 0.0
    %3512 = vmatprep.subr.mxu0 0.0
    %3513 = vmatpush1.msra.mxu0 0.0
    %3514 = vmatprep.subr.mxu0 0.0
    %3515 = vmatpush1.msra.mxu0 0.0
    %3516 = vmatprep.subr.mxu0 0.0
    %3517 = vmatpush1.msra.mxu0 0.0
    %3518 = vmatprep.subr.mxu0 0.0
    %3519 = vmatpush1.msra.mxu0 0.0
    %3520 = vmatprep.subr.mxu0 0.0
    %3521 = vmatpush1.msra.mxu0 0.0
    %3522 = vmatprep.subr.mxu0 0.0
    %3523 = vmatpush1.msra.mxu0 0.0
    %3524 = vmatprep.subr.mxu0 0.0
    %3525 = vmatpush1.msra.mxu0 0.0
    %3526 = vmatprep.subr.mxu0 0.0
    %3527 = vmatpush1.msra.mxu0 0.0
    %3528 = vmatprep.mubr.f32.mxu0 0.0
    %3529 = vmatmul.mubr.f32.gmra.mrb[0].mxu0 %v3450
    %v3530 = vpop.f32.mrb[0].mxu0
    %v3531 = vadd.f32 %v3427, %v3530
    %v3532 = vpop.f32.mrb[0].mxu0
    %v3533 = vadd.f32 %v3427, %v3532
    %3534 = vmatprep.mubr.f32.mxu0 0.0
    %3535 = vmatmul.mubr.f32.gmra.mrb[0].mxu0 %v3453
    %v3536 = vpop.f32.mrb[0].mxu0
    %v3537 = vadd.f32 %v3432, %v3536
    %v3538 = vpop.f32.mrb[0].mxu0
    %v3539 = vadd.f32 %v3432, %v3538
    %3540 = vmatprep.mubr.f32.mxu0 0.0
    %3541 = vmatmul.mubr.f32.gmra.mrb[0].mxu0 %v3456
    %v3542 = vpop.f32.mrb[0].mxu0
    %v3543 = vadd.f32 %v3437, %v3542
    %v3544 = vpop.f32.mrb[0].mxu0
    %v3545 = vadd.f32 %v3437, %v3544
    %3546 = vmatprep.mubr.f32.mxu0 0.0
    %3547 = vmatmul.mubr.f32.gmra.mrb[0].mxu0 %v3459
    %v3548 = vpop.f32.mrb[0].mxu0
    %v3549 = vadd.f32 %v3442, %v3548
    %v3550 = vpop.f32.mrb[0].mxu0
    %v3551 = vadd.f32 %v3442, %v3550
    %3552 = vmatprep.mubr.f32.mxu0 0.0
    %3553 = vmatmul.mubr.f32.gmra.mrb[0].mxu0 %v3462
    %v3554 = vpop.f32.mrb[0].mxu0
    %v3555 = vadd.f32 %v3447, %v3554
    %v3556 = vpop.f32.mrb[0].mxu0
    %v3557 = vadd.f32 %v3447, %v3556
    %3558 = vdwg.mxu0
    %3559 = vmatprep.subr.mxu0 %v3260
    %3560 = vmatpush1.msra.mxu0 %v3259
    %3561 = vmatprep.subr.mxu0 0.0
    %3562 = vmatpush1.msra.mxu0 0.0
    %3563 = vmatprep.subr.mxu0 0.0
    %3564 = vmatpush1.msra.mxu0 0.0
    %3565 = vmatprep.subr.mxu0 0.0
    %3566 = vmatpush1.msra.mxu0 0.0
    %3567 = vmatprep.subr.mxu0 0.0
    %3568 = vmatpush1.msra.mxu0 0.0
    %3569 = vmatprep.subr.mxu0 0.0
    %3570 = vmatpush1.msra.mxu0 0.0
    %3571 = vmatprep.subr.mxu0 0.0
    %3572 = vmatpush1.msra.mxu0 0.0
    %3573 = vmatprep.subr.mxu0 0.0
    %3574 = vmatpush1.msra.mxu0 0.0
    %3575 = vmatprep.subr.mxu0 0.0
    %3576 = vmatpush1.msra.mxu0 0.0
    %3577 = vmatprep.subr.mxu0 0.0
    %3578 = vmatpush1.msra.mxu0 0.0
    %3579 = vmatprep.subr.mxu0 0.0
    %3580 = vmatpush1.msra.mxu0 0.0
    %3581 = vmatprep.subr.mxu0 0.0
    %3582 = vmatpush1.msra.mxu0 0.0
    %3583 = vmatprep.subr.mxu0 0.0
    %3584 = vmatpush1.msra.mxu0 0.0
    %3585 = vmatprep.subr.mxu0 0.0
    %3586 = vmatpush1.msra.mxu0 0.0
    %3587 = vmatprep.subr.mxu0 0.0
    %3588 = vmatpush1.msra.mxu0 0.0
    %3589 = vmatprep.subr.mxu0 0.0
    %3590 = vmatpush1.msra.mxu0 0.0
    %3591 = vmatprep.subr.mxu0 0.0
    %3592 = vmatpush1.msra.mxu0 0.0
    %3593 = vmatprep.subr.mxu0 0.0
    %3594 = vmatpush1.msra.mxu0 0.0
    %3595 = vmatprep.subr.mxu0 0.0
    %3596 = vmatpush1.msra.mxu0 0.0
    %3597 = vmatprep.subr.mxu0 0.0
    %3598 = vmatpush1.msra.mxu0 0.0
    %3599 = vmatprep.subr.mxu0 0.0
    %3600 = vmatpush1.msra.mxu0 0.0
    %3601 = vmatprep.subr.mxu0 0.0
    %3602 = vmatpush1.msra.mxu0 0.0
    %3603 = vmatprep.subr.mxu0 0.0
    %3604 = vmatpush1.msra.mxu0 0.0
    %3605 = vmatprep.subr.mxu0 0.0
    %3606 = vmatpush1.msra.mxu0 0.0
    %3607 = vmatprep.subr.mxu0 0.0
    %3608 = vmatpush1.msra.mxu0 0.0
    %3609 = vmatprep.subr.mxu0 0.0
    %3610 = vmatpush1.msra.mxu0 0.0
    %3611 = vmatprep.subr.mxu0 0.0
    %3612 = vmatpush1.msra.mxu0 0.0
    %3613 = vmatprep.subr.mxu0 0.0
    %3614 = vmatpush1.msra.mxu0 0.0
    %3615 = vmatprep.subr.mxu0 0.0
    %3616 = vmatpush1.msra.mxu0 0.0
    %3617 = vmatprep.subr.mxu0 0.0
    %3618 = vmatpush1.msra.mxu0 0.0
    %3619 = vmatprep.subr.mxu0 0.0
    %3620 = vmatpush1.msra.mxu0 0.0
    %3621 = vmatprep.subr.mxu0 0.0
    %3622 = vmatpush1.msra.mxu0 0.0
    %3623 = vmatprep.mubr.f32.mxu0 0.0
    %3624 = vmatmul.mubr.f32.gmra.mrb[0].mxu0 %v3450
    %v3625 = vpop.f32.mrb[0].mxu0
    %v3626 = vadd.f32 %v3427, %v3625
    %v3627 = vpop.f32.mrb[0].mxu0
    %v3628 = vadd.f32 %v3427, %v3627
    %3629 = vmatprep.mubr.f32.mxu0 0.0
    %3630 = vmatmul.mubr.f32.gmra.mrb[0].mxu0 %v3453
    %v3631 = vpop.f32.mrb[0].mxu0
    %v3632 = vadd.f32 %v3432, %v3631
    %v3633 = vpop.f32.mrb[0].mxu0
    %v3634 = vadd.f32 %v3432, %v3633
    %3635 = vmatprep.mubr.f32.mxu0 0.0
    %3636 = vmatmul.mubr.f32.gmra.mrb[0].mxu0 %v3456
    %v3637 = vpop.f32.mrb[0].mxu0
    %v3638 = vadd.f32 %v3437, %v3637
    %v3639 = vpop.f32.mrb[0].mxu0
    %v3640 = vadd.f32 %v3437, %v3639
    %3641 = vmatprep.mubr.f32.mxu0 0.0
    %3642 = vmatmul.mubr.f32.gmra.mrb[0].mxu0 %v3459
    %v3643 = vpop.f32.mrb[0].mxu0
    %v3644 = vadd.f32 %v3442, %v3643
    %v3645 = vpop.f32.mrb[0].mxu0
    %v3646 = vadd.f32 %v3442, %v3645
    %3647 = vmatprep.mubr.f32.mxu0 0.0
    %3648 = vmatmul.mubr.f32.gmra.mrb[0].mxu0 %v3462
    %v3649 = vpop.f32.mrb[0].mxu0
    %v3650 = vadd.f32 %v3447, %v3649
    %v3651 = vpop.f32.mrb[0].mxu0
    %v3652 = vadd.f32 %v3447, %v3651
    %3653 = vdwg.mxu0
    %v3654 = vxor.u32 %v3531, 2147483648
    %v3655 = vxor.u32 %v3533, 2147483648
    %v3656 = vxor.u32 %v3626, 2147483648
    %v3657 = vxor.u32 %v3628, 2147483648
    %v3658 = vxor.u32 %v3537, 2147483648
    %v3659 = vxor.u32 %v3539, 2147483648
    %v3660 = vxor.u32 %v3632, 2147483648
    %v3661 = vxor.u32 %v3634, 2147483648
    %v3662 = vxor.u32 %v3543, 2147483648
    %v3663 = vxor.u32 %v3545, 2147483648
    %v3664 = vxor.u32 %v3638, 2147483648
    %v3665 = vxor.u32 %v3640, 2147483648
    %v3666 = vxor.u32 %v3549, 2147483648
    %v3667 = vxor.u32 %v3551, 2147483648
    %v3668 = vxor.u32 %v3644, 2147483648
    %v3669 = vxor.u32 %v3646, 2147483648
    %v3670 = vxor.u32 %v3555, 2147483648
    %v3671 = vxor.u32 %v3557, 2147483648
    %v3672 = vxor.u32 %v3650, 2147483648
    %v3673 = vxor.u32 %v3652, 2147483648
    %v3674 = vmul.f32 %v3654, 1.442695
    %v3675 = vpow.pop %v3674
    %v3676 = vmul.f32 %v3655, 1.442695
    %v3677 = vpow.pop %v3676
    %v3678 = vmul.f32 %v3656, 1.442695
    %v3679 = vpow.pop %v3678
    %v3680 = vmul.f32 %v3657, 1.442695
    %v3681 = vpow.pop %v3680
    %v3682 = vmul.f32 %v3658, 1.442695
    %v3683 = vpow.pop %v3682
    %v3684 = vmul.f32 %v3659, 1.442695
    %v3685 = vpow.pop %v3684
    %v3686 = vmul.f32 %v3660, 1.442695
    %v3687 = vpow.pop %v3686
    %v3688 = vmul.f32 %v3661, 1.442695
    %v3689 = vpow.pop %v3688
    %v3690 = vmul.f32 %v3662, 1.442695
    %v3691 = vpow.pop %v3690
    %v3692 = vmul.f32 %v3663, 1.442695
    %v3693 = vpow.pop %v3692
    %v3694 = vmul.f32 %v3664, 1.442695
    %v3695 = vpow.pop %v3694
    %v3696 = vmul.f32 %v3665, 1.442695
    %v3697 = vpow.pop %v3696
    %v3698 = vmul.f32 %v3666, 1.442695
    %v3699 = vpow.pop %v3698
    %v3700 = vmul.f32 %v3667, 1.442695
    %v3701 = vpow.pop %v3700
    %v3702 = vmul.f32 %v3668, 1.442695
    %v3703 = vpow.pop %v3702
    %v3704 = vmul.f32 %v3669, 1.442695
    %v3705 = vpow.pop %v3704
    %v3706 = vmul.f32 %v3670, 1.442695
    %v3707 = vpow.pop %v3706
    %v3708 = vmul.f32 %v3671, 1.442695
    %v3709 = vpow.pop %v3708
    %v3710 = vmul.f32 %v3672, 1.442695
    %v3711 = vpow.pop %v3710
    %v3712 = vmul.f32 %v3673, 1.442695
    %v3713 = vpow.pop %v3712
    %v3714 = vadd.f32 %v3675, 1.0
    %v3715 = vadd.f32 %v3677, 1.0
    %v3716 = vadd.f32 %v3679, 1.0
    %v3717 = vadd.f32 %v3681, 1.0
    %v3718 = vadd.f32 %v3683, 1.0
    %v3719 = vadd.f32 %v3685, 1.0
    %v3720 = vadd.f32 %v3687, 1.0
    %v3721 = vadd.f32 %v3689, 1.0
    %v3722 = vadd.f32 %v3691, 1.0
    %v3723 = vadd.f32 %v3693, 1.0
    %v3724 = vadd.f32 %v3695, 1.0
    %v3725 = vadd.f32 %v3697, 1.0
    %v3726 = vadd.f32 %v3699, 1.0
    %v3727 = vadd.f32 %v3701, 1.0
    %v3728 = vadd.f32 %v3703, 1.0
    %v3729 = vadd.f32 %v3705, 1.0
    %v3730 = vadd.f32 %v3707, 1.0
    %v3731 = vadd.f32 %v3709, 1.0
    %v3732 = vadd.f32 %v3711, 1.0
    %v3733 = vadd.f32 %v3713, 1.0
    %v3734 = vrcp.pop %v3714
    %v3735 = vmul.f32 1.0, %v3734
    %v3736 = vrcp.pop %v3715
    %v3737 = vmul.f32 1.0, %v3736
    %v3738 = vrcp.pop %v3716
    %v3739 = vmul.f32 1.0, %v3738
    %v3740 = vrcp.pop %v3717
    %v3741 = vmul.f32 1.0, %v3740
    %v3742 = vrcp.pop %v3718
    %v3743 = vmul.f32 1.0, %v3742
    %v3744 = vrcp.pop %v3719
    %v3745 = vmul.f32 1.0, %v3744
    %v3746 = vrcp.pop %v3720
    %v3747 = vmul.f32 1.0, %v3746
    %v3748 = vrcp.pop %v3721
    %v3749 = vmul.f32 1.0, %v3748
    %v3750 = vrcp.pop %v3722
    %v3751 = vmul.f32 1.0, %v3750
    %v3752 = vrcp.pop %v3723
    %v3753 = vmul.f32 1.0, %v3752
    %v3754 = vrcp.pop %v3724
    %v3755 = vmul.f32 1.0, %v3754
    %v3756 = vrcp.pop %v3725
    %v3757 = vmul.f32 1.0, %v3756
    %v3758 = vrcp.pop %v3726
    %v3759 = vmul.f32 1.0, %v3758
    %v3760 = vrcp.pop %v3727
    %v3761 = vmul.f32 1.0, %v3760
    %v3762 = vrcp.pop %v3728
    %v3763 = vmul.f32 1.0, %v3762
    %v3764 = vrcp.pop %v3729
    %v3765 = vmul.f32 1.0, %v3764
    %v3766 = vrcp.pop %v3730
    %v3767 = vmul.f32 1.0, %v3766
    %v3768 = vrcp.pop %v3731
    %v3769 = vmul.f32 1.0, %v3768
    %v3770 = vrcp.pop %v3732
    %v3771 = vmul.f32 1.0, %v3770
    %v3772 = vrcp.pop %v3733
    %v3773 = vmul.f32 1.0, %v3772
    %v3774 = vmul.f32 %v3531, %v3735
    %v3775 = vmul.f32 %v3533, %v3737
    %v3776 = vmul.f32 %v3626, %v3739
    %v3777 = vmul.f32 %v3628, %v3741
    %v3778 = vmul.f32 %v3537, %v3743
    %v3779 = vmul.f32 %v3539, %v3745
    %v3780 = vmul.f32 %v3632, %v3747
    %v3781 = vmul.f32 %v3634, %v3749
    %v3782 = vmul.f32 %v3543, %v3751
    %v3783 = vmul.f32 %v3545, %v3753
    %v3784 = vmul.f32 %v3638, %v3755
    %v3785 = vmul.f32 %v3640, %v3757
    %v3786 = vmul.f32 %v3549, %v3759
    %v3787 = vmul.f32 %v3551, %v3761
    %v3788 = vmul.f32 %v3644, %v3763
    %v3789 = vmul.f32 %v3646, %v3765
    %v3790 = vmul.f32 %v3555, %v3767
    %v3791 = vmul.f32 %v3557, %v3769
    %v3792 = vmul.f32 %v3650, %v3771
    %v3793 = vmul.f32 %v3652, %v3773
    %v3794 = vsel %vm1660, %v3774, -inf
    %v3795 = vsel %vm1660, %v3775, -inf
    %v3796 = vsel %vm1660, %v3776, -inf
    %v3797 = vsel %vm1660, %v3777, -inf
    %v3798 = vmax.f32 %v3794, %v3795
    %v3799 = vmax.f32 %v3796, %v3797
    %v3800 = vmax.f32 %v3798, %v3799
    %3801 = vmax.xlane.f32.xlu0 %v3800
    %v3802 = vpop.xlane.xlu0 %3801
    %v3803 = vsub.f32 %v3774, %v3802
    %v3804 = vsub.f32 %v3775, %v3802
    %v3805 = vsub.f32 %v3776, %v3802
    %v3806 = vsub.f32 %v3777, %v3802
    %v3807 = vmul.f32 %v3803, 1.442695
    %v3808 = vpow.pop %v3807
    %v3809 = vmul.f32 %v3804, 1.442695
    %v3810 = vpow.pop %v3809
    %v3811 = vmul.f32 %v3805, 1.442695
    %v3812 = vpow.pop %v3811
    %v3813 = vmul.f32 %v3806, 1.442695
    %v3814 = vpow.pop %v3813
    %v3815 = vlaneseq
    %v3816 = vshrl.u32 %v3815, 7
    %v3817 = vsub.s32 0, %v3816
    %v3818 = vrot.slane %v3808, %v3817
    %v3819 = vlaneseq
    %v3820 = vshrl.u32 %v3819, 7
    %v3821 = vsub.s32 0, %v3820
    %v3822 = vrot.slane %v3810, %v3821
    %v3823 = vlaneseq
    %v3824 = vshrl.u32 %v3823, 7
    %v3825 = vsub.s32 0, %v3824
    %v3826 = vrot.slane %v3812, %v3825
    %v3827 = vlaneseq
    %v3828 = vshrl.u32 %v3827, 7
    %v3829 = vsub.s32 0, %v3828
    %v3830 = vrot.slane %v3814, %v3829
    %v3831 = vmul.f32 %v3778, %v3818
    %v3832 = vmul.f32 %v3779, %v3822
    %v3833 = vmul.f32 %v3780, %v3826
    %v3834 = vmul.f32 %v3781, %v3830
    %v3835 = vmul.f32 %v625, %v3818
    %v3836 = vmul.f32 %v625, %v3822
    %v3837 = vmul.f32 %v625, %v3826
    %v3838 = vmul.f32 %v625, %v3830
    %v3839 = vadd.f32 %v3831, %v3835
    %v3840 = vadd.f32 %v3832, %v3836
    %v3841 = vadd.f32 %v3833, %v3837
    %v3842 = vadd.f32 %v3834, %v3838
    %3843 = vmatprep.subr.mxu0 %v102
    %3844 = vmatpush1.msra.mxu0 %v101
    %3845 = vmatprep.subr.mxu0 %v106
    %3846 = vmatpush1.msra.mxu0 %v105
    %3847 = vmatprep.subr.mxu0 %v110
    %3848 = vmatpush1.msra.mxu0 %v109
    %3849 = vmatprep.subr.mxu0 %v114
    %3850 = vmatpush1.msra.mxu0 %v113
    %3851 = vmatprep.subr.mxu0 %v118
    %3852 = vmatpush1.msra.mxu0 %v117
    %3853 = vmatprep.subr.mxu0 %v122
    %3854 = vmatpush1.msra.mxu0 %v121
    %3855 = vmatprep.subr.mxu0 %v126
    %3856 = vmatpush1.msra.mxu0 %v125
    %3857 = vmatprep.subr.mxu0 %v130
    %3858 = vmatpush1.msra.mxu0 %v129
    %3859 = vmatprep.subr.mxu0 %v134
    %3860 = vmatpush1.msra.mxu0 %v133
    %3861 = vmatprep.subr.mxu0 %v138
    %3862 = vmatpush1.msra.mxu0 %v137
    %3863 = vmatprep.subr.mxu0 %v142
    %3864 = vmatpush1.msra.mxu0 %v141
    %3865 = vmatprep.subr.mxu0 %v146
    %3866 = vmatpush1.msra.mxu0 %v145
    %3867 = vmatprep.subr.mxu0 %v150
    %3868 = vmatpush1.msra.mxu0 %v149
    %3869 = vmatprep.subr.mxu0 %v154
    %3870 = vmatpush1.msra.mxu0 %v153
    %3871 = vmatprep.subr.mxu0 %v158
    %3872 = vmatpush1.msra.mxu0 %v157
    %3873 = vmatprep.subr.mxu0 %v162
    %3874 = vmatpush1.msra.mxu0 %v161
    %3875 = vmatprep.subr.mxu0 %v166
    %3876 = vmatpush1.msra.mxu0 %v165
    %3877 = vmatprep.subr.mxu0 %v170
    %3878 = vmatpush1.msra.mxu0 %v169
    %3879 = vmatprep.subr.mxu0 %v174
    %3880 = vmatpush1.msra.mxu0 %v173
    %3881 = vmatprep.subr.mxu0 %v178
    %3882 = vmatpush1.msra.mxu0 %v177
    %3883 = vmatprep.subr.mxu0 %v182
    %3884 = vmatpush1.msra.mxu0 %v181
    %3885 = vmatprep.subr.mxu0 %v186
    %3886 = vmatpush1.msra.mxu0 %v185
    %3887 = vmatprep.subr.mxu0 %v190
    %3888 = vmatpush1.msra.mxu0 %v189
    %3889 = vmatprep.subr.mxu0 %v194
    %3890 = vmatpush1.msra.mxu0 %v193
    %3891 = vmatprep.subr.mxu0 %v198
    %3892 = vmatpush1.msra.mxu0 %v197
    %3893 = vmatprep.subr.mxu0 %v202
    %3894 = vmatpush1.msra.mxu0 %v201
    %3895 = vmatprep.subr.mxu0 %v206
    %3896 = vmatpush1.msra.mxu0 %v205
    %3897 = vmatprep.subr.mxu0 %v210
    %3898 = vmatpush1.msra.mxu0 %v209
    %3899 = vmatprep.subr.mxu0 %v214
    %3900 = vmatpush1.msra.mxu0 %v213
    %3901 = vmatprep.subr.mxu0 %v218
    %3902 = vmatpush1.msra.mxu0 %v217
    %3903 = vmatprep.subr.mxu0 %v222
    %3904 = vmatpush1.msra.mxu0 %v221
    %3905 = vmatprep.subr.mxu0 %v226
    %3906 = vmatpush1.msra.mxu0 %v225
    %3907 = vmatprep.mubr.f32.mxu0 %v3840
    %3908 = vmatmul.mubr.f32.gmra.mrb[0].mxu0 %v3839
    %v3909 = vpop.f32.mrb[0].mxu0
    %v3910 = vadd.f32 0.0, %v3909
    %v3911 = vpop.f32.mrb[0].mxu0
    %v3912 = vadd.f32 0.0, %v3911
    %3913 = vdwg.mxu0
    %3914 = vmatprep.subr.mxu0 %v230
    %3915 = vmatpush1.msra.mxu0 %v229
    %3916 = vmatprep.subr.mxu0 %v234
    %3917 = vmatpush1.msra.mxu0 %v233
    %3918 = vmatprep.subr.mxu0 %v238
    %3919 = vmatpush1.msra.mxu0 %v237
    %3920 = vmatprep.subr.mxu0 %v242
    %3921 = vmatpush1.msra.mxu0 %v241
    %3922 = vmatprep.subr.mxu0 %v246
    %3923 = vmatpush1.msra.mxu0 %v245
    %3924 = vmatprep.subr.mxu0 %v250
    %3925 = vmatpush1.msra.mxu0 %v249
    %3926 = vmatprep.subr.mxu0 %v254
    %3927 = vmatpush1.msra.mxu0 %v253
    %3928 = vmatprep.subr.mxu0 %v258
    %3929 = vmatpush1.msra.mxu0 %v257
    %3930 = vmatprep.subr.mxu0 %v262
    %3931 = vmatpush1.msra.mxu0 %v261
    %3932 = vmatprep.subr.mxu0 %v266
    %3933 = vmatpush1.msra.mxu0 %v265
    %3934 = vmatprep.subr.mxu0 %v270
    %3935 = vmatpush1.msra.mxu0 %v269
    %3936 = vmatprep.subr.mxu0 %v274
    %3937 = vmatpush1.msra.mxu0 %v273
    %3938 = vmatprep.subr.mxu0 %v278
    %3939 = vmatpush1.msra.mxu0 %v277
    %3940 = vmatprep.subr.mxu0 %v282
    %3941 = vmatpush1.msra.mxu0 %v281
    %3942 = vmatprep.subr.mxu0 %v286
    %3943 = vmatpush1.msra.mxu0 %v285
    %3944 = vmatprep.subr.mxu0 %v290
    %3945 = vmatpush1.msra.mxu0 %v289
    %3946 = vmatprep.subr.mxu0 %v294
    %3947 = vmatpush1.msra.mxu0 %v293
    %3948 = vmatprep.subr.mxu0 %v298
    %3949 = vmatpush1.msra.mxu0 %v297
    %3950 = vmatprep.subr.mxu0 %v302
    %3951 = vmatpush1.msra.mxu0 %v301
    %3952 = vmatprep.subr.mxu0 %v306
    %3953 = vmatpush1.msra.mxu0 %v305
    %3954 = vmatprep.subr.mxu0 %v310
    %3955 = vmatpush1.msra.mxu0 %v309
    %3956 = vmatprep.subr.mxu0 %v314
    %3957 = vmatpush1.msra.mxu0 %v313
    %3958 = vmatprep.subr.mxu0 %v318
    %3959 = vmatpush1.msra.mxu0 %v317
    %3960 = vmatprep.subr.mxu0 %v322
    %3961 = vmatpush1.msra.mxu0 %v321
    %3962 = vmatprep.subr.mxu0 %v326
    %3963 = vmatpush1.msra.mxu0 %v325
    %3964 = vmatprep.subr.mxu0 %v330
    %3965 = vmatpush1.msra.mxu0 %v329
    %3966 = vmatprep.subr.mxu0 %v334
    %3967 = vmatpush1.msra.mxu0 %v333
    %3968 = vmatprep.subr.mxu0 %v338
    %3969 = vmatpush1.msra.mxu0 %v337
    %3970 = vmatprep.subr.mxu0 %v342
    %3971 = vmatpush1.msra.mxu0 %v341
    %3972 = vmatprep.subr.mxu0 %v346
    %3973 = vmatpush1.msra.mxu0 %v345
    %3974 = vmatprep.subr.mxu0 %v350
    %3975 = vmatpush1.msra.mxu0 %v349
    %3976 = vmatprep.subr.mxu0 %v354
    %3977 = vmatpush1.msra.mxu0 %v353
    %3978 = vmatprep.mubr.f32.mxu0 %v3842
    %3979 = vmatmul.mubr.f32.gmra.mrb[0].mxu0 %v3841
    %v3980 = vpop.f32.mrb[0].mxu0
    %v3981 = vadd.f32 %v3910, %v3980
    %v3982 = vpop.f32.mrb[0].mxu0
    %v3983 = vadd.f32 %v3912, %v3982
    %3984 = vdwg.mxu0
    %3985 = vmatprep.subr.mxu0 %v104
    %3986 = vmatpush1.msra.mxu0 %v103
    %3987 = vmatprep.subr.mxu0 %v108
    %3988 = vmatpush1.msra.mxu0 %v107
    %3989 = vmatprep.subr.mxu0 %v112
    %3990 = vmatpush1.msra.mxu0 %v111
    %3991 = vmatprep.subr.mxu0 %v116
    %3992 = vmatpush1.msra.mxu0 %v115
    %3993 = vmatprep.subr.mxu0 %v120
    %3994 = vmatpush1.msra.mxu0 %v119
    %3995 = vmatprep.subr.mxu0 %v124
    %3996 = vmatpush1.msra.mxu0 %v123
    %3997 = vmatprep.subr.mxu0 %v128
    %3998 = vmatpush1.msra.mxu0 %v127
    %3999 = vmatprep.subr.mxu0 %v132
    %4000 = vmatpush1.msra.mxu0 %v131
    %4001 = vmatprep.subr.mxu0 %v136
    %4002 = vmatpush1.msra.mxu0 %v135
    %4003 = vmatprep.subr.mxu0 %v140
    %4004 = vmatpush1.msra.mxu0 %v139
    %4005 = vmatprep.subr.mxu0 %v144
    %4006 = vmatpush1.msra.mxu0 %v143
    %4007 = vmatprep.subr.mxu0 %v148
    %4008 = vmatpush1.msra.mxu0 %v147
    %4009 = vmatprep.subr.mxu0 %v152
    %4010 = vmatpush1.msra.mxu0 %v151
    %4011 = vmatprep.subr.mxu0 %v156
    %4012 = vmatpush1.msra.mxu0 %v155
    %4013 = vmatprep.subr.mxu0 %v160
    %4014 = vmatpush1.msra.mxu0 %v159
    %4015 = vmatprep.subr.mxu0 %v164
    %4016 = vmatpush1.msra.mxu0 %v163
    %4017 = vmatprep.subr.mxu0 %v168
    %4018 = vmatpush1.msra.mxu0 %v167
    %4019 = vmatprep.subr.mxu0 %v172
    %4020 = vmatpush1.msra.mxu0 %v171
    %4021 = vmatprep.subr.mxu0 %v176
    %4022 = vmatpush1.msra.mxu0 %v175
    %4023 = vmatprep.subr.mxu0 %v180
    %4024 = vmatpush1.msra.mxu0 %v179
    %4025 = vmatprep.subr.mxu0 %v184
    %4026 = vmatpush1.msra.mxu0 %v183
    %4027 = vmatprep.subr.mxu0 %v188
    %4028 = vmatpush1.msra.mxu0 %v187
    %4029 = vmatprep.subr.mxu0 %v192
    %4030 = vmatpush1.msra.mxu0 %v191
    %4031 = vmatprep.subr.mxu0 %v196
    %4032 = vmatpush1.msra.mxu0 %v195
    %4033 = vmatprep.subr.mxu0 %v200
    %4034 = vmatpush1.msra.mxu0 %v199
    %4035 = vmatprep.subr.mxu0 %v204
    %4036 = vmatpush1.msra.mxu0 %v203
    %4037 = vmatprep.subr.mxu0 %v208
    %4038 = vmatpush1.msra.mxu0 %v207
    %4039 = vmatprep.subr.mxu0 %v212
    %4040 = vmatpush1.msra.mxu0 %v211
    %4041 = vmatprep.subr.mxu0 %v216
    %4042 = vmatpush1.msra.mxu0 %v215
    %4043 = vmatprep.subr.mxu0 %v220
    %4044 = vmatpush1.msra.mxu0 %v219
    %4045 = vmatprep.subr.mxu0 %v224
    %4046 = vmatpush1.msra.mxu0 %v223
    %4047 = vmatprep.subr.mxu0 %v228
    %4048 = vmatpush1.msra.mxu0 %v227
    %4049 = vmatprep.mubr.f32.mxu0 %v3840
    %4050 = vmatmul.mubr.f32.gmra.mrb[0].mxu0 %v3839
    %v4051 = vpop.f32.mrb[0].mxu0
    %v4052 = vadd.f32 0.0, %v4051
    %v4053 = vpop.f32.mrb[0].mxu0
    %v4054 = vadd.f32 0.0, %v4053
    %4055 = vdwg.mxu0
    %4056 = vmatprep.subr.mxu0 %v232
    %4057 = vmatpush1.msra.mxu0 %v231
    %4058 = vmatprep.subr.mxu0 %v236
    %4059 = vmatpush1.msra.mxu0 %v235
    %4060 = vmatprep.subr.mxu0 %v240
    %4061 = vmatpush1.msra.mxu0 %v239
    %4062 = vmatprep.subr.mxu0 %v244
    %4063 = vmatpush1.msra.mxu0 %v243
    %4064 = vmatprep.subr.mxu0 %v248
    %4065 = vmatpush1.msra.mxu0 %v247
    %4066 = vmatprep.subr.mxu0 %v252
    %4067 = vmatpush1.msra.mxu0 %v251
    %4068 = vmatprep.subr.mxu0 %v256
    %4069 = vmatpush1.msra.mxu0 %v255
    %4070 = vmatprep.subr.mxu0 %v260
    %4071 = vmatpush1.msra.mxu0 %v259
    %4072 = vmatprep.subr.mxu0 %v264
    %4073 = vmatpush1.msra.mxu0 %v263
    %4074 = vmatprep.subr.mxu0 %v268
    %4075 = vmatpush1.msra.mxu0 %v267
    %4076 = vmatprep.subr.mxu0 %v272
    %4077 = vmatpush1.msra.mxu0 %v271
    %4078 = vmatprep.subr.mxu0 %v276
    %4079 = vmatpush1.msra.mxu0 %v275
    %4080 = vmatprep.subr.mxu0 %v280
    %4081 = vmatpush1.msra.mxu0 %v279
    %4082 = vmatprep.subr.mxu0 %v284
    %4083 = vmatpush1.msra.mxu0 %v283
    %4084 = vmatprep.subr.mxu0 %v288
    %4085 = vmatpush1.msra.mxu0 %v287
    %4086 = vmatprep.subr.mxu0 %v292
    %4087 = vmatpush1.msra.mxu0 %v291
    %4088 = vmatprep.subr.mxu0 %v296
    %4089 = vmatpush1.msra.mxu0 %v295
    %4090 = vmatprep.subr.mxu0 %v300
    %4091 = vmatpush1.msra.mxu0 %v299
    %4092 = vmatprep.subr.mxu0 %v304
    %4093 = vmatpush1.msra.mxu0 %v303
    %4094 = vmatprep.subr.mxu0 %v308
    %4095 = vmatpush1.msra.mxu0 %v307
    %4096 = vmatprep.subr.mxu0 %v312
    %4097 = vmatpush1.msra.mxu0 %v311
    %4098 = vmatprep.subr.mxu0 %v316
    %4099 = vmatpush1.msra.mxu0 %v315
    %4100 = vmatprep.subr.mxu0 %v320
    %4101 = vmatpush1.msra.mxu0 %v319
    %4102 = vmatprep.subr.mxu0 %v324
    %4103 = vmatpush1.msra.mxu0 %v323
    %4104 = vmatprep.subr.mxu0 %v328
    %4105 = vmatpush1.msra.mxu0 %v327
    %4106 = vmatprep.subr.mxu0 %v332
    %4107 = vmatpush1.msra.mxu0 %v331
    %4108 = vmatprep.subr.mxu0 %v336
    %4109 = vmatpush1.msra.mxu0 %v335
    %4110 = vmatprep.subr.mxu0 %v340
    %4111 = vmatpush1.msra.mxu0 %v339
    %4112 = vmatprep.subr.mxu0 %v344
    %4113 = vmatpush1.msra.mxu0 %v343
    %4114 = vmatprep.subr.mxu0 %v348
    %4115 = vmatpush1.msra.mxu0 %v347
    %4116 = vmatprep.subr.mxu0 %v352
    %4117 = vmatpush1.msra.mxu0 %v351
    %4118 = vmatprep.subr.mxu0 %v356
    %4119 = vmatpush1.msra.mxu0 %v355
    %4120 = vmatprep.mubr.f32.mxu0 %v3842
    %4121 = vmatmul.mubr.f32.gmra.mrb[0].mxu0 %v3841
    %v4122 = vpop.f32.mrb[0].mxu0
    %v4123 = vadd.f32 %v4052, %v4122
    %v4124 = vpop.f32.mrb[0].mxu0
    %v4125 = vadd.f32 %v4054, %v4124
    %4126 = vdwg.mxu0
    %v4127 = vadd.f32 %v3981, 1e-30
    %v4128 = vadd.f32 %v3983, 1e-30
    %v4129 = vadd.f32 %v4123, 1e-30
    %v4130 = vadd.f32 %v4125, 1e-30
    %v4131 = vrcp.pop %v4127
    %v4132 = vrcp.pop %v4128
    %v4133 = vrcp.pop %v4129
    %v4134 = vrcp.pop %v4130
    %v4135 = vmul.f32 %v4127, %v4131
    %v4136 = vmul.f32 %v4128, %v4132
    %v4137 = vmul.f32 %v4129, %v4133
    %v4138 = vmul.f32 %v4130, %v4134
    %v4139 = vsub.f32 2.0, %v4135
    %v4140 = vsub.f32 2.0, %v4136
    %v4141 = vsub.f32 2.0, %v4137
    %v4142 = vsub.f32 2.0, %v4138
    %v4143 = vmul.f32 %v4131, %v4139
    %v4144 = vmul.f32 %v4132, %v4140
    %v4145 = vmul.f32 %v4133, %v4141
    %v4146 = vmul.f32 %v4134, %v4142
    %v4147 = vlaneseq
    %v4148 = vshrl.u32 %v4147, 7
    %v4149 = vsub.s32 4, %v4148
    %v4150 = vrot.slane %v4143, %v4149
    %v4151 = vlaneseq
    %v4152 = vshrl.u32 %v4151, 7
    %v4153 = vsub.s32 4, %v4152
    %v4154 = vrot.slane %v4144, %v4153
    %v4155 = vlaneseq
    %v4156 = vshrl.u32 %v4155, 7
    %v4157 = vsub.s32 4, %v4156
    %v4158 = vrot.slane %v4145, %v4157
    %v4159 = vlaneseq
    %v4160 = vshrl.u32 %v4159, 7
    %v4161 = vsub.s32 4, %v4160
    %v4162 = vrot.slane %v4146, %v4161
    %v4163 = vmul.f32 %v3981, %v4150
    %v4164 = vmul.f32 %v3983, %v4154
    %v4165 = vmul.f32 %v4123, %v4158
    %v4166 = vmul.f32 %v4125, %v4162
    %v4167 = vsel %vm1660, %v3782, -inf
    %v4168 = vsel %vm1660, %v3783, -inf
    %v4169 = vsel %vm1660, %v3784, -inf
    %v4170 = vsel %vm1660, %v3785, -inf
    %v4171 = vmax.f32 %v4167, %v4168
    %v4172 = vmax.f32 %v4169, %v4170
    %v4173 = vmax.f32 %v4171, %v4172
    %4174 = vmax.xlane.f32.xlu0 %v4173
    %v4175 = vpop.xlane.xlu0 %4174
    %v4176 = vsub.f32 %v3782, %v4175
    %v4177 = vsub.f32 %v3783, %v4175
    %v4178 = vsub.f32 %v3784, %v4175
    %v4179 = vsub.f32 %v3785, %v4175
    %v4180 = vmul.f32 %v4176, 1.442695
    %v4181 = vpow.pop %v4180
    %v4182 = vmul.f32 %v4177, 1.442695
    %v4183 = vpow.pop %v4182
    %v4184 = vmul.f32 %v4178, 1.442695
    %v4185 = vpow.pop %v4184
    %v4186 = vmul.f32 %v4179, 1.442695
    %v4187 = vpow.pop %v4186
    %v4188 = vlaneseq
    %v4189 = vshrl.u32 %v4188, 7
    %v4190 = vsub.s32 0, %v4189
    %v4191 = vrot.slane %v4181, %v4190
    %v4192 = vlaneseq
    %v4193 = vshrl.u32 %v4192, 7
    %v4194 = vsub.s32 0, %v4193
    %v4195 = vrot.slane %v4183, %v4194
    %v4196 = vlaneseq
    %v4197 = vshrl.u32 %v4196, 7
    %v4198 = vsub.s32 0, %v4197
    %v4199 = vrot.slane %v4185, %v4198
    %v4200 = vlaneseq
    %v4201 = vshrl.u32 %v4200, 7
    %v4202 = vsub.s32 0, %v4201
    %v4203 = vrot.slane %v4187, %v4202
    %v4204 = vmul.f32 %v3786, %v4191
    %v4205 = vmul.f32 %v3787, %v4195
    %v4206 = vmul.f32 %v3788, %v4199
    %v4207 = vmul.f32 %v3789, %v4203
    %v4208 = vmul.f32 %v625, %v4191
    %v4209 = vmul.f32 %v625, %v4195
    %v4210 = vmul.f32 %v625, %v4199
    %v4211 = vmul.f32 %v625, %v4203
    %v4212 = vadd.f32 %v4204, %v4208
    %v4213 = vadd.f32 %v4205, %v4209
    %v4214 = vadd.f32 %v4206, %v4210
    %v4215 = vadd.f32 %v4207, %v4211
    %4216 = vmatprep.subr.mxu0 %v358
    %4217 = vmatpush1.msra.mxu0 %v357
    %4218 = vmatprep.subr.mxu0 %v362
    %4219 = vmatpush1.msra.mxu0 %v361
    %4220 = vmatprep.subr.mxu0 %v366
    %4221 = vmatpush1.msra.mxu0 %v365
    %4222 = vmatprep.subr.mxu0 %v370
    %4223 = vmatpush1.msra.mxu0 %v369
    %4224 = vmatprep.subr.mxu0 %v374
    %4225 = vmatpush1.msra.mxu0 %v373
    %4226 = vmatprep.subr.mxu0 %v378
    %4227 = vmatpush1.msra.mxu0 %v377
    %4228 = vmatprep.subr.mxu0 %v382
    %4229 = vmatpush1.msra.mxu0 %v381
    %4230 = vmatprep.subr.mxu0 %v386
    %4231 = vmatpush1.msra.mxu0 %v385
    %4232 = vmatprep.subr.mxu0 %v390
    %4233 = vmatpush1.msra.mxu0 %v389
    %4234 = vmatprep.subr.mxu0 %v394
    %4235 = vmatpush1.msra.mxu0 %v393
    %4236 = vmatprep.subr.mxu0 %v398
    %4237 = vmatpush1.msra.mxu0 %v397
    %4238 = vmatprep.subr.mxu0 %v402
    %4239 = vmatpush1.msra.mxu0 %v401
    %4240 = vmatprep.subr.mxu0 %v406
    %4241 = vmatpush1.msra.mxu0 %v405
    %4242 = vmatprep.subr.mxu0 %v410
    %4243 = vmatpush1.msra.mxu0 %v409
    %4244 = vmatprep.subr.mxu0 %v414
    %4245 = vmatpush1.msra.mxu0 %v413
    %4246 = vmatprep.subr.mxu0 %v418
    %4247 = vmatpush1.msra.mxu0 %v417
    %4248 = vmatprep.subr.mxu0 %v422
    %4249 = vmatpush1.msra.mxu0 %v421
    %4250 = vmatprep.subr.mxu0 %v426
    %4251 = vmatpush1.msra.mxu0 %v425
    %4252 = vmatprep.subr.mxu0 %v430
    %4253 = vmatpush1.msra.mxu0 %v429
    %4254 = vmatprep.subr.mxu0 %v434
    %4255 = vmatpush1.msra.mxu0 %v433
    %4256 = vmatprep.subr.mxu0 %v438
    %4257 = vmatpush1.msra.mxu0 %v437
    %4258 = vmatprep.subr.mxu0 %v442
    %4259 = vmatpush1.msra.mxu0 %v441
    %4260 = vmatprep.subr.mxu0 %v446
    %4261 = vmatpush1.msra.mxu0 %v445
    %4262 = vmatprep.subr.mxu0 %v450
    %4263 = vmatpush1.msra.mxu0 %v449
    %4264 = vmatprep.subr.mxu0 %v454
    %4265 = vmatpush1.msra.mxu0 %v453
    %4266 = vmatprep.subr.mxu0 %v458
    %4267 = vmatpush1.msra.mxu0 %v457
    %4268 = vmatprep.subr.mxu0 %v462
    %4269 = vmatpush1.msra.mxu0 %v461
    %4270 = vmatprep.subr.mxu0 %v466
    %4271 = vmatpush1.msra.mxu0 %v465
    %4272 = vmatprep.subr.mxu0 %v470
    %4273 = vmatpush1.msra.mxu0 %v469
    %4274 = vmatprep.subr.mxu0 %v474
    %4275 = vmatpush1.msra.mxu0 %v473
    %4276 = vmatprep.subr.mxu0 %v478
    %4277 = vmatpush1.msra.mxu0 %v477
    %4278 = vmatprep.subr.mxu0 %v482
    %4279 = vmatpush1.msra.mxu0 %v481
    %4280 = vmatprep.mubr.f32.mxu0 %v4213
    %4281 = vmatmul.mubr.f32.gmra.mrb[0].mxu0 %v4212
    %v4282 = vpop.f32.mrb[0].mxu0
    %v4283 = vadd.f32 0.0, %v4282
    %v4284 = vpop.f32.mrb[0].mxu0
    %v4285 = vadd.f32 0.0, %v4284
    %4286 = vdwg.mxu0
    %4287 = vmatprep.subr.mxu0 %v486
    %4288 = vmatpush1.msra.mxu0 %v485
    %4289 = vmatprep.subr.mxu0 %v490
    %4290 = vmatpush1.msra.mxu0 %v489
    %4291 = vmatprep.subr.mxu0 %v494
    %4292 = vmatpush1.msra.mxu0 %v493
    %4293 = vmatprep.subr.mxu0 %v498
    %4294 = vmatpush1.msra.mxu0 %v497
    %4295 = vmatprep.subr.mxu0 %v502
    %4296 = vmatpush1.msra.mxu0 %v501
    %4297 = vmatprep.subr.mxu0 %v506
    %4298 = vmatpush1.msra.mxu0 %v505
    %4299 = vmatprep.subr.mxu0 %v510
    %4300 = vmatpush1.msra.mxu0 %v509
    %4301 = vmatprep.subr.mxu0 %v514
    %4302 = vmatpush1.msra.mxu0 %v513
    %4303 = vmatprep.subr.mxu0 %v518
    %4304 = vmatpush1.msra.mxu0 %v517
    %4305 = vmatprep.subr.mxu0 %v522
    %4306 = vmatpush1.msra.mxu0 %v521
    %4307 = vmatprep.subr.mxu0 %v526
    %4308 = vmatpush1.msra.mxu0 %v525
    %4309 = vmatprep.subr.mxu0 %v530
    %4310 = vmatpush1.msra.mxu0 %v529
    %4311 = vmatprep.subr.mxu0 %v534
    %4312 = vmatpush1.msra.mxu0 %v533
    %4313 = vmatprep.subr.mxu0 %v538
    %4314 = vmatpush1.msra.mxu0 %v537
    %4315 = vmatprep.subr.mxu0 %v542
    %4316 = vmatpush1.msra.mxu0 %v541
    %4317 = vmatprep.subr.mxu0 %v546
    %4318 = vmatpush1.msra.mxu0 %v545
    %4319 = vmatprep.subr.mxu0 %v550
    %4320 = vmatpush1.msra.mxu0 %v549
    %4321 = vmatprep.subr.mxu0 %v554
    %4322 = vmatpush1.msra.mxu0 %v553
    %4323 = vmatprep.subr.mxu0 %v558
    %4324 = vmatpush1.msra.mxu0 %v557
    %4325 = vmatprep.subr.mxu0 %v562
    %4326 = vmatpush1.msra.mxu0 %v561
    %4327 = vmatprep.subr.mxu0 %v566
    %4328 = vmatpush1.msra.mxu0 %v565
    %4329 = vmatprep.subr.mxu0 %v570
    %4330 = vmatpush1.msra.mxu0 %v569
    %4331 = vmatprep.subr.mxu0 %v574
    %4332 = vmatpush1.msra.mxu0 %v573
    %4333 = vmatprep.subr.mxu0 %v578
    %4334 = vmatpush1.msra.mxu0 %v577
    %4335 = vmatprep.subr.mxu0 %v582
    %4336 = vmatpush1.msra.mxu0 %v581
    %4337 = vmatprep.subr.mxu0 %v586
    %4338 = vmatpush1.msra.mxu0 %v585
    %4339 = vmatprep.subr.mxu0 %v590
    %4340 = vmatpush1.msra.mxu0 %v589
    %4341 = vmatprep.subr.mxu0 %v594
    %4342 = vmatpush1.msra.mxu0 %v593
    %4343 = vmatprep.subr.mxu0 %v598
    %4344 = vmatpush1.msra.mxu0 %v597
    %4345 = vmatprep.subr.mxu0 %v602
    %4346 = vmatpush1.msra.mxu0 %v601
    %4347 = vmatprep.subr.mxu0 %v606
    %4348 = vmatpush1.msra.mxu0 %v605
    %4349 = vmatprep.subr.mxu0 %v610
    %4350 = vmatpush1.msra.mxu0 %v609
    %4351 = vmatprep.mubr.f32.mxu0 %v4215
    %4352 = vmatmul.mubr.f32.gmra.mrb[0].mxu0 %v4214
    %v4353 = vpop.f32.mrb[0].mxu0
    %v4354 = vadd.f32 %v4283, %v4353
    %v4355 = vpop.f32.mrb[0].mxu0
    %v4356 = vadd.f32 %v4285, %v4355
    %4357 = vdwg.mxu0
    %4358 = vmatprep.subr.mxu0 %v360
    %4359 = vmatpush1.msra.mxu0 %v359
    %4360 = vmatprep.subr.mxu0 %v364
    %4361 = vmatpush1.msra.mxu0 %v363
    %4362 = vmatprep.subr.mxu0 %v368
    %4363 = vmatpush1.msra.mxu0 %v367
    %4364 = vmatprep.subr.mxu0 %v372
    %4365 = vmatpush1.msra.mxu0 %v371
    %4366 = vmatprep.subr.mxu0 %v376
    %4367 = vmatpush1.msra.mxu0 %v375
    %4368 = vmatprep.subr.mxu0 %v380
    %4369 = vmatpush1.msra.mxu0 %v379
    %4370 = vmatprep.subr.mxu0 %v384
    %4371 = vmatpush1.msra.mxu0 %v383
    %4372 = vmatprep.subr.mxu0 %v388
    %4373 = vmatpush1.msra.mxu0 %v387
    %4374 = vmatprep.subr.mxu0 %v392
    %4375 = vmatpush1.msra.mxu0 %v391
    %4376 = vmatprep.subr.mxu0 %v396
    %4377 = vmatpush1.msra.mxu0 %v395
    %4378 = vmatprep.subr.mxu0 %v400
    %4379 = vmatpush1.msra.mxu0 %v399
    %4380 = vmatprep.subr.mxu0 %v404
    %4381 = vmatpush1.msra.mxu0 %v403
    %4382 = vmatprep.subr.mxu0 %v408
    %4383 = vmatpush1.msra.mxu0 %v407
    %4384 = vmatprep.subr.mxu0 %v412
    %4385 = vmatpush1.msra.mxu0 %v411
    %4386 = vmatprep.subr.mxu0 %v416
    %4387 = vmatpush1.msra.mxu0 %v415
    %4388 = vmatprep.subr.mxu0 %v420
    %4389 = vmatpush1.msra.mxu0 %v419
    %4390 = vmatprep.subr.mxu0 %v424
    %4391 = vmatpush1.msra.mxu0 %v423
    %4392 = vmatprep.subr.mxu0 %v428
    %4393 = vmatpush1.msra.mxu0 %v427
    %4394 = vmatprep.subr.mxu0 %v432
    %4395 = vmatpush1.msra.mxu0 %v431
    %4396 = vmatprep.subr.mxu0 %v436
    %4397 = vmatpush1.msra.mxu0 %v435
    %4398 = vmatprep.subr.mxu0 %v440
    %4399 = vmatpush1.msra.mxu0 %v439
    %4400 = vmatprep.subr.mxu0 %v444
    %4401 = vmatpush1.msra.mxu0 %v443
    %4402 = vmatprep.subr.mxu0 %v448
    %4403 = vmatpush1.msra.mxu0 %v447
    %4404 = vmatprep.subr.mxu0 %v452
    %4405 = vmatpush1.msra.mxu0 %v451
    %4406 = vmatprep.subr.mxu0 %v456
    %4407 = vmatpush1.msra.mxu0 %v455
    %4408 = vmatprep.subr.mxu0 %v460
    %4409 = vmatpush1.msra.mxu0 %v459
    %4410 = vmatprep.subr.mxu0 %v464
    %4411 = vmatpush1.msra.mxu0 %v463
    %4412 = vmatprep.subr.mxu0 %v468
    %4413 = vmatpush1.msra.mxu0 %v467
    %4414 = vmatprep.subr.mxu0 %v472
    %4415 = vmatpush1.msra.mxu0 %v471
    %4416 = vmatprep.subr.mxu0 %v476
    %4417 = vmatpush1.msra.mxu0 %v475
    %4418 = vmatprep.subr.mxu0 %v480
    %4419 = vmatpush1.msra.mxu0 %v479
    %4420 = vmatprep.subr.mxu0 %v484
    %4421 = vmatpush1.msra.mxu0 %v483
    %4422 = vmatprep.mubr.f32.mxu0 %v4213
    %4423 = vmatmul.mubr.f32.gmra.mrb[0].mxu0 %v4212
    %v4424 = vpop.f32.mrb[0].mxu0
    %v4425 = vadd.f32 0.0, %v4424
    %v4426 = vpop.f32.mrb[0].mxu0
    %v4427 = vadd.f32 0.0, %v4426
    %4428 = vdwg.mxu0
    %4429 = vmatprep.subr.mxu0 %v488
    %4430 = vmatpush1.msra.mxu0 %v487
    %4431 = vmatprep.subr.mxu0 %v492
    %4432 = vmatpush1.msra.mxu0 %v491
    %4433 = vmatprep.subr.mxu0 %v496
    %4434 = vmatpush1.msra.mxu0 %v495
    %4435 = vmatprep.subr.mxu0 %v500
    %4436 = vmatpush1.msra.mxu0 %v499
    %4437 = vmatprep.subr.mxu0 %v504
    %4438 = vmatpush1.msra.mxu0 %v503
    %4439 = vmatprep.subr.mxu0 %v508
    %4440 = vmatpush1.msra.mxu0 %v507
    %4441 = vmatprep.subr.mxu0 %v512
    %4442 = vmatpush1.msra.mxu0 %v511
    %4443 = vmatprep.subr.mxu0 %v516
    %4444 = vmatpush1.msra.mxu0 %v515
    %4445 = vmatprep.subr.mxu0 %v520
    %4446 = vmatpush1.msra.mxu0 %v519
    %4447 = vmatprep.subr.mxu0 %v524
    %4448 = vmatpush1.msra.mxu0 %v523
    %4449 = vmatprep.subr.mxu0 %v528
    %4450 = vmatpush1.msra.mxu0 %v527
    %4451 = vmatprep.subr.mxu0 %v532
    %4452 = vmatpush1.msra.mxu0 %v531
    %4453 = vmatprep.subr.mxu0 %v536
    %4454 = vmatpush1.msra.mxu0 %v535
    %4455 = vmatprep.subr.mxu0 %v540
    %4456 = vmatpush1.msra.mxu0 %v539
    %4457 = vmatprep.subr.mxu0 %v544
    %4458 = vmatpush1.msra.mxu0 %v543
    %4459 = vmatprep.subr.mxu0 %v548
    %4460 = vmatpush1.msra.mxu0 %v547
    %4461 = vmatprep.subr.mxu0 %v552
    %4462 = vmatpush1.msra.mxu0 %v551
    %4463 = vmatprep.subr.mxu0 %v556
    %4464 = vmatpush1.msra.mxu0 %v555
    %4465 = vmatprep.subr.mxu0 %v560
    %4466 = vmatpush1.msra.mxu0 %v559
    %4467 = vmatprep.subr.mxu0 %v564
    %4468 = vmatpush1.msra.mxu0 %v563
    %4469 = vmatprep.subr.mxu0 %v568
    %4470 = vmatpush1.msra.mxu0 %v567
    %4471 = vmatprep.subr.mxu0 %v572
    %4472 = vmatpush1.msra.mxu0 %v571
    %4473 = vmatprep.subr.mxu0 %v576
    %4474 = vmatpush1.msra.mxu0 %v575
    %4475 = vmatprep.subr.mxu0 %v580
    %4476 = vmatpush1.msra.mxu0 %v579
    %4477 = vmatprep.subr.mxu0 %v584
    %4478 = vmatpush1.msra.mxu0 %v583
    %4479 = vmatprep.subr.mxu0 %v588
    %4480 = vmatpush1.msra.mxu0 %v587
    %4481 = vmatprep.subr.mxu0 %v592
    %4482 = vmatpush1.msra.mxu0 %v591
    %4483 = vmatprep.subr.mxu0 %v596
    %4484 = vmatpush1.msra.mxu0 %v595
    %4485 = vmatprep.subr.mxu0 %v600
    %4486 = vmatpush1.msra.mxu0 %v599
    %4487 = vmatprep.subr.mxu0 %v604
    %4488 = vmatpush1.msra.mxu0 %v603
    %4489 = vmatprep.subr.mxu0 %v608
    %4490 = vmatpush1.msra.mxu0 %v607
    %4491 = vmatprep.subr.mxu0 %v612
    %4492 = vmatpush1.msra.mxu0 %v611
    %4493 = vmatprep.mubr.f32.mxu0 %v4215
    %4494 = vmatmul.mubr.f32.gmra.mrb[0].mxu0 %v4214
    %v4495 = vpop.f32.mrb[0].mxu0
    %v4496 = vadd.f32 %v4425, %v4495
    %v4497 = vpop.f32.mrb[0].mxu0
    %v4498 = vadd.f32 %v4427, %v4497
    %4499 = vdwg.mxu0
    %v4500 = vadd.f32 %v4354, 1e-30
    %v4501 = vadd.f32 %v4356, 1e-30
    %v4502 = vadd.f32 %v4496, 1e-30
    %v4503 = vadd.f32 %v4498, 1e-30
    %v4504 = vrcp.pop %v4500
    %v4505 = vrcp.pop %v4501
    %v4506 = vrcp.pop %v4502
    %v4507 = vrcp.pop %v4503
    %v4508 = vmul.f32 %v4500, %v4504
    %v4509 = vmul.f32 %v4501, %v4505
    %v4510 = vmul.f32 %v4502, %v4506
    %v4511 = vmul.f32 %v4503, %v4507
    %v4512 = vsub.f32 2.0, %v4508
    %v4513 = vsub.f32 2.0, %v4509
    %v4514 = vsub.f32 2.0, %v4510
    %v4515 = vsub.f32 2.0, %v4511
    %v4516 = vmul.f32 %v4504, %v4512
    %v4517 = vmul.f32 %v4505, %v4513
    %v4518 = vmul.f32 %v4506, %v4514
    %v4519 = vmul.f32 %v4507, %v4515
    %v4520 = vlaneseq
    %v4521 = vshrl.u32 %v4520, 7
    %v4522 = vsub.s32 4, %v4521
    %v4523 = vrot.slane %v4516, %v4522
    %v4524 = vlaneseq
    %v4525 = vshrl.u32 %v4524, 7
    %v4526 = vsub.s32 4, %v4525
    %v4527 = vrot.slane %v4517, %v4526
    %v4528 = vlaneseq
    %v4529 = vshrl.u32 %v4528, 7
    %v4530 = vsub.s32 4, %v4529
    %v4531 = vrot.slane %v4518, %v4530
    %v4532 = vlaneseq
    %v4533 = vshrl.u32 %v4532, 7
    %v4534 = vsub.s32 4, %v4533
    %v4535 = vrot.slane %v4519, %v4534
    %v4536 = vmul.f32 %v4354, %v4523
    %v4537 = vmul.f32 %v4356, %v4527
    %v4538 = vmul.f32 %v4496, %v4531
    %v4539 = vmul.f32 %v4498, %v4535
    %v4540 = vmul.f32 %v4163, %v4536
    %v4541 = vmul.f32 %v4164, %v4537
    %v4542 = vmul.f32 %v4165, %v4538
    %v4543 = vmul.f32 %v4166, %v4539
    %v4544 = vmul.f32 %v4540, 0.5
    %v4545 = vmul.f32 %v4541, 0.5
    %v4546 = vmul.f32 %v4542, 0.5
    %v4547 = vmul.f32 %v4543, 0.5
    %v4548 = vmul.f32 %v3790, %v4544
    %v4549 = vmul.f32 %v3791, %v4545
    %v4550 = vmul.f32 %v3792, %v4546
    %v4551 = vmul.f32 %v3793, %v4547
    %v4552 = vadd.f32 %v4548, %v3257
    %v4553 = vadd.f32 %v4549, %v3258
    %v4554 = vadd.f32 %v4550, %v3259
    %v4555 = vadd.f32 %v4551, %v3260
    %s4556 = scalar_lea.vmem %s13, 8
    %v4557 = vld [vmem:[%s4556] sm:$0xff]
    %s4558 = scalar_lea.vmem %s14, 8
    %v4559 = vld [vmem:[%s4558] sm:$0xff]
    %4561 = vset.pattern.permute.xlu0 0
    %4562 = vperm.xlu0 %4561, %v4559
    %v4563 = vpop.permute.xlu0 %4562
    %v4566 = vsel %vm633, %v4557, 0
    %4568 = vmatprep.subr.mxu0 %v4553
    %4569 = vmatpush1.msra.mxu0 %v4552
    %4570 = vmatprep.subr.mxu0 0.0
    %4571 = vmatpush1.msra.mxu0 0.0
    %4572 = vmatprep.subr.mxu0 0.0
    %4573 = vmatpush1.msra.mxu0 0.0
    %4574 = vmatprep.subr.mxu0 0.0
    %4575 = vmatpush1.msra.mxu0 0.0
    %4576 = vmatprep.subr.mxu0 0.0
    %4577 = vmatpush1.msra.mxu0 0.0
    %4578 = vmatprep.subr.mxu0 0.0
    %4579 = vmatpush1.msra.mxu0 0.0
    %4580 = vmatprep.subr.mxu0 0.0
    %4581 = vmatpush1.msra.mxu0 0.0
    %4582 = vmatprep.subr.mxu0 0.0
    %4583 = vmatpush1.msra.mxu0 0.0
    %4584 = vmatprep.subr.mxu0 0.0
    %4585 = vmatpush1.msra.mxu0 0.0
    %4586 = vmatprep.subr.mxu0 0.0
    %4587 = vmatpush1.msra.mxu0 0.0
    %4588 = vmatprep.subr.mxu0 0.0
    %4589 = vmatpush1.msra.mxu0 0.0
    %4590 = vmatprep.subr.mxu0 0.0
    %4591 = vmatpush1.msra.mxu0 0.0
    %4592 = vmatprep.subr.mxu0 0.0
    %4593 = vmatpush1.msra.mxu0 0.0
    %4594 = vmatprep.subr.mxu0 0.0
    %4595 = vmatpush1.msra.mxu0 0.0
    %4596 = vmatprep.subr.mxu0 0.0
    %4597 = vmatpush1.msra.mxu0 0.0
    %4598 = vmatprep.subr.mxu0 0.0
    %4599 = vmatpush1.msra.mxu0 0.0
    %4600 = vmatprep.subr.mxu0 0.0
    %4601 = vmatpush1.msra.mxu0 0.0
    %4602 = vmatprep.subr.mxu0 0.0
    %4603 = vmatpush1.msra.mxu0 0.0
    %4604 = vmatprep.subr.mxu0 0.0
    %4605 = vmatpush1.msra.mxu0 0.0
    %4606 = vmatprep.subr.mxu0 0.0
    %4607 = vmatpush1.msra.mxu0 0.0
    %4608 = vmatprep.subr.mxu0 0.0
    %4609 = vmatpush1.msra.mxu0 0.0
    %4610 = vmatprep.subr.mxu0 0.0
    %4611 = vmatpush1.msra.mxu0 0.0
    %4612 = vmatprep.subr.mxu0 0.0
    %4613 = vmatpush1.msra.mxu0 0.0
    %4614 = vmatprep.subr.mxu0 0.0
    %4615 = vmatpush1.msra.mxu0 0.0
    %4616 = vmatprep.subr.mxu0 0.0
    %4617 = vmatpush1.msra.mxu0 0.0
    %4618 = vmatprep.subr.mxu0 0.0
    %4619 = vmatpush1.msra.mxu0 0.0
    %4620 = vmatprep.subr.mxu0 0.0
    %4621 = vmatpush1.msra.mxu0 0.0
    %4622 = vmatprep.subr.mxu0 0.0
    %4623 = vmatpush1.msra.mxu0 0.0
    %4624 = vmatprep.subr.mxu0 0.0
    %4625 = vmatpush1.msra.mxu0 0.0
    %4626 = vmatprep.subr.mxu0 0.0
    %4627 = vmatpush1.msra.mxu0 0.0
    %4628 = vmatprep.subr.mxu0 0.0
    %4629 = vmatpush1.msra.mxu0 0.0
    %4630 = vmatprep.subr.mxu0 0.0
    %4631 = vmatpush1.msra.mxu0 0.0
    %4632 = vmatprep.mubr.f32.mxu0 0.0
    %4633 = vmatmul.mubr.f32.gmra.mrb[0].mxu0 %v4566
    %v4634 = vpop.f32.mrb[0].mxu0
    %v4635 = vadd.f32 %v4563, %v4634
    %v4636 = vpop.f32.mrb[0].mxu0
    %v4637 = vadd.f32 %v4563, %v4636
    %4638 = vdwg.mxu0
    %4639 = vmatprep.subr.mxu0 %v4555
    %4640 = vmatpush1.msra.mxu0 %v4554
    %4641 = vmatprep.subr.mxu0 0.0
    %4642 = vmatpush1.msra.mxu0 0.0
    %4643 = vmatprep.subr.mxu0 0.0
    %4644 = vmatpush1.msra.mxu0 0.0
    %4645 = vmatprep.subr.mxu0 0.0
    %4646 = vmatpush1.msra.mxu0 0.0
    %4647 = vmatprep.subr.mxu0 0.0
    %4648 = vmatpush1.msra.mxu0 0.0
    %4649 = vmatprep.subr.mxu0 0.0
    %4650 = vmatpush1.msra.mxu0 0.0
    %4651 = vmatprep.subr.mxu0 0.0
    %4652 = vmatpush1.msra.mxu0 0.0
    %4653 = vmatprep.subr.mxu0 0.0
    %4654 = vmatpush1.msra.mxu0 0.0
    %4655 = vmatprep.subr.mxu0 0.0
    %4656 = vmatpush1.msra.mxu0 0.0
    %4657 = vmatprep.subr.mxu0 0.0
    %4658 = vmatpush1.msra.mxu0 0.0
    %4659 = vmatprep.subr.mxu0 0.0
    %4660 = vmatpush1.msra.mxu0 0.0
    %4661 = vmatprep.subr.mxu0 0.0
    %4662 = vmatpush1.msra.mxu0 0.0
    %4663 = vmatprep.subr.mxu0 0.0
    %4664 = vmatpush1.msra.mxu0 0.0
    %4665 = vmatprep.subr.mxu0 0.0
    %4666 = vmatpush1.msra.mxu0 0.0
    %4667 = vmatprep.subr.mxu0 0.0
    %4668 = vmatpush1.msra.mxu0 0.0
    %4669 = vmatprep.subr.mxu0 0.0
    %4670 = vmatpush1.msra.mxu0 0.0
    %4671 = vmatprep.subr.mxu0 0.0
    %4672 = vmatpush1.msra.mxu0 0.0
    %4673 = vmatprep.subr.mxu0 0.0
    %4674 = vmatpush1.msra.mxu0 0.0
    %4675 = vmatprep.subr.mxu0 0.0
    %4676 = vmatpush1.msra.mxu0 0.0
    %4677 = vmatprep.subr.mxu0 0.0
    %4678 = vmatpush1.msra.mxu0 0.0
    %4679 = vmatprep.subr.mxu0 0.0
    %4680 = vmatpush1.msra.mxu0 0.0
    %4681 = vmatprep.subr.mxu0 0.0
    %4682 = vmatpush1.msra.mxu0 0.0
    %4683 = vmatprep.subr.mxu0 0.0
    %4684 = vmatpush1.msra.mxu0 0.0
    %4685 = vmatprep.subr.mxu0 0.0
    %4686 = vmatpush1.msra.mxu0 0.0
    %4687 = vmatprep.subr.mxu0 0.0
    %4688 = vmatpush1.msra.mxu0 0.0
    %4689 = vmatprep.subr.mxu0 0.0
    %4690 = vmatpush1.msra.mxu0 0.0
    %4691 = vmatprep.subr.mxu0 0.0
    %4692 = vmatpush1.msra.mxu0 0.0
    %4693 = vmatprep.subr.mxu0 0.0
    %4694 = vmatpush1.msra.mxu0 0.0
    %4695 = vmatprep.subr.mxu0 0.0
    %4696 = vmatpush1.msra.mxu0 0.0
    %4697 = vmatprep.subr.mxu0 0.0
    %4698 = vmatpush1.msra.mxu0 0.0
    %4699 = vmatprep.subr.mxu0 0.0
    %4700 = vmatpush1.msra.mxu0 0.0
    %4701 = vmatprep.subr.mxu0 0.0
    %4702 = vmatpush1.msra.mxu0 0.0
    %4703 = vmatprep.mubr.f32.mxu0 0.0
    %4704 = vmatmul.mubr.f32.gmra.mrb[0].mxu0 %v4566
    %v4705 = vpop.f32.mrb[0].mxu0
    %v4706 = vadd.f32 %v4563, %v4705
    %v4707 = vpop.f32.mrb[0].mxu0
    %v4708 = vadd.f32 %v4563, %v4707
    %4709 = vdwg.mxu0
    %v4710 = vxor.u32 %v4635, 2147483648
    %v4711 = vxor.u32 %v4637, 2147483648
    %v4712 = vxor.u32 %v4706, 2147483648
    %v4713 = vxor.u32 %v4708, 2147483648
    %v4714 = vmul.f32 %v4710, 1.442695
    %v4715 = vpow.pop %v4714
    %v4716 = vmul.f32 %v4711, 1.442695
    %v4717 = vpow.pop %v4716
    %v4718 = vmul.f32 %v4712, 1.442695
    %v4719 = vpow.pop %v4718
    %v4720 = vmul.f32 %v4713, 1.442695
    %v4721 = vpow.pop %v4720
    %v4722 = vadd.f32 %v4715, 1.0
    %v4723 = vadd.f32 %v4717, 1.0
    %v4724 = vadd.f32 %v4719, 1.0
    %v4725 = vadd.f32 %v4721, 1.0
    %v4726 = vrcp.pop %v4722
    %v4727 = vmul.f32 1.0, %v4726
    %v4728 = vrcp.pop %v4723
    %v4729 = vmul.f32 1.0, %v4728
    %v4730 = vrcp.pop %v4724
    %v4731 = vmul.f32 1.0, %v4730
    %v4732 = vrcp.pop %v4725
    %v4733 = vmul.f32 1.0, %v4732
    %v4734 = vmul.f32 %v4635, %v4727
    %v4735 = vmul.f32 %v4637, %v4729
    %v4736 = vmul.f32 %v4706, %v4731
    %v4737 = vmul.f32 %v4708, %v4733
    %4738 = vrot.lane.b32.xlu0 %v4734, 17
    %v4739 = vpop.permute.xlu0 %4738
    %4740 = vrot.lane.b32.xlu0 %v4735, 17
    %v4741 = vpop.permute.xlu0 %4740
    %4742 = vrot.lane.b32.xlu0 %v4736, 17
    %v4743 = vpop.permute.xlu0 %4742
    %4744 = vrot.lane.b32.xlu0 %v4737, 17
    %v4745 = vpop.permute.xlu0 %4744
    %v4746 = vsel %vm2613, %v4743, %v4745
    %v4747 = vsel %vm2613, %v4741, %v4743
    %v4748 = vsel %vm2613, %v4739, %v4741
    %v4749 = vsel %vm2613, %v4745, %v4739
    %v4750 = vmul.f32 %v4749, %v2622
    %v4751 = vmul.f32 %v4748, %v2626
    %v4752 = vmul.f32 %v4747, %v2630
    %v4753 = vmul.f32 %v4746, %v2634
    %s4754 = scalar_lea.vmem %s15, 72
    %v4755 = vld [vmem:[%s4754] sm:$0xff]
    %4757 = vset.pattern.permute.xlu0 0
    %4758 = vperm.xlu0 %4757, %v4755
    %v4759 = vpop.permute.xlu0 %4758
    %v4761 = vmul.f32 %v4759, %v4750
    %v4762 = vmul.f32 %v4759, %v4751
    %v4763 = vmul.f32 %v4759, %v4752
    %v4764 = vmul.f32 %v4759, %v4753
    %v4765 = vadd.f32 %v4761, 0.0
    %v4766 = vadd.f32 %v4762, 0.0
    %v4767 = vadd.f32 %v4763, 0.0
    %v4768 = vadd.f32 %v4764, 0.0
    %4769 = vrot.lane.b32.xlu0 %v4734, 16
    %v4770 = vpop.permute.xlu0 %4769
    %4771 = vrot.lane.b32.xlu0 %v4735, 16
    %v4772 = vpop.permute.xlu0 %4771
    %4773 = vrot.lane.b32.xlu0 %v4736, 16
    %v4774 = vpop.permute.xlu0 %4773
    %4775 = vrot.lane.b32.xlu0 %v4737, 16
    %v4776 = vpop.permute.xlu0 %4775
    %v4777 = vsel %vm2665, %v4774, %v4776
    %v4778 = vsel %vm2665, %v4772, %v4774
    %v4779 = vsel %vm2665, %v4770, %v4772
    %v4780 = vsel %vm2665, %v4776, %v4770
    %v4781 = vmul.f32 %v4780, %v2674
    %v4782 = vmul.f32 %v4779, %v2678
    %v4783 = vmul.f32 %v4778, %v2682
    %v4784 = vmul.f32 %v4777, %v2686
    %s4785 = scalar_lea.vmem %s15, 80
    %v4786 = vld [vmem:[%s4785] sm:$0xff]
    %4788 = vset.pattern.permute.xlu0 0
    %4789 = vperm.xlu0 %4788, %v4786
    %v4790 = vpop.permute.xlu0 %4789
    %v4792 = vmul.f32 %v4790, %v4781
    %v4793 = vmul.f32 %v4790, %v4782
    %v4794 = vmul.f32 %v4790, %v4783
    %v4795 = vmul.f32 %v4790, %v4784
    %v4796 = vadd.f32 %v4765, %v4792
    %v4797 = vadd.f32 %v4766, %v4793
    %v4798 = vadd.f32 %v4767, %v4794
    %v4799 = vadd.f32 %v4768, %v4795
    %4800 = vrot.lane.b32.xlu0 %v4734, 15
    %v4801 = vpop.permute.xlu0 %4800
    %4802 = vrot.lane.b32.xlu0 %v4735, 15
    %v4803 = vpop.permute.xlu0 %4802
    %4804 = vrot.lane.b32.xlu0 %v4736, 15
    %v4805 = vpop.permute.xlu0 %4804
    %4806 = vrot.lane.b32.xlu0 %v4737, 15
    %v4807 = vpop.permute.xlu0 %4806
    %v4808 = vsel %vm2718, %v4805, %v4807
    %v4809 = vsel %vm2718, %v4803, %v4805
    %v4810 = vsel %vm2718, %v4801, %v4803
    %v4811 = vsel %vm2718, %v4807, %v4801
    %v4812 = vmul.f32 %v4811, %v2727
    %v4813 = vmul.f32 %v4810, %v2731
    %v4814 = vmul.f32 %v4809, %v2735
    %v4815 = vmul.f32 %v4808, %v2739
    %s4816 = scalar_lea.vmem %s15, 88
    %v4817 = vld [vmem:[%s4816] sm:$0xff]
    %4819 = vset.pattern.permute.xlu0 0
    %4820 = vperm.xlu0 %4819, %v4817
    %v4821 = vpop.permute.xlu0 %4820
    %v4823 = vmul.f32 %v4821, %v4812
    %v4824 = vmul.f32 %v4821, %v4813
    %v4825 = vmul.f32 %v4821, %v4814
    %v4826 = vmul.f32 %v4821, %v4815
    %v4827 = vadd.f32 %v4796, %v4823
    %v4828 = vadd.f32 %v4797, %v4824
    %v4829 = vadd.f32 %v4798, %v4825
    %v4830 = vadd.f32 %v4799, %v4826
    %4831 = vrot.lane.b32.xlu0 %v4734, 1
    %v4832 = vpop.permute.xlu0 %4831
    %4833 = vrot.lane.b32.xlu0 %v4735, 1
    %v4834 = vpop.permute.xlu0 %4833
    %4835 = vrot.lane.b32.xlu0 %v4736, 1
    %v4836 = vpop.permute.xlu0 %4835
    %4837 = vrot.lane.b32.xlu0 %v4737, 1
    %v4838 = vpop.permute.xlu0 %4837
    %v4839 = vsel %vm2771, %v4836, %v4838
    %v4840 = vsel %vm2771, %v4834, %v4836
    %v4841 = vsel %vm2771, %v4832, %v4834
    %v4842 = vsel %vm2771, %v4838, %v4832
    %v4843 = vmul.f32 %v4842, %v2780
    %v4844 = vmul.f32 %v4841, %v2784
    %v4845 = vmul.f32 %v4840, %v2788
    %v4846 = vmul.f32 %v4839, %v2792
    %s4847 = scalar_lea.vmem %s15, 96
    %v4848 = vld [vmem:[%s4847] sm:$0xff]
    %4850 = vset.pattern.permute.xlu0 0
    %4851 = vperm.xlu0 %4850, %v4848
    %v4852 = vpop.permute.xlu0 %4851
    %v4854 = vmul.f32 %v4852, %v4843
    %v4855 = vmul.f32 %v4852, %v4844
    %v4856 = vmul.f32 %v4852, %v4845
    %v4857 = vmul.f32 %v4852, %v4846
    %v4858 = vadd.f32 %v4827, %v4854
    %v4859 = vadd.f32 %v4828, %v4855
    %v4860 = vadd.f32 %v4829, %v4856
    %v4861 = vadd.f32 %v4830, %v4857
    %s4862 = scalar_lea.vmem %s15, 104
    %v4863 = vld [vmem:[%s4862] sm:$0xff]
    %4865 = vset.pattern.permute.xlu0 0
    %4866 = vperm.xlu0 %4865, %v4863
    %v4867 = vpop.permute.xlu0 %4866
    %v4869 = vmul.f32 %v4867, %v4734
    %v4870 = vmul.f32 %v4867, %v4735
    %v4871 = vmul.f32 %v4867, %v4736
    %v4872 = vmul.f32 %v4867, %v4737
    %v4873 = vadd.f32 %v4858, %v4869
    %v4874 = vadd.f32 %v4859, %v4870
    %v4875 = vadd.f32 %v4860, %v4871
    %v4876 = vadd.f32 %v4861, %v4872
    %4877 = vrot.lane.b32.xlu0 %v4734, 127
    %v4878 = vpop.permute.xlu0 %4877
    %4879 = vrot.lane.b32.xlu0 %v4735, 127
    %v4880 = vpop.permute.xlu0 %4879
    %4881 = vrot.lane.b32.xlu0 %v4736, 127
    %v4882 = vpop.permute.xlu0 %4881
    %4883 = vrot.lane.b32.xlu0 %v4737, 127
    %v4884 = vpop.permute.xlu0 %4883
    %v4885 = vsel %vm2839, %v4882, %v4884
    %v4886 = vsel %vm2839, %v4880, %v4882
    %v4887 = vsel %vm2839, %v4878, %v4880
    %v4888 = vsel %vm2839, %v4884, %v4878
    %v4889 = vmul.f32 %v4887, %v2848
    %v4890 = vmul.f32 %v4886, %v2852
    %v4891 = vmul.f32 %v4885, %v2856
    %v4892 = vmul.f32 %v4888, %v2860
    %s4893 = scalar_lea.vmem %s15, 112
    %v4894 = vld [vmem:[%s4893] sm:$0xff]
    %4896 = vset.pattern.permute.xlu0 0
    %4897 = vperm.xlu0 %4896, %v4894
    %v4898 = vpop.permute.xlu0 %4897
    %v4900 = vmul.f32 %v4898, %v4889
    %v4901 = vmul.f32 %v4898, %v4890
    %v4902 = vmul.f32 %v4898, %v4891
    %v4903 = vmul.f32 %v4898, %v4892
    %v4904 = vadd.f32 %v4873, %v4900
    %v4905 = vadd.f32 %v4874, %v4901
    %v4906 = vadd.f32 %v4875, %v4902
    %v4907 = vadd.f32 %v4876, %v4903
    %4908 = vrot.lane.b32.xlu0 %v4734, 113
    %v4909 = vpop.permute.xlu0 %4908
    %4910 = vrot.lane.b32.xlu0 %v4735, 113
    %v4911 = vpop.permute.xlu0 %4910
    %4912 = vrot.lane.b32.xlu0 %v4736, 113
    %v4913 = vpop.permute.xlu0 %4912
    %4914 = vrot.lane.b32.xlu0 %v4737, 113
    %v4915 = vpop.permute.xlu0 %4914
    %v4916 = vsel %vm2892, %v4913, %v4915
    %v4917 = vsel %vm2892, %v4911, %v4913
    %v4918 = vsel %vm2892, %v4909, %v4911
    %v4919 = vsel %vm2892, %v4915, %v4909
    %v4920 = vmul.f32 %v4918, %v2901
    %v4921 = vmul.f32 %v4917, %v2905
    %v4922 = vmul.f32 %v4916, %v2909
    %v4923 = vmul.f32 %v4919, %v2913
    %s4924 = scalar_lea.vmem %s15, 120
    %v4925 = vld [vmem:[%s4924] sm:$0xff]
    %4927 = vset.pattern.permute.xlu0 0
    %4928 = vperm.xlu0 %4927, %v4925
    %v4929 = vpop.permute.xlu0 %4928
    %v4931 = vmul.f32 %v4929, %v4920
    %v4932 = vmul.f32 %v4929, %v4921
    %v4933 = vmul.f32 %v4929, %v4922
    %v4934 = vmul.f32 %v4929, %v4923
    %v4935 = vadd.f32 %v4904, %v4931
    %v4936 = vadd.f32 %v4905, %v4932
    %v4937 = vadd.f32 %v4906, %v4933
    %v4938 = vadd.f32 %v4907, %v4934
    %4939 = vrot.lane.b32.xlu0 %v4734, 112
    %v4940 = vpop.permute.xlu0 %4939
    %4941 = vrot.lane.b32.xlu0 %v4735, 112
    %v4942 = vpop.permute.xlu0 %4941
    %4943 = vrot.lane.b32.xlu0 %v4736, 112
    %v4944 = vpop.permute.xlu0 %4943
    %4945 = vrot.lane.b32.xlu0 %v4737, 112
    %v4946 = vpop.permute.xlu0 %4945
    %v4947 = vsel %vm2945, %v4944, %v4946
    %v4948 = vsel %vm2945, %v4942, %v4944
    %v4949 = vsel %vm2945, %v4940, %v4942
    %v4950 = vsel %vm2945, %v4946, %v4940
    %v4951 = vmul.f32 %v4949, %v2954
    %v4952 = vmul.f32 %v4948, %v2958
    %v4953 = vmul.f32 %v4947, %v2962
    %v4954 = vmul.f32 %v4950, %v2966
    %s4955 = scalar_lea.vmem %s15, 128
    %v4956 = vld [vmem:[%s4955] sm:$0xff]
    %4958 = vset.pattern.permute.xlu0 0
    %4959 = vperm.xlu0 %4958, %v4956
    %v4960 = vpop.permute.xlu0 %4959
    %v4962 = vmul.f32 %v4960, %v4951
    %v4963 = vmul.f32 %v4960, %v4952
    %v4964 = vmul.f32 %v4960, %v4953
    %v4965 = vmul.f32 %v4960, %v4954
    %v4966 = vadd.f32 %v4935, %v4962
    %v4967 = vadd.f32 %v4936, %v4963
    %v4968 = vadd.f32 %v4937, %v4964
    %v4969 = vadd.f32 %v4938, %v4965
    %4970 = vrot.lane.b32.xlu0 %v4734, 111
    %v4971 = vpop.permute.xlu0 %4970
    %4972 = vrot.lane.b32.xlu0 %v4735, 111
    %v4973 = vpop.permute.xlu0 %4972
    %4974 = vrot.lane.b32.xlu0 %v4736, 111
    %v4975 = vpop.permute.xlu0 %4974
    %4976 = vrot.lane.b32.xlu0 %v4737, 111
    %v4977 = vpop.permute.xlu0 %4976
    %v4978 = vsel %vm2998, %v4975, %v4977
    %v4979 = vsel %vm2998, %v4973, %v4975
    %v4980 = vsel %vm2998, %v4971, %v4973
    %v4981 = vsel %vm2998, %v4977, %v4971
    %v4982 = vmul.f32 %v4980, %v3007
    %v4983 = vmul.f32 %v4979, %v3011
    %v4984 = vmul.f32 %v4978, %v3015
    %v4985 = vmul.f32 %v4981, %v3019
    %s4986 = scalar_lea.vmem %s15, 136
    %v4987 = vld [vmem:[%s4986] sm:$0xff]
    %4989 = vset.pattern.permute.xlu0 0
    %4990 = vperm.xlu0 %4989, %v4987
    %v4991 = vpop.permute.xlu0 %4990
    %v4993 = vmul.f32 %v4991, %v4982
    %v4994 = vmul.f32 %v4991, %v4983
    %v4995 = vmul.f32 %v4991, %v4984
    %v4996 = vmul.f32 %v4991, %v4985
    %v4997 = vadd.f32 %v4966, %v4993
    %v4998 = vadd.f32 %v4967, %v4994
    %v4999 = vadd.f32 %v4968, %v4995
    %v5000 = vadd.f32 %v4969, %v4996
    %s5001 = scalar_lea.vmem %s16, 8
    %v5002 = vld [vmem:[%s5001] sm:$0xff]
    %5004 = vset.pattern.permute.xlu0 0
    %5005 = vperm.xlu0 %5004, %v5002
    %v5006 = vpop.permute.xlu0 %5005
    %v5008 = vadd.f32 %v4997, %v5006
    %v5009 = vadd.f32 %v4998, %v5006
    %v5010 = vadd.f32 %v4999, %v5006
    %v5011 = vadd.f32 %v5000, %v5006
    %v5012 = vxor.u32 %v5008, 2147483648
    %v5013 = vxor.u32 %v5009, 2147483648
    %v5014 = vxor.u32 %v5010, 2147483648
    %v5015 = vxor.u32 %v5011, 2147483648
    %v5016 = vmul.f32 %v5012, 1.442695
    %v5017 = vpow.pop %v5016
    %v5018 = vmul.f32 %v5013, 1.442695
    %v5019 = vpow.pop %v5018
    %v5020 = vmul.f32 %v5014, 1.442695
    %v5021 = vpow.pop %v5020
    %v5022 = vmul.f32 %v5015, 1.442695
    %v5023 = vpow.pop %v5022
    %v5024 = vadd.f32 %v5017, 1.0
    %v5025 = vadd.f32 %v5019, 1.0
    %v5026 = vadd.f32 %v5021, 1.0
    %v5027 = vadd.f32 %v5023, 1.0
    %v5028 = vrcp.pop %v5024
    %v5029 = vmul.f32 1.0, %v5028
    %v5030 = vrcp.pop %v5025
    %v5031 = vmul.f32 1.0, %v5030
    %v5032 = vrcp.pop %v5026
    %v5033 = vmul.f32 1.0, %v5032
    %v5034 = vrcp.pop %v5027
    %v5035 = vmul.f32 1.0, %v5034
    %v5036 = vmul.f32 %v5008, %v5029
    %v5037 = vmul.f32 %v5009, %v5031
    %v5038 = vmul.f32 %v5010, %v5033
    %v5039 = vmul.f32 %v5011, %v5035
    %s5040 = scalar_lea.vmem %s17, 8
    %v5041 = vld [vmem:[%s5040] sm:$0xff]
    %s5042 = scalar_lea.vmem %s18, 8
    %v5043 = vld [vmem:[%s5042] sm:$0xff]
    %5045 = vset.pattern.permute.xlu0 0
    %5046 = vperm.xlu0 %5045, %v5043
    %v5047 = vpop.permute.xlu0 %5046
    %v5050 = vsel %vm633, %v5041, 0
    %5052 = vmatprep.subr.mxu0 %v5037
    %5053 = vmatpush1.msra.mxu0 %v5036
    %5054 = vmatprep.subr.mxu0 0.0
    %5055 = vmatpush1.msra.mxu0 0.0
    %5056 = vmatprep.subr.mxu0 0.0
    %5057 = vmatpush1.msra.mxu0 0.0
    %5058 = vmatprep.subr.mxu0 0.0
    %5059 = vmatpush1.msra.mxu0 0.0
    %5060 = vmatprep.subr.mxu0 0.0
    %5061 = vmatpush1.msra.mxu0 0.0
    %5062 = vmatprep.subr.mxu0 0.0
    %5063 = vmatpush1.msra.mxu0 0.0
    %5064 = vmatprep.subr.mxu0 0.0
    %5065 = vmatpush1.msra.mxu0 0.0
    %5066 = vmatprep.subr.mxu0 0.0
    %5067 = vmatpush1.msra.mxu0 0.0
    %5068 = vmatprep.subr.mxu0 0.0
    %5069 = vmatpush1.msra.mxu0 0.0
    %5070 = vmatprep.subr.mxu0 0.0
    %5071 = vmatpush1.msra.mxu0 0.0
    %5072 = vmatprep.subr.mxu0 0.0
    %5073 = vmatpush1.msra.mxu0 0.0
    %5074 = vmatprep.subr.mxu0 0.0
    %5075 = vmatpush1.msra.mxu0 0.0
    %5076 = vmatprep.subr.mxu0 0.0
    %5077 = vmatpush1.msra.mxu0 0.0
    %5078 = vmatprep.subr.mxu0 0.0
    %5079 = vmatpush1.msra.mxu0 0.0
    %5080 = vmatprep.subr.mxu0 0.0
    %5081 = vmatpush1.msra.mxu0 0.0
    %5082 = vmatprep.subr.mxu0 0.0
    %5083 = vmatpush1.msra.mxu0 0.0
    %5084 = vmatprep.subr.mxu0 0.0
    %5085 = vmatpush1.msra.mxu0 0.0
    %5086 = vmatprep.subr.mxu0 0.0
    %5087 = vmatpush1.msra.mxu0 0.0
    %5088 = vmatprep.subr.mxu0 0.0
    %5089 = vmatpush1.msra.mxu0 0.0
    %5090 = vmatprep.subr.mxu0 0.0
    %5091 = vmatpush1.msra.mxu0 0.0
    %5092 = vmatprep.subr.mxu0 0.0
    %5093 = vmatpush1.msra.mxu0 0.0
    %5094 = vmatprep.subr.mxu0 0.0
    %5095 = vmatpush1.msra.mxu0 0.0
    %5096 = vmatprep.subr.mxu0 0.0
    %5097 = vmatpush1.msra.mxu0 0.0
    %5098 = vmatprep.subr.mxu0 0.0
    %5099 = vmatpush1.msra.mxu0 0.0
    %5100 = vmatprep.subr.mxu0 0.0
    %5101 = vmatpush1.msra.mxu0 0.0
    %5102 = vmatprep.subr.mxu0 0.0
    %5103 = vmatpush1.msra.mxu0 0.0
    %5104 = vmatprep.subr.mxu0 0.0
    %5105 = vmatpush1.msra.mxu0 0.0
    %5106 = vmatprep.subr.mxu0 0.0
    %5107 = vmatpush1.msra.mxu0 0.0
    %5108 = vmatprep.subr.mxu0 0.0
    %5109 = vmatpush1.msra.mxu0 0.0
    %5110 = vmatprep.subr.mxu0 0.0
    %5111 = vmatpush1.msra.mxu0 0.0
    %5112 = vmatprep.subr.mxu0 0.0
    %5113 = vmatpush1.msra.mxu0 0.0
    %5114 = vmatprep.subr.mxu0 0.0
    %5115 = vmatpush1.msra.mxu0 0.0
    %5116 = vmatprep.mubr.f32.mxu0 0.0
    %5117 = vmatmul.mubr.f32.gmra.mrb[0].mxu0 %v5050
    %v5118 = vpop.f32.mrb[0].mxu0
    %v5119 = vadd.f32 %v5047, %v5118
    %v5120 = vpop.f32.mrb[0].mxu0
    %v5121 = vadd.f32 %v5047, %v5120
    %5122 = vdwg.mxu0
    %5123 = vmatprep.subr.mxu0 %v5039
    %5124 = vmatpush1.msra.mxu0 %v5038
    %5125 = vmatprep.subr.mxu0 0.0
    %5126 = vmatpush1.msra.mxu0 0.0
    %5127 = vmatprep.subr.mxu0 0.0
    %5128 = vmatpush1.msra.mxu0 0.0
    %5129 = vmatprep.subr.mxu0 0.0
    %5130 = vmatpush1.msra.mxu0 0.0
    %5131 = vmatprep.subr.mxu0 0.0
    %5132 = vmatpush1.msra.mxu0 0.0
    %5133 = vmatprep.subr.mxu0 0.0
    %5134 = vmatpush1.msra.mxu0 0.0
    %5135 = vmatprep.subr.mxu0 0.0
    %5136 = vmatpush1.msra.mxu0 0.0
    %5137 = vmatprep.subr.mxu0 0.0
    %5138 = vmatpush1.msra.mxu0 0.0
    %5139 = vmatprep.subr.mxu0 0.0
    %5140 = vmatpush1.msra.mxu0 0.0
    %5141 = vmatprep.subr.mxu0 0.0
    %5142 = vmatpush1.msra.mxu0 0.0
    %5143 = vmatprep.subr.mxu0 0.0
    %5144 = vmatpush1.msra.mxu0 0.0
    %5145 = vmatprep.subr.mxu0 0.0
    %5146 = vmatpush1.msra.mxu0 0.0
    %5147 = vmatprep.subr.mxu0 0.0
    %5148 = vmatpush1.msra.mxu0 0.0
    %5149 = vmatprep.subr.mxu0 0.0
    %5150 = vmatpush1.msra.mxu0 0.0
    %5151 = vmatprep.subr.mxu0 0.0
    %5152 = vmatpush1.msra.mxu0 0.0
    %5153 = vmatprep.subr.mxu0 0.0
    %5154 = vmatpush1.msra.mxu0 0.0
    %5155 = vmatprep.subr.mxu0 0.0
    %5156 = vmatpush1.msra.mxu0 0.0
    %5157 = vmatprep.subr.mxu0 0.0
    %5158 = vmatpush1.msra.mxu0 0.0
    %5159 = vmatprep.subr.mxu0 0.0
    %5160 = vmatpush1.msra.mxu0 0.0
    %5161 = vmatprep.subr.mxu0 0.0
    %5162 = vmatpush1.msra.mxu0 0.0
    %5163 = vmatprep.subr.mxu0 0.0
    %5164 = vmatpush1.msra.mxu0 0.0
    %5165 = vmatprep.subr.mxu0 0.0
    %5166 = vmatpush1.msra.mxu0 0.0
    %5167 = vmatprep.subr.mxu0 0.0
    %5168 = vmatpush1.msra.mxu0 0.0
    %5169 = vmatprep.subr.mxu0 0.0
    %5170 = vmatpush1.msra.mxu0 0.0
    %5171 = vmatprep.subr.mxu0 0.0
    %5172 = vmatpush1.msra.mxu0 0.0
    %5173 = vmatprep.subr.mxu0 0.0
    %5174 = vmatpush1.msra.mxu0 0.0
    %5175 = vmatprep.subr.mxu0 0.0
    %5176 = vmatpush1.msra.mxu0 0.0
    %5177 = vmatprep.subr.mxu0 0.0
    %5178 = vmatpush1.msra.mxu0 0.0
    %5179 = vmatprep.subr.mxu0 0.0
    %5180 = vmatpush1.msra.mxu0 0.0
    %5181 = vmatprep.subr.mxu0 0.0
    %5182 = vmatpush1.msra.mxu0 0.0
    %5183 = vmatprep.subr.mxu0 0.0
    %5184 = vmatpush1.msra.mxu0 0.0
    %5185 = vmatprep.subr.mxu0 0.0
    %5186 = vmatpush1.msra.mxu0 0.0
    %5187 = vmatprep.mubr.f32.mxu0 0.0
    %5188 = vmatmul.mubr.f32.gmra.mrb[0].mxu0 %v5050
    %v5189 = vpop.f32.mrb[0].mxu0
    %v5190 = vadd.f32 %v5047, %v5189
    %v5191 = vpop.f32.mrb[0].mxu0
    %v5192 = vadd.f32 %v5047, %v5191
    %5193 = vdwg.mxu0
    %v5194 = vxor.u32 %v5119, 2147483648
    %v5195 = vxor.u32 %v5121, 2147483648
    %v5196 = vxor.u32 %v5190, 2147483648
    %v5197 = vxor.u32 %v5192, 2147483648
    %v5198 = vmul.f32 %v5194, 1.442695
    %v5199 = vpow.pop %v5198
    %v5200 = vmul.f32 %v5195, 1.442695
    %v5201 = vpow.pop %v5200
    %v5202 = vmul.f32 %v5196, 1.442695
    %v5203 = vpow.pop %v5202
    %v5204 = vmul.f32 %v5197, 1.442695
    %v5205 = vpow.pop %v5204
    %v5206 = vadd.f32 %v5199, 1.0
    %v5207 = vadd.f32 %v5201, 1.0
    %v5208 = vadd.f32 %v5203, 1.0
    %v5209 = vadd.f32 %v5205, 1.0
    %v5210 = vrcp.pop %v5206
    %v5211 = vmul.f32 1.0, %v5210
    %v5212 = vrcp.pop %v5207
    %v5213 = vmul.f32 1.0, %v5212
    %v5214 = vrcp.pop %v5208
    %v5215 = vmul.f32 1.0, %v5214
    %v5216 = vrcp.pop %v5209
    %v5217 = vmul.f32 1.0, %v5216
    %v5218 = vmul.f32 %v5119, %v5211
    %v5219 = vmul.f32 %v5121, %v5213
    %v5220 = vmul.f32 %v5190, %v5215
    %v5221 = vmul.f32 %v5192, %v5217
    %s5222 = scalar_lea.vmem %s19, 24
    %v5223 = vld [vmem:[%s5222] sm:$0xff]
    %v5225 = vsel %vm633, %v5223, 0
    %5227 = vmatprep.subr.mxu0 %v5219
    %5228 = vmatpush1.msra.mxu0 %v5218
    %5229 = vmatprep.subr.mxu0 0.0
    %5230 = vmatpush1.msra.mxu0 0.0
    %5231 = vmatprep.subr.mxu0 0.0
    %5232 = vmatpush1.msra.mxu0 0.0
    %5233 = vmatprep.subr.mxu0 0.0
    %5234 = vmatpush1.msra.mxu0 0.0
    %5235 = vmatprep.subr.mxu0 0.0
    %5236 = vmatpush1.msra.mxu0 0.0
    %5237 = vmatprep.subr.mxu0 0.0
    %5238 = vmatpush1.msra.mxu0 0.0
    %5239 = vmatprep.subr.mxu0 0.0
    %5240 = vmatpush1.msra.mxu0 0.0
    %5241 = vmatprep.subr.mxu0 0.0
    %5242 = vmatpush1.msra.mxu0 0.0
    %5243 = vmatprep.subr.mxu0 0.0
    %5244 = vmatpush1.msra.mxu0 0.0
    %5245 = vmatprep.subr.mxu0 0.0
    %5246 = vmatpush1.msra.mxu0 0.0
    %5247 = vmatprep.subr.mxu0 0.0
    %5248 = vmatpush1.msra.mxu0 0.0
    %5249 = vmatprep.subr.mxu0 0.0
    %5250 = vmatpush1.msra.mxu0 0.0
    %5251 = vmatprep.subr.mxu0 0.0
    %5252 = vmatpush1.msra.mxu0 0.0
    %5253 = vmatprep.subr.mxu0 0.0
    %5254 = vmatpush1.msra.mxu0 0.0
    %5255 = vmatprep.subr.mxu0 0.0
    %5256 = vmatpush1.msra.mxu0 0.0
    %5257 = vmatprep.subr.mxu0 0.0
    %5258 = vmatpush1.msra.mxu0 0.0
    %5259 = vmatprep.subr.mxu0 0.0
    %5260 = vmatpush1.msra.mxu0 0.0
    %5261 = vmatprep.subr.mxu0 0.0
    %5262 = vmatpush1.msra.mxu0 0.0
    %5263 = vmatprep.subr.mxu0 0.0
    %5264 = vmatpush1.msra.mxu0 0.0
    %5265 = vmatprep.subr.mxu0 0.0
    %5266 = vmatpush1.msra.mxu0 0.0
    %5267 = vmatprep.subr.mxu0 0.0
    %5268 = vmatpush1.msra.mxu0 0.0
    %5269 = vmatprep.subr.mxu0 0.0
    %5270 = vmatpush1.msra.mxu0 0.0
    %5271 = vmatprep.subr.mxu0 0.0
    %5272 = vmatpush1.msra.mxu0 0.0
    %5273 = vmatprep.subr.mxu0 0.0
    %5274 = vmatpush1.msra.mxu0 0.0
    %5275 = vmatprep.subr.mxu0 0.0
    %5276 = vmatpush1.msra.mxu0 0.0
    %5277 = vmatprep.subr.mxu0 0.0
    %5278 = vmatpush1.msra.mxu0 0.0
    %5279 = vmatprep.subr.mxu0 0.0
    %5280 = vmatpush1.msra.mxu0 0.0
    %5281 = vmatprep.subr.mxu0 0.0
    %5282 = vmatpush1.msra.mxu0 0.0
    %5283 = vmatprep.subr.mxu0 0.0
    %5284 = vmatpush1.msra.mxu0 0.0
    %5285 = vmatprep.subr.mxu0 0.0
    %5286 = vmatpush1.msra.mxu0 0.0
    %5287 = vmatprep.subr.mxu0 0.0
    %5288 = vmatpush1.msra.mxu0 0.0
    %5289 = vmatprep.subr.mxu0 0.0
    %5290 = vmatpush1.msra.mxu0 0.0
    %5291 = vmatprep.mubr.f32.mxu0 0.0
    %5292 = vmatmul.mubr.f32.gmra.mrb[0].mxu0 %v5225
    %v5293 = vpop.f32.mrb[0].mxu0
    %v5294 = vadd.f32 0.0, %v5293
    %v5295 = vpop.f32.mrb[0].mxu0
    %v5296 = vadd.f32 0.0, %v5295
    %5297 = vdwg.mxu0
    %5298 = vmatprep.subr.mxu0 %v5221
    %5299 = vmatpush1.msra.mxu0 %v5220
    %5300 = vmatprep.subr.mxu0 0.0
    %5301 = vmatpush1.msra.mxu0 0.0
    %5302 = vmatprep.subr.mxu0 0.0
    %5303 = vmatpush1.msra.mxu0 0.0
    %5304 = vmatprep.subr.mxu0 0.0
    %5305 = vmatpush1.msra.mxu0 0.0
    %5306 = vmatprep.subr.mxu0 0.0
    %5307 = vmatpush1.msra.mxu0 0.0
    %5308 = vmatprep.subr.mxu0 0.0
    %5309 = vmatpush1.msra.mxu0 0.0
    %5310 = vmatprep.subr.mxu0 0.0
    %5311 = vmatpush1.msra.mxu0 0.0
    %5312 = vmatprep.subr.mxu0 0.0
    %5313 = vmatpush1.msra.mxu0 0.0
    %5314 = vmatprep.subr.mxu0 0.0
    %5315 = vmatpush1.msra.mxu0 0.0
    %5316 = vmatprep.subr.mxu0 0.0
    %5317 = vmatpush1.msra.mxu0 0.0
    %5318 = vmatprep.subr.mxu0 0.0
    %5319 = vmatpush1.msra.mxu0 0.0
    %5320 = vmatprep.subr.mxu0 0.0
    %5321 = vmatpush1.msra.mxu0 0.0
    %5322 = vmatprep.subr.mxu0 0.0
    %5323 = vmatpush1.msra.mxu0 0.0
    %5324 = vmatprep.subr.mxu0 0.0
    %5325 = vmatpush1.msra.mxu0 0.0
    %5326 = vmatprep.subr.mxu0 0.0
    %5327 = vmatpush1.msra.mxu0 0.0
    %5328 = vmatprep.subr.mxu0 0.0
    %5329 = vmatpush1.msra.mxu0 0.0
    %5330 = vmatprep.subr.mxu0 0.0
    %5331 = vmatpush1.msra.mxu0 0.0
    %5332 = vmatprep.subr.mxu0 0.0
    %5333 = vmatpush1.msra.mxu0 0.0
    %5334 = vmatprep.subr.mxu0 0.0
    %5335 = vmatpush1.msra.mxu0 0.0
    %5336 = vmatprep.subr.mxu0 0.0
    %5337 = vmatpush1.msra.mxu0 0.0
    %5338 = vmatprep.subr.mxu0 0.0
    %5339 = vmatpush1.msra.mxu0 0.0
    %5340 = vmatprep.subr.mxu0 0.0
    %5341 = vmatpush1.msra.mxu0 0.0
    %5342 = vmatprep.subr.mxu0 0.0
    %5343 = vmatpush1.msra.mxu0 0.0
    %5344 = vmatprep.subr.mxu0 0.0
    %5345 = vmatpush1.msra.mxu0 0.0
    %5346 = vmatprep.subr.mxu0 0.0
    %5347 = vmatpush1.msra.mxu0 0.0
    %5348 = vmatprep.subr.mxu0 0.0
    %5349 = vmatpush1.msra.mxu0 0.0
    %5350 = vmatprep.subr.mxu0 0.0
    %5351 = vmatpush1.msra.mxu0 0.0
    %5352 = vmatprep.subr.mxu0 0.0
    %5353 = vmatpush1.msra.mxu0 0.0
    %5354 = vmatprep.subr.mxu0 0.0
    %5355 = vmatpush1.msra.mxu0 0.0
    %5356 = vmatprep.subr.mxu0 0.0
    %5357 = vmatpush1.msra.mxu0 0.0
    %5358 = vmatprep.subr.mxu0 0.0
    %5359 = vmatpush1.msra.mxu0 0.0
    %5360 = vmatprep.subr.mxu0 0.0
    %5361 = vmatpush1.msra.mxu0 0.0
    %5362 = vmatprep.mubr.f32.mxu0 0.0
    %5363 = vmatmul.mubr.f32.gmra.mrb[0].mxu0 %v5225
    %v5364 = vpop.f32.mrb[0].mxu0
    %v5365 = vadd.f32 0.0, %v5364
    %v5366 = vpop.f32.mrb[0].mxu0
    %v5367 = vadd.f32 0.0, %v5366
    %5368 = vdwg.mxu0
    %v5369 = vadd.f32 %v3408, %v5294
    %v5370 = vadd.f32 %v3409, %v5296
    %v5371 = vadd.f32 %v3410, %v5365
    %v5372 = vadd.f32 %v3411, %v5367
    %v5373 = vld [vmem:[%s20] sm:$0xff]
    %5375 = vset.pattern.permute.xlu0 0
    %5376 = vperm.xlu0 %5375, %v5373
    %v5377 = vpop.permute.xlu0 %5376
    %v5379 = vadd.f32 %v5369, %v5377
    %v5380 = vadd.f32 %v5370, %v5377
    %v5381 = vadd.f32 %v5371, %v5377
    %v5382 = vadd.f32 %v5372, %v5377
    %v5383 = vxor.u32 %v5379, 2147483648
    %v5384 = vxor.u32 %v5380, 2147483648
    %v5385 = vxor.u32 %v5381, 2147483648
    %v5386 = vxor.u32 %v5382, 2147483648
    %v5387 = vmul.f32 %v5383, 1.442695
    %v5388 = vpow.pop %v5387
    %v5389 = vmul.f32 %v5384, 1.442695
    %v5390 = vpow.pop %v5389
    %v5391 = vmul.f32 %v5385, 1.442695
    %v5392 = vpow.pop %v5391
    %v5393 = vmul.f32 %v5386, 1.442695
    %v5394 = vpow.pop %v5393
    %v5395 = vadd.f32 %v5388, 1.0
    %v5396 = vadd.f32 %v5390, 1.0
    %v5397 = vadd.f32 %v5392, 1.0
    %v5398 = vadd.f32 %v5394, 1.0
    %v5399 = vrcp.pop %v5395
    %v5400 = vmul.f32 1.0, %v5399
    %v5401 = vrcp.pop %v5396
    %v5402 = vmul.f32 1.0, %v5401
    %v5403 = vrcp.pop %v5397
    %v5404 = vmul.f32 1.0, %v5403
    %v5405 = vrcp.pop %v5398
    %v5406 = vmul.f32 1.0, %v5405
    %v5407 = vmul.f32 %v5379, %v5400
    %v5408 = vmul.f32 %v5380, %v5402
    %v5409 = vmul.f32 %v5381, %v5404
    %v5410 = vmul.f32 %v5382, %v5406
    %v5411 = vadd.f32 %v5407, %v96
    %v5412 = vadd.f32 %v5408, %v97
    %v5413 = vadd.f32 %v5409, %v99
    %v5414 = vadd.f32 %v5410, %v100
    %5415 = vst [vmem:[%s21] sm:$0xff] %v5411
    %5416 = vst [vmem:[%s21 + $0x8] sm:$0xff] %v5412
    %s5417 = scalar_lea.vmem %s21, 16
    %5418 = vst [vmem:[%s5417] sm:$0xff] %v5413
    %5419 = vst [vmem:[%s5417 + $0x8] sm:$0xff] %v5414
    // Predicated region
    $region94: #{pinwheel_attn_forward.1} parent=1 // pred_check
      _
    $region95: #{pinwheel_attn_forward.1} parent=1 // pred_check_branch
      %5421 = sbr.rel (0) target = $region97
    $region96: #{pinwheel_attn_forward.1} parent=1 // pred_region
      _
    $region97: #{pinwheel_attn_forward.1} parent=1 // pred_fallthru
      _
    // Predicated region
    $region98: #{pinwheel_attn_forward.1} parent=1 // pred_check
      _
    $region99: #{pinwheel_attn_forward.1} parent=1 // pred_check_branch
      %5423 = sbr.rel (0) target = $region101
    $region100: #{pinwheel_attn_forward.1} parent=1 // pred_region
      _
    $region101: #{pinwheel_attn_forward.1} parent=1 // pred_fallthru
      _
    %5424 = vsyncpa [#allocation3], 1
    %5425 = vsyncpa [#allocation5], 1

</llo_original>
